<compile_context>
chip_gen: v7x
topology: tpu7x:2x2x1
jax: 0.10.0
libtpu: 0.0.40
codegen_flags: <defaults>
</compile_context>

<pallas_src>
import jax
import jax.numpy as jnp
from jax.experimental import pallas as pl
from jax.experimental.pallas import tpu as pltpu

NEG_SLOPE = 0.02  # LeakyReLU(0.02) inside residual_block.conv


def _make_channel_reduction_kernel(cin, cmid, H, W, n_blocks, bt):
    """Fused kernel body for static sizes (cin = in_ch, cmid = in_ch // 4)."""
    HW = H * W

    def lrelu(t):
        return jnp.where(t > 0, t, NEG_SLOPE * t)

    def conv3x3(a2d, wm_ref, b_ref):
        # a2d: (H*W, c_in) f32, channels-last.  Build ONE im2col slab per conv
        # and contract it on the MXU against the (9*c_in, c_out) weight matrix.
        c_in = a2d.shape[1]
        a = a2d.reshape(H, W, c_in)            # trivial split of the major dim
        # ReflectionPad2d(1) over H (axis 0) and W (axis 1); lane dim untouched.
        a = jnp.concatenate([a[1:2], a, a[H - 2:H - 1]], axis=0)
        a = jnp.concatenate([a[:, 1:2], a, a[:, W - 2:W - 1]], axis=1)
        taps = [a[kh:kh + H, kw:kw + W, :]
                for kh in range(3) for kw in range(3)]
        slab = jnp.concatenate(taps, axis=-1).reshape(HW, 9 * c_in)
        out = jnp.dot(slab, wm_ref[...], preferred_element_type=jnp.float32)
        return out + b_ref[...]                # bias broadcast (1, c_out)

    def kernel(*refs):
        wrefs = refs[:6 * n_blocks]            # VMEM weight/bias refs
        x_ref = refs[6 * n_blocks]             # (bt, 2*cin, H*W), lane-dense
        o_ref = refs[6 * n_blocks + 1]         # (bt, 2*cin, H*W), lane-dense

        for bi in range(bt):
            x = x_ref[bi].astype(jnp.float32)  # (2*cin, HW)
            x1 = x[:cin].T                     # (HW, cin) channels-last
            x2 = x[cin:].T
            for i in range(n_blocks):
                w1, b1, w2, b2, w3, b3 = wrefs[6 * i:6 * i + 6]
                t = lrelu(conv3x3(x2, w1, b1))
                t = lrelu(conv3x3(t, w2, b2))
                fx2 = conv3x3(t, w3, b3)
                x1, x2 = x2, fx2 + x1          # residual_block.forward (stride=1)
            # Write the two output halves directly (no concat temporary),
            # lane-dense along H*W.
            o_ref[bi, :cin, :] = x1.T.astype(o_ref.dtype)
            o_ref[bi, cin:, :] = x2.T.astype(o_ref.dtype)

    return kernel


def channel_reduction_forward(x, params):
    """x: (B, 2*in_ch, H, W) NCHW.  params: list (len n_blocks) of tuples
    (w1, b1, w2, b2, w3, b3) with PyTorch OIHW conv weights / 1-D biases."""
    B, C, H, W = x.shape
    assert C % 2 == 0 and H >= 2 and W >= 2
    cin = C // 2
    cmid = cin // 4
    assert cmid >= 1, "residual_block uses channel // 4 hidden width"
    n_blocks = len(params)
    HW = H * W

    # Batch tile: target ~512 KiB of activation per grid step, but keep >= 2
    # parallel grid steps when possible so v7x's two TensorCores both work.
    per_image = C * HW * x.dtype.itemsize
    bt = max(1, min(B, (512 * 1024) // max(per_image, 1)))
    while bt > 1 and (B // bt) < 2:
        bt -= 1
    while B % bt:
        bt -= 1
    grid = (B // bt,)

    flat_args, in_specs = [], []
    for (w1, b1, w2, b2, w3, b3) in params:
        for w, b, ci, co in ((w1, b1, cin, cmid),
                             (w2, b2, cmid, cmid),
                             (w3, b3, cmid, cin)):
            w = jnp.asarray(w, jnp.float32)
            assert w.shape == (co, ci, 3, 3)
            # OIHW -> (9*c_in, c_out); row index = (kh*3 + kw)*c_in + ci,
            # matching the in-kernel im2col tap/channel ordering.
            wm = jnp.transpose(w, (2, 3, 1, 0)).reshape(9 * ci, co)
            bv = jnp.asarray(b, jnp.float32).reshape(1, co)
            flat_args.append(wm)
            in_specs.append(pl.BlockSpec(wm.shape, lambda g: (0, 0)))
            flat_args.append(bv)
            in_specs.append(pl.BlockSpec(bv.shape, lambda g: (0, 0)))

    # Lane-dense blocks: flatten spatial dims so the last (lane) dim is H*W.
    x_flat = x.reshape(B, C, HW)
    flat_args.append(x_flat)
    in_specs.append(pl.BlockSpec((bt, C, HW), lambda g: (g, 0, 0)))

    kernel = _make_channel_reduction_kernel(cin, cmid, H, W, n_blocks, bt)

    # Rough VMEM budget: double-buffered in/out blocks + f32 working set +
    # resident weights; clamp so it is safe on every generation (v7x 64 MiB).
    weight_bytes = sum(int(a.size) * 4 for a in flat_args[:-1])
    work_bytes = (2 * C + 2 * 9 * cin + 4 * cin) * HW * 4
    est = 4 * bt * C * HW * x.dtype.itemsize + bt * 0 + work_bytes + weight_bytes
    vmem_limit = int(min(max(2 * est, 32 << 20), 56 << 20))

    out = pl.pallas_call(
        kernel,
        out_shape=jax.ShapeDtypeStruct((B, C, HW), x.dtype),
        grid=grid,
        in_specs=in_specs,
        out_specs=pl.BlockSpec((bt, C, HW), lambda g: (g, 0, 0)),
        compiler_params=pltpu.CompilerParams(
            dimension_semantics=("parallel",),
            vmem_limit_bytes=vmem_limit),
    )(*flat_args)
    return out.reshape(B, C, H, W)


# ----------------------- pure-JAX reference (PyTorch semantics) ----------------
def _conv3x3_ref(x, w, b):
    xp = jnp.pad(x, ((0, 0), (0, 0), (1, 1), (1, 1)), mode="reflect")
    y = jax.lax.conv_general_dilated(
        xp, w, window_strides=(1, 1), padding="VALID",
        dimension_numbers=("NCHW", "OIHW", "NCHW"),
        precision=jax.lax.Precision.HIGHEST)
    return y + b[None, :, None, None]


def _lrelu_ref(x):
    return jnp.where(x > 0, x, NEG_SLOPE * x)


def channel_reduction_ref(x, params):
    n = x.shape[1] // 2
    x1, x2 = x[:, :n], x[:, n:]
    for (w1, b1, w2, b2, w3, b3) in params:
        t = _lrelu_ref(_conv3x3_ref(x2, w1, b1))
        t = _lrelu_ref(_conv3x3_ref(t, w2, b2))
        t = _conv3x3_ref(t, w3, b3)
        x1, x2 = x2, t + x1
    return jnp.concatenate([x1, x2], axis=1)


if __name__ == "__main__":
    key = jax.random.PRNGKey(0)
    B, in_ch, H, W = 2, 4, 16, 16     # channel_reduction(in_ch=4): x has 2*in_ch chans
    C = 2 * in_ch
    cmid = in_ch // 4
    n_blocks = 2

    keys = jax.random.split(key, 1 + 3 * n_blocks)
    x = jax.random.normal(keys[0], (B, C, H, W), dtype=jnp.float32)

    params = []
    ki = 1
    for _ in range(n_blocks):
        w1 = 0.1 * jax.random.normal(keys[ki], (cmid, in_ch, 3, 3), jnp.float32); ki += 1
        w2 = 0.1 * jax.random.normal(keys[ki], (cmid, cmid, 3, 3), jnp.float32); ki += 1
        w3 = 0.1 * jax.random.normal(keys[ki], (in_ch, cmid, 3, 3), jnp.float32); ki += 1
        # residual_block.init_layers() zeroes all conv biases.
        b1 = jnp.zeros((cmid,), jnp.float32)
        b2 = jnp.zeros((cmid,), jnp.float32)
        b3 = jnp.zeros((in_ch,), jnp.float32)
        params.append((w1, b1, w2, b2, w3, b3))

    out = channel_reduction_forward(x, params)
    out = jax.block_until_ready(out)

    ref = channel_reduction_ref(x, params)
    assert out.shape == (B, C, H, W)
    assert out.dtype == x.dtype
    err = float(jnp.max(jnp.abs(out - ref)))
    assert jnp.allclose(out, ref, atol=5e-4, rtol=5e-4), err

    print("KERNEL_OK")
</pallas_src>

<mosaic_0001>
module attributes {stable_mosaic.version = 11 : i64} {
  func.func @kernel(%arg0: i32, %arg1: memref<36x1xf32, #tpu.memory_space<vmem>>, %arg2: memref<1x1xf32, #tpu.memory_space<vmem>>, %arg3: memref<9x1xf32, #tpu.memory_space<vmem>>, %arg4: memref<1x1xf32, #tpu.memory_space<vmem>>, %arg5: memref<9x4xf32, #tpu.memory_space<vmem>>, %arg6: memref<1x4xf32, #tpu.memory_space<vmem>>, %arg7: memref<36x1xf32, #tpu.memory_space<vmem>>, %arg8: memref<1x1xf32, #tpu.memory_space<vmem>>, %arg9: memref<9x1xf32, #tpu.memory_space<vmem>>, %arg10: memref<1x1xf32, #tpu.memory_space<vmem>>, %arg11: memref<9x4xf32, #tpu.memory_space<vmem>>, %arg12: memref<1x4xf32, #tpu.memory_space<vmem>>, %arg13: memref<1x8x256xf32, #tpu.memory_space<vmem>>, %arg14: memref<1x8x256xf32, #tpu.memory_space<vmem>>) attributes {dimension_semantics = [#tpu.dimension_semantics<parallel>], iteration_bounds = array<i64: 2>, scalar_prefetch = 0 : i64, scratch_operands = 0 : i64, tpu.core_type = #tpu.core_type<tc>, window_params = [{pipeline_mode = #tpu.pipeline_mode<synchronous>, transform_indices = @transform_0, window_bounds = array<i64: 36, 1>}, {pipeline_mode = #tpu.pipeline_mode<synchronous>, transform_indices = @transform_1, window_bounds = array<i64: 1, 1>}, {pipeline_mode = #tpu.pipeline_mode<synchronous>, transform_indices = @transform_2, window_bounds = array<i64: 9, 1>}, {pipeline_mode = #tpu.pipeline_mode<synchronous>, transform_indices = @transform_3, window_bounds = array<i64: 1, 1>}, {pipeline_mode = #tpu.pipeline_mode<synchronous>, transform_indices = @transform_4, window_bounds = array<i64: 9, 4>}, {pipeline_mode = #tpu.pipeline_mode<synchronous>, transform_indices = @transform_5, window_bounds = array<i64: 1, 4>}, {pipeline_mode = #tpu.pipeline_mode<synchronous>, transform_indices = @transform_6, window_bounds = array<i64: 36, 1>}, {pipeline_mode = #tpu.pipeline_mode<synchronous>, transform_indices = @transform_7, window_bounds = array<i64: 1, 1>}, {pipeline_mode = #tpu.pipeline_mode<synchronous>, transform_indices = @transform_8, window_bounds = array<i64: 9, 1>}, {pipeline_mode = #tpu.pipeline_mode<synchronous>, transform_indices = @transform_9, window_bounds = array<i64: 1, 1>}, {pipeline_mode = #tpu.pipeline_mode<synchronous>, transform_indices = @transform_10, window_bounds = array<i64: 9, 4>}, {pipeline_mode = #tpu.pipeline_mode<synchronous>, transform_indices = @transform_11, window_bounds = array<i64: 1, 4>}, {transform_indices = @transform_12, window_bounds = array<i64: 1, 8, 256>}, {transform_indices = @transform_13, window_bounds = array<i64: 1, 8, 256>}]} {
    %c0 = arith.constant 0 : index
    %c0_0 = arith.constant 0 : index
    %c0_1 = arith.constant 0 : index
    %0 = vector.load %arg13[%c0, %c0_0, %c0_1] : memref<1x8x256xf32, #tpu.memory_space<vmem>>, vector<1x8x256xf32>
    %1 = vector.shape_cast %0 : vector<1x8x256xf32> to vector<8x256xf32>
    %2 = vector.extract_strided_slice %1 {offsets = [0, 0], sizes = [4, 256], strides = [1, 1]} : vector<8x256xf32> to vector<4x256xf32>
    %3 = tpu.transpose %2, [1, 0] : vector<4x256xf32> -> vector<256x4xf32>
    %4 = vector.extract_strided_slice %1 {offsets = [4, 0], sizes = [4, 256], strides = [1, 1]} : vector<8x256xf32> to vector<4x256xf32>
    %5 = tpu.transpose %4, [1, 0] : vector<4x256xf32> -> vector<256x4xf32>
    %6 = vector.shape_cast %5 : vector<256x4xf32> to vector<16x16x4xf32>
    %7 = vector.extract_strided_slice %6 {offsets = [1, 0, 0], sizes = [1, 16, 4], strides = [1, 1, 1]} : vector<16x16x4xf32> to vector<1x16x4xf32>
    %8 = vector.extract_strided_slice %6 {offsets = [14, 0, 0], sizes = [1, 16, 4], strides = [1, 1, 1]} : vector<16x16x4xf32> to vector<1x16x4xf32>
    %9 = tpu.concatenate %7, %6, %8 in 0 : vector<1x16x4xf32>, vector<16x16x4xf32>, vector<1x16x4xf32> -> vector<18x16x4xf32>
    %10 = vector.extract_strided_slice %9 {offsets = [0, 1, 0], sizes = [18, 1, 4], strides = [1, 1, 1]} : vector<18x16x4xf32> to vector<18x1x4xf32>
    %11 = vector.extract_strided_slice %9 {offsets = [0, 14, 0], sizes = [18, 1, 4], strides = [1, 1, 1]} : vector<18x16x4xf32> to vector<18x1x4xf32>
    %12 = tpu.concatenate %10, %9, %11 in 1 : vector<18x1x4xf32>, vector<18x16x4xf32>, vector<18x1x4xf32> -> vector<18x18x4xf32>
    %13 = vector.extract_strided_slice %12 {offsets = [0, 0, 0], sizes = [16, 16, 4], strides = [1, 1, 1]} : vector<18x18x4xf32> to vector<16x16x4xf32>
    %14 = vector.extract_strided_slice %12 {offsets = [0, 1, 0], sizes = [16, 16, 4], strides = [1, 1, 1]} : vector<18x18x4xf32> to vector<16x16x4xf32>
    %15 = vector.extract_strided_slice %12 {offsets = [0, 2, 0], sizes = [16, 16, 4], strides = [1, 1, 1]} : vector<18x18x4xf32> to vector<16x16x4xf32>
    %16 = vector.extract_strided_slice %12 {offsets = [1, 0, 0], sizes = [16, 16, 4], strides = [1, 1, 1]} : vector<18x18x4xf32> to vector<16x16x4xf32>
    %17 = vector.extract_strided_slice %12 {offsets = [1, 1, 0], sizes = [16, 16, 4], strides = [1, 1, 1]} : vector<18x18x4xf32> to vector<16x16x4xf32>
    %18 = vector.extract_strided_slice %12 {offsets = [1, 2, 0], sizes = [16, 16, 4], strides = [1, 1, 1]} : vector<18x18x4xf32> to vector<16x16x4xf32>
    %19 = vector.extract_strided_slice %12 {offsets = [2, 0, 0], sizes = [16, 16, 4], strides = [1, 1, 1]} : vector<18x18x4xf32> to vector<16x16x4xf32>
    %20 = vector.extract_strided_slice %12 {offsets = [2, 1, 0], sizes = [16, 16, 4], strides = [1, 1, 1]} : vector<18x18x4xf32> to vector<16x16x4xf32>
    %21 = vector.extract_strided_slice %12 {offsets = [2, 2, 0], sizes = [16, 16, 4], strides = [1, 1, 1]} : vector<18x18x4xf32> to vector<16x16x4xf32>
    %22 = tpu.concatenate %13, %14, %15, %16, %17, %18, %19, %20, %21 in 2 : vector<16x16x4xf32>, vector<16x16x4xf32>, vector<16x16x4xf32>, vector<16x16x4xf32>, vector<16x16x4xf32>, vector<16x16x4xf32>, vector<16x16x4xf32>, vector<16x16x4xf32>, vector<16x16x4xf32> -> vector<16x16x36xf32>
    %23 = vector.shape_cast %22 : vector<16x16x36xf32> to vector<256x36xf32>
    %c0_2 = arith.constant 0 : index
    %c0_3 = arith.constant 0 : index
    %24 = vector.load %arg1[%c0_2, %c0_3] : memref<36x1xf32, #tpu.memory_space<vmem>>, vector<36x1xf32>
    %cst = arith.constant dense<0.000000e+00> : vector<256x1xf32>
    %25 = tpu.matmul %23, %24, %cst {dimension_numbers = #tpu.dot_dimension_numbers<[1], [0], [0], [1], [0, 0, 1, 1], [], []>} : vector<256x36xf32>, vector<36x1xf32>, vector<256x1xf32> -> vector<256x1xf32>
    %c0_4 = arith.constant 0 : index
    %c0_5 = arith.constant 0 : index
    %26 = vector.load %arg2[%c0_4, %c0_5] : memref<1x1xf32, #tpu.memory_space<vmem>>, vector<1x1xf32>
    %27 = vector.broadcast %26 : vector<1x1xf32> to vector<256x1xf32>
    %28 = arith.addf %25, %27 : vector<256x1xf32>
    %cst_6 = arith.constant 0.000000e+00 : f32
    %29 = vector.broadcast %cst_6 : f32 to vector<256x1xf32>
    %30 = arith.cmpf ogt, %28, %29 : vector<256x1xf32>
    %cst_7 = arith.constant 2.000000e-02 : f32
    %31 = vector.broadcast %cst_7 : f32 to vector<256x1xf32>
    %32 = arith.mulf %31, %28 : vector<256x1xf32>
    %33 = arith.select %30, %28, %32 : vector<256x1xi1>, vector<256x1xf32>
    %34 = vector.shape_cast %33 : vector<256x1xf32> to vector<16x16x1xf32>
    %35 = vector.extract_strided_slice %34 {offsets = [1, 0, 0], sizes = [1, 16, 1], strides = [1, 1, 1]} : vector<16x16x1xf32> to vector<1x16x1xf32>
    %36 = vector.extract_strided_slice %34 {offsets = [14, 0, 0], sizes = [1, 16, 1], strides = [1, 1, 1]} : vector<16x16x1xf32> to vector<1x16x1xf32>
    %37 = tpu.concatenate %35, %34, %36 in 0 : vector<1x16x1xf32>, vector<16x16x1xf32>, vector<1x16x1xf32> -> vector<18x16x1xf32>
    %38 = vector.extract_strided_slice %37 {offsets = [0, 1, 0], sizes = [18, 1, 1], strides = [1, 1, 1]} : vector<18x16x1xf32> to vector<18x1x1xf32>
    %39 = vector.extract_strided_slice %37 {offsets = [0, 14, 0], sizes = [18, 1, 1], strides = [1, 1, 1]} : vector<18x16x1xf32> to vector<18x1x1xf32>
    %40 = tpu.concatenate %38, %37, %39 in 1 : vector<18x1x1xf32>, vector<18x16x1xf32>, vector<18x1x1xf32> -> vector<18x18x1xf32>
    %41 = vector.extract_strided_slice %40 {offsets = [0, 0, 0], sizes = [16, 16, 1], strides = [1, 1, 1]} : vector<18x18x1xf32> to vector<16x16x1xf32>
    %42 = vector.extract_strided_slice %40 {offsets = [0, 1, 0], sizes = [16, 16, 1], strides = [1, 1, 1]} : vector<18x18x1xf32> to vector<16x16x1xf32>
    %43 = vector.extract_strided_slice %40 {offsets = [0, 2, 0], sizes = [16, 16, 1], strides = [1, 1, 1]} : vector<18x18x1xf32> to vector<16x16x1xf32>
    %44 = vector.extract_strided_slice %40 {offsets = [1, 0, 0], sizes = [16, 16, 1], strides = [1, 1, 1]} : vector<18x18x1xf32> to vector<16x16x1xf32>
    %45 = vector.extract_strided_slice %40 {offsets = [1, 1, 0], sizes = [16, 16, 1], strides = [1, 1, 1]} : vector<18x18x1xf32> to vector<16x16x1xf32>
    %46 = vector.extract_strided_slice %40 {offsets = [1, 2, 0], sizes = [16, 16, 1], strides = [1, 1, 1]} : vector<18x18x1xf32> to vector<16x16x1xf32>
    %47 = vector.extract_strided_slice %40 {offsets = [2, 0, 0], sizes = [16, 16, 1], strides = [1, 1, 1]} : vector<18x18x1xf32> to vector<16x16x1xf32>
    %48 = vector.extract_strided_slice %40 {offsets = [2, 1, 0], sizes = [16, 16, 1], strides = [1, 1, 1]} : vector<18x18x1xf32> to vector<16x16x1xf32>
    %49 = vector.extract_strided_slice %40 {offsets = [2, 2, 0], sizes = [16, 16, 1], strides = [1, 1, 1]} : vector<18x18x1xf32> to vector<16x16x1xf32>
    %50 = tpu.concatenate %41, %42, %43, %44, %45, %46, %47, %48, %49 in 2 : vector<16x16x1xf32>, vector<16x16x1xf32>, vector<16x16x1xf32>, vector<16x16x1xf32>, vector<16x16x1xf32>, vector<16x16x1xf32>, vector<16x16x1xf32>, vector<16x16x1xf32>, vector<16x16x1xf32> -> vector<16x16x9xf32>
    %51 = vector.shape_cast %50 : vector<16x16x9xf32> to vector<256x9xf32>
    %c0_8 = arith.constant 0 : index
    %c0_9 = arith.constant 0 : index
    %52 = vector.load %arg3[%c0_8, %c0_9] : memref<9x1xf32, #tpu.memory_space<vmem>>, vector<9x1xf32>
    %cst_10 = arith.constant dense<0.000000e+00> : vector<256x1xf32>
    %53 = tpu.matmul %51, %52, %cst_10 {dimension_numbers = #tpu.dot_dimension_numbers<[1], [0], [0], [1], [0, 0, 1, 1], [], []>} : vector<256x9xf32>, vector<9x1xf32>, vector<256x1xf32> -> vector<256x1xf32>
    %c0_11 = arith.constant 0 : index
    %c0_12 = arith.constant 0 : index
    %54 = vector.load %arg4[%c0_11, %c0_12] : memref<1x1xf32, #tpu.memory_space<vmem>>, vector<1x1xf32>
    %55 = vector.broadcast %54 : vector<1x1xf32> to vector<256x1xf32>
    %56 = arith.addf %53, %55 : vector<256x1xf32>
    %cst_13 = arith.constant 0.000000e+00 : f32
    %57 = vector.broadcast %cst_13 : f32 to vector<256x1xf32>
    %58 = arith.cmpf ogt, %56, %57 : vector<256x1xf32>
    %cst_14 = arith.constant 2.000000e-02 : f32
    %59 = vector.broadcast %cst_14 : f32 to vector<256x1xf32>
    %60 = arith.mulf %59, %56 : vector<256x1xf32>
    %61 = arith.select %58, %56, %60 : vector<256x1xi1>, vector<256x1xf32>
    %62 = vector.shape_cast %61 : vector<256x1xf32> to vector<16x16x1xf32>
    %63 = vector.extract_strided_slice %62 {offsets = [1, 0, 0], sizes = [1, 16, 1], strides = [1, 1, 1]} : vector<16x16x1xf32> to vector<1x16x1xf32>
    %64 = vector.extract_strided_slice %62 {offsets = [14, 0, 0], sizes = [1, 16, 1], strides = [1, 1, 1]} : vector<16x16x1xf32> to vector<1x16x1xf32>
    %65 = tpu.concatenate %63, %62, %64 in 0 : vector<1x16x1xf32>, vector<16x16x1xf32>, vector<1x16x1xf32> -> vector<18x16x1xf32>
    %66 = vector.extract_strided_slice %65 {offsets = [0, 1, 0], sizes = [18, 1, 1], strides = [1, 1, 1]} : vector<18x16x1xf32> to vector<18x1x1xf32>
    %67 = vector.extract_strided_slice %65 {offsets = [0, 14, 0], sizes = [18, 1, 1], strides = [1, 1, 1]} : vector<18x16x1xf32> to vector<18x1x1xf32>
    %68 = tpu.concatenate %66, %65, %67 in 1 : vector<18x1x1xf32>, vector<18x16x1xf32>, vector<18x1x1xf32> -> vector<18x18x1xf32>
    %69 = vector.extract_strided_slice %68 {offsets = [0, 0, 0], sizes = [16, 16, 1], strides = [1, 1, 1]} : vector<18x18x1xf32> to vector<16x16x1xf32>
    %70 = vector.extract_strided_slice %68 {offsets = [0, 1, 0], sizes = [16, 16, 1], strides = [1, 1, 1]} : vector<18x18x1xf32> to vector<16x16x1xf32>
    %71 = vector.extract_strided_slice %68 {offsets = [0, 2, 0], sizes = [16, 16, 1], strides = [1, 1, 1]} : vector<18x18x1xf32> to vector<16x16x1xf32>
    %72 = vector.extract_strided_slice %68 {offsets = [1, 0, 0], sizes = [16, 16, 1], strides = [1, 1, 1]} : vector<18x18x1xf32> to vector<16x16x1xf32>
    %73 = vector.extract_strided_slice %68 {offsets = [1, 1, 0], sizes = [16, 16, 1], strides = [1, 1, 1]} : vector<18x18x1xf32> to vector<16x16x1xf32>
    %74 = vector.extract_strided_slice %68 {offsets = [1, 2, 0], sizes = [16, 16, 1], strides = [1, 1, 1]} : vector<18x18x1xf32> to vector<16x16x1xf32>
    %75 = vector.extract_strided_slice %68 {offsets = [2, 0, 0], sizes = [16, 16, 1], strides = [1, 1, 1]} : vector<18x18x1xf32> to vector<16x16x1xf32>
    %76 = vector.extract_strided_slice %68 {offsets = [2, 1, 0], sizes = [16, 16, 1], strides = [1, 1, 1]} : vector<18x18x1xf32> to vector<16x16x1xf32>
    %77 = vector.extract_strided_slice %68 {offsets = [2, 2, 0], sizes = [16, 16, 1], strides = [1, 1, 1]} : vector<18x18x1xf32> to vector<16x16x1xf32>
    %78 = tpu.concatenate %69, %70, %71, %72, %73, %74, %75, %76, %77 in 2 : vector<16x16x1xf32>, vector<16x16x1xf32>, vector<16x16x1xf32>, vector<16x16x1xf32>, vector<16x16x1xf32>, vector<16x16x1xf32>, vector<16x16x1xf32>, vector<16x16x1xf32>, vector<16x16x1xf32> -> vector<16x16x9xf32>
    %79 = vector.shape_cast %78 : vector<16x16x9xf32> to vector<256x9xf32>
    %c0_15 = arith.constant 0 : index
    %c0_16 = arith.constant 0 : index
    %80 = vector.load %arg5[%c0_15, %c0_16] : memref<9x4xf32, #tpu.memory_space<vmem>>, vector<9x4xf32>
    %cst_17 = arith.constant dense<0.000000e+00> : vector<256x4xf32>
    %81 = tpu.matmul %79, %80, %cst_17 {dimension_numbers = #tpu.dot_dimension_numbers<[1], [0], [0], [1], [0, 0, 1, 1], [], []>} : vector<256x9xf32>, vector<9x4xf32>, vector<256x4xf32> -> vector<256x4xf32>
    %c0_18 = arith.constant 0 : index
    %c0_19 = arith.constant 0 : index
    %82 = vector.load %arg6[%c0_18, %c0_19] : memref<1x4xf32, #tpu.memory_space<vmem>>, vector<1x4xf32>
    %83 = vector.broadcast %82 : vector<1x4xf32> to vector<256x4xf32>
    %84 = arith.addf %81, %83 : vector<256x4xf32>
    %85 = arith.addf %84, %3 : vector<256x4xf32>
    %86 = vector.shape_cast %85 : vector<256x4xf32> to vector<16x16x4xf32>
    %87 = vector.extract_strided_slice %86 {offsets = [1, 0, 0], sizes = [1, 16, 4], strides = [1, 1, 1]} : vector<16x16x4xf32> to vector<1x16x4xf32>
    %88 = vector.extract_strided_slice %86 {offsets = [14, 0, 0], sizes = [1, 16, 4], strides = [1, 1, 1]} : vector<16x16x4xf32> to vector<1x16x4xf32>
    %89 = tpu.concatenate %87, %86, %88 in 0 : vector<1x16x4xf32>, vector<16x16x4xf32>, vector<1x16x4xf32> -> vector<18x16x4xf32>
    %90 = vector.extract_strided_slice %89 {offsets = [0, 1, 0], sizes = [18, 1, 4], strides = [1, 1, 1]} : vector<18x16x4xf32> to vector<18x1x4xf32>
    %91 = vector.extract_strided_slice %89 {offsets = [0, 14, 0], sizes = [18, 1, 4], strides = [1, 1, 1]} : vector<18x16x4xf32> to vector<18x1x4xf32>
    %92 = tpu.concatenate %90, %89, %91 in 1 : vector<18x1x4xf32>, vector<18x16x4xf32>, vector<18x1x4xf32> -> vector<18x18x4xf32>
    %93 = vector.extract_strided_slice %92 {offsets = [0, 0, 0], sizes = [16, 16, 4], strides = [1, 1, 1]} : vector<18x18x4xf32> to vector<16x16x4xf32>
    %94 = vector.extract_strided_slice %92 {offsets = [0, 1, 0], sizes = [16, 16, 4], strides = [1, 1, 1]} : vector<18x18x4xf32> to vector<16x16x4xf32>
    %95 = vector.extract_strided_slice %92 {offsets = [0, 2, 0], sizes = [16, 16, 4], strides = [1, 1, 1]} : vector<18x18x4xf32> to vector<16x16x4xf32>
    %96 = vector.extract_strided_slice %92 {offsets = [1, 0, 0], sizes = [16, 16, 4], strides = [1, 1, 1]} : vector<18x18x4xf32> to vector<16x16x4xf32>
    %97 = vector.extract_strided_slice %92 {offsets = [1, 1, 0], sizes = [16, 16, 4], strides = [1, 1, 1]} : vector<18x18x4xf32> to vector<16x16x4xf32>
    %98 = vector.extract_strided_slice %92 {offsets = [1, 2, 0], sizes = [16, 16, 4], strides = [1, 1, 1]} : vector<18x18x4xf32> to vector<16x16x4xf32>
    %99 = vector.extract_strided_slice %92 {offsets = [2, 0, 0], sizes = [16, 16, 4], strides = [1, 1, 1]} : vector<18x18x4xf32> to vector<16x16x4xf32>
    %100 = vector.extract_strided_slice %92 {offsets = [2, 1, 0], sizes = [16, 16, 4], strides = [1, 1, 1]} : vector<18x18x4xf32> to vector<16x16x4xf32>
    %101 = vector.extract_strided_slice %92 {offsets = [2, 2, 0], sizes = [16, 16, 4], strides = [1, 1, 1]} : vector<18x18x4xf32> to vector<16x16x4xf32>
    %102 = tpu.concatenate %93, %94, %95, %96, %97, %98, %99, %100, %101 in 2 : vector<16x16x4xf32>, vector<16x16x4xf32>, vector<16x16x4xf32>, vector<16x16x4xf32>, vector<16x16x4xf32>, vector<16x16x4xf32>, vector<16x16x4xf32>, vector<16x16x4xf32>, vector<16x16x4xf32> -> vector<16x16x36xf32>
    %103 = vector.shape_cast %102 : vector<16x16x36xf32> to vector<256x36xf32>
    %c0_20 = arith.constant 0 : index
    %c0_21 = arith.constant 0 : index
    %104 = vector.load %arg7[%c0_20, %c0_21] : memref<36x1xf32, #tpu.memory_space<vmem>>, vector<36x1xf32>
    %cst_22 = arith.constant dense<0.000000e+00> : vector<256x1xf32>
    %105 = tpu.matmul %103, %104, %cst_22 {dimension_numbers = #tpu.dot_dimension_numbers<[1], [0], [0], [1], [0, 0, 1, 1], [], []>} : vector<256x36xf32>, vector<36x1xf32>, vector<256x1xf32> -> vector<256x1xf32>
    %c0_23 = arith.constant 0 : index
    %c0_24 = arith.constant 0 : index
    %106 = vector.load %arg8[%c0_23, %c0_24] : memref<1x1xf32, #tpu.memory_space<vmem>>, vector<1x1xf32>
    %107 = vector.broadcast %106 : vector<1x1xf32> to vector<256x1xf32>
    %108 = arith.addf %105, %107 : vector<256x1xf32>
    %cst_25 = arith.constant 0.000000e+00 : f32
    %109 = vector.broadcast %cst_25 : f32 to vector<256x1xf32>
    %110 = arith.cmpf ogt, %108, %109 : vector<256x1xf32>
    %cst_26 = arith.constant 2.000000e-02 : f32
    %111 = vector.broadcast %cst_26 : f32 to vector<256x1xf32>
    %112 = arith.mulf %111, %108 : vector<256x1xf32>
    %113 = arith.select %110, %108, %112 : vector<256x1xi1>, vector<256x1xf32>
    %114 = vector.shape_cast %113 : vector<256x1xf32> to vector<16x16x1xf32>
    %115 = vector.extract_strided_slice %114 {offsets = [1, 0, 0], sizes = [1, 16, 1], strides = [1, 1, 1]} : vector<16x16x1xf32> to vector<1x16x1xf32>
    %116 = vector.extract_strided_slice %114 {offsets = [14, 0, 0], sizes = [1, 16, 1], strides = [1, 1, 1]} : vector<16x16x1xf32> to vector<1x16x1xf32>
    %117 = tpu.concatenate %115, %114, %116 in 0 : vector<1x16x1xf32>, vector<16x16x1xf32>, vector<1x16x1xf32> -> vector<18x16x1xf32>
    %118 = vector.extract_strided_slice %117 {offsets = [0, 1, 0], sizes = [18, 1, 1], strides = [1, 1, 1]} : vector<18x16x1xf32> to vector<18x1x1xf32>
    %119 = vector.extract_strided_slice %117 {offsets = [0, 14, 0], sizes = [18, 1, 1], strides = [1, 1, 1]} : vector<18x16x1xf32> to vector<18x1x1xf32>
    %120 = tpu.concatenate %118, %117, %119 in 1 : vector<18x1x1xf32>, vector<18x16x1xf32>, vector<18x1x1xf32> -> vector<18x18x1xf32>
    %121 = vector.extract_strided_slice %120 {offsets = [0, 0, 0], sizes = [16, 16, 1], strides = [1, 1, 1]} : vector<18x18x1xf32> to vector<16x16x1xf32>
    %122 = vector.extract_strided_slice %120 {offsets = [0, 1, 0], sizes = [16, 16, 1], strides = [1, 1, 1]} : vector<18x18x1xf32> to vector<16x16x1xf32>
    %123 = vector.extract_strided_slice %120 {offsets = [0, 2, 0], sizes = [16, 16, 1], strides = [1, 1, 1]} : vector<18x18x1xf32> to vector<16x16x1xf32>
    %124 = vector.extract_strided_slice %120 {offsets = [1, 0, 0], sizes = [16, 16, 1], strides = [1, 1, 1]} : vector<18x18x1xf32> to vector<16x16x1xf32>
    %125 = vector.extract_strided_slice %120 {offsets = [1, 1, 0], sizes = [16, 16, 1], strides = [1, 1, 1]} : vector<18x18x1xf32> to vector<16x16x1xf32>
    %126 = vector.extract_strided_slice %120 {offsets = [1, 2, 0], sizes = [16, 16, 1], strides = [1, 1, 1]} : vector<18x18x1xf32> to vector<16x16x1xf32>
    %127 = vector.extract_strided_slice %120 {offsets = [2, 0, 0], sizes = [16, 16, 1], strides = [1, 1, 1]} : vector<18x18x1xf32> to vector<16x16x1xf32>
    %128 = vector.extract_strided_slice %120 {offsets = [2, 1, 0], sizes = [16, 16, 1], strides = [1, 1, 1]} : vector<18x18x1xf32> to vector<16x16x1xf32>
    %129 = vector.extract_strided_slice %120 {offsets = [2, 2, 0], sizes = [16, 16, 1], strides = [1, 1, 1]} : vector<18x18x1xf32> to vector<16x16x1xf32>
    %130 = tpu.concatenate %121, %122, %123, %124, %125, %126, %127, %128, %129 in 2 : vector<16x16x1xf32>, vector<16x16x1xf32>, vector<16x16x1xf32>, vector<16x16x1xf32>, vector<16x16x1xf32>, vector<16x16x1xf32>, vector<16x16x1xf32>, vector<16x16x1xf32>, vector<16x16x1xf32> -> vector<16x16x9xf32>
    %131 = vector.shape_cast %130 : vector<16x16x9xf32> to vector<256x9xf32>
    %c0_27 = arith.constant 0 : index
    %c0_28 = arith.constant 0 : index
    %132 = vector.load %arg9[%c0_27, %c0_28] : memref<9x1xf32, #tpu.memory_space<vmem>>, vector<9x1xf32>
    %cst_29 = arith.constant dense<0.000000e+00> : vector<256x1xf32>
    %133 = tpu.matmul %131, %132, %cst_29 {dimension_numbers = #tpu.dot_dimension_numbers<[1], [0], [0], [1], [0, 0, 1, 1], [], []>} : vector<256x9xf32>, vector<9x1xf32>, vector<256x1xf32> -> vector<256x1xf32>
    %c0_30 = arith.constant 0 : index
    %c0_31 = arith.constant 0 : index
    %134 = vector.load %arg10[%c0_30, %c0_31] : memref<1x1xf32, #tpu.memory_space<vmem>>, vector<1x1xf32>
    %135 = vector.broadcast %134 : vector<1x1xf32> to vector<256x1xf32>
    %136 = arith.addf %133, %135 : vector<256x1xf32>
    %cst_32 = arith.constant 0.000000e+00 : f32
    %137 = vector.broadcast %cst_32 : f32 to vector<256x1xf32>
    %138 = arith.cmpf ogt, %136, %137 : vector<256x1xf32>
    %cst_33 = arith.constant 2.000000e-02 : f32
    %139 = vector.broadcast %cst_33 : f32 to vector<256x1xf32>
    %140 = arith.mulf %139, %136 : vector<256x1xf32>
    %141 = arith.select %138, %136, %140 : vector<256x1xi1>, vector<256x1xf32>
    %142 = vector.shape_cast %141 : vector<256x1xf32> to vector<16x16x1xf32>
    %143 = vector.extract_strided_slice %142 {offsets = [1, 0, 0], sizes = [1, 16, 1], strides = [1, 1, 1]} : vector<16x16x1xf32> to vector<1x16x1xf32>
    %144 = vector.extract_strided_slice %142 {offsets = [14, 0, 0], sizes = [1, 16, 1], strides = [1, 1, 1]} : vector<16x16x1xf32> to vector<1x16x1xf32>
    %145 = tpu.concatenate %143, %142, %144 in 0 : vector<1x16x1xf32>, vector<16x16x1xf32>, vector<1x16x1xf32> -> vector<18x16x1xf32>
    %146 = vector.extract_strided_slice %145 {offsets = [0, 1, 0], sizes = [18, 1, 1], strides = [1, 1, 1]} : vector<18x16x1xf32> to vector<18x1x1xf32>
    %147 = vector.extract_strided_slice %145 {offsets = [0, 14, 0], sizes = [18, 1, 1], strides = [1, 1, 1]} : vector<18x16x1xf32> to vector<18x1x1xf32>
    %148 = tpu.concatenate %146, %145, %147 in 1 : vector<18x1x1xf32>, vector<18x16x1xf32>, vector<18x1x1xf32> -> vector<18x18x1xf32>
    %149 = vector.extract_strided_slice %148 {offsets = [0, 0, 0], sizes = [16, 16, 1], strides = [1, 1, 1]} : vector<18x18x1xf32> to vector<16x16x1xf32>
    %150 = vector.extract_strided_slice %148 {offsets = [0, 1, 0], sizes = [16, 16, 1], strides = [1, 1, 1]} : vector<18x18x1xf32> to vector<16x16x1xf32>
    %151 = vector.extract_strided_slice %148 {offsets = [0, 2, 0], sizes = [16, 16, 1], strides = [1, 1, 1]} : vector<18x18x1xf32> to vector<16x16x1xf32>
    %152 = vector.extract_strided_slice %148 {offsets = [1, 0, 0], sizes = [16, 16, 1], strides = [1, 1, 1]} : vector<18x18x1xf32> to vector<16x16x1xf32>
    %153 = vector.extract_strided_slice %148 {offsets = [1, 1, 0], sizes = [16, 16, 1], strides = [1, 1, 1]} : vector<18x18x1xf32> to vector<16x16x1xf32>
    %154 = vector.extract_strided_slice %148 {offsets = [1, 2, 0], sizes = [16, 16, 1], strides = [1, 1, 1]} : vector<18x18x1xf32> to vector<16x16x1xf32>
    %155 = vector.extract_strided_slice %148 {offsets = [2, 0, 0], sizes = [16, 16, 1], strides = [1, 1, 1]} : vector<18x18x1xf32> to vector<16x16x1xf32>
    %156 = vector.extract_strided_slice %148 {offsets = [2, 1, 0], sizes = [16, 16, 1], strides = [1, 1, 1]} : vector<18x18x1xf32> to vector<16x16x1xf32>
    %157 = vector.extract_strided_slice %148 {offsets = [2, 2, 0], sizes = [16, 16, 1], strides = [1, 1, 1]} : vector<18x18x1xf32> to vector<16x16x1xf32>
    %158 = tpu.concatenate %149, %150, %151, %152, %153, %154, %155, %156, %157 in 2 : vector<16x16x1xf32>, vector<16x16x1xf32>, vector<16x16x1xf32>, vector<16x16x1xf32>, vector<16x16x1xf32>, vector<16x16x1xf32>, vector<16x16x1xf32>, vector<16x16x1xf32>, vector<16x16x1xf32> -> vector<16x16x9xf32>
    %159 = vector.shape_cast %158 : vector<16x16x9xf32> to vector<256x9xf32>
    %c0_34 = arith.constant 0 : index
    %c0_35 = arith.constant 0 : index
    %160 = vector.load %arg11[%c0_34, %c0_35] : memref<9x4xf32, #tpu.memory_space<vmem>>, vector<9x4xf32>
    %cst_36 = arith.constant dense<0.000000e+00> : vector<256x4xf32>
    %161 = tpu.matmul %159, %160, %cst_36 {dimension_numbers = #tpu.dot_dimension_numbers<[1], [0], [0], [1], [0, 0, 1, 1], [], []>} : vector<256x9xf32>, vector<9x4xf32>, vector<256x4xf32> -> vector<256x4xf32>
    %c0_37 = arith.constant 0 : index
    %c0_38 = arith.constant 0 : index
    %162 = vector.load %arg12[%c0_37, %c0_38] : memref<1x4xf32, #tpu.memory_space<vmem>>, vector<1x4xf32>
    %163 = vector.broadcast %162 : vector<1x4xf32> to vector<256x4xf32>
    %164 = arith.addf %161, %163 : vector<256x4xf32>
    %165 = arith.addf %164, %5 : vector<256x4xf32>
    %166 = tpu.transpose %85, [1, 0] : vector<256x4xf32> -> vector<4x256xf32>
    %c0_39 = arith.constant 0 : index
    %c0_40 = arith.constant 0 : index
    %c0_41 = arith.constant 0 : index
    %167 = vector.load %arg14[%c0_39, %c0_40, %c0_41] : memref<1x8x256xf32, #tpu.memory_space<vmem>>, vector<1x4x256xf32>
    %168 = vector.shape_cast %167 : vector<1x4x256xf32> to vector<4x256xf32>
    %169 = vector.shape_cast %166 : vector<4x256xf32> to vector<1x4x256xf32>
    tpu.vector_store %arg14[%c0_39, %c0_40, %c0_41], %169 {strides = array<i32>} : memref<1x8x256xf32, #tpu.memory_space<vmem>>, vector<1x4x256xf32>,
    %170 = tpu.transpose %165, [1, 0] : vector<256x4xf32> -> vector<4x256xf32>
    %c0_42 = arith.constant 0 : index
    %c4 = arith.constant 4 : index
    %c0_43 = arith.constant 0 : index
    %171 = vector.load %arg14[%c0_42, %c4, %c0_43] : memref<1x8x256xf32, #tpu.memory_space<vmem>>, vector<1x4x256xf32>
    %172 = vector.shape_cast %171 : vector<1x4x256xf32> to vector<4x256xf32>
    %173 = vector.shape_cast %170 : vector<4x256xf32> to vector<1x4x256xf32>
    tpu.vector_store %arg14[%c0_42, %c4, %c0_43], %173 {strides = array<i32>} : memref<1x8x256xf32, #tpu.memory_space<vmem>>, vector<1x4x256xf32>,
    return
  }
  func.func @transform_0(%arg0: i32) -> (i32, i32) {
    %c0_i32 = arith.constant 0 : i32
    %c0_i32_0 = arith.constant 0 : i32
    %c0_i32_1 = arith.constant 0 : i32
    return %c0_i32, %c0_i32_0 : i32, i32
  }
  func.func @transform_1(%arg0: i32) -> (i32, i32) {
    %c0_i32 = arith.constant 0 : i32
    %c0_i32_0 = arith.constant 0 : i32
    %c0_i32_1 = arith.constant 0 : i32
    return %c0_i32, %c0_i32_0 : i32, i32
  }
  func.func @transform_2(%arg0: i32) -> (i32, i32) {
    %c0_i32 = arith.constant 0 : i32
    %c0_i32_0 = arith.constant 0 : i32
    %c0_i32_1 = arith.constant 0 : i32
    return %c0_i32, %c0_i32_0 : i32, i32
  }
  func.func @transform_3(%arg0: i32) -> (i32, i32) {
    %c0_i32 = arith.constant 0 : i32
    %c0_i32_0 = arith.constant 0 : i32
    %c0_i32_1 = arith.constant 0 : i32
    return %c0_i32, %c0_i32_0 : i32, i32
  }
  func.func @transform_4(%arg0: i32) -> (i32, i32) {
    %c0_i32 = arith.constant 0 : i32
    %c0_i32_0 = arith.constant 0 : i32
    %c0_i32_1 = arith.constant 0 : i32
    return %c0_i32, %c0_i32_0 : i32, i32
  }
  func.func @transform_5(%arg0: i32) -> (i32, i32) {
    %c0_i32 = arith.constant 0 : i32
    %c0_i32_0 = arith.constant 0 : i32
    %c0_i32_1 = arith.constant 0 : i32
    return %c0_i32, %c0_i32_0 : i32, i32
  }
  func.func @transform_6(%arg0: i32) -> (i32, i32) {
    %c0_i32 = arith.constant 0 : i32
    %c0_i32_0 = arith.constant 0 : i32
    %c0_i32_1 = arith.constant 0 : i32
    return %c0_i32, %c0_i32_0 : i32, i32
  }
  func.func @transform_7(%arg0: i32) -> (i32, i32) {
    %c0_i32 = arith.constant 0 : i32
    %c0_i32_0 = arith.constant 0 : i32
    %c0_i32_1 = arith.constant 0 : i32
    return %c0_i32, %c0_i32_0 : i32, i32
  }
  func.func @transform_8(%arg0: i32) -> (i32, i32) {
    %c0_i32 = arith.constant 0 : i32
    %c0_i32_0 = arith.constant 0 : i32
    %c0_i32_1 = arith.constant 0 : i32
    return %c0_i32, %c0_i32_0 : i32, i32
  }
  func.func @transform_9(%arg0: i32) -> (i32, i32) {
    %c0_i32 = arith.constant 0 : i32
    %c0_i32_0 = arith.constant 0 : i32
    %c0_i32_1 = arith.constant 0 : i32
    return %c0_i32, %c0_i32_0 : i32, i32
  }
  func.func @transform_10(%arg0: i32) -> (i32, i32) {
    %c0_i32 = arith.constant 0 : i32
    %c0_i32_0 = arith.constant 0 : i32
    %c0_i32_1 = arith.constant 0 : i32
    return %c0_i32, %c0_i32_0 : i32, i32
  }
  func.func @transform_11(%arg0: i32) -> (i32, i32) {
    %c0_i32 = arith.constant 0 : i32
    %c0_i32_0 = arith.constant 0 : i32
    %c0_i32_1 = arith.constant 0 : i32
    return %c0_i32, %c0_i32_0 : i32, i32
  }
  func.func @transform_12(%arg0: i32) -> (i32, i32, i32) {
    %c0_i32 = arith.constant 0 : i32
    %c0_i32_0 = arith.constant 0 : i32
    %c0_i32_1 = arith.constant 0 : i32
    return %arg0, %c0_i32, %c0_i32_0 : i32, i32, i32
  }
  func.func @transform_13(%arg0: i32) -> (i32, i32, i32) {
    %c0_i32 = arith.constant 0 : i32
    %c0_i32_0 = arith.constant 0 : i32
    %c0_i32_1 = arith.constant 0 : i32
    return %arg0, %c0_i32, %c0_i32_0 : i32, i32, i32
  }
}

</mosaic_0001>

<llo_original>
// kernel: tpu_custom_call.1
$region0: #{tpu_custom_call.1}
  #allocation0 [shape = 'u32[]', space=smem, size = 0x4, offset = 0x4, fixed_abs, tag = 'smem constant byte address 0x4 - core index']
  #allocation1 [shape = 'u32[144,128]{1,0:T(1,128)}', space=vmem, size = 0x12000, scoped, tag = 'internal scratch']
  #allocation2 [shape = 'f32[1,1]{1,0:T(1,128)S(1)}', space=vmem, size = 0x200, scoped, tag = 'scoped memory for tpu_custom_call.1']
  #allocation3 [shape = 'f32[1,1]{1,0:T(1,128)S(1)}', space=vmem, size = 0x200, scoped, tag = 'scoped memory for tpu_custom_call.1']
  #allocation4 [shape = 'f32[1,1]{1,0:T(1,128)S(1)}', space=vmem, size = 0x200, scoped, tag = 'scoped memory for tpu_custom_call.1']
  #allocation5 [shape = 'f32[1,1]{1,0:T(1,128)S(1)}', space=vmem, size = 0x200, scoped, tag = 'scoped memory for tpu_custom_call.1']
  %s0 = inlined_call_operand.vmem [shape: f32[36,1], index: 0, kind: input, shape index: {}]
  %s1 = inlined_call_operand.<no memory space> [shape: f32[1,1], index: 1, kind: input, shape index: {}]
  %s2 = inlined_call_operand.vmem [shape: f32[9,1], index: 2, kind: input, shape index: {}]
  %s3 = inlined_call_operand.<no memory space> [shape: f32[1,1], index: 3, kind: input, shape index: {}]
  %s4 = inlined_call_operand.vmem [shape: f32[9,4], index: 4, kind: input, shape index: {}]
  %s5 = inlined_call_operand.vmem [shape: f32[1,4], index: 5, kind: input, shape index: {}]
  %s6 = inlined_call_operand.vmem [shape: f32[36,1], index: 6, kind: input, shape index: {}]
  %s7 = inlined_call_operand.<no memory space> [shape: f32[1,1], index: 7, kind: input, shape index: {}]
  %s8 = inlined_call_operand.vmem [shape: f32[9,1], index: 8, kind: input, shape index: {}]
  %s9 = inlined_call_operand.<no memory space> [shape: f32[1,1], index: 9, kind: input, shape index: {}]
  %s10 = inlined_call_operand.vmem [shape: f32[9,4], index: 10, kind: input, shape index: {}]
  %s11 = inlined_call_operand.vmem [shape: f32[1,4], index: 11, kind: input, shape index: {}]
  %s12 = inlined_call_operand.vmem [shape: f32[2,8,256], index: 12, kind: input, shape index: {}]
  %s13 = inlined_call_operand.hbm [shape: f32[2,8,256], index: 13, kind: output, shape index: {}]
  %s14 = sld [smem:[#allocation0]]
  $region85: #{tpu_custom_call.1} parent=0
    _
  %s16 = ssub.s32 1, %s14
  %s17 = scalar_select 0, %s16, %s14
  %v18 = vstv %s1
  %19 = vst [vmem:[#allocation2] sm:$0x1] %v18
  %v20 = vstv %s3
  %21 = vst [vmem:[#allocation3] sm:$0x1] %v20
  %v22 = vstv %s7
  %23 = vst [vmem:[#allocation4] sm:$0x1] %v22
  %v24 = vstv %s9
  %25 = vst [vmem:[#allocation5] sm:$0x1] %v24
  $region1: #{tpu_custom_call.1} parent=0
    #allocation6 [shape = 'u8[16384]{0}', space=vmem, size = 0x4000, scoped, tag = 'output window, operand 0']
    #allocation7 [shape = 's32[2]{0}', space=sflag, size = 0x8, scoped, tag = 'scoped memory for tpu_custom_call.1']
    %26 = vsyncpa [#allocation7], 0
    %s27 = scalar_lea.sflag [#allocation7], 1
    %28 = vsyncpa %s27, 0
    loop: start=0, step=1, limit=4
    $region2: #{tpu_custom_call.1} parent=1 // loop_pre_header
      _
    $region3: #{tpu_custom_call.1} parent=1 // loop_header
      %s30 = sphi 0, %s34
      %p31 = scmp.ge.s32.totalorder %s30, 4
      %s38 = sphi 0, %s38
      %s40 = sphi 0, %s38
      %s41 = sphi 0, %s40
      %s55 = sphi 0, %s41
      %s59 = sphi 0, %s59
      %s61 = sphi 0, %s59
      %s62 = sphi 0, %s61
      %s76 = sphi 0, %s62
      %s80 = sphi 0, %s80
      %s82 = sphi 0, %s80
      %s83 = sphi 0, %s82
      %s97 = sphi 0, %s83
      %s101 = sphi 0, %s101
      %s103 = sphi 0, %s101
      %s104 = sphi 0, %s103
      %s118 = sphi 0, %s104
      %s122 = sphi 0, %s122
      %s124 = sphi 0, %s122
      %s125 = sphi 0, %s124
      %s139 = sphi 0, %s125
      %s143 = sphi 0, %s143
      %s145 = sphi 0, %s143
      %s146 = sphi 0, %s145
      %s160 = sphi 0, %s146
      %s164 = sphi 0, %s164
      %s166 = sphi 0, %s164
      %s167 = sphi 0, %s166
      %s181 = sphi 0, %s167
      %s185 = sphi 0, %s185
      %s187 = sphi 0, %s185
      %s188 = sphi 0, %s187
      %s202 = sphi 0, %s188
      %s206 = sphi 0, %s206
      %s208 = sphi 0, %s206
      %s209 = sphi 0, %s208
      %s223 = sphi 0, %s209
      %s227 = sphi 0, %s227
      %s229 = sphi 0, %s227
      %s230 = sphi 0, %s229
      %s244 = sphi 0, %s230
      %s248 = sphi 0, %s248
      %s250 = sphi 0, %s248
      %s251 = sphi 0, %s250
      %s265 = sphi 0, %s251
      %s269 = sphi 0, %s269
      %s271 = sphi 0, %s269
      %s272 = sphi 0, %s271
      %s286 = sphi 0, %s272
      %s292 = sphi 0, %s294
      %s295 = sphi 0, %s292
      %s296 = sphi 0, %s295
      %s312 = sphi 0, %s296
      %s318 = sphi 0, %s320
      %s321 = sphi 0, %s318
      %s322 = sphi 0, %s321
      %s338 = sphi 0, %s322
    $region4: #{tpu_custom_call.1} parent=1 // loop_header_branch
      %33 = sbr.rel (%p31) target = $region8
    $region5: #{tpu_custom_call.1} parent=1 // loop_body
      %s35 = ssub.s32 %s30, 1
      %s36 = ssub.s32 %s30, 2
      %s37 = sadd.s32 %s30, 1
      %s39 = sadd.s32 %s38, 1
      %p42 = scmp.eq.s32.totalorder %s30, 1
      %p43 = scmp.ne.s32.totalorder %s38, %s40
      %p44 = scmp.eq.s32.totalorder %s30, 0
      %p45 = por %p43, %p44
      %p46 = scmp.ne.s32.totalorder %s38, %s40
      %p47 = scmp.eq.s32.totalorder %s35, 1
      %p48 = por %p46, %p47
      %p49 = scmp.ne.s32.totalorder %s40, %s41
      %p50 = scmp.eq.s32.totalorder %s35, 0
      %p51 = por %p49, %p50
      %p52 = scmp.ne.s32.totalorder %s40, %s41
      %p53 = scmp.eq.s32.totalorder %s36, 1
      %p54 = por %p52, %p53
      %p56 = scmp.ne.s32.totalorder %s41, %s55
      %p57 = scmp.eq.s32.totalorder %s36, 0
      %p58 = por %p56, %p57
      %s60 = sadd.s32 %s59, 1
      %p63 = scmp.eq.s32.totalorder %s30, 1
      %p64 = scmp.ne.s32.totalorder %s59, %s61
      %p65 = scmp.eq.s32.totalorder %s30, 0
      %p66 = por %p64, %p65
      %p67 = scmp.ne.s32.totalorder %s59, %s61
      %p68 = scmp.eq.s32.totalorder %s35, 1
      %p69 = por %p67, %p68
      %p70 = scmp.ne.s32.totalorder %s61, %s62
      %p71 = scmp.eq.s32.totalorder %s35, 0
      %p72 = por %p70, %p71
      %p73 = scmp.ne.s32.totalorder %s61, %s62
      %p74 = scmp.eq.s32.totalorder %s36, 1
      %p75 = por %p73, %p74
      %p77 = scmp.ne.s32.totalorder %s62, %s76
      %p78 = scmp.eq.s32.totalorder %s36, 0
      %p79 = por %p77, %p78
      %s81 = sadd.s32 %s80, 1
      %p84 = scmp.eq.s32.totalorder %s30, 1
      %p85 = scmp.ne.s32.totalorder %s80, %s82
      %p86 = scmp.eq.s32.totalorder %s30, 0
      %p87 = por %p85, %p86
      %p88 = scmp.ne.s32.totalorder %s80, %s82
      %p89 = scmp.eq.s32.totalorder %s35, 1
      %p90 = por %p88, %p89
      %p91 = scmp.ne.s32.totalorder %s82, %s83
      %p92 = scmp.eq.s32.totalorder %s35, 0
      %p93 = por %p91, %p92
      %p94 = scmp.ne.s32.totalorder %s82, %s83
      %p95 = scmp.eq.s32.totalorder %s36, 1
      %p96 = por %p94, %p95
      %p98 = scmp.ne.s32.totalorder %s83, %s97
      %p99 = scmp.eq.s32.totalorder %s36, 0
      %p100 = por %p98, %p99
      %s102 = sadd.s32 %s101, 1
      %p105 = scmp.eq.s32.totalorder %s30, 1
      %p106 = scmp.ne.s32.totalorder %s101, %s103
      %p107 = scmp.eq.s32.totalorder %s30, 0
      %p108 = por %p106, %p107
      %p109 = scmp.ne.s32.totalorder %s101, %s103
      %p110 = scmp.eq.s32.totalorder %s35, 1
      %p111 = por %p109, %p110
      %p112 = scmp.ne.s32.totalorder %s103, %s104
      %p113 = scmp.eq.s32.totalorder %s35, 0
      %p114 = por %p112, %p113
      %p115 = scmp.ne.s32.totalorder %s103, %s104
      %p116 = scmp.eq.s32.totalorder %s36, 1
      %p117 = por %p115, %p116
      %p119 = scmp.ne.s32.totalorder %s104, %s118
      %p120 = scmp.eq.s32.totalorder %s36, 0
      %p121 = por %p119, %p120
      %s123 = sadd.s32 %s122, 1
      %p126 = scmp.eq.s32.totalorder %s30, 1
      %p127 = scmp.ne.s32.totalorder %s122, %s124
      %p128 = scmp.eq.s32.totalorder %s30, 0
      %p129 = por %p127, %p128
      %p130 = scmp.ne.s32.totalorder %s122, %s124
      %p131 = scmp.eq.s32.totalorder %s35, 1
      %p132 = por %p130, %p131
      %p133 = scmp.ne.s32.totalorder %s124, %s125
      %p134 = scmp.eq.s32.totalorder %s35, 0
      %p135 = por %p133, %p134
      %p136 = scmp.ne.s32.totalorder %s124, %s125
      %p137 = scmp.eq.s32.totalorder %s36, 1
      %p138 = por %p136, %p137
      %p140 = scmp.ne.s32.totalorder %s125, %s139
      %p141 = scmp.eq.s32.totalorder %s36, 0
      %p142 = por %p140, %p141
      %s144 = sadd.s32 %s143, 1
      %p147 = scmp.eq.s32.totalorder %s30, 1
      %p148 = scmp.ne.s32.totalorder %s143, %s145
      %p149 = scmp.eq.s32.totalorder %s30, 0
      %p150 = por %p148, %p149
      %p151 = scmp.ne.s32.totalorder %s143, %s145
      %p152 = scmp.eq.s32.totalorder %s35, 1
      %p153 = por %p151, %p152
      %p154 = scmp.ne.s32.totalorder %s145, %s146
      %p155 = scmp.eq.s32.totalorder %s35, 0
      %p156 = por %p154, %p155
      %p157 = scmp.ne.s32.totalorder %s145, %s146
      %p158 = scmp.eq.s32.totalorder %s36, 1
      %p159 = por %p157, %p158
      %p161 = scmp.ne.s32.totalorder %s146, %s160
      %p162 = scmp.eq.s32.totalorder %s36, 0
      %p163 = por %p161, %p162
      %s165 = sadd.s32 %s164, 1
      %p168 = scmp.eq.s32.totalorder %s30, 1
      %p169 = scmp.ne.s32.totalorder %s164, %s166
      %p170 = scmp.eq.s32.totalorder %s30, 0
      %p171 = por %p169, %p170
      %p172 = scmp.ne.s32.totalorder %s164, %s166
      %p173 = scmp.eq.s32.totalorder %s35, 1
      %p174 = por %p172, %p173
      %p175 = scmp.ne.s32.totalorder %s166, %s167
      %p176 = scmp.eq.s32.totalorder %s35, 0
      %p177 = por %p175, %p176
      %p178 = scmp.ne.s32.totalorder %s166, %s167
      %p179 = scmp.eq.s32.totalorder %s36, 1
      %p180 = por %p178, %p179
      %p182 = scmp.ne.s32.totalorder %s167, %s181
      %p183 = scmp.eq.s32.totalorder %s36, 0
      %p184 = por %p182, %p183
      %s186 = sadd.s32 %s185, 1
      %p189 = scmp.eq.s32.totalorder %s30, 1
      %p190 = scmp.ne.s32.totalorder %s185, %s187
      %p191 = scmp.eq.s32.totalorder %s30, 0
      %p192 = por %p190, %p191
      %p193 = scmp.ne.s32.totalorder %s185, %s187
      %p194 = scmp.eq.s32.totalorder %s35, 1
      %p195 = por %p193, %p194
      %p196 = scmp.ne.s32.totalorder %s187, %s188
      %p197 = scmp.eq.s32.totalorder %s35, 0
      %p198 = por %p196, %p197
      %p199 = scmp.ne.s32.totalorder %s187, %s188
      %p200 = scmp.eq.s32.totalorder %s36, 1
      %p201 = por %p199, %p200
      %p203 = scmp.ne.s32.totalorder %s188, %s202
      %p204 = scmp.eq.s32.totalorder %s36, 0
      %p205 = por %p203, %p204
      %s207 = sadd.s32 %s206, 1
      %p210 = scmp.eq.s32.totalorder %s30, 1
      %p211 = scmp.ne.s32.totalorder %s206, %s208
      %p212 = scmp.eq.s32.totalorder %s30, 0
      %p213 = por %p211, %p212
      %p214 = scmp.ne.s32.totalorder %s206, %s208
      %p215 = scmp.eq.s32.totalorder %s35, 1
      %p216 = por %p214, %p215
      %p217 = scmp.ne.s32.totalorder %s208, %s209
      %p218 = scmp.eq.s32.totalorder %s35, 0
      %p219 = por %p217, %p218
      %p220 = scmp.ne.s32.totalorder %s208, %s209
      %p221 = scmp.eq.s32.totalorder %s36, 1
      %p222 = por %p220, %p221
      %p224 = scmp.ne.s32.totalorder %s209, %s223
      %p225 = scmp.eq.s32.totalorder %s36, 0
      %p226 = por %p224, %p225
      %s228 = sadd.s32 %s227, 1
      %p231 = scmp.eq.s32.totalorder %s30, 1
      %p232 = scmp.ne.s32.totalorder %s227, %s229
      %p233 = scmp.eq.s32.totalorder %s30, 0
      %p234 = por %p232, %p233
      %p235 = scmp.ne.s32.totalorder %s227, %s229
      %p236 = scmp.eq.s32.totalorder %s35, 1
      %p237 = por %p235, %p236
      %p238 = scmp.ne.s32.totalorder %s229, %s230
      %p239 = scmp.eq.s32.totalorder %s35, 0
      %p240 = por %p238, %p239
      %p241 = scmp.ne.s32.totalorder %s229, %s230
      %p242 = scmp.eq.s32.totalorder %s36, 1
      %p243 = por %p241, %p242
      %p245 = scmp.ne.s32.totalorder %s230, %s244
      %p246 = scmp.eq.s32.totalorder %s36, 0
      %p247 = por %p245, %p246
      %s249 = sadd.s32 %s248, 1
      %p252 = scmp.eq.s32.totalorder %s30, 1
      %p253 = scmp.ne.s32.totalorder %s248, %s250
      %p254 = scmp.eq.s32.totalorder %s30, 0
      %p255 = por %p253, %p254
      %p256 = scmp.ne.s32.totalorder %s248, %s250
      %p257 = scmp.eq.s32.totalorder %s35, 1
      %p258 = por %p256, %p257
      %p259 = scmp.ne.s32.totalorder %s250, %s251
      %p260 = scmp.eq.s32.totalorder %s35, 0
      %p261 = por %p259, %p260
      %p262 = scmp.ne.s32.totalorder %s250, %s251
      %p263 = scmp.eq.s32.totalorder %s36, 1
      %p264 = por %p262, %p263
      %p266 = scmp.ne.s32.totalorder %s251, %s265
      %p267 = scmp.eq.s32.totalorder %s36, 0
      %p268 = por %p266, %p267
      %s270 = sadd.s32 %s269, 1
      %p273 = scmp.eq.s32.totalorder %s30, 1
      %p274 = scmp.ne.s32.totalorder %s269, %s271
      %p275 = scmp.eq.s32.totalorder %s30, 0
      %p276 = por %p274, %p275
      %p277 = scmp.ne.s32.totalorder %s269, %s271
      %p278 = scmp.eq.s32.totalorder %s35, 1
      %p279 = por %p277, %p278
      %p280 = scmp.ne.s32.totalorder %s271, %s272
      %p281 = scmp.eq.s32.totalorder %s35, 0
      %p282 = por %p280, %p281
      %p283 = scmp.ne.s32.totalorder %s271, %s272
      %p284 = scmp.eq.s32.totalorder %s36, 1
      %p285 = por %p283, %p284
      %p287 = scmp.ne.s32.totalorder %s272, %s286
      %p288 = scmp.eq.s32.totalorder %s36, 0
      %p289 = por %p287, %p288
      %s290 = ssub.s32 %s30, %s37
      %p291 = scmp.eq.s32.totalorder %s290, 0
      %s293 = sadd.s32 %s292, 1
      %s294 = scalar_select %p291, %s292, %s293
      %p297 = pneg %p291
      %p298 = scmp.eq.s32.totalorder %s30, 1
      %p299 = por %p297, %p298
      %p300 = scmp.ne.s32.totalorder %s292, %s295
      %p301 = scmp.eq.s32.totalorder %s30, 0
      %p302 = por %p300, %p301
      %p303 = scmp.ne.s32.totalorder %s292, %s295
      %p304 = scmp.eq.s32.totalorder %s35, 1
      %p305 = por %p303, %p304
      %p306 = scmp.ne.s32.totalorder %s295, %s296
      %p307 = scmp.eq.s32.totalorder %s35, 0
      %p308 = por %p306, %p307
      %p309 = scmp.ne.s32.totalorder %s295, %s296
      %p310 = scmp.eq.s32.totalorder %s36, 1
      %p311 = por %p309, %p310
      %p313 = scmp.ne.s32.totalorder %s296, %s312
      %p314 = scmp.eq.s32.totalorder %s36, 0
      %p315 = por %p313, %p314
      %s316 = ssub.s32 %s30, %s37
      %p317 = scmp.eq.s32.totalorder %s316, 0
      %s319 = sadd.s32 %s318, 1
      %s320 = scalar_select %p317, %s318, %s319
      %p323 = pneg %p317
      %p324 = scmp.eq.s32.totalorder %s30, 1
      %p325 = por %p323, %p324
      %p326 = scmp.ne.s32.totalorder %s318, %s321
      %p327 = scmp.eq.s32.totalorder %s30, 0
      %p328 = por %p326, %p327
      %p329 = scmp.ne.s32.totalorder %s318, %s321
      %p330 = scmp.eq.s32.totalorder %s35, 1
      %p331 = por %p329, %p330
      %p332 = scmp.ne.s32.totalorder %s321, %s322
      %p333 = scmp.eq.s32.totalorder %s35, 0
      %p334 = por %p332, %p333
      %p335 = scmp.ne.s32.totalorder %s321, %s322
      %p336 = scmp.eq.s32.totalorder %s36, 1
      %p337 = por %p335, %p336
      %p339 = scmp.ne.s32.totalorder %s322, %s338
      %p340 = scmp.eq.s32.totalorder %s36, 0
      %p341 = por %p339, %p340
      %p342 = scmp.le.s32.totalorder 1, %s30
      %p343 = scmp.lt.s32.totalorder %s30, 3
      %p344 = pnand %p342, %p343
      %p345 = pneg %p344
      // Predicated region
      $region9: #{tpu_custom_call.1} parent=5 // pred_check
        _
      $region10: #{tpu_custom_call.1} parent=5 // pred_check_branch
        %347 = sbr.rel (%p344) target = $region12
      $region11: #{tpu_custom_call.1} parent=5 // pred_region
        %s348 = ssub.s32 %s30, 1
        // Predicated region
        $region13: #{tpu_custom_call.1} parent=11 // pred_check
          %p349 = pneg %p51
        $region14: #{tpu_custom_call.1} parent=11 // pred_check_branch
          %351 = sbr.rel (%p349) target = $region16
        $region15: #{tpu_custom_call.1} parent=11 // pred_region
          _
        $region16: #{tpu_custom_call.1} parent=11 // pred_fallthru
          _
        // Predicated region
        $region17: #{tpu_custom_call.1} parent=11 // pred_check
          %p352 = pneg %p72
        $region18: #{tpu_custom_call.1} parent=11 // pred_check_branch
          %354 = sbr.rel (%p352) target = $region20
        $region19: #{tpu_custom_call.1} parent=11 // pred_region
          _
        $region20: #{tpu_custom_call.1} parent=11 // pred_fallthru
          _
        // Predicated region
        $region21: #{tpu_custom_call.1} parent=11 // pred_check
          %p355 = pneg %p93
        $region22: #{tpu_custom_call.1} parent=11 // pred_check_branch
          %357 = sbr.rel (%p355) target = $region24
        $region23: #{tpu_custom_call.1} parent=11 // pred_region
          _
        $region24: #{tpu_custom_call.1} parent=11 // pred_fallthru
          _
        // Predicated region
        $region25: #{tpu_custom_call.1} parent=11 // pred_check
          %p358 = pneg %p114
        $region26: #{tpu_custom_call.1} parent=11 // pred_check_branch
          %360 = sbr.rel (%p358) target = $region28
        $region27: #{tpu_custom_call.1} parent=11 // pred_region
          _
        $region28: #{tpu_custom_call.1} parent=11 // pred_fallthru
          _
        // Predicated region
        $region29: #{tpu_custom_call.1} parent=11 // pred_check
          %p361 = pneg %p135
        $region30: #{tpu_custom_call.1} parent=11 // pred_check_branch
          %363 = sbr.rel (%p361) target = $region32
        $region31: #{tpu_custom_call.1} parent=11 // pred_region
          _
        $region32: #{tpu_custom_call.1} parent=11 // pred_fallthru
          _
        // Predicated region
        $region33: #{tpu_custom_call.1} parent=11 // pred_check
          %p364 = pneg %p156
        $region34: #{tpu_custom_call.1} parent=11 // pred_check_branch
          %366 = sbr.rel (%p364) target = $region36
        $region35: #{tpu_custom_call.1} parent=11 // pred_region
          _
        $region36: #{tpu_custom_call.1} parent=11 // pred_fallthru
          _
        // Predicated region
        $region37: #{tpu_custom_call.1} parent=11 // pred_check
          %p367 = pneg %p177
        $region38: #{tpu_custom_call.1} parent=11 // pred_check_branch
          %369 = sbr.rel (%p367) target = $region40
        $region39: #{tpu_custom_call.1} parent=11 // pred_region
          _
        $region40: #{tpu_custom_call.1} parent=11 // pred_fallthru
          _
        // Predicated region
        $region41: #{tpu_custom_call.1} parent=11 // pred_check
          %p370 = pneg %p198
        $region42: #{tpu_custom_call.1} parent=11 // pred_check_branch
          %372 = sbr.rel (%p370) target = $region44
        $region43: #{tpu_custom_call.1} parent=11 // pred_region
          _
        $region44: #{tpu_custom_call.1} parent=11 // pred_fallthru
          _
        // Predicated region
        $region45: #{tpu_custom_call.1} parent=11 // pred_check
          %p373 = pneg %p219
        $region46: #{tpu_custom_call.1} parent=11 // pred_check_branch
          %375 = sbr.rel (%p373) target = $region48
        $region47: #{tpu_custom_call.1} parent=11 // pred_region
          _
        $region48: #{tpu_custom_call.1} parent=11 // pred_fallthru
          _
        // Predicated region
        $region49: #{tpu_custom_call.1} parent=11 // pred_check
          %p376 = pneg %p240
        $region50: #{tpu_custom_call.1} parent=11 // pred_check_branch
          %378 = sbr.rel (%p376) target = $region52
        $region51: #{tpu_custom_call.1} parent=11 // pred_region
          _
        $region52: #{tpu_custom_call.1} parent=11 // pred_fallthru
          _
        // Predicated region
        $region53: #{tpu_custom_call.1} parent=11 // pred_check
          %p379 = pneg %p261
        $region54: #{tpu_custom_call.1} parent=11 // pred_check_branch
          %381 = sbr.rel (%p379) target = $region56
        $region55: #{tpu_custom_call.1} parent=11 // pred_region
          _
        $region56: #{tpu_custom_call.1} parent=11 // pred_fallthru
          _
        // Predicated region
        $region57: #{tpu_custom_call.1} parent=11 // pred_check
          %p382 = pneg %p282
        $region58: #{tpu_custom_call.1} parent=11 // pred_check_branch
          %384 = sbr.rel (%p382) target = $region60
        $region59: #{tpu_custom_call.1} parent=11 // pred_region
          _
        $region60: #{tpu_custom_call.1} parent=11 // pred_fallthru
          _
      $region12: #{tpu_custom_call.1} parent=5 // pred_fallthru
        _
      %p385 = scmp.lt.s32.totalorder %s30, 2
      // Predicated region
      $region61: #{tpu_custom_call.1} parent=5 // pred_check
        %p386 = pneg %p385
      $region62: #{tpu_custom_call.1} parent=5 // pred_check_branch
        %388 = sbr.rel (%p386) target = $region64
      $region63: #{tpu_custom_call.1} parent=5 // pred_region
        // Predicated region
        $region65: #{tpu_custom_call.1} parent=63 // pred_check
          %p389 = pneg %p302
        $region66: #{tpu_custom_call.1} parent=63 // pred_check_branch
          %391 = sbr.rel (%p389) target = $region68
        $region67: #{tpu_custom_call.1} parent=63 // pred_region
          %p392 = scmp.lt.s32.totalorder %s30, 1
          %s393 = scalar_select %p392, %s30, 1
          %s394 = smul.addr %s393, 2
          %s395 = smul.addr %s394, 8
          %s396 = scalar_lea.vmem %s12, %s395
        $region68: #{tpu_custom_call.1} parent=63 // pred_fallthru
          _
      $region64: #{tpu_custom_call.1} parent=5 // pred_fallthru
        _
      %p397 = scmp.le.s32.totalorder 1, %s30
      %p398 = scmp.lt.s32.totalorder %s30, 3
      %p399 = pnand %p397, %p398
      %p400 = pneg %p399
      // Predicated region
      $region69: #{tpu_custom_call.1} parent=5 // pred_check
        _
      $region70: #{tpu_custom_call.1} parent=5 // pred_check_branch
        %402 = sbr.rel (%p399) target = $region72
      $region71: #{tpu_custom_call.1} parent=5 // pred_region
        %s403 = ssub.s32 %s30, 1
        %p404 = pneg %p51
        %p405 = pneg %p48
        %p406 = pneg %p72
        %p407 = pneg %p69
        %p408 = pneg %p93
        %p409 = pneg %p90
        %p410 = pneg %p114
        %p411 = pneg %p111
        %p412 = pneg %p135
        %p413 = pneg %p132
        %p414 = pneg %p156
        %p415 = pneg %p153
        %p416 = pneg %p177
        %p417 = pneg %p174
        %p418 = pneg %p198
        %p419 = pneg %p195
        %p420 = pneg %p219
        %p421 = pneg %p216
        %p422 = pneg %p240
        %p423 = pneg %p237
        %p424 = pneg %p261
        %p425 = pneg %p258
        %p426 = pneg %p282
        %p427 = pneg %p279
        %p428 = scmp.lt.s32.totalorder %s35, 1
        %s429 = scalar_select %p428, %s35, 1
        %s430 = smul.addr %s429, 2
        %s431 = smul.addr %s430, 8
        %s432 = scalar_lea.vmem %s12, %s431
        %p433 = pneg %p308
        %p434 = pneg %p305
        %p435 = pneg %p334
        %p436 = pneg %p331
        %s437 = sand.u32 %s321, 1
        %s438 = scalar_lea.sflag [#allocation7], %s437
        %s439 = sand.u32 %s321, 1
        %s440 = smul.addr %s439, 16
        %s441 = scalar_lea.vmem [#allocation6], %s440
        %p442 = scmp.lt.s32.totalorder %s35, 1
        %s443 = scalar_select %p442, %s35, 1
        %s444 = smul.addr %s443, 2
        %s445 = smul.addr %s444, 8
        %s446 = scalar_lea.vmem %s12, %s445
        %v447 = vld [vmem:[%s446] sm:$0xff]
        %v448 = vld [vmem:[%s446 + $0x8] sm:$0xff]
        %449 = vxpose.xlu0.b32.start [1/16] %v447, 128
        %450 = vxpose.xlu0.b32.cont [2/16] 0.0, 128
        %451 = vxpose.xlu0.b32.cont [3/16] 0.0, 128
        %452 = vxpose.xlu0.b32.cont [4/16] 0.0, 128
        %453 = vxpose.xlu0.b32.cont [5/16] 0.0, 128
        %454 = vxpose.xlu0.b32.cont [6/16] 0.0, 128
        %455 = vxpose.xlu0.b32.cont [7/16] 0.0, 128
        %456 = vxpose.xlu0.b32.cont [8/16] 0.0, 128
        %457 = vxpose.xlu0.b32.cont [9/16] 0.0, 128
        %458 = vxpose.xlu0.b32.cont [10/16] 0.0, 128
        %459 = vxpose.xlu0.b32.cont [11/16] 0.0, 128
        %460 = vxpose.xlu0.b32.cont [12/16] 0.0, 128
        %461 = vxpose.xlu0.b32.cont [13/16] 0.0, 128
        %462 = vxpose.xlu0.b32.cont [14/16] 0.0, 128
        %463 = vxpose.xlu0.b32.cont [15/16] 0.0, 128
        %464 = vxpose.xlu0.b32.end [16/16] 0.0, 128
        %v465 = vpop.trf.xlu0
        %v466 = vpop.trf.xlu0
        %v467 = vpop.trf.xlu0
        %v468 = vpop.trf.xlu0
        %v469 = vpop.trf.xlu0
        %v470 = vpop.trf.xlu0
        %v471 = vpop.trf.xlu0
        %v472 = vpop.trf.xlu0
        %v473 = vpop.trf.xlu0
        %v474 = vpop.trf.xlu0
        %v475 = vpop.trf.xlu0
        %v476 = vpop.trf.xlu0
        %v477 = vpop.trf.xlu0
        %v478 = vpop.trf.xlu0
        %v479 = vpop.trf.xlu0
        %v480 = vpop.trf.xlu0
        %481 = vxpose.xlu0.b32.start [1/16] %v448, 128
        %482 = vxpose.xlu0.b32.cont [2/16] 0.0, 128
        %483 = vxpose.xlu0.b32.cont [3/16] 0.0, 128
        %484 = vxpose.xlu0.b32.cont [4/16] 0.0, 128
        %485 = vxpose.xlu0.b32.cont [5/16] 0.0, 128
        %486 = vxpose.xlu0.b32.cont [6/16] 0.0, 128
        %487 = vxpose.xlu0.b32.cont [7/16] 0.0, 128
        %488 = vxpose.xlu0.b32.cont [8/16] 0.0, 128
        %489 = vxpose.xlu0.b32.cont [9/16] 0.0, 128
        %490 = vxpose.xlu0.b32.cont [10/16] 0.0, 128
        %491 = vxpose.xlu0.b32.cont [11/16] 0.0, 128
        %492 = vxpose.xlu0.b32.cont [12/16] 0.0, 128
        %493 = vxpose.xlu0.b32.cont [13/16] 0.0, 128
        %494 = vxpose.xlu0.b32.cont [14/16] 0.0, 128
        %495 = vxpose.xlu0.b32.cont [15/16] 0.0, 128
        %496 = vxpose.xlu0.b32.end [16/16] 0.0, 128
        %v497 = vpop.trf.xlu0
        %v498 = vpop.trf.xlu0
        %v499 = vpop.trf.xlu0
        %v500 = vpop.trf.xlu0
        %v501 = vpop.trf.xlu0
        %v502 = vpop.trf.xlu0
        %v503 = vpop.trf.xlu0
        %v504 = vpop.trf.xlu0
        %v505 = vpop.trf.xlu0
        %v506 = vpop.trf.xlu0
        %v507 = vpop.trf.xlu0
        %v508 = vpop.trf.xlu0
        %v509 = vpop.trf.xlu0
        %v510 = vpop.trf.xlu0
        %v511 = vpop.trf.xlu0
        %v512 = vpop.trf.xlu0
        %v515 = vrot.slane %v447, 4
        %v516 = vrot.slane %v448, 4
        %519 = vxpose.xlu0.b32.start [1/16] %v515, 128
        %520 = vxpose.xlu0.b32.cont [2/16] 0.0, 128
        %521 = vxpose.xlu0.b32.cont [3/16] 0.0, 128
        %522 = vxpose.xlu0.b32.cont [4/16] 0.0, 128
        %523 = vxpose.xlu0.b32.cont [5/16] 0.0, 128
        %524 = vxpose.xlu0.b32.cont [6/16] 0.0, 128
        %525 = vxpose.xlu0.b32.cont [7/16] 0.0, 128
        %526 = vxpose.xlu0.b32.cont [8/16] 0.0, 128
        %527 = vxpose.xlu0.b32.cont [9/16] 0.0, 128
        %528 = vxpose.xlu0.b32.cont [10/16] 0.0, 128
        %529 = vxpose.xlu0.b32.cont [11/16] 0.0, 128
        %530 = vxpose.xlu0.b32.cont [12/16] 0.0, 128
        %531 = vxpose.xlu0.b32.cont [13/16] 0.0, 128
        %532 = vxpose.xlu0.b32.cont [14/16] 0.0, 128
        %533 = vxpose.xlu0.b32.cont [15/16] 0.0, 128
        %534 = vxpose.xlu0.b32.end [16/16] 0.0, 128
        %v535 = vpop.trf.xlu0
        %v536 = vpop.trf.xlu0
        %v537 = vpop.trf.xlu0
        %v538 = vpop.trf.xlu0
        %v539 = vpop.trf.xlu0
        %v540 = vpop.trf.xlu0
        %v541 = vpop.trf.xlu0
        %v542 = vpop.trf.xlu0
        %v543 = vpop.trf.xlu0
        %v544 = vpop.trf.xlu0
        %v545 = vpop.trf.xlu0
        %v546 = vpop.trf.xlu0
        %v547 = vpop.trf.xlu0
        %v548 = vpop.trf.xlu0
        %v549 = vpop.trf.xlu0
        %v550 = vpop.trf.xlu0
        %551 = vxpose.xlu0.b32.start [1/16] %v516, 128
        %552 = vxpose.xlu0.b32.cont [2/16] 0.0, 128
        %553 = vxpose.xlu0.b32.cont [3/16] 0.0, 128
        %554 = vxpose.xlu0.b32.cont [4/16] 0.0, 128
        %555 = vxpose.xlu0.b32.cont [5/16] 0.0, 128
        %556 = vxpose.xlu0.b32.cont [6/16] 0.0, 128
        %557 = vxpose.xlu0.b32.cont [7/16] 0.0, 128
        %558 = vxpose.xlu0.b32.cont [8/16] 0.0, 128
        %559 = vxpose.xlu0.b32.cont [9/16] 0.0, 128
        %560 = vxpose.xlu0.b32.cont [10/16] 0.0, 128
        %561 = vxpose.xlu0.b32.cont [11/16] 0.0, 128
        %562 = vxpose.xlu0.b32.cont [12/16] 0.0, 128
        %563 = vxpose.xlu0.b32.cont [13/16] 0.0, 128
        %564 = vxpose.xlu0.b32.cont [14/16] 0.0, 128
        %565 = vxpose.xlu0.b32.cont [15/16] 0.0, 128
        %566 = vxpose.xlu0.b32.end [16/16] 0.0, 128
        %v567 = vpop.trf.xlu0
        %v568 = vpop.trf.xlu0
        %v569 = vpop.trf.xlu0
        %v570 = vpop.trf.xlu0
        %v571 = vpop.trf.xlu0
        %v572 = vpop.trf.xlu0
        %v573 = vpop.trf.xlu0
        %v574 = vpop.trf.xlu0
        %v575 = vpop.trf.xlu0
        %v576 = vpop.trf.xlu0
        %v577 = vpop.trf.xlu0
        %v578 = vpop.trf.xlu0
        %v579 = vpop.trf.xlu0
        %v580 = vpop.trf.xlu0
        %v581 = vpop.trf.xlu0
        %v582 = vpop.trf.xlu0
        %v599 = vrot.slane %v537, 1
        %v600 = vrot.slane %v535, 1
        %v601 = vrot.slane %v539, 1
        %v602 = vrot.slane %v541, 1
        %v603 = vrot.slane %v543, 1
        %v604 = vrot.slane %v545, 1
        %v605 = vrot.slane %v547, 1
        %v606 = vrot.slane %v549, 1
        %v607 = vrot.slane %v567, 1
        %v608 = vrot.slane %v569, 1
        %v609 = vrot.slane %v571, 1
        %v610 = vrot.slane %v573, 1
        %v611 = vrot.slane %v575, 1
        %v612 = vrot.slane %v577, 1
        %v613 = vrot.slane %v579, 1
        %v614 = vrot.slane %v581, 1
        %vm647 = vcmask 1040384
        %v648 = vrot.slane %v537, 7
        %v649 = vrot.slane %v538, 7
        %v650 = vsel %vm647, %v648, %v649
        %v651 = vrot.slane %v535, 7
        %v652 = vrot.slane %v536, 7
        %v653 = vsel %vm647, %v651, %v652
        %v654 = vrot.slane %v539, 7
        %v655 = vrot.slane %v540, 7
        %v656 = vsel %vm647, %v654, %v655
        %v657 = vrot.slane %v541, 7
        %v658 = vrot.slane %v542, 7
        %v659 = vsel %vm647, %v657, %v658
        %v660 = vrot.slane %v543, 7
        %v661 = vrot.slane %v544, 7
        %v662 = vsel %vm647, %v660, %v661
        %v663 = vrot.slane %v545, 7
        %v664 = vrot.slane %v546, 7
        %v665 = vsel %vm647, %v663, %v664
        %v666 = vrot.slane %v547, 7
        %v667 = vrot.slane %v548, 7
        %v668 = vsel %vm647, %v666, %v667
        %v669 = vrot.slane %v549, 7
        %v670 = vrot.slane %v550, 7
        %v671 = vsel %vm647, %v669, %v670
        %v672 = vrot.slane %v567, 7
        %v673 = vrot.slane %v568, 7
        %v674 = vsel %vm647, %v672, %v673
        %v675 = vrot.slane %v569, 7
        %v676 = vrot.slane %v570, 7
        %v677 = vsel %vm647, %v675, %v676
        %v678 = vrot.slane %v571, 7
        %v679 = vrot.slane %v572, 7
        %v680 = vsel %vm647, %v678, %v679
        %v681 = vrot.slane %v573, 7
        %v682 = vrot.slane %v574, 7
        %v683 = vsel %vm647, %v681, %v682
        %v684 = vrot.slane %v575, 7
        %v685 = vrot.slane %v576, 7
        %v686 = vsel %vm647, %v684, %v685
        %v687 = vrot.slane %v577, 7
        %v688 = vrot.slane %v578, 7
        %v689 = vsel %vm647, %v687, %v688
        %v690 = vrot.slane %v579, 7
        %v691 = vrot.slane %v580, 7
        %v692 = vsel %vm647, %v690, %v691
        %v693 = vrot.slane %v581, 7
        %v694 = vrot.slane %v582, 7
        %v695 = vsel %vm647, %v693, %v694
        %v743 = vrot.slane %v538, 5
        %v744 = vrot.slane %v536, 5
        %v745 = vrot.slane %v540, 5
        %v746 = vrot.slane %v542, 5
        %v747 = vrot.slane %v544, 5
        %v748 = vrot.slane %v546, 5
        %v749 = vrot.slane %v548, 5
        %v750 = vrot.slane %v550, 5
        %v751 = vrot.slane %v568, 5
        %v752 = vrot.slane %v570, 5
        %v753 = vrot.slane %v572, 5
        %v754 = vrot.slane %v574, 5
        %v755 = vrot.slane %v576, 5
        %v756 = vrot.slane %v578, 5
        %v757 = vrot.slane %v580, 5
        %v758 = vrot.slane %v582, 5
        %v775 = vsel %vm647, %v599, %v648
        %v776 = vsel %vm647, %v600, %v651
        %v777 = vsel %vm647, %v601, %v654
        %v778 = vsel %vm647, %v602, %v657
        %v779 = vsel %vm647, %v603, %v660
        %v780 = vsel %vm647, %v604, %v663
        %v781 = vsel %vm647, %v605, %v666
        %v782 = vsel %vm647, %v606, %v669
        %v783 = vsel %vm647, %v607, %v672
        %v784 = vsel %vm647, %v608, %v675
        %v785 = vsel %vm647, %v609, %v678
        %v786 = vsel %vm647, %v610, %v681
        %v787 = vsel %vm647, %v611, %v684
        %v788 = vsel %vm647, %v612, %v687
        %v789 = vsel %vm647, %v613, %v690
        %v790 = vsel %vm647, %v614, %v693
        %v791 = vsel %vm647, %v649, %v743
        %v792 = vsel %vm647, %v652, %v744
        %v793 = vsel %vm647, %v655, %v745
        %v794 = vsel %vm647, %v658, %v746
        %v795 = vsel %vm647, %v661, %v747
        %v796 = vsel %vm647, %v664, %v748
        %v797 = vsel %vm647, %v667, %v749
        %v798 = vsel %vm647, %v670, %v750
        %v799 = vsel %vm647, %v673, %v751
        %v800 = vsel %vm647, %v676, %v752
        %v801 = vsel %vm647, %v679, %v753
        %v802 = vsel %vm647, %v682, %v754
        %v803 = vsel %vm647, %v685, %v755
        %v804 = vsel %vm647, %v688, %v756
        %v805 = vsel %vm647, %v691, %v757
        %v806 = vsel %vm647, %v694, %v758
        %vm837 = vcmask 1046528
        %v838 = vrot.slane %v775, 1
        %v839 = vrot.slane %v650, 1
        %v840 = vsel %vm837, %v838, %v839
        %v841 = vrot.slane %v791, 1
        %v842 = vsel %vm837, %v839, %v841
        %v843 = vrot.slane %v776, 1
        %v844 = vrot.slane %v653, 1
        %v845 = vsel %vm837, %v843, %v844
        %v846 = vrot.slane %v792, 1
        %v847 = vsel %vm837, %v844, %v846
        %v848 = vrot.slane %v777, 1
        %v849 = vrot.slane %v656, 1
        %v850 = vsel %vm837, %v848, %v849
        %v851 = vrot.slane %v793, 1
        %v852 = vsel %vm837, %v849, %v851
        %v853 = vrot.slane %v778, 1
        %v854 = vrot.slane %v659, 1
        %v855 = vsel %vm837, %v853, %v854
        %v856 = vrot.slane %v794, 1
        %v857 = vsel %vm837, %v854, %v856
        %v858 = vrot.slane %v779, 1
        %v859 = vrot.slane %v662, 1
        %v860 = vsel %vm837, %v858, %v859
        %v861 = vrot.slane %v795, 1
        %v862 = vsel %vm837, %v859, %v861
        %v863 = vrot.slane %v780, 1
        %v864 = vrot.slane %v665, 1
        %v865 = vsel %vm837, %v863, %v864
        %v866 = vrot.slane %v796, 1
        %v867 = vsel %vm837, %v864, %v866
        %v868 = vrot.slane %v781, 1
        %v869 = vrot.slane %v668, 1
        %v870 = vsel %vm837, %v868, %v869
        %v871 = vrot.slane %v797, 1
        %v872 = vsel %vm837, %v869, %v871
        %v873 = vrot.slane %v782, 1
        %v874 = vrot.slane %v671, 1
        %v875 = vsel %vm837, %v873, %v874
        %v876 = vrot.slane %v798, 1
        %v877 = vsel %vm837, %v874, %v876
        %v878 = vrot.slane %v783, 1
        %v879 = vrot.slane %v674, 1
        %v880 = vsel %vm837, %v878, %v879
        %v881 = vrot.slane %v799, 1
        %v882 = vsel %vm837, %v879, %v881
        %v883 = vrot.slane %v784, 1
        %v884 = vrot.slane %v677, 1
        %v885 = vsel %vm837, %v883, %v884
        %v886 = vrot.slane %v800, 1
        %v887 = vsel %vm837, %v884, %v886
        %v888 = vrot.slane %v785, 1
        %v889 = vrot.slane %v680, 1
        %v890 = vsel %vm837, %v888, %v889
        %v891 = vrot.slane %v801, 1
        %v892 = vsel %vm837, %v889, %v891
        %v893 = vrot.slane %v786, 1
        %v894 = vrot.slane %v683, 1
        %v895 = vsel %vm837, %v893, %v894
        %v896 = vrot.slane %v802, 1
        %v897 = vsel %vm837, %v894, %v896
        %v898 = vrot.slane %v787, 1
        %v899 = vrot.slane %v686, 1
        %v900 = vsel %vm837, %v898, %v899
        %v901 = vrot.slane %v803, 1
        %v902 = vsel %vm837, %v899, %v901
        %v903 = vrot.slane %v788, 1
        %v904 = vrot.slane %v689, 1
        %v905 = vsel %vm837, %v903, %v904
        %v906 = vrot.slane %v804, 1
        %v907 = vsel %vm837, %v904, %v906
        %v908 = vrot.slane %v789, 1
        %v909 = vrot.slane %v692, 1
        %v910 = vsel %vm837, %v908, %v909
        %v911 = vrot.slane %v805, 1
        %v912 = vsel %vm837, %v909, %v911
        %913 = vrot.lane.b32.xlu0 %v840, 4
        %v914 = vpop.permute.xlu0 %913
        %915 = vrot.lane.b32.xlu0 %v842, 4
        %v916 = vpop.permute.xlu0 %915
        %917 = vrot.lane.b32.xlu0 %v845, 4
        %v918 = vpop.permute.xlu0 %917
        %919 = vrot.lane.b32.xlu0 %v847, 4
        %v920 = vpop.permute.xlu0 %919
        %921 = vrot.lane.b32.xlu0 %v850, 4
        %v922 = vpop.permute.xlu0 %921
        %923 = vrot.lane.b32.xlu0 %v852, 4
        %v924 = vpop.permute.xlu0 %923
        %925 = vrot.lane.b32.xlu0 %v855, 4
        %v926 = vpop.permute.xlu0 %925
        %927 = vrot.lane.b32.xlu0 %v857, 4
        %v928 = vpop.permute.xlu0 %927
        %929 = vrot.lane.b32.xlu0 %v860, 4
        %v930 = vpop.permute.xlu0 %929
        %931 = vrot.lane.b32.xlu0 %v862, 4
        %v932 = vpop.permute.xlu0 %931
        %933 = vrot.lane.b32.xlu0 %v865, 4
        %v934 = vpop.permute.xlu0 %933
        %935 = vrot.lane.b32.xlu0 %v867, 4
        %v936 = vpop.permute.xlu0 %935
        %937 = vrot.lane.b32.xlu0 %v870, 4
        %v938 = vpop.permute.xlu0 %937
        %939 = vrot.lane.b32.xlu0 %v872, 4
        %v940 = vpop.permute.xlu0 %939
        %941 = vrot.lane.b32.xlu0 %v875, 4
        %v942 = vpop.permute.xlu0 %941
        %943 = vrot.lane.b32.xlu0 %v877, 4
        %v944 = vpop.permute.xlu0 %943
        %945 = vrot.lane.b32.xlu0 %v880, 4
        %v946 = vpop.permute.xlu0 %945
        %947 = vrot.lane.b32.xlu0 %v882, 4
        %v948 = vpop.permute.xlu0 %947
        %949 = vrot.lane.b32.xlu0 %v885, 4
        %v950 = vpop.permute.xlu0 %949
        %951 = vrot.lane.b32.xlu0 %v887, 4
        %v952 = vpop.permute.xlu0 %951
        %953 = vrot.lane.b32.xlu0 %v890, 4
        %v954 = vpop.permute.xlu0 %953
        %955 = vrot.lane.b32.xlu0 %v892, 4
        %v956 = vpop.permute.xlu0 %955
        %957 = vrot.lane.b32.xlu0 %v895, 4
        %v958 = vpop.permute.xlu0 %957
        %959 = vrot.lane.b32.xlu0 %v897, 4
        %v960 = vpop.permute.xlu0 %959
        %961 = vrot.lane.b32.xlu0 %v900, 4
        %v962 = vpop.permute.xlu0 %961
        %963 = vrot.lane.b32.xlu0 %v902, 4
        %v964 = vpop.permute.xlu0 %963
        %965 = vrot.lane.b32.xlu0 %v905, 4
        %v966 = vpop.permute.xlu0 %965
        %967 = vrot.lane.b32.xlu0 %v907, 4
        %v968 = vpop.permute.xlu0 %967
        %969 = vrot.lane.b32.xlu0 %v910, 4
        %v970 = vpop.permute.xlu0 %969
        %971 = vrot.lane.b32.xlu0 %v912, 4
        %v972 = vpop.permute.xlu0 %971
        %vm1003 = vcmask 1045504
        %v1004 = vrot.slane %v775, 2
        %v1005 = vrot.slane %v650, 2
        %v1006 = vsel %vm1003, %v1004, %v1005
        %v1007 = vrot.slane %v791, 2
        %v1008 = vsel %vm1003, %v1005, %v1007
        %v1009 = vrot.slane %v776, 2
        %v1010 = vrot.slane %v653, 2
        %v1011 = vsel %vm1003, %v1009, %v1010
        %v1012 = vrot.slane %v792, 2
        %v1013 = vsel %vm1003, %v1010, %v1012
        %v1014 = vrot.slane %v777, 2
        %v1015 = vrot.slane %v656, 2
        %v1016 = vsel %vm1003, %v1014, %v1015
        %v1017 = vrot.slane %v793, 2
        %v1018 = vsel %vm1003, %v1015, %v1017
        %v1019 = vrot.slane %v778, 2
        %v1020 = vrot.slane %v659, 2
        %v1021 = vsel %vm1003, %v1019, %v1020
        %v1022 = vrot.slane %v794, 2
        %v1023 = vsel %vm1003, %v1020, %v1022
        %v1024 = vrot.slane %v779, 2
        %v1025 = vrot.slane %v662, 2
        %v1026 = vsel %vm1003, %v1024, %v1025
        %v1027 = vrot.slane %v795, 2
        %v1028 = vsel %vm1003, %v1025, %v1027
        %v1029 = vrot.slane %v780, 2
        %v1030 = vrot.slane %v665, 2
        %v1031 = vsel %vm1003, %v1029, %v1030
        %v1032 = vrot.slane %v796, 2
        %v1033 = vsel %vm1003, %v1030, %v1032
        %v1034 = vrot.slane %v781, 2
        %v1035 = vrot.slane %v668, 2
        %v1036 = vsel %vm1003, %v1034, %v1035
        %v1037 = vrot.slane %v797, 2
        %v1038 = vsel %vm1003, %v1035, %v1037
        %v1039 = vrot.slane %v782, 2
        %v1040 = vrot.slane %v671, 2
        %v1041 = vsel %vm1003, %v1039, %v1040
        %v1042 = vrot.slane %v798, 2
        %v1043 = vsel %vm1003, %v1040, %v1042
        %v1044 = vrot.slane %v783, 2
        %v1045 = vrot.slane %v674, 2
        %v1046 = vsel %vm1003, %v1044, %v1045
        %v1047 = vrot.slane %v799, 2
        %v1048 = vsel %vm1003, %v1045, %v1047
        %v1049 = vrot.slane %v784, 2
        %v1050 = vrot.slane %v677, 2
        %v1051 = vsel %vm1003, %v1049, %v1050
        %v1052 = vrot.slane %v800, 2
        %v1053 = vsel %vm1003, %v1050, %v1052
        %v1054 = vrot.slane %v785, 2
        %v1055 = vrot.slane %v680, 2
        %v1056 = vsel %vm1003, %v1054, %v1055
        %v1057 = vrot.slane %v801, 2
        %v1058 = vsel %vm1003, %v1055, %v1057
        %v1059 = vrot.slane %v786, 2
        %v1060 = vrot.slane %v683, 2
        %v1061 = vsel %vm1003, %v1059, %v1060
        %v1062 = vrot.slane %v802, 2
        %v1063 = vsel %vm1003, %v1060, %v1062
        %v1064 = vrot.slane %v787, 2
        %v1065 = vrot.slane %v686, 2
        %v1066 = vsel %vm1003, %v1064, %v1065
        %v1067 = vrot.slane %v803, 2
        %v1068 = vsel %vm1003, %v1065, %v1067
        %v1069 = vrot.slane %v788, 2
        %v1070 = vrot.slane %v689, 2
        %v1071 = vsel %vm1003, %v1069, %v1070
        %v1072 = vrot.slane %v804, 2
        %v1073 = vsel %vm1003, %v1070, %v1072
        %v1074 = vrot.slane %v789, 2
        %v1075 = vrot.slane %v692, 2
        %v1076 = vsel %vm1003, %v1074, %v1075
        %v1077 = vrot.slane %v805, 2
        %v1078 = vsel %vm1003, %v1075, %v1077
        %1079 = vrot.lane.b32.xlu0 %v1006, 8
        %v1080 = vpop.permute.xlu0 %1079
        %1081 = vrot.lane.b32.xlu0 %v1008, 8
        %v1082 = vpop.permute.xlu0 %1081
        %1083 = vrot.lane.b32.xlu0 %v1011, 8
        %v1084 = vpop.permute.xlu0 %1083
        %1085 = vrot.lane.b32.xlu0 %v1013, 8
        %v1086 = vpop.permute.xlu0 %1085
        %1087 = vrot.lane.b32.xlu0 %v1016, 8
        %v1088 = vpop.permute.xlu0 %1087
        %1089 = vrot.lane.b32.xlu0 %v1018, 8
        %v1090 = vpop.permute.xlu0 %1089
        %1091 = vrot.lane.b32.xlu0 %v1021, 8
        %v1092 = vpop.permute.xlu0 %1091
        %1093 = vrot.lane.b32.xlu0 %v1023, 8
        %v1094 = vpop.permute.xlu0 %1093
        %1095 = vrot.lane.b32.xlu0 %v1026, 8
        %v1096 = vpop.permute.xlu0 %1095
        %1097 = vrot.lane.b32.xlu0 %v1028, 8
        %v1098 = vpop.permute.xlu0 %1097
        %1099 = vrot.lane.b32.xlu0 %v1031, 8
        %v1100 = vpop.permute.xlu0 %1099
        %1101 = vrot.lane.b32.xlu0 %v1033, 8
        %v1102 = vpop.permute.xlu0 %1101
        %1103 = vrot.lane.b32.xlu0 %v1036, 8
        %v1104 = vpop.permute.xlu0 %1103
        %1105 = vrot.lane.b32.xlu0 %v1038, 8
        %v1106 = vpop.permute.xlu0 %1105
        %1107 = vrot.lane.b32.xlu0 %v1041, 8
        %v1108 = vpop.permute.xlu0 %1107
        %1109 = vrot.lane.b32.xlu0 %v1043, 8
        %v1110 = vpop.permute.xlu0 %1109
        %1111 = vrot.lane.b32.xlu0 %v1046, 8
        %v1112 = vpop.permute.xlu0 %1111
        %1113 = vrot.lane.b32.xlu0 %v1048, 8
        %v1114 = vpop.permute.xlu0 %1113
        %1115 = vrot.lane.b32.xlu0 %v1051, 8
        %v1116 = vpop.permute.xlu0 %1115
        %1117 = vrot.lane.b32.xlu0 %v1053, 8
        %v1118 = vpop.permute.xlu0 %1117
        %1119 = vrot.lane.b32.xlu0 %v1056, 8
        %v1120 = vpop.permute.xlu0 %1119
        %1121 = vrot.lane.b32.xlu0 %v1058, 8
        %v1122 = vpop.permute.xlu0 %1121
        %1123 = vrot.lane.b32.xlu0 %v1061, 8
        %v1124 = vpop.permute.xlu0 %1123
        %1125 = vrot.lane.b32.xlu0 %v1063, 8
        %v1126 = vpop.permute.xlu0 %1125
        %1127 = vrot.lane.b32.xlu0 %v1066, 8
        %v1128 = vpop.permute.xlu0 %1127
        %1129 = vrot.lane.b32.xlu0 %v1068, 8
        %v1130 = vpop.permute.xlu0 %1129
        %1131 = vrot.lane.b32.xlu0 %v1071, 8
        %v1132 = vpop.permute.xlu0 %1131
        %1133 = vrot.lane.b32.xlu0 %v1073, 8
        %v1134 = vpop.permute.xlu0 %1133
        %1135 = vrot.lane.b32.xlu0 %v1076, 8
        %v1136 = vpop.permute.xlu0 %1135
        %1137 = vrot.lane.b32.xlu0 %v1078, 8
        %v1138 = vpop.permute.xlu0 %1137
        %1170 = vrot.lane.b32.xlu0 %v776, 12
        %v1171 = vpop.permute.xlu0 %1170
        %1172 = vrot.lane.b32.xlu0 %v653, 12
        %v1173 = vpop.permute.xlu0 %1172
        %1174 = vrot.lane.b32.xlu0 %v775, 12
        %v1175 = vpop.permute.xlu0 %1174
        %1176 = vrot.lane.b32.xlu0 %v650, 12
        %v1177 = vpop.permute.xlu0 %1176
        %1178 = vrot.lane.b32.xlu0 %v777, 12
        %v1179 = vpop.permute.xlu0 %1178
        %1180 = vrot.lane.b32.xlu0 %v656, 12
        %v1181 = vpop.permute.xlu0 %1180
        %1182 = vrot.lane.b32.xlu0 %v778, 12
        %v1183 = vpop.permute.xlu0 %1182
        %1184 = vrot.lane.b32.xlu0 %v659, 12
        %v1185 = vpop.permute.xlu0 %1184
        %1186 = vrot.lane.b32.xlu0 %v779, 12
        %v1187 = vpop.permute.xlu0 %1186
        %1188 = vrot.lane.b32.xlu0 %v662, 12
        %v1189 = vpop.permute.xlu0 %1188
        %1190 = vrot.lane.b32.xlu0 %v780, 12
        %v1191 = vpop.permute.xlu0 %1190
        %1192 = vrot.lane.b32.xlu0 %v665, 12
        %v1193 = vpop.permute.xlu0 %1192
        %1194 = vrot.lane.b32.xlu0 %v781, 12
        %v1195 = vpop.permute.xlu0 %1194
        %1196 = vrot.lane.b32.xlu0 %v668, 12
        %v1197 = vpop.permute.xlu0 %1196
        %1198 = vrot.lane.b32.xlu0 %v782, 12
        %v1199 = vpop.permute.xlu0 %1198
        %1200 = vrot.lane.b32.xlu0 %v671, 12
        %v1201 = vpop.permute.xlu0 %1200
        %1202 = vrot.lane.b32.xlu0 %v783, 12
        %v1203 = vpop.permute.xlu0 %1202
        %1204 = vrot.lane.b32.xlu0 %v674, 12
        %v1205 = vpop.permute.xlu0 %1204
        %1206 = vrot.lane.b32.xlu0 %v784, 12
        %v1207 = vpop.permute.xlu0 %1206
        %1208 = vrot.lane.b32.xlu0 %v677, 12
        %v1209 = vpop.permute.xlu0 %1208
        %1210 = vrot.lane.b32.xlu0 %v785, 12
        %v1211 = vpop.permute.xlu0 %1210
        %1212 = vrot.lane.b32.xlu0 %v680, 12
        %v1213 = vpop.permute.xlu0 %1212
        %1214 = vrot.lane.b32.xlu0 %v786, 12
        %v1215 = vpop.permute.xlu0 %1214
        %1216 = vrot.lane.b32.xlu0 %v683, 12
        %v1217 = vpop.permute.xlu0 %1216
        %1218 = vrot.lane.b32.xlu0 %v787, 12
        %v1219 = vpop.permute.xlu0 %1218
        %1220 = vrot.lane.b32.xlu0 %v686, 12
        %v1221 = vpop.permute.xlu0 %1220
        %1222 = vrot.lane.b32.xlu0 %v788, 12
        %v1223 = vpop.permute.xlu0 %1222
        %1224 = vrot.lane.b32.xlu0 %v689, 12
        %v1225 = vpop.permute.xlu0 %1224
        %1226 = vrot.lane.b32.xlu0 %v789, 12
        %v1227 = vpop.permute.xlu0 %1226
        %1228 = vrot.lane.b32.xlu0 %v692, 12
        %v1229 = vpop.permute.xlu0 %1228
        %1230 = vrot.lane.b32.xlu0 %v790, 12
        %v1231 = vpop.permute.xlu0 %1230
        %1232 = vrot.lane.b32.xlu0 %v695, 12
        %v1233 = vpop.permute.xlu0 %1232
        %v1267 = vrot.slane %v790, 1
        %v1268 = vrot.slane %v695, 1
        %v1269 = vsel %vm837, %v1267, %v1268
        %v1270 = vrot.slane %v806, 1
        %v1271 = vsel %vm837, %v1268, %v1270
        %1272 = vrot.lane.b32.xlu0 %v845, 16
        %v1273 = vpop.permute.xlu0 %1272
        %1274 = vrot.lane.b32.xlu0 %v847, 16
        %v1275 = vpop.permute.xlu0 %1274
        %1276 = vrot.lane.b32.xlu0 %v840, 16
        %v1277 = vpop.permute.xlu0 %1276
        %1278 = vrot.lane.b32.xlu0 %v842, 16
        %v1279 = vpop.permute.xlu0 %1278
        %1280 = vrot.lane.b32.xlu0 %v850, 16
        %v1281 = vpop.permute.xlu0 %1280
        %1282 = vrot.lane.b32.xlu0 %v852, 16
        %v1283 = vpop.permute.xlu0 %1282
        %1284 = vrot.lane.b32.xlu0 %v855, 16
        %v1285 = vpop.permute.xlu0 %1284
        %1286 = vrot.lane.b32.xlu0 %v857, 16
        %v1287 = vpop.permute.xlu0 %1286
        %1288 = vrot.lane.b32.xlu0 %v860, 16
        %v1289 = vpop.permute.xlu0 %1288
        %1290 = vrot.lane.b32.xlu0 %v862, 16
        %v1291 = vpop.permute.xlu0 %1290
        %1292 = vrot.lane.b32.xlu0 %v865, 16
        %v1293 = vpop.permute.xlu0 %1292
        %1294 = vrot.lane.b32.xlu0 %v867, 16
        %v1295 = vpop.permute.xlu0 %1294
        %1296 = vrot.lane.b32.xlu0 %v870, 16
        %v1297 = vpop.permute.xlu0 %1296
        %1298 = vrot.lane.b32.xlu0 %v872, 16
        %v1299 = vpop.permute.xlu0 %1298
        %1300 = vrot.lane.b32.xlu0 %v875, 16
        %v1301 = vpop.permute.xlu0 %1300
        %1302 = vrot.lane.b32.xlu0 %v877, 16
        %v1303 = vpop.permute.xlu0 %1302
        %1304 = vrot.lane.b32.xlu0 %v880, 16
        %v1305 = vpop.permute.xlu0 %1304
        %1306 = vrot.lane.b32.xlu0 %v882, 16
        %v1307 = vpop.permute.xlu0 %1306
        %1308 = vrot.lane.b32.xlu0 %v885, 16
        %v1309 = vpop.permute.xlu0 %1308
        %1310 = vrot.lane.b32.xlu0 %v887, 16
        %v1311 = vpop.permute.xlu0 %1310
        %1312 = vrot.lane.b32.xlu0 %v890, 16
        %v1313 = vpop.permute.xlu0 %1312
        %1314 = vrot.lane.b32.xlu0 %v892, 16
        %v1315 = vpop.permute.xlu0 %1314
        %1316 = vrot.lane.b32.xlu0 %v895, 16
        %v1317 = vpop.permute.xlu0 %1316
        %1318 = vrot.lane.b32.xlu0 %v897, 16
        %v1319 = vpop.permute.xlu0 %1318
        %1320 = vrot.lane.b32.xlu0 %v900, 16
        %v1321 = vpop.permute.xlu0 %1320
        %1322 = vrot.lane.b32.xlu0 %v902, 16
        %v1323 = vpop.permute.xlu0 %1322
        %1324 = vrot.lane.b32.xlu0 %v905, 16
        %v1325 = vpop.permute.xlu0 %1324
        %1326 = vrot.lane.b32.xlu0 %v907, 16
        %v1327 = vpop.permute.xlu0 %1326
        %1328 = vrot.lane.b32.xlu0 %v910, 16
        %v1329 = vpop.permute.xlu0 %1328
        %1330 = vrot.lane.b32.xlu0 %v912, 16
        %v1331 = vpop.permute.xlu0 %1330
        %1332 = vrot.lane.b32.xlu0 %v1269, 16
        %v1333 = vpop.permute.xlu0 %1332
        %1334 = vrot.lane.b32.xlu0 %v1271, 16
        %v1335 = vpop.permute.xlu0 %1334
        %v1368 = vrot.slane %v790, 2
        %v1369 = vrot.slane %v695, 2
        %v1370 = vsel %vm1003, %v1368, %v1369
        %v1371 = vrot.slane %v806, 2
        %v1372 = vsel %vm1003, %v1369, %v1371
        %1373 = vrot.lane.b32.xlu0 %v1011, 20
        %v1374 = vpop.permute.xlu0 %1373
        %1375 = vrot.lane.b32.xlu0 %v1013, 20
        %v1376 = vpop.permute.xlu0 %1375
        %1377 = vrot.lane.b32.xlu0 %v1006, 20
        %v1378 = vpop.permute.xlu0 %1377
        %1379 = vrot.lane.b32.xlu0 %v1008, 20
        %v1380 = vpop.permute.xlu0 %1379
        %1381 = vrot.lane.b32.xlu0 %v1016, 20
        %v1382 = vpop.permute.xlu0 %1381
        %1383 = vrot.lane.b32.xlu0 %v1018, 20
        %v1384 = vpop.permute.xlu0 %1383
        %1385 = vrot.lane.b32.xlu0 %v1021, 20
        %v1386 = vpop.permute.xlu0 %1385
        %1387 = vrot.lane.b32.xlu0 %v1023, 20
        %v1388 = vpop.permute.xlu0 %1387
        %1389 = vrot.lane.b32.xlu0 %v1026, 20
        %v1390 = vpop.permute.xlu0 %1389
        %1391 = vrot.lane.b32.xlu0 %v1028, 20
        %v1392 = vpop.permute.xlu0 %1391
        %1393 = vrot.lane.b32.xlu0 %v1031, 20
        %v1394 = vpop.permute.xlu0 %1393
        %1395 = vrot.lane.b32.xlu0 %v1033, 20
        %v1396 = vpop.permute.xlu0 %1395
        %1397 = vrot.lane.b32.xlu0 %v1036, 20
        %v1398 = vpop.permute.xlu0 %1397
        %1399 = vrot.lane.b32.xlu0 %v1038, 20
        %v1400 = vpop.permute.xlu0 %1399
        %1401 = vrot.lane.b32.xlu0 %v1041, 20
        %v1402 = vpop.permute.xlu0 %1401
        %1403 = vrot.lane.b32.xlu0 %v1043, 20
        %v1404 = vpop.permute.xlu0 %1403
        %1405 = vrot.lane.b32.xlu0 %v1046, 20
        %v1406 = vpop.permute.xlu0 %1405
        %1407 = vrot.lane.b32.xlu0 %v1048, 20
        %v1408 = vpop.permute.xlu0 %1407
        %1409 = vrot.lane.b32.xlu0 %v1051, 20
        %v1410 = vpop.permute.xlu0 %1409
        %1411 = vrot.lane.b32.xlu0 %v1053, 20
        %v1412 = vpop.permute.xlu0 %1411
        %1413 = vrot.lane.b32.xlu0 %v1056, 20
        %v1414 = vpop.permute.xlu0 %1413
        %1415 = vrot.lane.b32.xlu0 %v1058, 20
        %v1416 = vpop.permute.xlu0 %1415
        %1417 = vrot.lane.b32.xlu0 %v1061, 20
        %v1418 = vpop.permute.xlu0 %1417
        %1419 = vrot.lane.b32.xlu0 %v1063, 20
        %v1420 = vpop.permute.xlu0 %1419
        %1421 = vrot.lane.b32.xlu0 %v1066, 20
        %v1422 = vpop.permute.xlu0 %1421
        %1423 = vrot.lane.b32.xlu0 %v1068, 20
        %v1424 = vpop.permute.xlu0 %1423
        %1425 = vrot.lane.b32.xlu0 %v1071, 20
        %v1426 = vpop.permute.xlu0 %1425
        %1427 = vrot.lane.b32.xlu0 %v1073, 20
        %v1428 = vpop.permute.xlu0 %1427
        %1429 = vrot.lane.b32.xlu0 %v1076, 20
        %v1430 = vpop.permute.xlu0 %1429
        %1431 = vrot.lane.b32.xlu0 %v1078, 20
        %v1432 = vpop.permute.xlu0 %1431
        %1433 = vrot.lane.b32.xlu0 %v1370, 20
        %v1434 = vpop.permute.xlu0 %1433
        %1435 = vrot.lane.b32.xlu0 %v1372, 20
        %v1436 = vpop.permute.xlu0 %1435
        %1469 = vrot.lane.b32.xlu0 %v775, 24
        %v1470 = vpop.permute.xlu0 %1469
        %1471 = vrot.lane.b32.xlu0 %v650, 24
        %v1472 = vpop.permute.xlu0 %1471
        %1473 = vrot.lane.b32.xlu0 %v777, 24
        %v1474 = vpop.permute.xlu0 %1473
        %1475 = vrot.lane.b32.xlu0 %v656, 24
        %v1476 = vpop.permute.xlu0 %1475
        %1477 = vrot.lane.b32.xlu0 %v778, 24
        %v1478 = vpop.permute.xlu0 %1477
        %1479 = vrot.lane.b32.xlu0 %v659, 24
        %v1480 = vpop.permute.xlu0 %1479
        %1481 = vrot.lane.b32.xlu0 %v779, 24
        %v1482 = vpop.permute.xlu0 %1481
        %1483 = vrot.lane.b32.xlu0 %v662, 24
        %v1484 = vpop.permute.xlu0 %1483
        %1485 = vrot.lane.b32.xlu0 %v780, 24
        %v1486 = vpop.permute.xlu0 %1485
        %1487 = vrot.lane.b32.xlu0 %v665, 24
        %v1488 = vpop.permute.xlu0 %1487
        %1489 = vrot.lane.b32.xlu0 %v781, 24
        %v1490 = vpop.permute.xlu0 %1489
        %1491 = vrot.lane.b32.xlu0 %v668, 24
        %v1492 = vpop.permute.xlu0 %1491
        %1493 = vrot.lane.b32.xlu0 %v782, 24
        %v1494 = vpop.permute.xlu0 %1493
        %1495 = vrot.lane.b32.xlu0 %v671, 24
        %v1496 = vpop.permute.xlu0 %1495
        %1497 = vrot.lane.b32.xlu0 %v783, 24
        %v1498 = vpop.permute.xlu0 %1497
        %1499 = vrot.lane.b32.xlu0 %v674, 24
        %v1500 = vpop.permute.xlu0 %1499
        %1501 = vrot.lane.b32.xlu0 %v784, 24
        %v1502 = vpop.permute.xlu0 %1501
        %1503 = vrot.lane.b32.xlu0 %v677, 24
        %v1504 = vpop.permute.xlu0 %1503
        %1505 = vrot.lane.b32.xlu0 %v785, 24
        %v1506 = vpop.permute.xlu0 %1505
        %1507 = vrot.lane.b32.xlu0 %v680, 24
        %v1508 = vpop.permute.xlu0 %1507
        %1509 = vrot.lane.b32.xlu0 %v786, 24
        %v1510 = vpop.permute.xlu0 %1509
        %1511 = vrot.lane.b32.xlu0 %v683, 24
        %v1512 = vpop.permute.xlu0 %1511
        %1513 = vrot.lane.b32.xlu0 %v787, 24
        %v1514 = vpop.permute.xlu0 %1513
        %1515 = vrot.lane.b32.xlu0 %v686, 24
        %v1516 = vpop.permute.xlu0 %1515
        %1517 = vrot.lane.b32.xlu0 %v788, 24
        %v1518 = vpop.permute.xlu0 %1517
        %1519 = vrot.lane.b32.xlu0 %v689, 24
        %v1520 = vpop.permute.xlu0 %1519
        %1521 = vrot.lane.b32.xlu0 %v789, 24
        %v1522 = vpop.permute.xlu0 %1521
        %1523 = vrot.lane.b32.xlu0 %v692, 24
        %v1524 = vpop.permute.xlu0 %1523
        %1525 = vrot.lane.b32.xlu0 %v790, 24
        %v1526 = vpop.permute.xlu0 %1525
        %1527 = vrot.lane.b32.xlu0 %v695, 24
        %v1528 = vpop.permute.xlu0 %1527
        %1559 = vrot.lane.b32.xlu0 %v840, 28
        %v1560 = vpop.permute.xlu0 %1559
        %1561 = vrot.lane.b32.xlu0 %v842, 28
        %v1562 = vpop.permute.xlu0 %1561
        %1563 = vrot.lane.b32.xlu0 %v850, 28
        %v1564 = vpop.permute.xlu0 %1563
        %1565 = vrot.lane.b32.xlu0 %v852, 28
        %v1566 = vpop.permute.xlu0 %1565
        %1567 = vrot.lane.b32.xlu0 %v855, 28
        %v1568 = vpop.permute.xlu0 %1567
        %1569 = vrot.lane.b32.xlu0 %v857, 28
        %v1570 = vpop.permute.xlu0 %1569
        %1571 = vrot.lane.b32.xlu0 %v860, 28
        %v1572 = vpop.permute.xlu0 %1571
        %1573 = vrot.lane.b32.xlu0 %v862, 28
        %v1574 = vpop.permute.xlu0 %1573
        %1575 = vrot.lane.b32.xlu0 %v865, 28
        %v1576 = vpop.permute.xlu0 %1575
        %1577 = vrot.lane.b32.xlu0 %v867, 28
        %v1578 = vpop.permute.xlu0 %1577
        %1579 = vrot.lane.b32.xlu0 %v870, 28
        %v1580 = vpop.permute.xlu0 %1579
        %1581 = vrot.lane.b32.xlu0 %v872, 28
        %v1582 = vpop.permute.xlu0 %1581
        %1583 = vrot.lane.b32.xlu0 %v875, 28
        %v1584 = vpop.permute.xlu0 %1583
        %1585 = vrot.lane.b32.xlu0 %v877, 28
        %v1586 = vpop.permute.xlu0 %1585
        %1587 = vrot.lane.b32.xlu0 %v880, 28
        %v1588 = vpop.permute.xlu0 %1587
        %1589 = vrot.lane.b32.xlu0 %v882, 28
        %v1590 = vpop.permute.xlu0 %1589
        %1591 = vrot.lane.b32.xlu0 %v885, 28
        %v1592 = vpop.permute.xlu0 %1591
        %1593 = vrot.lane.b32.xlu0 %v887, 28
        %v1594 = vpop.permute.xlu0 %1593
        %1595 = vrot.lane.b32.xlu0 %v890, 28
        %v1596 = vpop.permute.xlu0 %1595
        %1597 = vrot.lane.b32.xlu0 %v892, 28
        %v1598 = vpop.permute.xlu0 %1597
        %1599 = vrot.lane.b32.xlu0 %v895, 28
        %v1600 = vpop.permute.xlu0 %1599
        %1601 = vrot.lane.b32.xlu0 %v897, 28
        %v1602 = vpop.permute.xlu0 %1601
        %1603 = vrot.lane.b32.xlu0 %v900, 28
        %v1604 = vpop.permute.xlu0 %1603
        %1605 = vrot.lane.b32.xlu0 %v902, 28
        %v1606 = vpop.permute.xlu0 %1605
        %1607 = vrot.lane.b32.xlu0 %v905, 28
        %v1608 = vpop.permute.xlu0 %1607
        %1609 = vrot.lane.b32.xlu0 %v907, 28
        %v1610 = vpop.permute.xlu0 %1609
        %1611 = vrot.lane.b32.xlu0 %v910, 28
        %v1612 = vpop.permute.xlu0 %1611
        %1613 = vrot.lane.b32.xlu0 %v912, 28
        %v1614 = vpop.permute.xlu0 %1613
        %1615 = vrot.lane.b32.xlu0 %v1269, 28
        %v1616 = vpop.permute.xlu0 %1615
        %1617 = vrot.lane.b32.xlu0 %v1271, 28
        %v1618 = vpop.permute.xlu0 %1617
        %1649 = vrot.lane.b32.xlu0 %v1006, 32
        %v1650 = vpop.permute.xlu0 %1649
        %1651 = vrot.lane.b32.xlu0 %v1008, 32
        %v1652 = vpop.permute.xlu0 %1651
        %1653 = vrot.lane.b32.xlu0 %v1016, 32
        %v1654 = vpop.permute.xlu0 %1653
        %1655 = vrot.lane.b32.xlu0 %v1018, 32
        %v1656 = vpop.permute.xlu0 %1655
        %1657 = vrot.lane.b32.xlu0 %v1021, 32
        %v1658 = vpop.permute.xlu0 %1657
        %1659 = vrot.lane.b32.xlu0 %v1023, 32
        %v1660 = vpop.permute.xlu0 %1659
        %1661 = vrot.lane.b32.xlu0 %v1026, 32
        %v1662 = vpop.permute.xlu0 %1661
        %1663 = vrot.lane.b32.xlu0 %v1028, 32
        %v1664 = vpop.permute.xlu0 %1663
        %1665 = vrot.lane.b32.xlu0 %v1031, 32
        %v1666 = vpop.permute.xlu0 %1665
        %1667 = vrot.lane.b32.xlu0 %v1033, 32
        %v1668 = vpop.permute.xlu0 %1667
        %1669 = vrot.lane.b32.xlu0 %v1036, 32
        %v1670 = vpop.permute.xlu0 %1669
        %1671 = vrot.lane.b32.xlu0 %v1038, 32
        %v1672 = vpop.permute.xlu0 %1671
        %1673 = vrot.lane.b32.xlu0 %v1041, 32
        %v1674 = vpop.permute.xlu0 %1673
        %1675 = vrot.lane.b32.xlu0 %v1043, 32
        %v1676 = vpop.permute.xlu0 %1675
        %1677 = vrot.lane.b32.xlu0 %v1046, 32
        %v1678 = vpop.permute.xlu0 %1677
        %1679 = vrot.lane.b32.xlu0 %v1048, 32
        %v1680 = vpop.permute.xlu0 %1679
        %1681 = vrot.lane.b32.xlu0 %v1051, 32
        %v1682 = vpop.permute.xlu0 %1681
        %1683 = vrot.lane.b32.xlu0 %v1053, 32
        %v1684 = vpop.permute.xlu0 %1683
        %1685 = vrot.lane.b32.xlu0 %v1056, 32
        %v1686 = vpop.permute.xlu0 %1685
        %1687 = vrot.lane.b32.xlu0 %v1058, 32
        %v1688 = vpop.permute.xlu0 %1687
        %1689 = vrot.lane.b32.xlu0 %v1061, 32
        %v1690 = vpop.permute.xlu0 %1689
        %1691 = vrot.lane.b32.xlu0 %v1063, 32
        %v1692 = vpop.permute.xlu0 %1691
        %1693 = vrot.lane.b32.xlu0 %v1066, 32
        %v1694 = vpop.permute.xlu0 %1693
        %1695 = vrot.lane.b32.xlu0 %v1068, 32
        %v1696 = vpop.permute.xlu0 %1695
        %1697 = vrot.lane.b32.xlu0 %v1071, 32
        %v1698 = vpop.permute.xlu0 %1697
        %1699 = vrot.lane.b32.xlu0 %v1073, 32
        %v1700 = vpop.permute.xlu0 %1699
        %1701 = vrot.lane.b32.xlu0 %v1076, 32
        %v1702 = vpop.permute.xlu0 %1701
        %1703 = vrot.lane.b32.xlu0 %v1078, 32
        %v1704 = vpop.permute.xlu0 %1703
        %1705 = vrot.lane.b32.xlu0 %v1370, 32
        %v1706 = vpop.permute.xlu0 %1705
        %1707 = vrot.lane.b32.xlu0 %v1372, 32
        %v1708 = vpop.permute.xlu0 %1707
        %vm1739 = vcmask 31744
        %v1740 = vsel %vm1739, %v775, %v914
        %v1741 = vsel %vm1739, %v650, %v916
        %v1742 = vsel %vm1739, %v776, %v918
        %v1743 = vsel %vm1739, %v653, %v920
        %v1744 = vsel %vm1739, %v777, %v922
        %v1745 = vsel %vm1739, %v656, %v924
        %v1746 = vsel %vm1739, %v778, %v926
        %v1747 = vsel %vm1739, %v659, %v928
        %v1748 = vsel %vm1739, %v779, %v930
        %v1749 = vsel %vm1739, %v662, %v932
        %v1750 = vsel %vm1739, %v780, %v934
        %v1751 = vsel %vm1739, %v665, %v936
        %v1752 = vsel %vm1739, %v781, %v938
        %v1753 = vsel %vm1739, %v668, %v940
        %v1754 = vsel %vm1739, %v782, %v942
        %v1755 = vsel %vm1739, %v671, %v944
        %v1756 = vsel %vm1739, %v783, %v946
        %v1757 = vsel %vm1739, %v674, %v948
        %v1758 = vsel %vm1739, %v784, %v950
        %v1759 = vsel %vm1739, %v677, %v952
        %v1760 = vsel %vm1739, %v785, %v954
        %v1761 = vsel %vm1739, %v680, %v956
        %v1762 = vsel %vm1739, %v786, %v958
        %v1763 = vsel %vm1739, %v683, %v960
        %v1764 = vsel %vm1739, %v787, %v962
        %v1765 = vsel %vm1739, %v686, %v964
        %v1766 = vsel %vm1739, %v788, %v966
        %v1767 = vsel %vm1739, %v689, %v968
        %v1768 = vsel %vm1739, %v789, %v970
        %v1769 = vsel %vm1739, %v692, %v972
        %vm1770 = vcmask 64512
        %v1771 = vsel %vm1770, %v1740, %v1080
        %v1772 = vsel %vm1770, %v1741, %v1082
        %v1773 = vsel %vm1770, %v1742, %v1084
        %v1774 = vsel %vm1770, %v1743, %v1086
        %v1775 = vsel %vm1770, %v1744, %v1088
        %v1776 = vsel %vm1770, %v1745, %v1090
        %v1777 = vsel %vm1770, %v1746, %v1092
        %v1778 = vsel %vm1770, %v1747, %v1094
        %v1779 = vsel %vm1770, %v1748, %v1096
        %v1780 = vsel %vm1770, %v1749, %v1098
        %v1781 = vsel %vm1770, %v1750, %v1100
        %v1782 = vsel %vm1770, %v1751, %v1102
        %v1783 = vsel %vm1770, %v1752, %v1104
        %v1784 = vsel %vm1770, %v1753, %v1106
        %v1785 = vsel %vm1770, %v1754, %v1108
        %v1786 = vsel %vm1770, %v1755, %v1110
        %v1787 = vsel %vm1770, %v1756, %v1112
        %v1788 = vsel %vm1770, %v1757, %v1114
        %v1789 = vsel %vm1770, %v1758, %v1116
        %v1790 = vsel %vm1770, %v1759, %v1118
        %v1791 = vsel %vm1770, %v1760, %v1120
        %v1792 = vsel %vm1770, %v1761, %v1122
        %v1793 = vsel %vm1770, %v1762, %v1124
        %v1794 = vsel %vm1770, %v1763, %v1126
        %v1795 = vsel %vm1770, %v1764, %v1128
        %v1796 = vsel %vm1770, %v1765, %v1130
        %v1797 = vsel %vm1770, %v1766, %v1132
        %v1798 = vsel %vm1770, %v1767, %v1134
        %v1799 = vsel %vm1770, %v1768, %v1136
        %v1800 = vsel %vm1770, %v1769, %v1138
        %vm1801 = vcmask 97280
        %v1802 = vsel %vm1801, %v1771, %v1171
        %v1803 = vsel %vm1801, %v1772, %v1173
        %v1804 = vsel %vm1801, %v1773, %v1175
        %v1805 = vsel %vm1801, %v1774, %v1177
        %v1806 = vsel %vm1801, %v1771, %v1179
        %v1807 = vsel %vm1801, %v1772, %v1181
        %v1808 = vsel %vm1801, %v1775, %v1183
        %v1809 = vsel %vm1801, %v1776, %v1185
        %v1810 = vsel %vm1801, %v1777, %v1187
        %v1811 = vsel %vm1801, %v1778, %v1189
        %v1812 = vsel %vm1801, %v1779, %v1191
        %v1813 = vsel %vm1801, %v1780, %v1193
        %v1814 = vsel %vm1801, %v1781, %v1195
        %v1815 = vsel %vm1801, %v1782, %v1197
        %v1816 = vsel %vm1801, %v1783, %v1199
        %v1817 = vsel %vm1801, %v1784, %v1201
        %v1818 = vsel %vm1801, %v1785, %v1203
        %v1819 = vsel %vm1801, %v1786, %v1205
        %v1820 = vsel %vm1801, %v1787, %v1207
        %v1821 = vsel %vm1801, %v1788, %v1209
        %v1822 = vsel %vm1801, %v1789, %v1211
        %v1823 = vsel %vm1801, %v1790, %v1213
        %v1824 = vsel %vm1801, %v1791, %v1215
        %v1825 = vsel %vm1801, %v1792, %v1217
        %v1826 = vsel %vm1801, %v1793, %v1219
        %v1827 = vsel %vm1801, %v1794, %v1221
        %v1828 = vsel %vm1801, %v1795, %v1223
        %v1829 = vsel %vm1801, %v1796, %v1225
        %v1830 = vsel %vm1801, %v1797, %v1227
        %v1831 = vsel %vm1801, %v1798, %v1229
        %v1832 = vsel %vm1801, %v1799, %v1231
        %v1833 = vsel %vm1801, %v1800, %v1233
        %vm1834 = vcmask 130048
        %v1835 = vsel %vm1834, %v1802, %v1273
        %v1836 = vsel %vm1834, %v1803, %v1275
        %v1837 = vsel %vm1834, %v1804, %v1277
        %v1838 = vsel %vm1834, %v1805, %v1279
        %v1839 = vsel %vm1834, %v1806, %v1281
        %v1840 = vsel %vm1834, %v1807, %v1283
        %v1841 = vsel %vm1834, %v1808, %v1285
        %v1842 = vsel %vm1834, %v1809, %v1287
        %v1843 = vsel %vm1834, %v1810, %v1289
        %v1844 = vsel %vm1834, %v1811, %v1291
        %v1845 = vsel %vm1834, %v1812, %v1293
        %v1846 = vsel %vm1834, %v1813, %v1295
        %v1847 = vsel %vm1834, %v1814, %v1297
        %v1848 = vsel %vm1834, %v1815, %v1299
        %v1849 = vsel %vm1834, %v1816, %v1301
        %v1850 = vsel %vm1834, %v1817, %v1303
        %v1851 = vsel %vm1834, %v1818, %v1305
        %v1852 = vsel %vm1834, %v1819, %v1307
        %v1853 = vsel %vm1834, %v1820, %v1309
        %v1854 = vsel %vm1834, %v1821, %v1311
        %v1855 = vsel %vm1834, %v1822, %v1313
        %v1856 = vsel %vm1834, %v1823, %v1315
        %v1857 = vsel %vm1834, %v1824, %v1317
        %v1858 = vsel %vm1834, %v1825, %v1319
        %v1859 = vsel %vm1834, %v1826, %v1321
        %v1860 = vsel %vm1834, %v1827, %v1323
        %v1861 = vsel %vm1834, %v1828, %v1325
        %v1862 = vsel %vm1834, %v1829, %v1327
        %v1863 = vsel %vm1834, %v1830, %v1329
        %v1864 = vsel %vm1834, %v1831, %v1331
        %v1865 = vsel %vm1834, %v1832, %v1333
        %v1866 = vsel %vm1834, %v1833, %v1335
        %vm1867 = vcmask 162816
        %v1868 = vsel %vm1867, %v1835, %v1374
        %v1869 = vsel %vm1867, %v1836, %v1376
        %v1870 = vsel %vm1867, %v1837, %v1378
        %v1871 = vsel %vm1867, %v1838, %v1380
        %v1872 = vsel %vm1867, %v1839, %v1382
        %v1873 = vsel %vm1867, %v1840, %v1384
        %v1874 = vsel %vm1867, %v1841, %v1386
        %v1875 = vsel %vm1867, %v1842, %v1388
        %v1876 = vsel %vm1867, %v1843, %v1390
        %v1877 = vsel %vm1867, %v1844, %v1392
        %v1878 = vsel %vm1867, %v1845, %v1394
        %v1879 = vsel %vm1867, %v1846, %v1396
        %v1880 = vsel %vm1867, %v1847, %v1398
        %v1881 = vsel %vm1867, %v1848, %v1400
        %v1882 = vsel %vm1867, %v1849, %v1402
        %v1883 = vsel %vm1867, %v1850, %v1404
        %v1884 = vsel %vm1867, %v1851, %v1406
        %v1885 = vsel %vm1867, %v1852, %v1408
        %v1886 = vsel %vm1867, %v1853, %v1410
        %v1887 = vsel %vm1867, %v1854, %v1412
        %v1888 = vsel %vm1867, %v1855, %v1414
        %v1889 = vsel %vm1867, %v1856, %v1416
        %v1890 = vsel %vm1867, %v1857, %v1418
        %v1891 = vsel %vm1867, %v1858, %v1420
        %v1892 = vsel %vm1867, %v1859, %v1422
        %v1893 = vsel %vm1867, %v1860, %v1424
        %v1894 = vsel %vm1867, %v1861, %v1426
        %v1895 = vsel %vm1867, %v1862, %v1428
        %v1896 = vsel %vm1867, %v1863, %v1430
        %v1897 = vsel %vm1867, %v1864, %v1432
        %v1898 = vsel %vm1867, %v1865, %v1434
        %v1899 = vsel %vm1867, %v1866, %v1436
        %vm1900 = vcmask 195584
        %v1901 = vsel %vm1900, %v1868, %v1470
        %v1902 = vsel %vm1900, %v1869, %v1472
        %v1903 = vsel %vm1900, %v1870, %v1474
        %v1904 = vsel %vm1900, %v1871, %v1476
        %v1905 = vsel %vm1900, %v1872, %v1478
        %v1906 = vsel %vm1900, %v1873, %v1480
        %v1907 = vsel %vm1900, %v1874, %v1482
        %v1908 = vsel %vm1900, %v1875, %v1484
        %v1909 = vsel %vm1900, %v1876, %v1486
        %v1910 = vsel %vm1900, %v1877, %v1488
        %v1911 = vsel %vm1900, %v1878, %v1490
        %v1912 = vsel %vm1900, %v1879, %v1492
        %v1913 = vsel %vm1900, %v1880, %v1494
        %v1914 = vsel %vm1900, %v1881, %v1496
        %v1915 = vsel %vm1900, %v1882, %v1498
        %v1916 = vsel %vm1900, %v1883, %v1500
        %v1917 = vsel %vm1900, %v1884, %v1502
        %v1918 = vsel %vm1900, %v1885, %v1504
        %v1919 = vsel %vm1900, %v1886, %v1506
        %v1920 = vsel %vm1900, %v1887, %v1508
        %v1921 = vsel %vm1900, %v1888, %v1510
        %v1922 = vsel %vm1900, %v1889, %v1512
        %v1923 = vsel %vm1900, %v1890, %v1514
        %v1924 = vsel %vm1900, %v1891, %v1516
        %v1925 = vsel %vm1900, %v1892, %v1518
        %v1926 = vsel %vm1900, %v1893, %v1520
        %v1927 = vsel %vm1900, %v1894, %v1522
        %v1928 = vsel %vm1900, %v1895, %v1524
        %v1929 = vsel %vm1900, %v1896, %v1526
        %v1930 = vsel %vm1900, %v1897, %v1528
        %v1931 = vsel %vm1900, %v1898, %v1522
        %v1932 = vsel %vm1900, %v1899, %v1524
        %vm1933 = vcmask 228352
        %v1934 = vsel %vm1933, %v1901, %v1560
        %v1935 = vsel %vm1933, %v1902, %v1562
        %v1936 = vsel %vm1933, %v1903, %v1564
        %v1937 = vsel %vm1933, %v1904, %v1566
        %v1938 = vsel %vm1933, %v1905, %v1568
        %v1939 = vsel %vm1933, %v1906, %v1570
        %v1940 = vsel %vm1933, %v1907, %v1572
        %v1941 = vsel %vm1933, %v1908, %v1574
        %v1942 = vsel %vm1933, %v1909, %v1576
        %v1943 = vsel %vm1933, %v1910, %v1578
        %v1944 = vsel %vm1933, %v1911, %v1580
        %v1945 = vsel %vm1933, %v1912, %v1582
        %v1946 = vsel %vm1933, %v1913, %v1584
        %v1947 = vsel %vm1933, %v1914, %v1586
        %v1948 = vsel %vm1933, %v1915, %v1588
        %v1949 = vsel %vm1933, %v1916, %v1590
        %v1950 = vsel %vm1933, %v1917, %v1592
        %v1951 = vsel %vm1933, %v1918, %v1594
        %v1952 = vsel %vm1933, %v1919, %v1596
        %v1953 = vsel %vm1933, %v1920, %v1598
        %v1954 = vsel %vm1933, %v1921, %v1600
        %v1955 = vsel %vm1933, %v1922, %v1602
        %v1956 = vsel %vm1933, %v1923, %v1604
        %v1957 = vsel %vm1933, %v1924, %v1606
        %v1958 = vsel %vm1933, %v1925, %v1608
        %v1959 = vsel %vm1933, %v1926, %v1610
        %v1960 = vsel %vm1933, %v1927, %v1612
        %v1961 = vsel %vm1933, %v1928, %v1614
        %v1962 = vsel %vm1933, %v1929, %v1616
        %v1963 = vsel %vm1933, %v1930, %v1618
        %v1964 = vsel %vm1933, %v1931, %v1612
        %v1965 = vsel %vm1933, %v1932, %v1614
        %vm1966 = vcmask 261120
        %v1967 = vsel %vm1966, %v1934, %v1650
        %v1968 = vsel %vm1966, %v1935, %v1652
        %v1969 = vsel %vm1966, %v1936, %v1654
        %v1970 = vsel %vm1966, %v1937, %v1656
        %v1971 = vsel %vm1966, %v1938, %v1658
        %v1972 = vsel %vm1966, %v1939, %v1660
        %v1973 = vsel %vm1966, %v1940, %v1662
        %v1974 = vsel %vm1966, %v1941, %v1664
        %v1975 = vsel %vm1966, %v1942, %v1666
        %v1976 = vsel %vm1966, %v1943, %v1668
        %v1977 = vsel %vm1966, %v1944, %v1670
        %v1978 = vsel %vm1966, %v1945, %v1672
        %v1979 = vsel %vm1966, %v1946, %v1674
        %v1980 = vsel %vm1966, %v1947, %v1676
        %v1981 = vsel %vm1966, %v1948, %v1678
        %v1982 = vsel %vm1966, %v1949, %v1680
        %v1983 = vsel %vm1966, %v1950, %v1682
        %v1984 = vsel %vm1966, %v1951, %v1684
        %v1985 = vsel %vm1966, %v1952, %v1686
        %v1986 = vsel %vm1966, %v1953, %v1688
        %v1987 = vsel %vm1966, %v1954, %v1690
        %v1988 = vsel %vm1966, %v1955, %v1692
        %v1989 = vsel %vm1966, %v1956, %v1694
        %v1990 = vsel %vm1966, %v1957, %v1696
        %v1991 = vsel %vm1966, %v1958, %v1698
        %v1992 = vsel %vm1966, %v1959, %v1700
        %v1993 = vsel %vm1966, %v1960, %v1702
        %v1994 = vsel %vm1966, %v1961, %v1704
        %v1995 = vsel %vm1966, %v1962, %v1706
        %v1996 = vsel %vm1966, %v1963, %v1708
        %v1997 = vsel %vm1966, %v1964, %v1702
        %v1998 = vsel %vm1966, %v1965, %v1704
        %v1999 = vld [vmem:[%s0] sm:$0xff]
        %v2000 = vld [vmem:[%s0 + $0x8] sm:$0xff]
        %v2001 = vld [vmem:[%s0 + $0x10] sm:$0xff]
        %v2002 = vld [vmem:[%s0 + $0x18] sm:$0xff]
        %v2003 = vld [vmem:[%s0 + $0x20] sm:$0xf]
        %v2004 = vld [vmem:[#allocation2] sm:$0x1]
        %v2006 = vlaneseq
        %v2007 = vshrl.u32 %v2006, 7
        %v2008 = vsub.s32 0, %v2007
        %v2009 = vrot.slane %v2004, %v2008
        %vm2011 = vcmask 293888
        %v2013 = vsel %vm2011, %v1967, 0
        %v2016 = vsel %vm2011, %v1968, 0
        %v2019 = vsel %vm2011, %v1969, 0
        %v2022 = vsel %vm2011, %v1970, 0
        %v2025 = vsel %vm2011, %v1971, 0
        %v2028 = vsel %vm2011, %v1972, 0
        %v2031 = vsel %vm2011, %v1973, 0
        %v2034 = vsel %vm2011, %v1974, 0
        %v2037 = vsel %vm2011, %v1975, 0
        %v2040 = vsel %vm2011, %v1976, 0
        %v2043 = vsel %vm2011, %v1977, 0
        %v2046 = vsel %vm2011, %v1978, 0
        %v2049 = vsel %vm2011, %v1979, 0
        %v2052 = vsel %vm2011, %v1980, 0
        %v2055 = vsel %vm2011, %v1981, 0
        %v2058 = vsel %vm2011, %v1982, 0
        %v2061 = vsel %vm2011, %v1983, 0
        %v2064 = vsel %vm2011, %v1984, 0
        %v2067 = vsel %vm2011, %v1985, 0
        %v2070 = vsel %vm2011, %v1986, 0
        %v2073 = vsel %vm2011, %v1987, 0
        %v2076 = vsel %vm2011, %v1988, 0
        %v2079 = vsel %vm2011, %v1989, 0
        %v2082 = vsel %vm2011, %v1990, 0
        %v2085 = vsel %vm2011, %v1991, 0
        %v2088 = vsel %vm2011, %v1992, 0
        %v2091 = vsel %vm2011, %v1993, 0
        %v2094 = vsel %vm2011, %v1994, 0
        %v2097 = vsel %vm2011, %v1995, 0
        %v2100 = vsel %vm2011, %v1996, 0
        %v2103 = vsel %vm2011, %v1997, 0
        %v2106 = vsel %vm2011, %v1998, 0
        %vm2108 = vcmask 1043456
        %v2110 = vsel %vm2108, %v2003, 0
        %2112 = vmatprep.subr.mxu0 0.0
        %2113 = vmatpush1.msra.mxu0 %v1999
        %2114 = vmatprep.subr.mxu0 0.0
        %2115 = vmatpush1.msra.mxu0 %v2000
        %2116 = vmatprep.subr.mxu0 0.0
        %2117 = vmatpush1.msra.mxu0 %v2001
        %2118 = vmatprep.subr.mxu0 0.0
        %2119 = vmatpush1.msra.mxu0 %v2002
        %2120 = vmatprep.subr.mxu0 0.0
        %2121 = vmatpush1.msra.mxu0 %v2110
        %2122 = vmatprep.subr.mxu0 0.0
        %2123 = vmatpush1.msra.mxu0 0.0
        %2124 = vmatprep.subr.mxu0 0.0
        %2125 = vmatpush1.msra.mxu0 0.0
        %2126 = vmatprep.subr.mxu0 0.0
        %2127 = vmatpush1.msra.mxu0 0.0
        %2128 = vmatprep.subr.mxu0 0.0
        %2129 = vmatpush1.msra.mxu0 0.0
        %2130 = vmatprep.subr.mxu0 0.0
        %2131 = vmatpush1.msra.mxu0 0.0
        %2132 = vmatprep.subr.mxu0 0.0
        %2133 = vmatpush1.msra.mxu0 0.0
        %2134 = vmatprep.subr.mxu0 0.0
        %2135 = vmatpush1.msra.mxu0 0.0
        %2136 = vmatprep.subr.mxu0 0.0
        %2137 = vmatpush1.msra.mxu0 0.0
        %2138 = vmatprep.subr.mxu0 0.0
        %2139 = vmatpush1.msra.mxu0 0.0
        %2140 = vmatprep.subr.mxu0 0.0
        %2141 = vmatpush1.msra.mxu0 0.0
        %2142 = vmatprep.subr.mxu0 0.0
        %2143 = vmatpush1.msra.mxu0 0.0
        %2144 = vmatprep.subr.mxu0 0.0
        %2145 = vmatpush1.msra.mxu0 0.0
        %2146 = vmatprep.subr.mxu0 0.0
        %2147 = vmatpush1.msra.mxu0 0.0
        %2148 = vmatprep.subr.mxu0 0.0
        %2149 = vmatpush1.msra.mxu0 0.0
        %2150 = vmatprep.subr.mxu0 0.0
        %2151 = vmatpush1.msra.mxu0 0.0
        %2152 = vmatprep.subr.mxu0 0.0
        %2153 = vmatpush1.msra.mxu0 0.0
        %2154 = vmatprep.subr.mxu0 0.0
        %2155 = vmatpush1.msra.mxu0 0.0
        %2156 = vmatprep.subr.mxu0 0.0
        %2157 = vmatpush1.msra.mxu0 0.0
        %2158 = vmatprep.subr.mxu0 0.0
        %2159 = vmatpush1.msra.mxu0 0.0
        %2160 = vmatprep.subr.mxu0 0.0
        %2161 = vmatpush1.msra.mxu0 0.0
        %2162 = vmatprep.subr.mxu0 0.0
        %2163 = vmatpush1.msra.mxu0 0.0
        %2164 = vmatprep.subr.mxu0 0.0
        %2165 = vmatpush1.msra.mxu0 0.0
        %2166 = vmatprep.subr.mxu0 0.0
        %2167 = vmatpush1.msra.mxu0 0.0
        %2168 = vmatprep.subr.mxu0 0.0
        %2169 = vmatpush1.msra.mxu0 0.0
        %2170 = vmatprep.subr.mxu0 0.0
        %2171 = vmatpush1.msra.mxu0 0.0
        %2172 = vmatprep.subr.mxu0 0.0
        %2173 = vmatpush1.msra.mxu0 0.0
        %2174 = vmatprep.subr.mxu0 0.0
        %2175 = vmatpush1.msra.mxu0 0.0
        %2176 = vmatprep.mubr.f32.mxu0 0.0
        %2177 = vmatmul.mubr.f32.gmra.mrb[0].mxu0 %v2013
        %v2178 = vpop.f32.mrb[0].mxu0
        %v2179 = vadd.f32 %v2009, %v2178
        %v2180 = vpop.f32.mrb[0].mxu0
        %2181 = vmatprep.mubr.f32.mxu0 0.0
        %2182 = vmatmul.mubr.f32.gmra.mrb[0].mxu0 %v2016
        %v2183 = vpop.f32.mrb[0].mxu0
        %v2184 = vadd.f32 %v2009, %v2183
        %v2185 = vpop.f32.mrb[0].mxu0
        %2186 = vmatprep.mubr.f32.mxu0 0.0
        %2187 = vmatmul.mubr.f32.gmra.mrb[0].mxu0 %v2019
        %v2188 = vpop.f32.mrb[0].mxu0
        %v2189 = vadd.f32 %v2009, %v2188
        %v2190 = vpop.f32.mrb[0].mxu0
        %2191 = vmatprep.mubr.f32.mxu0 0.0
        %2192 = vmatmul.mubr.f32.gmra.mrb[0].mxu0 %v2022
        %v2193 = vpop.f32.mrb[0].mxu0
        %v2194 = vadd.f32 %v2009, %v2193
        %v2195 = vpop.f32.mrb[0].mxu0
        %2196 = vmatprep.mubr.f32.mxu0 0.0
        %2197 = vmatmul.mubr.f32.gmra.mrb[0].mxu0 %v2025
        %v2198 = vpop.f32.mrb[0].mxu0
        %v2199 = vadd.f32 %v2009, %v2198
        %v2200 = vpop.f32.mrb[0].mxu0
        %2201 = vmatprep.mubr.f32.mxu0 0.0
        %2202 = vmatmul.mubr.f32.gmra.mrb[0].mxu0 %v2028
        %v2203 = vpop.f32.mrb[0].mxu0
        %v2204 = vadd.f32 %v2009, %v2203
        %v2205 = vpop.f32.mrb[0].mxu0
        %2206 = vmatprep.mubr.f32.mxu0 0.0
        %2207 = vmatmul.mubr.f32.gmra.mrb[0].mxu0 %v2031
        %v2208 = vpop.f32.mrb[0].mxu0
        %v2209 = vadd.f32 %v2009, %v2208
        %v2210 = vpop.f32.mrb[0].mxu0
        %2211 = vmatprep.mubr.f32.mxu0 0.0
        %2212 = vmatmul.mubr.f32.gmra.mrb[0].mxu0 %v2034
        %v2213 = vpop.f32.mrb[0].mxu0
        %v2214 = vadd.f32 %v2009, %v2213
        %v2215 = vpop.f32.mrb[0].mxu0
        %2216 = vmatprep.mubr.f32.mxu0 0.0
        %2217 = vmatmul.mubr.f32.gmra.mrb[0].mxu0 %v2037
        %v2218 = vpop.f32.mrb[0].mxu0
        %v2219 = vadd.f32 %v2009, %v2218
        %v2220 = vpop.f32.mrb[0].mxu0
        %2221 = vmatprep.mubr.f32.mxu0 0.0
        %2222 = vmatmul.mubr.f32.gmra.mrb[0].mxu0 %v2040
        %v2223 = vpop.f32.mrb[0].mxu0
        %v2224 = vadd.f32 %v2009, %v2223
        %v2225 = vpop.f32.mrb[0].mxu0
        %2226 = vmatprep.mubr.f32.mxu0 0.0
        %2227 = vmatmul.mubr.f32.gmra.mrb[0].mxu0 %v2043
        %v2228 = vpop.f32.mrb[0].mxu0
        %v2229 = vadd.f32 %v2009, %v2228
        %v2230 = vpop.f32.mrb[0].mxu0
        %2231 = vmatprep.mubr.f32.mxu0 0.0
        %2232 = vmatmul.mubr.f32.gmra.mrb[0].mxu0 %v2046
        %v2233 = vpop.f32.mrb[0].mxu0
        %v2234 = vadd.f32 %v2009, %v2233
        %v2235 = vpop.f32.mrb[0].mxu0
        %2236 = vmatprep.mubr.f32.mxu0 0.0
        %2237 = vmatmul.mubr.f32.gmra.mrb[0].mxu0 %v2049
        %v2238 = vpop.f32.mrb[0].mxu0
        %v2239 = vadd.f32 %v2009, %v2238
        %v2240 = vpop.f32.mrb[0].mxu0
        %2241 = vmatprep.mubr.f32.mxu0 0.0
        %2242 = vmatmul.mubr.f32.gmra.mrb[0].mxu0 %v2052
        %v2243 = vpop.f32.mrb[0].mxu0
        %v2244 = vadd.f32 %v2009, %v2243
        %v2245 = vpop.f32.mrb[0].mxu0
        %2246 = vmatprep.mubr.f32.mxu0 0.0
        %2247 = vmatmul.mubr.f32.gmra.mrb[0].mxu0 %v2055
        %v2248 = vpop.f32.mrb[0].mxu0
        %v2249 = vadd.f32 %v2009, %v2248
        %v2250 = vpop.f32.mrb[0].mxu0
        %2251 = vmatprep.mubr.f32.mxu0 0.0
        %2252 = vmatmul.mubr.f32.gmra.mrb[0].mxu0 %v2058
        %v2253 = vpop.f32.mrb[0].mxu0
        %v2254 = vadd.f32 %v2009, %v2253
        %v2255 = vpop.f32.mrb[0].mxu0
        %2256 = vmatprep.mubr.f32.mxu0 0.0
        %2257 = vmatmul.mubr.f32.gmra.mrb[0].mxu0 %v2061
        %v2258 = vpop.f32.mrb[0].mxu0
        %v2259 = vadd.f32 %v2009, %v2258
        %v2260 = vpop.f32.mrb[0].mxu0
        %2261 = vmatprep.mubr.f32.mxu0 0.0
        %2262 = vmatmul.mubr.f32.gmra.mrb[0].mxu0 %v2064
        %v2263 = vpop.f32.mrb[0].mxu0
        %v2264 = vadd.f32 %v2009, %v2263
        %v2265 = vpop.f32.mrb[0].mxu0
        %2266 = vmatprep.mubr.f32.mxu0 0.0
        %2267 = vmatmul.mubr.f32.gmra.mrb[0].mxu0 %v2067
        %v2268 = vpop.f32.mrb[0].mxu0
        %v2269 = vadd.f32 %v2009, %v2268
        %v2270 = vpop.f32.mrb[0].mxu0
        %2271 = vmatprep.mubr.f32.mxu0 0.0
        %2272 = vmatmul.mubr.f32.gmra.mrb[0].mxu0 %v2070
        %v2273 = vpop.f32.mrb[0].mxu0
        %v2274 = vadd.f32 %v2009, %v2273
        %v2275 = vpop.f32.mrb[0].mxu0
        %2276 = vmatprep.mubr.f32.mxu0 0.0
        %2277 = vmatmul.mubr.f32.gmra.mrb[0].mxu0 %v2073
        %v2278 = vpop.f32.mrb[0].mxu0
        %v2279 = vadd.f32 %v2009, %v2278
        %v2280 = vpop.f32.mrb[0].mxu0
        %2281 = vmatprep.mubr.f32.mxu0 0.0
        %2282 = vmatmul.mubr.f32.gmra.mrb[0].mxu0 %v2076
        %v2283 = vpop.f32.mrb[0].mxu0
        %v2284 = vadd.f32 %v2009, %v2283
        %v2285 = vpop.f32.mrb[0].mxu0
        %2286 = vmatprep.mubr.f32.mxu0 0.0
        %2287 = vmatmul.mubr.f32.gmra.mrb[0].mxu0 %v2079
        %v2288 = vpop.f32.mrb[0].mxu0
        %v2289 = vadd.f32 %v2009, %v2288
        %v2290 = vpop.f32.mrb[0].mxu0
        %2291 = vmatprep.mubr.f32.mxu0 0.0
        %2292 = vmatmul.mubr.f32.gmra.mrb[0].mxu0 %v2082
        %v2293 = vpop.f32.mrb[0].mxu0
        %v2294 = vadd.f32 %v2009, %v2293
        %v2295 = vpop.f32.mrb[0].mxu0
        %2296 = vmatprep.mubr.f32.mxu0 0.0
        %2297 = vmatmul.mubr.f32.gmra.mrb[0].mxu0 %v2085
        %v2298 = vpop.f32.mrb[0].mxu0
        %v2299 = vadd.f32 %v2009, %v2298
        %v2300 = vpop.f32.mrb[0].mxu0
        %2301 = vmatprep.mubr.f32.mxu0 0.0
        %2302 = vmatmul.mubr.f32.gmra.mrb[0].mxu0 %v2088
        %v2303 = vpop.f32.mrb[0].mxu0
        %v2304 = vadd.f32 %v2009, %v2303
        %v2305 = vpop.f32.mrb[0].mxu0
        %2306 = vmatprep.mubr.f32.mxu0 0.0
        %2307 = vmatmul.mubr.f32.gmra.mrb[0].mxu0 %v2091
        %v2308 = vpop.f32.mrb[0].mxu0
        %v2309 = vadd.f32 %v2009, %v2308
        %v2310 = vpop.f32.mrb[0].mxu0
        %2311 = vmatprep.mubr.f32.mxu0 0.0
        %2312 = vmatmul.mubr.f32.gmra.mrb[0].mxu0 %v2094
        %v2313 = vpop.f32.mrb[0].mxu0
        %v2314 = vadd.f32 %v2009, %v2313
        %v2315 = vpop.f32.mrb[0].mxu0
        %2316 = vmatprep.mubr.f32.mxu0 0.0
        %2317 = vmatmul.mubr.f32.gmra.mrb[0].mxu0 %v2097
        %v2318 = vpop.f32.mrb[0].mxu0
        %v2319 = vadd.f32 %v2009, %v2318
        %v2320 = vpop.f32.mrb[0].mxu0
        %2321 = vmatprep.mubr.f32.mxu0 0.0
        %2322 = vmatmul.mubr.f32.gmra.mrb[0].mxu0 %v2100
        %v2323 = vpop.f32.mrb[0].mxu0
        %v2324 = vadd.f32 %v2009, %v2323
        %v2325 = vpop.f32.mrb[0].mxu0
        %2326 = vmatprep.mubr.f32.mxu0 0.0
        %2327 = vmatmul.mubr.f32.gmra.mrb[0].mxu0 %v2103
        %v2328 = vpop.f32.mrb[0].mxu0
        %v2329 = vadd.f32 %v2009, %v2328
        %v2330 = vpop.f32.mrb[0].mxu0
        %2331 = vmatprep.mubr.f32.mxu0 0.0
        %2332 = vmatmul.mubr.f32.gmra.mrb[0].mxu0 %v2106
        %v2333 = vpop.f32.mrb[0].mxu0
        %v2334 = vadd.f32 %v2009, %v2333
        %v2335 = vpop.f32.mrb[0].mxu0
        %2336 = vdwg.mxu0
        %vm2337 = vcmp.gt.f32.partialorder %v2179, 0.0
        %vm2338 = vcmp.gt.f32.partialorder %v2184, 0.0
        %vm2339 = vcmp.gt.f32.partialorder %v2189, 0.0
        %vm2340 = vcmp.gt.f32.partialorder %v2194, 0.0
        %vm2341 = vcmp.gt.f32.partialorder %v2199, 0.0
        %vm2342 = vcmp.gt.f32.partialorder %v2204, 0.0
        %vm2343 = vcmp.gt.f32.partialorder %v2209, 0.0
        %vm2344 = vcmp.gt.f32.partialorder %v2214, 0.0
        %vm2345 = vcmp.gt.f32.partialorder %v2219, 0.0
        %vm2346 = vcmp.gt.f32.partialorder %v2224, 0.0
        %vm2347 = vcmp.gt.f32.partialorder %v2229, 0.0
        %vm2348 = vcmp.gt.f32.partialorder %v2234, 0.0
        %vm2349 = vcmp.gt.f32.partialorder %v2239, 0.0
        %vm2350 = vcmp.gt.f32.partialorder %v2244, 0.0
        %vm2351 = vcmp.gt.f32.partialorder %v2249, 0.0
        %vm2352 = vcmp.gt.f32.partialorder %v2254, 0.0
        %vm2353 = vcmp.gt.f32.partialorder %v2259, 0.0
        %vm2354 = vcmp.gt.f32.partialorder %v2264, 0.0
        %vm2355 = vcmp.gt.f32.partialorder %v2269, 0.0
        %vm2356 = vcmp.gt.f32.partialorder %v2274, 0.0
        %vm2357 = vcmp.gt.f32.partialorder %v2279, 0.0
        %vm2358 = vcmp.gt.f32.partialorder %v2284, 0.0
        %vm2359 = vcmp.gt.f32.partialorder %v2289, 0.0
        %vm2360 = vcmp.gt.f32.partialorder %v2294, 0.0
        %vm2361 = vcmp.gt.f32.partialorder %v2299, 0.0
        %vm2362 = vcmp.gt.f32.partialorder %v2304, 0.0
        %vm2363 = vcmp.gt.f32.partialorder %v2309, 0.0
        %vm2364 = vcmp.gt.f32.partialorder %v2314, 0.0
        %vm2365 = vcmp.gt.f32.partialorder %v2319, 0.0
        %vm2366 = vcmp.gt.f32.partialorder %v2324, 0.0
        %vm2367 = vcmp.gt.f32.partialorder %v2329, 0.0
        %vm2368 = vcmp.gt.f32.partialorder %v2334, 0.0
        %v2369 = vmul.f32 %v2179, 0.02
        %v2370 = vmul.f32 %v2184, 0.02
        %v2371 = vmul.f32 %v2189, 0.02
        %v2372 = vmul.f32 %v2194, 0.02
        %v2373 = vmul.f32 %v2199, 0.02
        %v2374 = vmul.f32 %v2204, 0.02
        %v2375 = vmul.f32 %v2209, 0.02
        %v2376 = vmul.f32 %v2214, 0.02
        %v2377 = vmul.f32 %v2219, 0.02
        %v2378 = vmul.f32 %v2224, 0.02
        %v2379 = vmul.f32 %v2229, 0.02
        %v2380 = vmul.f32 %v2234, 0.02
        %v2381 = vmul.f32 %v2239, 0.02
        %v2382 = vmul.f32 %v2244, 0.02
        %v2383 = vmul.f32 %v2249, 0.02
        %v2384 = vmul.f32 %v2254, 0.02
        %v2385 = vmul.f32 %v2259, 0.02
        %v2386 = vmul.f32 %v2264, 0.02
        %v2387 = vmul.f32 %v2269, 0.02
        %v2388 = vmul.f32 %v2274, 0.02
        %v2389 = vmul.f32 %v2279, 0.02
        %v2390 = vmul.f32 %v2284, 0.02
        %v2391 = vmul.f32 %v2289, 0.02
        %v2392 = vmul.f32 %v2294, 0.02
        %v2393 = vmul.f32 %v2299, 0.02
        %v2394 = vmul.f32 %v2304, 0.02
        %v2395 = vmul.f32 %v2309, 0.02
        %v2396 = vmul.f32 %v2314, 0.02
        %v2397 = vmul.f32 %v2319, 0.02
        %v2398 = vmul.f32 %v2324, 0.02
        %v2399 = vmul.f32 %v2329, 0.02
        %v2400 = vmul.f32 %v2334, 0.02
        %v2401 = vsel %vm2337, %v2179, %v2369
        %v2402 = vsel %vm2338, %v2184, %v2370
        %v2403 = vsel %vm2339, %v2189, %v2371
        %v2404 = vsel %vm2340, %v2194, %v2372
        %v2405 = vsel %vm2341, %v2199, %v2373
        %v2406 = vsel %vm2342, %v2204, %v2374
        %v2407 = vsel %vm2343, %v2209, %v2375
        %v2408 = vsel %vm2344, %v2214, %v2376
        %v2409 = vsel %vm2345, %v2219, %v2377
        %v2410 = vsel %vm2346, %v2224, %v2378
        %v2411 = vsel %vm2347, %v2229, %v2379
        %v2412 = vsel %vm2348, %v2234, %v2380
        %v2413 = vsel %vm2349, %v2239, %v2381
        %v2414 = vsel %vm2350, %v2244, %v2382
        %v2415 = vsel %vm2351, %v2249, %v2383
        %v2416 = vsel %vm2352, %v2254, %v2384
        %v2417 = vsel %vm2353, %v2259, %v2385
        %v2418 = vsel %vm2354, %v2264, %v2386
        %v2419 = vsel %vm2355, %v2269, %v2387
        %v2420 = vsel %vm2356, %v2274, %v2388
        %v2421 = vsel %vm2357, %v2279, %v2389
        %v2422 = vsel %vm2358, %v2284, %v2390
        %v2423 = vsel %vm2359, %v2289, %v2391
        %v2424 = vsel %vm2360, %v2294, %v2392
        %v2425 = vsel %vm2361, %v2299, %v2393
        %v2426 = vsel %vm2362, %v2304, %v2394
        %v2427 = vsel %vm2363, %v2309, %v2395
        %v2428 = vsel %vm2364, %v2314, %v2396
        %v2429 = vsel %vm2365, %v2319, %v2397
        %v2430 = vsel %vm2366, %v2324, %v2398
        %v2431 = vsel %vm2367, %v2329, %v2399
        %v2432 = vsel %vm2368, %v2334, %v2400
        %v2449 = vrot.slane %v2403, 1
        %v2450 = vrot.slane %v2401, 1
        %v2451 = vrot.slane %v2405, 1
        %v2452 = vrot.slane %v2407, 1
        %v2453 = vrot.slane %v2409, 1
        %v2454 = vrot.slane %v2411, 1
        %v2455 = vrot.slane %v2413, 1
        %v2456 = vrot.slane %v2415, 1
        %v2457 = vrot.slane %v2417, 1
        %v2458 = vrot.slane %v2419, 1
        %v2459 = vrot.slane %v2421, 1
        %v2460 = vrot.slane %v2423, 1
        %v2461 = vrot.slane %v2425, 1
        %v2462 = vrot.slane %v2427, 1
        %v2463 = vrot.slane %v2429, 1
        %v2464 = vrot.slane %v2431, 1
        %v2497 = vrot.slane %v2403, 7
        %v2498 = vrot.slane %v2404, 7
        %v2499 = vsel %vm647, %v2497, %v2498
        %v2500 = vrot.slane %v2401, 7
        %v2501 = vrot.slane %v2402, 7
        %v2502 = vsel %vm647, %v2500, %v2501
        %v2503 = vrot.slane %v2405, 7
        %v2504 = vrot.slane %v2406, 7
        %v2505 = vsel %vm647, %v2503, %v2504
        %v2506 = vrot.slane %v2407, 7
        %v2507 = vrot.slane %v2408, 7
        %v2508 = vsel %vm647, %v2506, %v2507
        %v2509 = vrot.slane %v2409, 7
        %v2510 = vrot.slane %v2410, 7
        %v2511 = vsel %vm647, %v2509, %v2510
        %v2512 = vrot.slane %v2411, 7
        %v2513 = vrot.slane %v2412, 7
        %v2514 = vsel %vm647, %v2512, %v2513
        %v2515 = vrot.slane %v2413, 7
        %v2516 = vrot.slane %v2414, 7
        %v2517 = vsel %vm647, %v2515, %v2516
        %v2518 = vrot.slane %v2415, 7
        %v2519 = vrot.slane %v2416, 7
        %v2520 = vsel %vm647, %v2518, %v2519
        %v2521 = vrot.slane %v2417, 7
        %v2522 = vrot.slane %v2418, 7
        %v2523 = vsel %vm647, %v2521, %v2522
        %v2524 = vrot.slane %v2419, 7
        %v2525 = vrot.slane %v2420, 7
        %v2526 = vsel %vm647, %v2524, %v2525
        %v2527 = vrot.slane %v2421, 7
        %v2528 = vrot.slane %v2422, 7
        %v2529 = vsel %vm647, %v2527, %v2528
        %v2530 = vrot.slane %v2423, 7
        %v2531 = vrot.slane %v2424, 7
        %v2532 = vsel %vm647, %v2530, %v2531
        %v2533 = vrot.slane %v2425, 7
        %v2534 = vrot.slane %v2426, 7
        %v2535 = vsel %vm647, %v2533, %v2534
        %v2536 = vrot.slane %v2427, 7
        %v2537 = vrot.slane %v2428, 7
        %v2538 = vsel %vm647, %v2536, %v2537
        %v2539 = vrot.slane %v2429, 7
        %v2540 = vrot.slane %v2430, 7
        %v2541 = vsel %vm647, %v2539, %v2540
        %v2542 = vrot.slane %v2431, 7
        %v2543 = vrot.slane %v2432, 7
        %v2544 = vsel %vm647, %v2542, %v2543
        %v2592 = vrot.slane %v2404, 5
        %v2593 = vrot.slane %v2402, 5
        %v2594 = vrot.slane %v2406, 5
        %v2595 = vrot.slane %v2408, 5
        %v2596 = vrot.slane %v2410, 5
        %v2597 = vrot.slane %v2412, 5
        %v2598 = vrot.slane %v2414, 5
        %v2599 = vrot.slane %v2416, 5
        %v2600 = vrot.slane %v2418, 5
        %v2601 = vrot.slane %v2420, 5
        %v2602 = vrot.slane %v2422, 5
        %v2603 = vrot.slane %v2424, 5
        %v2604 = vrot.slane %v2426, 5
        %v2605 = vrot.slane %v2428, 5
        %v2606 = vrot.slane %v2430, 5
        %v2607 = vrot.slane %v2432, 5
        %v2624 = vsel %vm647, %v2449, %v2497
        %v2625 = vsel %vm647, %v2450, %v2500
        %v2626 = vsel %vm647, %v2451, %v2503
        %v2627 = vsel %vm647, %v2452, %v2506
        %v2628 = vsel %vm647, %v2453, %v2509
        %v2629 = vsel %vm647, %v2454, %v2512
        %v2630 = vsel %vm647, %v2455, %v2515
        %v2631 = vsel %vm647, %v2456, %v2518
        %v2632 = vsel %vm647, %v2457, %v2521
        %v2633 = vsel %vm647, %v2458, %v2524
        %v2634 = vsel %vm647, %v2459, %v2527
        %v2635 = vsel %vm647, %v2460, %v2530
        %v2636 = vsel %vm647, %v2461, %v2533
        %v2637 = vsel %vm647, %v2462, %v2536
        %v2638 = vsel %vm647, %v2463, %v2539
        %v2639 = vsel %vm647, %v2464, %v2542
        %v2640 = vsel %vm647, %v2498, %v2592
        %v2641 = vsel %vm647, %v2501, %v2593
        %v2642 = vsel %vm647, %v2504, %v2594
        %v2643 = vsel %vm647, %v2507, %v2595
        %v2644 = vsel %vm647, %v2510, %v2596
        %v2645 = vsel %vm647, %v2513, %v2597
        %v2646 = vsel %vm647, %v2516, %v2598
        %v2647 = vsel %vm647, %v2519, %v2599
        %v2648 = vsel %vm647, %v2522, %v2600
        %v2649 = vsel %vm647, %v2525, %v2601
        %v2650 = vsel %vm647, %v2528, %v2602
        %v2651 = vsel %vm647, %v2531, %v2603
        %v2652 = vsel %vm647, %v2534, %v2604
        %v2653 = vsel %vm647, %v2537, %v2605
        %v2654 = vsel %vm647, %v2540, %v2606
        %v2655 = vsel %vm647, %v2543, %v2607
        %v2686 = vrot.slane %v2624, 1
        %v2687 = vrot.slane %v2499, 1
        %v2688 = vsel %vm837, %v2686, %v2687
        %v2689 = vrot.slane %v2640, 1
        %v2690 = vsel %vm837, %v2687, %v2689
        %v2691 = vrot.slane %v2625, 1
        %v2692 = vrot.slane %v2502, 1
        %v2693 = vsel %vm837, %v2691, %v2692
        %v2694 = vrot.slane %v2641, 1
        %v2695 = vsel %vm837, %v2692, %v2694
        %v2696 = vrot.slane %v2626, 1
        %v2697 = vrot.slane %v2505, 1
        %v2698 = vsel %vm837, %v2696, %v2697
        %v2699 = vrot.slane %v2642, 1
        %v2700 = vsel %vm837, %v2697, %v2699
        %v2701 = vrot.slane %v2627, 1
        %v2702 = vrot.slane %v2508, 1
        %v2703 = vsel %vm837, %v2701, %v2702
        %v2704 = vrot.slane %v2643, 1
        %v2705 = vsel %vm837, %v2702, %v2704
        %v2706 = vrot.slane %v2628, 1
        %v2707 = vrot.slane %v2511, 1
        %v2708 = vsel %vm837, %v2706, %v2707
        %v2709 = vrot.slane %v2644, 1
        %v2710 = vsel %vm837, %v2707, %v2709
        %v2711 = vrot.slane %v2629, 1
        %v2712 = vrot.slane %v2514, 1
        %v2713 = vsel %vm837, %v2711, %v2712
        %v2714 = vrot.slane %v2645, 1
        %v2715 = vsel %vm837, %v2712, %v2714
        %v2716 = vrot.slane %v2630, 1
        %v2717 = vrot.slane %v2517, 1
        %v2718 = vsel %vm837, %v2716, %v2717
        %v2719 = vrot.slane %v2646, 1
        %v2720 = vsel %vm837, %v2717, %v2719
        %v2721 = vrot.slane %v2631, 1
        %v2722 = vrot.slane %v2520, 1
        %v2723 = vsel %vm837, %v2721, %v2722
        %v2724 = vrot.slane %v2647, 1
        %v2725 = vsel %vm837, %v2722, %v2724
        %v2726 = vrot.slane %v2632, 1
        %v2727 = vrot.slane %v2523, 1
        %v2728 = vsel %vm837, %v2726, %v2727
        %v2729 = vrot.slane %v2648, 1
        %v2730 = vsel %vm837, %v2727, %v2729
        %v2731 = vrot.slane %v2633, 1
        %v2732 = vrot.slane %v2526, 1
        %v2733 = vsel %vm837, %v2731, %v2732
        %v2734 = vrot.slane %v2649, 1
        %v2735 = vsel %vm837, %v2732, %v2734
        %v2736 = vrot.slane %v2634, 1
        %v2737 = vrot.slane %v2529, 1
        %v2738 = vsel %vm837, %v2736, %v2737
        %v2739 = vrot.slane %v2650, 1
        %v2740 = vsel %vm837, %v2737, %v2739
        %v2741 = vrot.slane %v2635, 1
        %v2742 = vrot.slane %v2532, 1
        %v2743 = vsel %vm837, %v2741, %v2742
        %v2744 = vrot.slane %v2651, 1
        %v2745 = vsel %vm837, %v2742, %v2744
        %v2746 = vrot.slane %v2636, 1
        %v2747 = vrot.slane %v2535, 1
        %v2748 = vsel %vm837, %v2746, %v2747
        %v2749 = vrot.slane %v2652, 1
        %v2750 = vsel %vm837, %v2747, %v2749
        %v2751 = vrot.slane %v2637, 1
        %v2752 = vrot.slane %v2538, 1
        %v2753 = vsel %vm837, %v2751, %v2752
        %v2754 = vrot.slane %v2653, 1
        %v2755 = vsel %vm837, %v2752, %v2754
        %v2756 = vrot.slane %v2638, 1
        %v2757 = vrot.slane %v2541, 1
        %v2758 = vsel %vm837, %v2756, %v2757
        %v2759 = vrot.slane %v2654, 1
        %v2760 = vsel %vm837, %v2757, %v2759
        %2761 = vrot.lane.b32.xlu0 %v2688, 1
        %v2762 = vpop.permute.xlu0 %2761
        %2763 = vrot.lane.b32.xlu0 %v2690, 1
        %v2764 = vpop.permute.xlu0 %2763
        %2765 = vrot.lane.b32.xlu0 %v2693, 1
        %v2766 = vpop.permute.xlu0 %2765
        %2767 = vrot.lane.b32.xlu0 %v2695, 1
        %v2768 = vpop.permute.xlu0 %2767
        %2769 = vrot.lane.b32.xlu0 %v2698, 1
        %v2770 = vpop.permute.xlu0 %2769
        %2771 = vrot.lane.b32.xlu0 %v2700, 1
        %v2772 = vpop.permute.xlu0 %2771
        %2773 = vrot.lane.b32.xlu0 %v2703, 1
        %v2774 = vpop.permute.xlu0 %2773
        %2775 = vrot.lane.b32.xlu0 %v2705, 1
        %v2776 = vpop.permute.xlu0 %2775
        %2777 = vrot.lane.b32.xlu0 %v2708, 1
        %v2778 = vpop.permute.xlu0 %2777
        %2779 = vrot.lane.b32.xlu0 %v2710, 1
        %v2780 = vpop.permute.xlu0 %2779
        %2781 = vrot.lane.b32.xlu0 %v2713, 1
        %v2782 = vpop.permute.xlu0 %2781
        %2783 = vrot.lane.b32.xlu0 %v2715, 1
        %v2784 = vpop.permute.xlu0 %2783
        %2785 = vrot.lane.b32.xlu0 %v2718, 1
        %v2786 = vpop.permute.xlu0 %2785
        %2787 = vrot.lane.b32.xlu0 %v2720, 1
        %v2788 = vpop.permute.xlu0 %2787
        %2789 = vrot.lane.b32.xlu0 %v2723, 1
        %v2790 = vpop.permute.xlu0 %2789
        %2791 = vrot.lane.b32.xlu0 %v2725, 1
        %v2792 = vpop.permute.xlu0 %2791
        %2793 = vrot.lane.b32.xlu0 %v2728, 1
        %v2794 = vpop.permute.xlu0 %2793
        %2795 = vrot.lane.b32.xlu0 %v2730, 1
        %v2796 = vpop.permute.xlu0 %2795
        %2797 = vrot.lane.b32.xlu0 %v2733, 1
        %v2798 = vpop.permute.xlu0 %2797
        %2799 = vrot.lane.b32.xlu0 %v2735, 1
        %v2800 = vpop.permute.xlu0 %2799
        %2801 = vrot.lane.b32.xlu0 %v2738, 1
        %v2802 = vpop.permute.xlu0 %2801
        %2803 = vrot.lane.b32.xlu0 %v2740, 1
        %v2804 = vpop.permute.xlu0 %2803
        %2805 = vrot.lane.b32.xlu0 %v2743, 1
        %v2806 = vpop.permute.xlu0 %2805
        %2807 = vrot.lane.b32.xlu0 %v2745, 1
        %v2808 = vpop.permute.xlu0 %2807
        %2809 = vrot.lane.b32.xlu0 %v2748, 1
        %v2810 = vpop.permute.xlu0 %2809
        %2811 = vrot.lane.b32.xlu0 %v2750, 1
        %v2812 = vpop.permute.xlu0 %2811
        %2813 = vrot.lane.b32.xlu0 %v2753, 1
        %v2814 = vpop.permute.xlu0 %2813
        %2815 = vrot.lane.b32.xlu0 %v2755, 1
        %v2816 = vpop.permute.xlu0 %2815
        %2817 = vrot.lane.b32.xlu0 %v2758, 1
        %v2818 = vpop.permute.xlu0 %2817
        %2819 = vrot.lane.b32.xlu0 %v2760, 1
        %v2820 = vpop.permute.xlu0 %2819
        %v2851 = vrot.slane %v2624, 2
        %v2852 = vrot.slane %v2499, 2
        %v2853 = vsel %vm1003, %v2851, %v2852
        %v2854 = vrot.slane %v2640, 2
        %v2855 = vsel %vm1003, %v2852, %v2854
        %v2856 = vrot.slane %v2625, 2
        %v2857 = vrot.slane %v2502, 2
        %v2858 = vsel %vm1003, %v2856, %v2857
        %v2859 = vrot.slane %v2641, 2
        %v2860 = vsel %vm1003, %v2857, %v2859
        %v2861 = vrot.slane %v2626, 2
        %v2862 = vrot.slane %v2505, 2
        %v2863 = vsel %vm1003, %v2861, %v2862
        %v2864 = vrot.slane %v2642, 2
        %v2865 = vsel %vm1003, %v2862, %v2864
        %v2866 = vrot.slane %v2627, 2
        %v2867 = vrot.slane %v2508, 2
        %v2868 = vsel %vm1003, %v2866, %v2867
        %v2869 = vrot.slane %v2643, 2
        %v2870 = vsel %vm1003, %v2867, %v2869
        %v2871 = vrot.slane %v2628, 2
        %v2872 = vrot.slane %v2511, 2
        %v2873 = vsel %vm1003, %v2871, %v2872
        %v2874 = vrot.slane %v2644, 2
        %v2875 = vsel %vm1003, %v2872, %v2874
        %v2876 = vrot.slane %v2629, 2
        %v2877 = vrot.slane %v2514, 2
        %v2878 = vsel %vm1003, %v2876, %v2877
        %v2879 = vrot.slane %v2645, 2
        %v2880 = vsel %vm1003, %v2877, %v2879
        %v2881 = vrot.slane %v2630, 2
        %v2882 = vrot.slane %v2517, 2
        %v2883 = vsel %vm1003, %v2881, %v2882
        %v2884 = vrot.slane %v2646, 2
        %v2885 = vsel %vm1003, %v2882, %v2884
        %v2886 = vrot.slane %v2631, 2
        %v2887 = vrot.slane %v2520, 2
        %v2888 = vsel %vm1003, %v2886, %v2887
        %v2889 = vrot.slane %v2647, 2
        %v2890 = vsel %vm1003, %v2887, %v2889
        %v2891 = vrot.slane %v2632, 2
        %v2892 = vrot.slane %v2523, 2
        %v2893 = vsel %vm1003, %v2891, %v2892
        %v2894 = vrot.slane %v2648, 2
        %v2895 = vsel %vm1003, %v2892, %v2894
        %v2896 = vrot.slane %v2633, 2
        %v2897 = vrot.slane %v2526, 2
        %v2898 = vsel %vm1003, %v2896, %v2897
        %v2899 = vrot.slane %v2649, 2
        %v2900 = vsel %vm1003, %v2897, %v2899
        %v2901 = vrot.slane %v2634, 2
        %v2902 = vrot.slane %v2529, 2
        %v2903 = vsel %vm1003, %v2901, %v2902
        %v2904 = vrot.slane %v2650, 2
        %v2905 = vsel %vm1003, %v2902, %v2904
        %v2906 = vrot.slane %v2635, 2
        %v2907 = vrot.slane %v2532, 2
        %v2908 = vsel %vm1003, %v2906, %v2907
        %v2909 = vrot.slane %v2651, 2
        %v2910 = vsel %vm1003, %v2907, %v2909
        %v2911 = vrot.slane %v2636, 2
        %v2912 = vrot.slane %v2535, 2
        %v2913 = vsel %vm1003, %v2911, %v2912
        %v2914 = vrot.slane %v2652, 2
        %v2915 = vsel %vm1003, %v2912, %v2914
        %v2916 = vrot.slane %v2637, 2
        %v2917 = vrot.slane %v2538, 2
        %v2918 = vsel %vm1003, %v2916, %v2917
        %v2919 = vrot.slane %v2653, 2
        %v2920 = vsel %vm1003, %v2917, %v2919
        %v2921 = vrot.slane %v2638, 2
        %v2922 = vrot.slane %v2541, 2
        %v2923 = vsel %vm1003, %v2921, %v2922
        %v2924 = vrot.slane %v2654, 2
        %v2925 = vsel %vm1003, %v2922, %v2924
        %2926 = vrot.lane.b32.xlu0 %v2853, 2
        %v2927 = vpop.permute.xlu0 %2926
        %2928 = vrot.lane.b32.xlu0 %v2855, 2
        %v2929 = vpop.permute.xlu0 %2928
        %2930 = vrot.lane.b32.xlu0 %v2858, 2
        %v2931 = vpop.permute.xlu0 %2930
        %2932 = vrot.lane.b32.xlu0 %v2860, 2
        %v2933 = vpop.permute.xlu0 %2932
        %2934 = vrot.lane.b32.xlu0 %v2863, 2
        %v2935 = vpop.permute.xlu0 %2934
        %2936 = vrot.lane.b32.xlu0 %v2865, 2
        %v2937 = vpop.permute.xlu0 %2936
        %2938 = vrot.lane.b32.xlu0 %v2868, 2
        %v2939 = vpop.permute.xlu0 %2938
        %2940 = vrot.lane.b32.xlu0 %v2870, 2
        %v2941 = vpop.permute.xlu0 %2940
        %2942 = vrot.lane.b32.xlu0 %v2873, 2
        %v2943 = vpop.permute.xlu0 %2942
        %2944 = vrot.lane.b32.xlu0 %v2875, 2
        %v2945 = vpop.permute.xlu0 %2944
        %2946 = vrot.lane.b32.xlu0 %v2878, 2
        %v2947 = vpop.permute.xlu0 %2946
        %2948 = vrot.lane.b32.xlu0 %v2880, 2
        %v2949 = vpop.permute.xlu0 %2948
        %2950 = vrot.lane.b32.xlu0 %v2883, 2
        %v2951 = vpop.permute.xlu0 %2950
        %2952 = vrot.lane.b32.xlu0 %v2885, 2
        %v2953 = vpop.permute.xlu0 %2952
        %2954 = vrot.lane.b32.xlu0 %v2888, 2
        %v2955 = vpop.permute.xlu0 %2954
        %2956 = vrot.lane.b32.xlu0 %v2890, 2
        %v2957 = vpop.permute.xlu0 %2956
        %2958 = vrot.lane.b32.xlu0 %v2893, 2
        %v2959 = vpop.permute.xlu0 %2958
        %2960 = vrot.lane.b32.xlu0 %v2895, 2
        %v2961 = vpop.permute.xlu0 %2960
        %2962 = vrot.lane.b32.xlu0 %v2898, 2
        %v2963 = vpop.permute.xlu0 %2962
        %2964 = vrot.lane.b32.xlu0 %v2900, 2
        %v2965 = vpop.permute.xlu0 %2964
        %2966 = vrot.lane.b32.xlu0 %v2903, 2
        %v2967 = vpop.permute.xlu0 %2966
        %2968 = vrot.lane.b32.xlu0 %v2905, 2
        %v2969 = vpop.permute.xlu0 %2968
        %2970 = vrot.lane.b32.xlu0 %v2908, 2
        %v2971 = vpop.permute.xlu0 %2970
        %2972 = vrot.lane.b32.xlu0 %v2910, 2
        %v2973 = vpop.permute.xlu0 %2972
        %2974 = vrot.lane.b32.xlu0 %v2913, 2
        %v2975 = vpop.permute.xlu0 %2974
        %2976 = vrot.lane.b32.xlu0 %v2915, 2
        %v2977 = vpop.permute.xlu0 %2976
        %2978 = vrot.lane.b32.xlu0 %v2918, 2
        %v2979 = vpop.permute.xlu0 %2978
        %2980 = vrot.lane.b32.xlu0 %v2920, 2
        %v2981 = vpop.permute.xlu0 %2980
        %2982 = vrot.lane.b32.xlu0 %v2923, 2
        %v2983 = vpop.permute.xlu0 %2982
        %2984 = vrot.lane.b32.xlu0 %v2925, 2
        %v2985 = vpop.permute.xlu0 %2984
        %3017 = vrot.lane.b32.xlu0 %v2625, 3
        %v3018 = vpop.permute.xlu0 %3017
        %3019 = vrot.lane.b32.xlu0 %v2502, 3
        %v3020 = vpop.permute.xlu0 %3019
        %3021 = vrot.lane.b32.xlu0 %v2624, 3
        %v3022 = vpop.permute.xlu0 %3021
        %3023 = vrot.lane.b32.xlu0 %v2499, 3
        %v3024 = vpop.permute.xlu0 %3023
        %3025 = vrot.lane.b32.xlu0 %v2626, 3
        %v3026 = vpop.permute.xlu0 %3025
        %3027 = vrot.lane.b32.xlu0 %v2505, 3
        %v3028 = vpop.permute.xlu0 %3027
        %3029 = vrot.lane.b32.xlu0 %v2627, 3
        %v3030 = vpop.permute.xlu0 %3029
        %3031 = vrot.lane.b32.xlu0 %v2508, 3
        %v3032 = vpop.permute.xlu0 %3031
        %3033 = vrot.lane.b32.xlu0 %v2628, 3
        %v3034 = vpop.permute.xlu0 %3033
        %3035 = vrot.lane.b32.xlu0 %v2511, 3
        %v3036 = vpop.permute.xlu0 %3035
        %3037 = vrot.lane.b32.xlu0 %v2629, 3
        %v3038 = vpop.permute.xlu0 %3037
        %3039 = vrot.lane.b32.xlu0 %v2514, 3
        %v3040 = vpop.permute.xlu0 %3039
        %3041 = vrot.lane.b32.xlu0 %v2630, 3
        %v3042 = vpop.permute.xlu0 %3041
        %3043 = vrot.lane.b32.xlu0 %v2517, 3
        %v3044 = vpop.permute.xlu0 %3043
        %3045 = vrot.lane.b32.xlu0 %v2631, 3
        %v3046 = vpop.permute.xlu0 %3045
        %3047 = vrot.lane.b32.xlu0 %v2520, 3
        %v3048 = vpop.permute.xlu0 %3047
        %3049 = vrot.lane.b32.xlu0 %v2632, 3
        %v3050 = vpop.permute.xlu0 %3049
        %3051 = vrot.lane.b32.xlu0 %v2523, 3
        %v3052 = vpop.permute.xlu0 %3051
        %3053 = vrot.lane.b32.xlu0 %v2633, 3
        %v3054 = vpop.permute.xlu0 %3053
        %3055 = vrot.lane.b32.xlu0 %v2526, 3
        %v3056 = vpop.permute.xlu0 %3055
        %3057 = vrot.lane.b32.xlu0 %v2634, 3
        %v3058 = vpop.permute.xlu0 %3057
        %3059 = vrot.lane.b32.xlu0 %v2529, 3
        %v3060 = vpop.permute.xlu0 %3059
        %3061 = vrot.lane.b32.xlu0 %v2635, 3
        %v3062 = vpop.permute.xlu0 %3061
        %3063 = vrot.lane.b32.xlu0 %v2532, 3
        %v3064 = vpop.permute.xlu0 %3063
        %3065 = vrot.lane.b32.xlu0 %v2636, 3
        %v3066 = vpop.permute.xlu0 %3065
        %3067 = vrot.lane.b32.xlu0 %v2535, 3
        %v3068 = vpop.permute.xlu0 %3067
        %3069 = vrot.lane.b32.xlu0 %v2637, 3
        %v3070 = vpop.permute.xlu0 %3069
        %3071 = vrot.lane.b32.xlu0 %v2538, 3
        %v3072 = vpop.permute.xlu0 %3071
        %3073 = vrot.lane.b32.xlu0 %v2638, 3
        %v3074 = vpop.permute.xlu0 %3073
        %3075 = vrot.lane.b32.xlu0 %v2541, 3
        %v3076 = vpop.permute.xlu0 %3075
        %3077 = vrot.lane.b32.xlu0 %v2639, 3
        %v3078 = vpop.permute.xlu0 %3077
        %3079 = vrot.lane.b32.xlu0 %v2544, 3
        %v3080 = vpop.permute.xlu0 %3079
        %v3114 = vrot.slane %v2639, 1
        %v3115 = vrot.slane %v2544, 1
        %v3116 = vsel %vm837, %v3114, %v3115
        %v3117 = vrot.slane %v2655, 1
        %v3118 = vsel %vm837, %v3115, %v3117
        %3119 = vrot.lane.b32.xlu0 %v2693, 4
        %v3120 = vpop.permute.xlu0 %3119
        %3121 = vrot.lane.b32.xlu0 %v2695, 4
        %v3122 = vpop.permute.xlu0 %3121
        %3123 = vrot.lane.b32.xlu0 %v2688, 4
        %v3124 = vpop.permute.xlu0 %3123
        %3125 = vrot.lane.b32.xlu0 %v2690, 4
        %v3126 = vpop.permute.xlu0 %3125
        %3127 = vrot.lane.b32.xlu0 %v2698, 4
        %v3128 = vpop.permute.xlu0 %3127
        %3129 = vrot.lane.b32.xlu0 %v2700, 4
        %v3130 = vpop.permute.xlu0 %3129
        %3131 = vrot.lane.b32.xlu0 %v2703, 4
        %v3132 = vpop.permute.xlu0 %3131
        %3133 = vrot.lane.b32.xlu0 %v2705, 4
        %v3134 = vpop.permute.xlu0 %3133
        %3135 = vrot.lane.b32.xlu0 %v2708, 4
        %v3136 = vpop.permute.xlu0 %3135
        %3137 = vrot.lane.b32.xlu0 %v2710, 4
        %v3138 = vpop.permute.xlu0 %3137
        %3139 = vrot.lane.b32.xlu0 %v2713, 4
        %v3140 = vpop.permute.xlu0 %3139
        %3141 = vrot.lane.b32.xlu0 %v2715, 4
        %v3142 = vpop.permute.xlu0 %3141
        %3143 = vrot.lane.b32.xlu0 %v2718, 4
        %v3144 = vpop.permute.xlu0 %3143
        %3145 = vrot.lane.b32.xlu0 %v2720, 4
        %v3146 = vpop.permute.xlu0 %3145
        %3147 = vrot.lane.b32.xlu0 %v2723, 4
        %v3148 = vpop.permute.xlu0 %3147
        %3149 = vrot.lane.b32.xlu0 %v2725, 4
        %v3150 = vpop.permute.xlu0 %3149
        %3151 = vrot.lane.b32.xlu0 %v2728, 4
        %v3152 = vpop.permute.xlu0 %3151
        %3153 = vrot.lane.b32.xlu0 %v2730, 4
        %v3154 = vpop.permute.xlu0 %3153
        %3155 = vrot.lane.b32.xlu0 %v2733, 4
        %v3156 = vpop.permute.xlu0 %3155
        %3157 = vrot.lane.b32.xlu0 %v2735, 4
        %v3158 = vpop.permute.xlu0 %3157
        %3159 = vrot.lane.b32.xlu0 %v2738, 4
        %v3160 = vpop.permute.xlu0 %3159
        %3161 = vrot.lane.b32.xlu0 %v2740, 4
        %v3162 = vpop.permute.xlu0 %3161
        %3163 = vrot.lane.b32.xlu0 %v2743, 4
        %v3164 = vpop.permute.xlu0 %3163
        %3165 = vrot.lane.b32.xlu0 %v2745, 4
        %v3166 = vpop.permute.xlu0 %3165
        %3167 = vrot.lane.b32.xlu0 %v2748, 4
        %v3168 = vpop.permute.xlu0 %3167
        %3169 = vrot.lane.b32.xlu0 %v2750, 4
        %v3170 = vpop.permute.xlu0 %3169
        %3171 = vrot.lane.b32.xlu0 %v2753, 4
        %v3172 = vpop.permute.xlu0 %3171
        %3173 = vrot.lane.b32.xlu0 %v2755, 4
        %v3174 = vpop.permute.xlu0 %3173
        %3175 = vrot.lane.b32.xlu0 %v2758, 4
        %v3176 = vpop.permute.xlu0 %3175
        %3177 = vrot.lane.b32.xlu0 %v2760, 4
        %v3178 = vpop.permute.xlu0 %3177
        %3179 = vrot.lane.b32.xlu0 %v3116, 4
        %v3180 = vpop.permute.xlu0 %3179
        %3181 = vrot.lane.b32.xlu0 %v3118, 4
        %v3182 = vpop.permute.xlu0 %3181
        %v3215 = vrot.slane %v2639, 2
        %v3216 = vrot.slane %v2544, 2
        %v3217 = vsel %vm1003, %v3215, %v3216
        %v3218 = vrot.slane %v2655, 2
        %v3219 = vsel %vm1003, %v3216, %v3218
        %3220 = vrot.lane.b32.xlu0 %v2858, 5
        %v3221 = vpop.permute.xlu0 %3220
        %3222 = vrot.lane.b32.xlu0 %v2860, 5
        %v3223 = vpop.permute.xlu0 %3222
        %3224 = vrot.lane.b32.xlu0 %v2853, 5
        %v3225 = vpop.permute.xlu0 %3224
        %3226 = vrot.lane.b32.xlu0 %v2855, 5
        %v3227 = vpop.permute.xlu0 %3226
        %3228 = vrot.lane.b32.xlu0 %v2863, 5
        %v3229 = vpop.permute.xlu0 %3228
        %3230 = vrot.lane.b32.xlu0 %v2865, 5
        %v3231 = vpop.permute.xlu0 %3230
        %3232 = vrot.lane.b32.xlu0 %v2868, 5
        %v3233 = vpop.permute.xlu0 %3232
        %3234 = vrot.lane.b32.xlu0 %v2870, 5
        %v3235 = vpop.permute.xlu0 %3234
        %3236 = vrot.lane.b32.xlu0 %v2873, 5
        %v3237 = vpop.permute.xlu0 %3236
        %3238 = vrot.lane.b32.xlu0 %v2875, 5
        %v3239 = vpop.permute.xlu0 %3238
        %3240 = vrot.lane.b32.xlu0 %v2878, 5
        %v3241 = vpop.permute.xlu0 %3240
        %3242 = vrot.lane.b32.xlu0 %v2880, 5
        %v3243 = vpop.permute.xlu0 %3242
        %3244 = vrot.lane.b32.xlu0 %v2883, 5
        %v3245 = vpop.permute.xlu0 %3244
        %3246 = vrot.lane.b32.xlu0 %v2885, 5
        %v3247 = vpop.permute.xlu0 %3246
        %3248 = vrot.lane.b32.xlu0 %v2888, 5
        %v3249 = vpop.permute.xlu0 %3248
        %3250 = vrot.lane.b32.xlu0 %v2890, 5
        %v3251 = vpop.permute.xlu0 %3250
        %3252 = vrot.lane.b32.xlu0 %v2893, 5
        %v3253 = vpop.permute.xlu0 %3252
        %3254 = vrot.lane.b32.xlu0 %v2895, 5
        %v3255 = vpop.permute.xlu0 %3254
        %3256 = vrot.lane.b32.xlu0 %v2898, 5
        %v3257 = vpop.permute.xlu0 %3256
        %3258 = vrot.lane.b32.xlu0 %v2900, 5
        %v3259 = vpop.permute.xlu0 %3258
        %3260 = vrot.lane.b32.xlu0 %v2903, 5
        %v3261 = vpop.permute.xlu0 %3260
        %3262 = vrot.lane.b32.xlu0 %v2905, 5
        %v3263 = vpop.permute.xlu0 %3262
        %3264 = vrot.lane.b32.xlu0 %v2908, 5
        %v3265 = vpop.permute.xlu0 %3264
        %3266 = vrot.lane.b32.xlu0 %v2910, 5
        %v3267 = vpop.permute.xlu0 %3266
        %3268 = vrot.lane.b32.xlu0 %v2913, 5
        %v3269 = vpop.permute.xlu0 %3268
        %3270 = vrot.lane.b32.xlu0 %v2915, 5
        %v3271 = vpop.permute.xlu0 %3270
        %3272 = vrot.lane.b32.xlu0 %v2918, 5
        %v3273 = vpop.permute.xlu0 %3272
        %3274 = vrot.lane.b32.xlu0 %v2920, 5
        %v3275 = vpop.permute.xlu0 %3274
        %3276 = vrot.lane.b32.xlu0 %v2923, 5
        %v3277 = vpop.permute.xlu0 %3276
        %3278 = vrot.lane.b32.xlu0 %v2925, 5
        %v3279 = vpop.permute.xlu0 %3278
        %3280 = vrot.lane.b32.xlu0 %v3217, 5
        %v3281 = vpop.permute.xlu0 %3280
        %3282 = vrot.lane.b32.xlu0 %v3219, 5
        %v3283 = vpop.permute.xlu0 %3282
        %3316 = vrot.lane.b32.xlu0 %v2624, 6
        %v3317 = vpop.permute.xlu0 %3316
        %3318 = vrot.lane.b32.xlu0 %v2499, 6
        %v3319 = vpop.permute.xlu0 %3318
        %3320 = vrot.lane.b32.xlu0 %v2626, 6
        %v3321 = vpop.permute.xlu0 %3320
        %3322 = vrot.lane.b32.xlu0 %v2505, 6
        %v3323 = vpop.permute.xlu0 %3322
        %3324 = vrot.lane.b32.xlu0 %v2627, 6
        %v3325 = vpop.permute.xlu0 %3324
        %3326 = vrot.lane.b32.xlu0 %v2508, 6
        %v3327 = vpop.permute.xlu0 %3326
        %3328 = vrot.lane.b32.xlu0 %v2628, 6
        %v3329 = vpop.permute.xlu0 %3328
        %3330 = vrot.lane.b32.xlu0 %v2511, 6
        %v3331 = vpop.permute.xlu0 %3330
        %3332 = vrot.lane.b32.xlu0 %v2629, 6
        %v3333 = vpop.permute.xlu0 %3332
        %3334 = vrot.lane.b32.xlu0 %v2514, 6
        %v3335 = vpop.permute.xlu0 %3334
        %3336 = vrot.lane.b32.xlu0 %v2630, 6
        %v3337 = vpop.permute.xlu0 %3336
        %3338 = vrot.lane.b32.xlu0 %v2517, 6
        %v3339 = vpop.permute.xlu0 %3338
        %3340 = vrot.lane.b32.xlu0 %v2631, 6
        %v3341 = vpop.permute.xlu0 %3340
        %3342 = vrot.lane.b32.xlu0 %v2520, 6
        %v3343 = vpop.permute.xlu0 %3342
        %3344 = vrot.lane.b32.xlu0 %v2632, 6
        %v3345 = vpop.permute.xlu0 %3344
        %3346 = vrot.lane.b32.xlu0 %v2523, 6
        %v3347 = vpop.permute.xlu0 %3346
        %3348 = vrot.lane.b32.xlu0 %v2633, 6
        %v3349 = vpop.permute.xlu0 %3348
        %3350 = vrot.lane.b32.xlu0 %v2526, 6
        %v3351 = vpop.permute.xlu0 %3350
        %3352 = vrot.lane.b32.xlu0 %v2634, 6
        %v3353 = vpop.permute.xlu0 %3352
        %3354 = vrot.lane.b32.xlu0 %v2529, 6
        %v3355 = vpop.permute.xlu0 %3354
        %3356 = vrot.lane.b32.xlu0 %v2635, 6
        %v3357 = vpop.permute.xlu0 %3356
        %3358 = vrot.lane.b32.xlu0 %v2532, 6
        %v3359 = vpop.permute.xlu0 %3358
        %3360 = vrot.lane.b32.xlu0 %v2636, 6
        %v3361 = vpop.permute.xlu0 %3360
        %3362 = vrot.lane.b32.xlu0 %v2535, 6
        %v3363 = vpop.permute.xlu0 %3362
        %3364 = vrot.lane.b32.xlu0 %v2637, 6
        %v3365 = vpop.permute.xlu0 %3364
        %3366 = vrot.lane.b32.xlu0 %v2538, 6
        %v3367 = vpop.permute.xlu0 %3366
        %3368 = vrot.lane.b32.xlu0 %v2638, 6
        %v3369 = vpop.permute.xlu0 %3368
        %3370 = vrot.lane.b32.xlu0 %v2541, 6
        %v3371 = vpop.permute.xlu0 %3370
        %3372 = vrot.lane.b32.xlu0 %v2639, 6
        %v3373 = vpop.permute.xlu0 %3372
        %3374 = vrot.lane.b32.xlu0 %v2544, 6
        %v3375 = vpop.permute.xlu0 %3374
        %3406 = vrot.lane.b32.xlu0 %v2688, 7
        %v3407 = vpop.permute.xlu0 %3406
        %3408 = vrot.lane.b32.xlu0 %v2690, 7
        %v3409 = vpop.permute.xlu0 %3408
        %3410 = vrot.lane.b32.xlu0 %v2698, 7
        %v3411 = vpop.permute.xlu0 %3410
        %3412 = vrot.lane.b32.xlu0 %v2700, 7
        %v3413 = vpop.permute.xlu0 %3412
        %3414 = vrot.lane.b32.xlu0 %v2703, 7
        %v3415 = vpop.permute.xlu0 %3414
        %3416 = vrot.lane.b32.xlu0 %v2705, 7
        %v3417 = vpop.permute.xlu0 %3416
        %3418 = vrot.lane.b32.xlu0 %v2708, 7
        %v3419 = vpop.permute.xlu0 %3418
        %3420 = vrot.lane.b32.xlu0 %v2710, 7
        %v3421 = vpop.permute.xlu0 %3420
        %3422 = vrot.lane.b32.xlu0 %v2713, 7
        %v3423 = vpop.permute.xlu0 %3422
        %3424 = vrot.lane.b32.xlu0 %v2715, 7
        %v3425 = vpop.permute.xlu0 %3424
        %3426 = vrot.lane.b32.xlu0 %v2718, 7
        %v3427 = vpop.permute.xlu0 %3426
        %3428 = vrot.lane.b32.xlu0 %v2720, 7
        %v3429 = vpop.permute.xlu0 %3428
        %3430 = vrot.lane.b32.xlu0 %v2723, 7
        %v3431 = vpop.permute.xlu0 %3430
        %3432 = vrot.lane.b32.xlu0 %v2725, 7
        %v3433 = vpop.permute.xlu0 %3432
        %3434 = vrot.lane.b32.xlu0 %v2728, 7
        %v3435 = vpop.permute.xlu0 %3434
        %3436 = vrot.lane.b32.xlu0 %v2730, 7
        %v3437 = vpop.permute.xlu0 %3436
        %3438 = vrot.lane.b32.xlu0 %v2733, 7
        %v3439 = vpop.permute.xlu0 %3438
        %3440 = vrot.lane.b32.xlu0 %v2735, 7
        %v3441 = vpop.permute.xlu0 %3440
        %3442 = vrot.lane.b32.xlu0 %v2738, 7
        %v3443 = vpop.permute.xlu0 %3442
        %3444 = vrot.lane.b32.xlu0 %v2740, 7
        %v3445 = vpop.permute.xlu0 %3444
        %3446 = vrot.lane.b32.xlu0 %v2743, 7
        %v3447 = vpop.permute.xlu0 %3446
        %3448 = vrot.lane.b32.xlu0 %v2745, 7
        %v3449 = vpop.permute.xlu0 %3448
        %3450 = vrot.lane.b32.xlu0 %v2748, 7
        %v3451 = vpop.permute.xlu0 %3450
        %3452 = vrot.lane.b32.xlu0 %v2750, 7
        %v3453 = vpop.permute.xlu0 %3452
        %3454 = vrot.lane.b32.xlu0 %v2753, 7
        %v3455 = vpop.permute.xlu0 %3454
        %3456 = vrot.lane.b32.xlu0 %v2755, 7
        %v3457 = vpop.permute.xlu0 %3456
        %3458 = vrot.lane.b32.xlu0 %v2758, 7
        %v3459 = vpop.permute.xlu0 %3458
        %3460 = vrot.lane.b32.xlu0 %v2760, 7
        %v3461 = vpop.permute.xlu0 %3460
        %3462 = vrot.lane.b32.xlu0 %v3116, 7
        %v3463 = vpop.permute.xlu0 %3462
        %3464 = vrot.lane.b32.xlu0 %v3118, 7
        %v3465 = vpop.permute.xlu0 %3464
        %3496 = vrot.lane.b32.xlu0 %v2853, 8
        %v3497 = vpop.permute.xlu0 %3496
        %3498 = vrot.lane.b32.xlu0 %v2855, 8
        %v3499 = vpop.permute.xlu0 %3498
        %3500 = vrot.lane.b32.xlu0 %v2863, 8
        %v3501 = vpop.permute.xlu0 %3500
        %3502 = vrot.lane.b32.xlu0 %v2865, 8
        %v3503 = vpop.permute.xlu0 %3502
        %3504 = vrot.lane.b32.xlu0 %v2868, 8
        %v3505 = vpop.permute.xlu0 %3504
        %3506 = vrot.lane.b32.xlu0 %v2870, 8
        %v3507 = vpop.permute.xlu0 %3506
        %3508 = vrot.lane.b32.xlu0 %v2873, 8
        %v3509 = vpop.permute.xlu0 %3508
        %3510 = vrot.lane.b32.xlu0 %v2875, 8
        %v3511 = vpop.permute.xlu0 %3510
        %3512 = vrot.lane.b32.xlu0 %v2878, 8
        %v3513 = vpop.permute.xlu0 %3512
        %3514 = vrot.lane.b32.xlu0 %v2880, 8
        %v3515 = vpop.permute.xlu0 %3514
        %3516 = vrot.lane.b32.xlu0 %v2883, 8
        %v3517 = vpop.permute.xlu0 %3516
        %3518 = vrot.lane.b32.xlu0 %v2885, 8
        %v3519 = vpop.permute.xlu0 %3518
        %3520 = vrot.lane.b32.xlu0 %v2888, 8
        %v3521 = vpop.permute.xlu0 %3520
        %3522 = vrot.lane.b32.xlu0 %v2890, 8
        %v3523 = vpop.permute.xlu0 %3522
        %3524 = vrot.lane.b32.xlu0 %v2893, 8
        %v3525 = vpop.permute.xlu0 %3524
        %3526 = vrot.lane.b32.xlu0 %v2895, 8
        %v3527 = vpop.permute.xlu0 %3526
        %3528 = vrot.lane.b32.xlu0 %v2898, 8
        %v3529 = vpop.permute.xlu0 %3528
        %3530 = vrot.lane.b32.xlu0 %v2900, 8
        %v3531 = vpop.permute.xlu0 %3530
        %3532 = vrot.lane.b32.xlu0 %v2903, 8
        %v3533 = vpop.permute.xlu0 %3532
        %3534 = vrot.lane.b32.xlu0 %v2905, 8
        %v3535 = vpop.permute.xlu0 %3534
        %3536 = vrot.lane.b32.xlu0 %v2908, 8
        %v3537 = vpop.permute.xlu0 %3536
        %3538 = vrot.lane.b32.xlu0 %v2910, 8
        %v3539 = vpop.permute.xlu0 %3538
        %3540 = vrot.lane.b32.xlu0 %v2913, 8
        %v3541 = vpop.permute.xlu0 %3540
        %3542 = vrot.lane.b32.xlu0 %v2915, 8
        %v3543 = vpop.permute.xlu0 %3542
        %3544 = vrot.lane.b32.xlu0 %v2918, 8
        %v3545 = vpop.permute.xlu0 %3544
        %3546 = vrot.lane.b32.xlu0 %v2920, 8
        %v3547 = vpop.permute.xlu0 %3546
        %3548 = vrot.lane.b32.xlu0 %v2923, 8
        %v3549 = vpop.permute.xlu0 %3548
        %3550 = vrot.lane.b32.xlu0 %v2925, 8
        %v3551 = vpop.permute.xlu0 %3550
        %3552 = vrot.lane.b32.xlu0 %v3217, 8
        %v3553 = vpop.permute.xlu0 %3552
        %3554 = vrot.lane.b32.xlu0 %v3219, 8
        %v3555 = vpop.permute.xlu0 %3554
        %vm3586 = vcmask 7168
        %v3587 = vsel %vm3586, %v2624, %v2762
        %v3588 = vsel %vm3586, %v2499, %v2764
        %v3589 = vsel %vm3586, %v2625, %v2766
        %v3590 = vsel %vm3586, %v2502, %v2768
        %v3591 = vsel %vm3586, %v2626, %v2770
        %v3592 = vsel %vm3586, %v2505, %v2772
        %v3593 = vsel %vm3586, %v2627, %v2774
        %v3594 = vsel %vm3586, %v2508, %v2776
        %v3595 = vsel %vm3586, %v2628, %v2778
        %v3596 = vsel %vm3586, %v2511, %v2780
        %v3597 = vsel %vm3586, %v2629, %v2782
        %v3598 = vsel %vm3586, %v2514, %v2784
        %v3599 = vsel %vm3586, %v2630, %v2786
        %v3600 = vsel %vm3586, %v2517, %v2788
        %v3601 = vsel %vm3586, %v2631, %v2790
        %v3602 = vsel %vm3586, %v2520, %v2792
        %v3603 = vsel %vm3586, %v2632, %v2794
        %v3604 = vsel %vm3586, %v2523, %v2796
        %v3605 = vsel %vm3586, %v2633, %v2798
        %v3606 = vsel %vm3586, %v2526, %v2800
        %v3607 = vsel %vm3586, %v2634, %v2802
        %v3608 = vsel %vm3586, %v2529, %v2804
        %v3609 = vsel %vm3586, %v2635, %v2806
        %v3610 = vsel %vm3586, %v2532, %v2808
        %v3611 = vsel %vm3586, %v2636, %v2810
        %v3612 = vsel %vm3586, %v2535, %v2812
        %v3613 = vsel %vm3586, %v2637, %v2814
        %v3614 = vsel %vm3586, %v2538, %v2816
        %v3615 = vsel %vm3586, %v2638, %v2818
        %v3616 = vsel %vm3586, %v2541, %v2820
        %vm3617 = vcmask 15360
        %v3618 = vsel %vm3617, %v3587, %v2927
        %v3619 = vsel %vm3617, %v3588, %v2929
        %v3620 = vsel %vm3617, %v3589, %v2931
        %v3621 = vsel %vm3617, %v3590, %v2933
        %v3622 = vsel %vm3617, %v3591, %v2935
        %v3623 = vsel %vm3617, %v3592, %v2937
        %v3624 = vsel %vm3617, %v3593, %v2939
        %v3625 = vsel %vm3617, %v3594, %v2941
        %v3626 = vsel %vm3617, %v3595, %v2943
        %v3627 = vsel %vm3617, %v3596, %v2945
        %v3628 = vsel %vm3617, %v3597, %v2947
        %v3629 = vsel %vm3617, %v3598, %v2949
        %v3630 = vsel %vm3617, %v3599, %v2951
        %v3631 = vsel %vm3617, %v3600, %v2953
        %v3632 = vsel %vm3617, %v3601, %v2955
        %v3633 = vsel %vm3617, %v3602, %v2957
        %v3634 = vsel %vm3617, %v3603, %v2959
        %v3635 = vsel %vm3617, %v3604, %v2961
        %v3636 = vsel %vm3617, %v3605, %v2963
        %v3637 = vsel %vm3617, %v3606, %v2965
        %v3638 = vsel %vm3617, %v3607, %v2967
        %v3639 = vsel %vm3617, %v3608, %v2969
        %v3640 = vsel %vm3617, %v3609, %v2971
        %v3641 = vsel %vm3617, %v3610, %v2973
        %v3642 = vsel %vm3617, %v3611, %v2975
        %v3643 = vsel %vm3617, %v3612, %v2977
        %v3644 = vsel %vm3617, %v3613, %v2979
        %v3645 = vsel %vm3617, %v3614, %v2981
        %v3646 = vsel %vm3617, %v3615, %v2983
        %v3647 = vsel %vm3617, %v3616, %v2985
        %vm3648 = vcmask 23552
        %v3649 = vsel %vm3648, %v3618, %v3018
        %v3650 = vsel %vm3648, %v3619, %v3020
        %v3651 = vsel %vm3648, %v3620, %v3022
        %v3652 = vsel %vm3648, %v3621, %v3024
        %v3653 = vsel %vm3648, %v3618, %v3026
        %v3654 = vsel %vm3648, %v3619, %v3028
        %v3655 = vsel %vm3648, %v3622, %v3030
        %v3656 = vsel %vm3648, %v3623, %v3032
        %v3657 = vsel %vm3648, %v3624, %v3034
        %v3658 = vsel %vm3648, %v3625, %v3036
        %v3659 = vsel %vm3648, %v3626, %v3038
        %v3660 = vsel %vm3648, %v3627, %v3040
        %v3661 = vsel %vm3648, %v3628, %v3042
        %v3662 = vsel %vm3648, %v3629, %v3044
        %v3663 = vsel %vm3648, %v3630, %v3046
        %v3664 = vsel %vm3648, %v3631, %v3048
        %v3665 = vsel %vm3648, %v3632, %v3050
        %v3666 = vsel %vm3648, %v3633, %v3052
        %v3667 = vsel %vm3648, %v3634, %v3054
        %v3668 = vsel %vm3648, %v3635, %v3056
        %v3669 = vsel %vm3648, %v3636, %v3058
        %v3670 = vsel %vm3648, %v3637, %v3060
        %v3671 = vsel %vm3648, %v3638, %v3062
        %v3672 = vsel %vm3648, %v3639, %v3064
        %v3673 = vsel %vm3648, %v3640, %v3066
        %v3674 = vsel %vm3648, %v3641, %v3068
        %v3675 = vsel %vm3648, %v3642, %v3070
        %v3676 = vsel %vm3648, %v3643, %v3072
        %v3677 = vsel %vm3648, %v3644, %v3074
        %v3678 = vsel %vm3648, %v3645, %v3076
        %v3679 = vsel %vm3648, %v3646, %v3078
        %v3680 = vsel %vm3648, %v3647, %v3080
        %v3681 = vsel %vm1739, %v3649, %v3120
        %v3682 = vsel %vm1739, %v3650, %v3122
        %v3683 = vsel %vm1739, %v3651, %v3124
        %v3684 = vsel %vm1739, %v3652, %v3126
        %v3685 = vsel %vm1739, %v3653, %v3128
        %v3686 = vsel %vm1739, %v3654, %v3130
        %v3687 = vsel %vm1739, %v3655, %v3132
        %v3688 = vsel %vm1739, %v3656, %v3134
        %v3689 = vsel %vm1739, %v3657, %v3136
        %v3690 = vsel %vm1739, %v3658, %v3138
        %v3691 = vsel %vm1739, %v3659, %v3140
        %v3692 = vsel %vm1739, %v3660, %v3142
        %v3693 = vsel %vm1739, %v3661, %v3144
        %v3694 = vsel %vm1739, %v3662, %v3146
        %v3695 = vsel %vm1739, %v3663, %v3148
        %v3696 = vsel %vm1739, %v3664, %v3150
        %v3697 = vsel %vm1739, %v3665, %v3152
        %v3698 = vsel %vm1739, %v3666, %v3154
        %v3699 = vsel %vm1739, %v3667, %v3156
        %v3700 = vsel %vm1739, %v3668, %v3158
        %v3701 = vsel %vm1739, %v3669, %v3160
        %v3702 = vsel %vm1739, %v3670, %v3162
        %v3703 = vsel %vm1739, %v3671, %v3164
        %v3704 = vsel %vm1739, %v3672, %v3166
        %v3705 = vsel %vm1739, %v3673, %v3168
        %v3706 = vsel %vm1739, %v3674, %v3170
        %v3707 = vsel %vm1739, %v3675, %v3172
        %v3708 = vsel %vm1739, %v3676, %v3174
        %v3709 = vsel %vm1739, %v3677, %v3176
        %v3710 = vsel %vm1739, %v3678, %v3178
        %v3711 = vsel %vm1739, %v3679, %v3180
        %v3712 = vsel %vm1739, %v3680, %v3182
        %vm3713 = vcmask 39936
        %v3714 = vsel %vm3713, %v3681, %v3221
        %v3715 = vsel %vm3713, %v3682, %v3223
        %v3716 = vsel %vm3713, %v3683, %v3225
        %v3717 = vsel %vm3713, %v3684, %v3227
        %v3718 = vsel %vm3713, %v3685, %v3229
        %v3719 = vsel %vm3713, %v3686, %v3231
        %v3720 = vsel %vm3713, %v3687, %v3233
        %v3721 = vsel %vm3713, %v3688, %v3235
        %v3722 = vsel %vm3713, %v3689, %v3237
        %v3723 = vsel %vm3713, %v3690, %v3239
        %v3724 = vsel %vm3713, %v3691, %v3241
        %v3725 = vsel %vm3713, %v3692, %v3243
        %v3726 = vsel %vm3713, %v3693, %v3245
        %v3727 = vsel %vm3713, %v3694, %v3247
        %v3728 = vsel %vm3713, %v3695, %v3249
        %v3729 = vsel %vm3713, %v3696, %v3251
        %v3730 = vsel %vm3713, %v3697, %v3253
        %v3731 = vsel %vm3713, %v3698, %v3255
        %v3732 = vsel %vm3713, %v3699, %v3257
        %v3733 = vsel %vm3713, %v3700, %v3259
        %v3734 = vsel %vm3713, %v3701, %v3261
        %v3735 = vsel %vm3713, %v3702, %v3263
        %v3736 = vsel %vm3713, %v3703, %v3265
        %v3737 = vsel %vm3713, %v3704, %v3267
        %v3738 = vsel %vm3713, %v3705, %v3269
        %v3739 = vsel %vm3713, %v3706, %v3271
        %v3740 = vsel %vm3713, %v3707, %v3273
        %v3741 = vsel %vm3713, %v3708, %v3275
        %v3742 = vsel %vm3713, %v3709, %v3277
        %v3743 = vsel %vm3713, %v3710, %v3279
        %v3744 = vsel %vm3713, %v3711, %v3281
        %v3745 = vsel %vm3713, %v3712, %v3283
        %vm3746 = vcmask 48128
        %v3747 = vsel %vm3746, %v3714, %v3317
        %v3748 = vsel %vm3746, %v3715, %v3319
        %v3749 = vsel %vm3746, %v3716, %v3321
        %v3750 = vsel %vm3746, %v3717, %v3323
        %v3751 = vsel %vm3746, %v3718, %v3325
        %v3752 = vsel %vm3746, %v3719, %v3327
        %v3753 = vsel %vm3746, %v3720, %v3329
        %v3754 = vsel %vm3746, %v3721, %v3331
        %v3755 = vsel %vm3746, %v3722, %v3333
        %v3756 = vsel %vm3746, %v3723, %v3335
        %v3757 = vsel %vm3746, %v3724, %v3337
        %v3758 = vsel %vm3746, %v3725, %v3339
        %v3759 = vsel %vm3746, %v3726, %v3341
        %v3760 = vsel %vm3746, %v3727, %v3343
        %v3761 = vsel %vm3746, %v3728, %v3345
        %v3762 = vsel %vm3746, %v3729, %v3347
        %v3763 = vsel %vm3746, %v3730, %v3349
        %v3764 = vsel %vm3746, %v3731, %v3351
        %v3765 = vsel %vm3746, %v3732, %v3353
        %v3766 = vsel %vm3746, %v3733, %v3355
        %v3767 = vsel %vm3746, %v3734, %v3357
        %v3768 = vsel %vm3746, %v3735, %v3359
        %v3769 = vsel %vm3746, %v3736, %v3361
        %v3770 = vsel %vm3746, %v3737, %v3363
        %v3771 = vsel %vm3746, %v3738, %v3365
        %v3772 = vsel %vm3746, %v3739, %v3367
        %v3773 = vsel %vm3746, %v3740, %v3369
        %v3774 = vsel %vm3746, %v3741, %v3371
        %v3775 = vsel %vm3746, %v3742, %v3373
        %v3776 = vsel %vm3746, %v3743, %v3375
        %v3777 = vsel %vm3746, %v3744, %v3369
        %v3778 = vsel %vm3746, %v3745, %v3371
        %vm3779 = vcmask 56320
        %v3780 = vsel %vm3779, %v3747, %v3407
        %v3781 = vsel %vm3779, %v3748, %v3409
        %v3782 = vsel %vm3779, %v3749, %v3411
        %v3783 = vsel %vm3779, %v3750, %v3413
        %v3784 = vsel %vm3779, %v3751, %v3415
        %v3785 = vsel %vm3779, %v3752, %v3417
        %v3786 = vsel %vm3779, %v3753, %v3419
        %v3787 = vsel %vm3779, %v3754, %v3421
        %v3788 = vsel %vm3779, %v3755, %v3423
        %v3789 = vsel %vm3779, %v3756, %v3425
        %v3790 = vsel %vm3779, %v3757, %v3427
        %v3791 = vsel %vm3779, %v3758, %v3429
        %v3792 = vsel %vm3779, %v3759, %v3431
        %v3793 = vsel %vm3779, %v3760, %v3433
        %v3794 = vsel %vm3779, %v3761, %v3435
        %v3795 = vsel %vm3779, %v3762, %v3437
        %v3796 = vsel %vm3779, %v3763, %v3439
        %v3797 = vsel %vm3779, %v3764, %v3441
        %v3798 = vsel %vm3779, %v3765, %v3443
        %v3799 = vsel %vm3779, %v3766, %v3445
        %v3800 = vsel %vm3779, %v3767, %v3447
        %v3801 = vsel %vm3779, %v3768, %v3449
        %v3802 = vsel %vm3779, %v3769, %v3451
        %v3803 = vsel %vm3779, %v3770, %v3453
        %v3804 = vsel %vm3779, %v3771, %v3455
        %v3805 = vsel %vm3779, %v3772, %v3457
        %v3806 = vsel %vm3779, %v3773, %v3459
        %v3807 = vsel %vm3779, %v3774, %v3461
        %v3808 = vsel %vm3779, %v3775, %v3463
        %v3809 = vsel %vm3779, %v3776, %v3465
        %v3810 = vsel %vm3779, %v3777, %v3459
        %v3811 = vsel %vm3779, %v3778, %v3461
        %v3812 = vsel %vm1770, %v3780, %v3497
        %v3813 = vsel %vm1770, %v3781, %v3499
        %v3814 = vsel %vm1770, %v3782, %v3501
        %v3815 = vsel %vm1770, %v3783, %v3503
        %v3816 = vsel %vm1770, %v3784, %v3505
        %v3817 = vsel %vm1770, %v3785, %v3507
        %v3818 = vsel %vm1770, %v3786, %v3509
        %v3819 = vsel %vm1770, %v3787, %v3511
        %v3820 = vsel %vm1770, %v3788, %v3513
        %v3821 = vsel %vm1770, %v3789, %v3515
        %v3822 = vsel %vm1770, %v3790, %v3517
        %v3823 = vsel %vm1770, %v3791, %v3519
        %v3824 = vsel %vm1770, %v3792, %v3521
        %v3825 = vsel %vm1770, %v3793, %v3523
        %v3826 = vsel %vm1770, %v3794, %v3525
        %v3827 = vsel %vm1770, %v3795, %v3527
        %v3828 = vsel %vm1770, %v3796, %v3529
        %v3829 = vsel %vm1770, %v3797, %v3531
        %v3830 = vsel %vm1770, %v3798, %v3533
        %v3831 = vsel %vm1770, %v3799, %v3535
        %v3832 = vsel %vm1770, %v3800, %v3537
        %v3833 = vsel %vm1770, %v3801, %v3539
        %v3834 = vsel %vm1770, %v3802, %v3541
        %v3835 = vsel %vm1770, %v3803, %v3543
        %v3836 = vsel %vm1770, %v3804, %v3545
        %v3837 = vsel %vm1770, %v3805, %v3547
        %v3838 = vsel %vm1770, %v3806, %v3549
        %v3839 = vsel %vm1770, %v3807, %v3551
        %v3840 = vsel %vm1770, %v3808, %v3553
        %v3841 = vsel %vm1770, %v3809, %v3555
        %v3842 = vsel %vm1770, %v3810, %v3549
        %v3843 = vsel %vm1770, %v3811, %v3551
        %v3844 = vld [vmem:[%s2] sm:$0xff]
        %v3845 = vld [vmem:[%s2 + $0x8] sm:$0x1]
        %v3846 = vld [vmem:[#allocation3] sm:$0x1]
        %v3848 = vlaneseq
        %v3849 = vshrl.u32 %v3848, 7
        %v3850 = vsub.s32 0, %v3849
        %v3851 = vrot.slane %v3846, %v3850
        %vm3853 = vcmask 72704
        %v3855 = vsel %vm3853, %v3812, 0
        %v3858 = vsel %vm3853, %v3813, 0
        %v3861 = vsel %vm3853, %v3814, 0
        %v3864 = vsel %vm3853, %v3815, 0
        %v3867 = vsel %vm3853, %v3816, 0
        %v3870 = vsel %vm3853, %v3817, 0
        %v3873 = vsel %vm3853, %v3818, 0
        %v3876 = vsel %vm3853, %v3819, 0
        %v3879 = vsel %vm3853, %v3820, 0
        %v3882 = vsel %vm3853, %v3821, 0
        %v3885 = vsel %vm3853, %v3822, 0
        %v3888 = vsel %vm3853, %v3823, 0
        %v3891 = vsel %vm3853, %v3824, 0
        %v3894 = vsel %vm3853, %v3825, 0
        %v3897 = vsel %vm3853, %v3826, 0
        %v3900 = vsel %vm3853, %v3827, 0
        %v3903 = vsel %vm3853, %v3828, 0
        %v3906 = vsel %vm3853, %v3829, 0
        %v3909 = vsel %vm3853, %v3830, 0
        %v3912 = vsel %vm3853, %v3831, 0
        %v3915 = vsel %vm3853, %v3832, 0
        %v3918 = vsel %vm3853, %v3833, 0
        %v3921 = vsel %vm3853, %v3834, 0
        %v3924 = vsel %vm3853, %v3835, 0
        %v3927 = vsel %vm3853, %v3836, 0
        %v3930 = vsel %vm3853, %v3837, 0
        %v3933 = vsel %vm3853, %v3838, 0
        %v3936 = vsel %vm3853, %v3839, 0
        %v3939 = vsel %vm3853, %v3840, 0
        %v3942 = vsel %vm3853, %v3841, 0
        %v3945 = vsel %vm3853, %v3842, 0
        %v3948 = vsel %vm3853, %v3843, 0
        %v3951 = vsel %vm647, %v3845, 0
        %3953 = vmatprep.subr.mxu0 0.0
        %3954 = vmatpush1.msra.mxu0 %v3844
        %3955 = vmatprep.subr.mxu0 0.0
        %3956 = vmatpush1.msra.mxu0 %v3951
        %3957 = vmatprep.subr.mxu0 0.0
        %3958 = vmatpush1.msra.mxu0 0.0
        %3959 = vmatprep.subr.mxu0 0.0
        %3960 = vmatpush1.msra.mxu0 0.0
        %3961 = vmatprep.subr.mxu0 0.0
        %3962 = vmatpush1.msra.mxu0 0.0
        %3963 = vmatprep.subr.mxu0 0.0
        %3964 = vmatpush1.msra.mxu0 0.0
        %3965 = vmatprep.subr.mxu0 0.0
        %3966 = vmatpush1.msra.mxu0 0.0
        %3967 = vmatprep.subr.mxu0 0.0
        %3968 = vmatpush1.msra.mxu0 0.0
        %3969 = vmatprep.subr.mxu0 0.0
        %3970 = vmatpush1.msra.mxu0 0.0
        %3971 = vmatprep.subr.mxu0 0.0
        %3972 = vmatpush1.msra.mxu0 0.0
        %3973 = vmatprep.subr.mxu0 0.0
        %3974 = vmatpush1.msra.mxu0 0.0
        %3975 = vmatprep.subr.mxu0 0.0
        %3976 = vmatpush1.msra.mxu0 0.0
        %3977 = vmatprep.subr.mxu0 0.0
        %3978 = vmatpush1.msra.mxu0 0.0
        %3979 = vmatprep.subr.mxu0 0.0
        %3980 = vmatpush1.msra.mxu0 0.0
        %3981 = vmatprep.subr.mxu0 0.0
        %3982 = vmatpush1.msra.mxu0 0.0
        %3983 = vmatprep.subr.mxu0 0.0
        %3984 = vmatpush1.msra.mxu0 0.0
        %3985 = vmatprep.subr.mxu0 0.0
        %3986 = vmatpush1.msra.mxu0 0.0
        %3987 = vmatprep.subr.mxu0 0.0
        %3988 = vmatpush1.msra.mxu0 0.0
        %3989 = vmatprep.subr.mxu0 0.0
        %3990 = vmatpush1.msra.mxu0 0.0
        %3991 = vmatprep.subr.mxu0 0.0
        %3992 = vmatpush1.msra.mxu0 0.0
        %3993 = vmatprep.subr.mxu0 0.0
        %3994 = vmatpush1.msra.mxu0 0.0
        %3995 = vmatprep.subr.mxu0 0.0
        %3996 = vmatpush1.msra.mxu0 0.0
        %3997 = vmatprep.subr.mxu0 0.0
        %3998 = vmatpush1.msra.mxu0 0.0
        %3999 = vmatprep.subr.mxu0 0.0
        %4000 = vmatpush1.msra.mxu0 0.0
        %4001 = vmatprep.subr.mxu0 0.0
        %4002 = vmatpush1.msra.mxu0 0.0
        %4003 = vmatprep.subr.mxu0 0.0
        %4004 = vmatpush1.msra.mxu0 0.0
        %4005 = vmatprep.subr.mxu0 0.0
        %4006 = vmatpush1.msra.mxu0 0.0
        %4007 = vmatprep.subr.mxu0 0.0
        %4008 = vmatpush1.msra.mxu0 0.0
        %4009 = vmatprep.subr.mxu0 0.0
        %4010 = vmatpush1.msra.mxu0 0.0
        %4011 = vmatprep.subr.mxu0 0.0
        %4012 = vmatpush1.msra.mxu0 0.0
        %4013 = vmatprep.subr.mxu0 0.0
        %4014 = vmatpush1.msra.mxu0 0.0
        %4015 = vmatprep.subr.mxu0 0.0
        %4016 = vmatpush1.msra.mxu0 0.0
        %4017 = vmatprep.mubr.f32.mxu0 0.0
        %4018 = vmatmul.mubr.f32.gmra.mrb[0].mxu0 %v3855
        %v4019 = vpop.f32.mrb[0].mxu0
        %v4020 = vadd.f32 %v3851, %v4019
        %v4021 = vpop.f32.mrb[0].mxu0
        %4022 = vmatprep.mubr.f32.mxu0 0.0
        %4023 = vmatmul.mubr.f32.gmra.mrb[0].mxu0 %v3858
        %v4024 = vpop.f32.mrb[0].mxu0
        %v4025 = vadd.f32 %v3851, %v4024
        %v4026 = vpop.f32.mrb[0].mxu0
        %4027 = vmatprep.mubr.f32.mxu0 0.0
        %4028 = vmatmul.mubr.f32.gmra.mrb[0].mxu0 %v3861
        %v4029 = vpop.f32.mrb[0].mxu0
        %v4030 = vadd.f32 %v3851, %v4029
        %v4031 = vpop.f32.mrb[0].mxu0
        %4032 = vmatprep.mubr.f32.mxu0 0.0
        %4033 = vmatmul.mubr.f32.gmra.mrb[0].mxu0 %v3864
        %v4034 = vpop.f32.mrb[0].mxu0
        %v4035 = vadd.f32 %v3851, %v4034
        %v4036 = vpop.f32.mrb[0].mxu0
        %4037 = vmatprep.mubr.f32.mxu0 0.0
        %4038 = vmatmul.mubr.f32.gmra.mrb[0].mxu0 %v3867
        %v4039 = vpop.f32.mrb[0].mxu0
        %v4040 = vadd.f32 %v3851, %v4039
        %v4041 = vpop.f32.mrb[0].mxu0
        %4042 = vmatprep.mubr.f32.mxu0 0.0
        %4043 = vmatmul.mubr.f32.gmra.mrb[0].mxu0 %v3870
        %v4044 = vpop.f32.mrb[0].mxu0
        %v4045 = vadd.f32 %v3851, %v4044
        %v4046 = vpop.f32.mrb[0].mxu0
        %4047 = vmatprep.mubr.f32.mxu0 0.0
        %4048 = vmatmul.mubr.f32.gmra.mrb[0].mxu0 %v3873
        %v4049 = vpop.f32.mrb[0].mxu0
        %v4050 = vadd.f32 %v3851, %v4049
        %v4051 = vpop.f32.mrb[0].mxu0
        %4052 = vmatprep.mubr.f32.mxu0 0.0
        %4053 = vmatmul.mubr.f32.gmra.mrb[0].mxu0 %v3876
        %v4054 = vpop.f32.mrb[0].mxu0
        %v4055 = vadd.f32 %v3851, %v4054
        %v4056 = vpop.f32.mrb[0].mxu0
        %4057 = vmatprep.mubr.f32.mxu0 0.0
        %4058 = vmatmul.mubr.f32.gmra.mrb[0].mxu0 %v3879
        %v4059 = vpop.f32.mrb[0].mxu0
        %v4060 = vadd.f32 %v3851, %v4059
        %v4061 = vpop.f32.mrb[0].mxu0
        %4062 = vmatprep.mubr.f32.mxu0 0.0
        %4063 = vmatmul.mubr.f32.gmra.mrb[0].mxu0 %v3882
        %v4064 = vpop.f32.mrb[0].mxu0
        %v4065 = vadd.f32 %v3851, %v4064
        %v4066 = vpop.f32.mrb[0].mxu0
        %4067 = vmatprep.mubr.f32.mxu0 0.0
        %4068 = vmatmul.mubr.f32.gmra.mrb[0].mxu0 %v3885
        %v4069 = vpop.f32.mrb[0].mxu0
        %v4070 = vadd.f32 %v3851, %v4069
        %v4071 = vpop.f32.mrb[0].mxu0
        %4072 = vmatprep.mubr.f32.mxu0 0.0
        %4073 = vmatmul.mubr.f32.gmra.mrb[0].mxu0 %v3888
        %v4074 = vpop.f32.mrb[0].mxu0
        %v4075 = vadd.f32 %v3851, %v4074
        %v4076 = vpop.f32.mrb[0].mxu0
        %4077 = vmatprep.mubr.f32.mxu0 0.0
        %4078 = vmatmul.mubr.f32.gmra.mrb[0].mxu0 %v3891
        %v4079 = vpop.f32.mrb[0].mxu0
        %v4080 = vadd.f32 %v3851, %v4079
        %v4081 = vpop.f32.mrb[0].mxu0
        %4082 = vmatprep.mubr.f32.mxu0 0.0
        %4083 = vmatmul.mubr.f32.gmra.mrb[0].mxu0 %v3894
        %v4084 = vpop.f32.mrb[0].mxu0
        %v4085 = vadd.f32 %v3851, %v4084
        %v4086 = vpop.f32.mrb[0].mxu0
        %4087 = vmatprep.mubr.f32.mxu0 0.0
        %4088 = vmatmul.mubr.f32.gmra.mrb[0].mxu0 %v3897
        %v4089 = vpop.f32.mrb[0].mxu0
        %v4090 = vadd.f32 %v3851, %v4089
        %v4091 = vpop.f32.mrb[0].mxu0
        %4092 = vmatprep.mubr.f32.mxu0 0.0
        %4093 = vmatmul.mubr.f32.gmra.mrb[0].mxu0 %v3900
        %v4094 = vpop.f32.mrb[0].mxu0
        %v4095 = vadd.f32 %v3851, %v4094
        %v4096 = vpop.f32.mrb[0].mxu0
        %4097 = vmatprep.mubr.f32.mxu0 0.0
        %4098 = vmatmul.mubr.f32.gmra.mrb[0].mxu0 %v3903
        %v4099 = vpop.f32.mrb[0].mxu0
        %v4100 = vadd.f32 %v3851, %v4099
        %v4101 = vpop.f32.mrb[0].mxu0
        %4102 = vmatprep.mubr.f32.mxu0 0.0
        %4103 = vmatmul.mubr.f32.gmra.mrb[0].mxu0 %v3906
        %v4104 = vpop.f32.mrb[0].mxu0
        %v4105 = vadd.f32 %v3851, %v4104
        %v4106 = vpop.f32.mrb[0].mxu0
        %4107 = vmatprep.mubr.f32.mxu0 0.0
        %4108 = vmatmul.mubr.f32.gmra.mrb[0].mxu0 %v3909
        %v4109 = vpop.f32.mrb[0].mxu0
        %v4110 = vadd.f32 %v3851, %v4109
        %v4111 = vpop.f32.mrb[0].mxu0
        %4112 = vmatprep.mubr.f32.mxu0 0.0
        %4113 = vmatmul.mubr.f32.gmra.mrb[0].mxu0 %v3912
        %v4114 = vpop.f32.mrb[0].mxu0
        %v4115 = vadd.f32 %v3851, %v4114
        %v4116 = vpop.f32.mrb[0].mxu0
        %4117 = vmatprep.mubr.f32.mxu0 0.0
        %4118 = vmatmul.mubr.f32.gmra.mrb[0].mxu0 %v3915
        %v4119 = vpop.f32.mrb[0].mxu0
        %v4120 = vadd.f32 %v3851, %v4119
        %v4121 = vpop.f32.mrb[0].mxu0
        %4122 = vmatprep.mubr.f32.mxu0 0.0
        %4123 = vmatmul.mubr.f32.gmra.mrb[0].mxu0 %v3918
        %v4124 = vpop.f32.mrb[0].mxu0
        %v4125 = vadd.f32 %v3851, %v4124
        %v4126 = vpop.f32.mrb[0].mxu0
        %4127 = vmatprep.mubr.f32.mxu0 0.0
        %4128 = vmatmul.mubr.f32.gmra.mrb[0].mxu0 %v3921
        %v4129 = vpop.f32.mrb[0].mxu0
        %v4130 = vadd.f32 %v3851, %v4129
        %v4131 = vpop.f32.mrb[0].mxu0
        %4132 = vmatprep.mubr.f32.mxu0 0.0
        %4133 = vmatmul.mubr.f32.gmra.mrb[0].mxu0 %v3924
        %v4134 = vpop.f32.mrb[0].mxu0
        %v4135 = vadd.f32 %v3851, %v4134
        %v4136 = vpop.f32.mrb[0].mxu0
        %4137 = vmatprep.mubr.f32.mxu0 0.0
        %4138 = vmatmul.mubr.f32.gmra.mrb[0].mxu0 %v3927
        %v4139 = vpop.f32.mrb[0].mxu0
        %v4140 = vadd.f32 %v3851, %v4139
        %v4141 = vpop.f32.mrb[0].mxu0
        %4142 = vmatprep.mubr.f32.mxu0 0.0
        %4143 = vmatmul.mubr.f32.gmra.mrb[0].mxu0 %v3930
        %v4144 = vpop.f32.mrb[0].mxu0
        %v4145 = vadd.f32 %v3851, %v4144
        %v4146 = vpop.f32.mrb[0].mxu0
        %4147 = vmatprep.mubr.f32.mxu0 0.0
        %4148 = vmatmul.mubr.f32.gmra.mrb[0].mxu0 %v3933
        %v4149 = vpop.f32.mrb[0].mxu0
        %v4150 = vadd.f32 %v3851, %v4149
        %v4151 = vpop.f32.mrb[0].mxu0
        %4152 = vmatprep.mubr.f32.mxu0 0.0
        %4153 = vmatmul.mubr.f32.gmra.mrb[0].mxu0 %v3936
        %v4154 = vpop.f32.mrb[0].mxu0
        %v4155 = vadd.f32 %v3851, %v4154
        %v4156 = vpop.f32.mrb[0].mxu0
        %4157 = vmatprep.mubr.f32.mxu0 0.0
        %4158 = vmatmul.mubr.f32.gmra.mrb[0].mxu0 %v3939
        %v4159 = vpop.f32.mrb[0].mxu0
        %v4160 = vadd.f32 %v3851, %v4159
        %v4161 = vpop.f32.mrb[0].mxu0
        %4162 = vmatprep.mubr.f32.mxu0 0.0
        %4163 = vmatmul.mubr.f32.gmra.mrb[0].mxu0 %v3942
        %v4164 = vpop.f32.mrb[0].mxu0
        %v4165 = vadd.f32 %v3851, %v4164
        %v4166 = vpop.f32.mrb[0].mxu0
        %4167 = vmatprep.mubr.f32.mxu0 0.0
        %4168 = vmatmul.mubr.f32.gmra.mrb[0].mxu0 %v3945
        %v4169 = vpop.f32.mrb[0].mxu0
        %v4170 = vadd.f32 %v3851, %v4169
        %v4171 = vpop.f32.mrb[0].mxu0
        %4172 = vmatprep.mubr.f32.mxu0 0.0
        %4173 = vmatmul.mubr.f32.gmra.mrb[0].mxu0 %v3948
        %v4174 = vpop.f32.mrb[0].mxu0
        %v4175 = vadd.f32 %v3851, %v4174
        %v4176 = vpop.f32.mrb[0].mxu0
        %4177 = vdwg.mxu0
        %vm4178 = vcmp.gt.f32.partialorder %v4020, 0.0
        %vm4179 = vcmp.gt.f32.partialorder %v4025, 0.0
        %vm4180 = vcmp.gt.f32.partialorder %v4030, 0.0
        %vm4181 = vcmp.gt.f32.partialorder %v4035, 0.0
        %vm4182 = vcmp.gt.f32.partialorder %v4040, 0.0
        %vm4183 = vcmp.gt.f32.partialorder %v4045, 0.0
        %vm4184 = vcmp.gt.f32.partialorder %v4050, 0.0
        %vm4185 = vcmp.gt.f32.partialorder %v4055, 0.0
        %vm4186 = vcmp.gt.f32.partialorder %v4060, 0.0
        %vm4187 = vcmp.gt.f32.partialorder %v4065, 0.0
        %vm4188 = vcmp.gt.f32.partialorder %v4070, 0.0
        %vm4189 = vcmp.gt.f32.partialorder %v4075, 0.0
        %vm4190 = vcmp.gt.f32.partialorder %v4080, 0.0
        %vm4191 = vcmp.gt.f32.partialorder %v4085, 0.0
        %vm4192 = vcmp.gt.f32.partialorder %v4090, 0.0
        %vm4193 = vcmp.gt.f32.partialorder %v4095, 0.0
        %vm4194 = vcmp.gt.f32.partialorder %v4100, 0.0
        %vm4195 = vcmp.gt.f32.partialorder %v4105, 0.0
        %vm4196 = vcmp.gt.f32.partialorder %v4110, 0.0
        %vm4197 = vcmp.gt.f32.partialorder %v4115, 0.0
        %vm4198 = vcmp.gt.f32.partialorder %v4120, 0.0
        %vm4199 = vcmp.gt.f32.partialorder %v4125, 0.0
        %vm4200 = vcmp.gt.f32.partialorder %v4130, 0.0
        %vm4201 = vcmp.gt.f32.partialorder %v4135, 0.0
        %vm4202 = vcmp.gt.f32.partialorder %v4140, 0.0
        %vm4203 = vcmp.gt.f32.partialorder %v4145, 0.0
        %vm4204 = vcmp.gt.f32.partialorder %v4150, 0.0
        %vm4205 = vcmp.gt.f32.partialorder %v4155, 0.0
        %vm4206 = vcmp.gt.f32.partialorder %v4160, 0.0
        %vm4207 = vcmp.gt.f32.partialorder %v4165, 0.0
        %vm4208 = vcmp.gt.f32.partialorder %v4170, 0.0
        %vm4209 = vcmp.gt.f32.partialorder %v4175, 0.0
        %v4210 = vmul.f32 %v4020, 0.02
        %v4211 = vmul.f32 %v4025, 0.02
        %v4212 = vmul.f32 %v4030, 0.02
        %v4213 = vmul.f32 %v4035, 0.02
        %v4214 = vmul.f32 %v4040, 0.02
        %v4215 = vmul.f32 %v4045, 0.02
        %v4216 = vmul.f32 %v4050, 0.02
        %v4217 = vmul.f32 %v4055, 0.02
        %v4218 = vmul.f32 %v4060, 0.02
        %v4219 = vmul.f32 %v4065, 0.02
        %v4220 = vmul.f32 %v4070, 0.02
        %v4221 = vmul.f32 %v4075, 0.02
        %v4222 = vmul.f32 %v4080, 0.02
        %v4223 = vmul.f32 %v4085, 0.02
        %v4224 = vmul.f32 %v4090, 0.02
        %v4225 = vmul.f32 %v4095, 0.02
        %v4226 = vmul.f32 %v4100, 0.02
        %v4227 = vmul.f32 %v4105, 0.02
        %v4228 = vmul.f32 %v4110, 0.02
        %v4229 = vmul.f32 %v4115, 0.02
        %v4230 = vmul.f32 %v4120, 0.02
        %v4231 = vmul.f32 %v4125, 0.02
        %v4232 = vmul.f32 %v4130, 0.02
        %v4233 = vmul.f32 %v4135, 0.02
        %v4234 = vmul.f32 %v4140, 0.02
        %v4235 = vmul.f32 %v4145, 0.02
        %v4236 = vmul.f32 %v4150, 0.02
        %v4237 = vmul.f32 %v4155, 0.02
        %v4238 = vmul.f32 %v4160, 0.02
        %v4239 = vmul.f32 %v4165, 0.02
        %v4240 = vmul.f32 %v4170, 0.02
        %v4241 = vmul.f32 %v4175, 0.02
        %v4242 = vsel %vm4178, %v4020, %v4210
        %v4243 = vsel %vm4179, %v4025, %v4211
        %v4244 = vsel %vm4180, %v4030, %v4212
        %v4245 = vsel %vm4181, %v4035, %v4213
        %v4246 = vsel %vm4182, %v4040, %v4214
        %v4247 = vsel %vm4183, %v4045, %v4215
        %v4248 = vsel %vm4184, %v4050, %v4216
        %v4249 = vsel %vm4185, %v4055, %v4217
        %v4250 = vsel %vm4186, %v4060, %v4218
        %v4251 = vsel %vm4187, %v4065, %v4219
        %v4252 = vsel %vm4188, %v4070, %v4220
        %v4253 = vsel %vm4189, %v4075, %v4221
        %v4254 = vsel %vm4190, %v4080, %v4222
        %v4255 = vsel %vm4191, %v4085, %v4223
        %v4256 = vsel %vm4192, %v4090, %v4224
        %v4257 = vsel %vm4193, %v4095, %v4225
        %v4258 = vsel %vm4194, %v4100, %v4226
        %v4259 = vsel %vm4195, %v4105, %v4227
        %v4260 = vsel %vm4196, %v4110, %v4228
        %v4261 = vsel %vm4197, %v4115, %v4229
        %v4262 = vsel %vm4198, %v4120, %v4230
        %v4263 = vsel %vm4199, %v4125, %v4231
        %v4264 = vsel %vm4200, %v4130, %v4232
        %v4265 = vsel %vm4201, %v4135, %v4233
        %v4266 = vsel %vm4202, %v4140, %v4234
        %v4267 = vsel %vm4203, %v4145, %v4235
        %v4268 = vsel %vm4204, %v4150, %v4236
        %v4269 = vsel %vm4205, %v4155, %v4237
        %v4270 = vsel %vm4206, %v4160, %v4238
        %v4271 = vsel %vm4207, %v4165, %v4239
        %v4272 = vsel %vm4208, %v4170, %v4240
        %v4273 = vsel %vm4209, %v4175, %v4241
        %v4290 = vrot.slane %v4244, 1
        %v4291 = vrot.slane %v4242, 1
        %v4292 = vrot.slane %v4246, 1
        %v4293 = vrot.slane %v4248, 1
        %v4294 = vrot.slane %v4250, 1
        %v4295 = vrot.slane %v4252, 1
        %v4296 = vrot.slane %v4254, 1
        %v4297 = vrot.slane %v4256, 1
        %v4298 = vrot.slane %v4258, 1
        %v4299 = vrot.slane %v4260, 1
        %v4300 = vrot.slane %v4262, 1
        %v4301 = vrot.slane %v4264, 1
        %v4302 = vrot.slane %v4266, 1
        %v4303 = vrot.slane %v4268, 1
        %v4304 = vrot.slane %v4270, 1
        %v4305 = vrot.slane %v4272, 1
        %v4338 = vrot.slane %v4244, 7
        %v4339 = vrot.slane %v4245, 7
        %v4340 = vsel %vm647, %v4338, %v4339
        %v4341 = vrot.slane %v4242, 7
        %v4342 = vrot.slane %v4243, 7
        %v4343 = vsel %vm647, %v4341, %v4342
        %v4344 = vrot.slane %v4246, 7
        %v4345 = vrot.slane %v4247, 7
        %v4346 = vsel %vm647, %v4344, %v4345
        %v4347 = vrot.slane %v4248, 7
        %v4348 = vrot.slane %v4249, 7
        %v4349 = vsel %vm647, %v4347, %v4348
        %v4350 = vrot.slane %v4250, 7
        %v4351 = vrot.slane %v4251, 7
        %v4352 = vsel %vm647, %v4350, %v4351
        %v4353 = vrot.slane %v4252, 7
        %v4354 = vrot.slane %v4253, 7
        %v4355 = vsel %vm647, %v4353, %v4354
        %v4356 = vrot.slane %v4254, 7
        %v4357 = vrot.slane %v4255, 7
        %v4358 = vsel %vm647, %v4356, %v4357
        %v4359 = vrot.slane %v4256, 7
        %v4360 = vrot.slane %v4257, 7
        %v4361 = vsel %vm647, %v4359, %v4360
        %v4362 = vrot.slane %v4258, 7
        %v4363 = vrot.slane %v4259, 7
        %v4364 = vsel %vm647, %v4362, %v4363
        %v4365 = vrot.slane %v4260, 7
        %v4366 = vrot.slane %v4261, 7
        %v4367 = vsel %vm647, %v4365, %v4366
        %v4368 = vrot.slane %v4262, 7
        %v4369 = vrot.slane %v4263, 7
        %v4370 = vsel %vm647, %v4368, %v4369
        %v4371 = vrot.slane %v4264, 7
        %v4372 = vrot.slane %v4265, 7
        %v4373 = vsel %vm647, %v4371, %v4372
        %v4374 = vrot.slane %v4266, 7
        %v4375 = vrot.slane %v4267, 7
        %v4376 = vsel %vm647, %v4374, %v4375
        %v4377 = vrot.slane %v4268, 7
        %v4378 = vrot.slane %v4269, 7
        %v4379 = vsel %vm647, %v4377, %v4378
        %v4380 = vrot.slane %v4270, 7
        %v4381 = vrot.slane %v4271, 7
        %v4382 = vsel %vm647, %v4380, %v4381
        %v4383 = vrot.slane %v4272, 7
        %v4384 = vrot.slane %v4273, 7
        %v4385 = vsel %vm647, %v4383, %v4384
        %v4433 = vrot.slane %v4245, 5
        %v4434 = vrot.slane %v4243, 5
        %v4435 = vrot.slane %v4247, 5
        %v4436 = vrot.slane %v4249, 5
        %v4437 = vrot.slane %v4251, 5
        %v4438 = vrot.slane %v4253, 5
        %v4439 = vrot.slane %v4255, 5
        %v4440 = vrot.slane %v4257, 5
        %v4441 = vrot.slane %v4259, 5
        %v4442 = vrot.slane %v4261, 5
        %v4443 = vrot.slane %v4263, 5
        %v4444 = vrot.slane %v4265, 5
        %v4445 = vrot.slane %v4267, 5
        %v4446 = vrot.slane %v4269, 5
        %v4447 = vrot.slane %v4271, 5
        %v4448 = vrot.slane %v4273, 5
        %v4465 = vsel %vm647, %v4290, %v4338
        %v4466 = vsel %vm647, %v4291, %v4341
        %v4467 = vsel %vm647, %v4292, %v4344
        %v4468 = vsel %vm647, %v4293, %v4347
        %v4469 = vsel %vm647, %v4294, %v4350
        %v4470 = vsel %vm647, %v4295, %v4353
        %v4471 = vsel %vm647, %v4296, %v4356
        %v4472 = vsel %vm647, %v4297, %v4359
        %v4473 = vsel %vm647, %v4298, %v4362
        %v4474 = vsel %vm647, %v4299, %v4365
        %v4475 = vsel %vm647, %v4300, %v4368
        %v4476 = vsel %vm647, %v4301, %v4371
        %v4477 = vsel %vm647, %v4302, %v4374
        %v4478 = vsel %vm647, %v4303, %v4377
        %v4479 = vsel %vm647, %v4304, %v4380
        %v4480 = vsel %vm647, %v4305, %v4383
        %v4481 = vsel %vm647, %v4339, %v4433
        %v4482 = vsel %vm647, %v4342, %v4434
        %v4483 = vsel %vm647, %v4345, %v4435
        %v4484 = vsel %vm647, %v4348, %v4436
        %v4485 = vsel %vm647, %v4351, %v4437
        %v4486 = vsel %vm647, %v4354, %v4438
        %v4487 = vsel %vm647, %v4357, %v4439
        %v4488 = vsel %vm647, %v4360, %v4440
        %v4489 = vsel %vm647, %v4363, %v4441
        %v4490 = vsel %vm647, %v4366, %v4442
        %v4491 = vsel %vm647, %v4369, %v4443
        %v4492 = vsel %vm647, %v4372, %v4444
        %v4493 = vsel %vm647, %v4375, %v4445
        %v4494 = vsel %vm647, %v4378, %v4446
        %v4495 = vsel %vm647, %v4381, %v4447
        %v4496 = vsel %vm647, %v4384, %v4448
        %v4527 = vrot.slane %v4465, 1
        %v4528 = vrot.slane %v4340, 1
        %v4529 = vsel %vm837, %v4527, %v4528
        %v4530 = vrot.slane %v4481, 1
        %v4531 = vsel %vm837, %v4528, %v4530
        %v4532 = vrot.slane %v4466, 1
        %v4533 = vrot.slane %v4343, 1
        %v4534 = vsel %vm837, %v4532, %v4533
        %v4535 = vrot.slane %v4482, 1
        %v4536 = vsel %vm837, %v4533, %v4535
        %v4537 = vrot.slane %v4467, 1
        %v4538 = vrot.slane %v4346, 1
        %v4539 = vsel %vm837, %v4537, %v4538
        %v4540 = vrot.slane %v4483, 1
        %v4541 = vsel %vm837, %v4538, %v4540
        %v4542 = vrot.slane %v4468, 1
        %v4543 = vrot.slane %v4349, 1
        %v4544 = vsel %vm837, %v4542, %v4543
        %v4545 = vrot.slane %v4484, 1
        %v4546 = vsel %vm837, %v4543, %v4545
        %v4547 = vrot.slane %v4469, 1
        %v4548 = vrot.slane %v4352, 1
        %v4549 = vsel %vm837, %v4547, %v4548
        %v4550 = vrot.slane %v4485, 1
        %v4551 = vsel %vm837, %v4548, %v4550
        %v4552 = vrot.slane %v4470, 1
        %v4553 = vrot.slane %v4355, 1
        %v4554 = vsel %vm837, %v4552, %v4553
        %v4555 = vrot.slane %v4486, 1
        %v4556 = vsel %vm837, %v4553, %v4555
        %v4557 = vrot.slane %v4471, 1
        %v4558 = vrot.slane %v4358, 1
        %v4559 = vsel %vm837, %v4557, %v4558
        %v4560 = vrot.slane %v4487, 1
        %v4561 = vsel %vm837, %v4558, %v4560
        %v4562 = vrot.slane %v4472, 1
        %v4563 = vrot.slane %v4361, 1
        %v4564 = vsel %vm837, %v4562, %v4563
        %v4565 = vrot.slane %v4488, 1
        %v4566 = vsel %vm837, %v4563, %v4565
        %v4567 = vrot.slane %v4473, 1
        %v4568 = vrot.slane %v4364, 1
        %v4569 = vsel %vm837, %v4567, %v4568
        %v4570 = vrot.slane %v4489, 1
        %v4571 = vsel %vm837, %v4568, %v4570
        %v4572 = vrot.slane %v4474, 1
        %v4573 = vrot.slane %v4367, 1
        %v4574 = vsel %vm837, %v4572, %v4573
        %v4575 = vrot.slane %v4490, 1
        %v4576 = vsel %vm837, %v4573, %v4575
        %v4577 = vrot.slane %v4475, 1
        %v4578 = vrot.slane %v4370, 1
        %v4579 = vsel %vm837, %v4577, %v4578
        %v4580 = vrot.slane %v4491, 1
        %v4581 = vsel %vm837, %v4578, %v4580
        %v4582 = vrot.slane %v4476, 1
        %v4583 = vrot.slane %v4373, 1
        %v4584 = vsel %vm837, %v4582, %v4583
        %v4585 = vrot.slane %v4492, 1
        %v4586 = vsel %vm837, %v4583, %v4585
        %v4587 = vrot.slane %v4477, 1
        %v4588 = vrot.slane %v4376, 1
        %v4589 = vsel %vm837, %v4587, %v4588
        %v4590 = vrot.slane %v4493, 1
        %v4591 = vsel %vm837, %v4588, %v4590
        %v4592 = vrot.slane %v4478, 1
        %v4593 = vrot.slane %v4379, 1
        %v4594 = vsel %vm837, %v4592, %v4593
        %v4595 = vrot.slane %v4494, 1
        %v4596 = vsel %vm837, %v4593, %v4595
        %v4597 = vrot.slane %v4479, 1
        %v4598 = vrot.slane %v4382, 1
        %v4599 = vsel %vm837, %v4597, %v4598
        %v4600 = vrot.slane %v4495, 1
        %v4601 = vsel %vm837, %v4598, %v4600
        %4602 = vrot.lane.b32.xlu0 %v4529, 1
        %v4603 = vpop.permute.xlu0 %4602
        %4604 = vrot.lane.b32.xlu0 %v4531, 1
        %v4605 = vpop.permute.xlu0 %4604
        %4606 = vrot.lane.b32.xlu0 %v4534, 1
        %v4607 = vpop.permute.xlu0 %4606
        %4608 = vrot.lane.b32.xlu0 %v4536, 1
        %v4609 = vpop.permute.xlu0 %4608
        %4610 = vrot.lane.b32.xlu0 %v4539, 1
        %v4611 = vpop.permute.xlu0 %4610
        %4612 = vrot.lane.b32.xlu0 %v4541, 1
        %v4613 = vpop.permute.xlu0 %4612
        %4614 = vrot.lane.b32.xlu0 %v4544, 1
        %v4615 = vpop.permute.xlu0 %4614
        %4616 = vrot.lane.b32.xlu0 %v4546, 1
        %v4617 = vpop.permute.xlu0 %4616
        %4618 = vrot.lane.b32.xlu0 %v4549, 1
        %v4619 = vpop.permute.xlu0 %4618
        %4620 = vrot.lane.b32.xlu0 %v4551, 1
        %v4621 = vpop.permute.xlu0 %4620
        %4622 = vrot.lane.b32.xlu0 %v4554, 1
        %v4623 = vpop.permute.xlu0 %4622
        %4624 = vrot.lane.b32.xlu0 %v4556, 1
        %v4625 = vpop.permute.xlu0 %4624
        %4626 = vrot.lane.b32.xlu0 %v4559, 1
        %v4627 = vpop.permute.xlu0 %4626
        %4628 = vrot.lane.b32.xlu0 %v4561, 1
        %v4629 = vpop.permute.xlu0 %4628
        %4630 = vrot.lane.b32.xlu0 %v4564, 1
        %v4631 = vpop.permute.xlu0 %4630
        %4632 = vrot.lane.b32.xlu0 %v4566, 1
        %v4633 = vpop.permute.xlu0 %4632
        %4634 = vrot.lane.b32.xlu0 %v4569, 1
        %v4635 = vpop.permute.xlu0 %4634
        %4636 = vrot.lane.b32.xlu0 %v4571, 1
        %v4637 = vpop.permute.xlu0 %4636
        %4638 = vrot.lane.b32.xlu0 %v4574, 1
        %v4639 = vpop.permute.xlu0 %4638
        %4640 = vrot.lane.b32.xlu0 %v4576, 1
        %v4641 = vpop.permute.xlu0 %4640
        %4642 = vrot.lane.b32.xlu0 %v4579, 1
        %v4643 = vpop.permute.xlu0 %4642
        %4644 = vrot.lane.b32.xlu0 %v4581, 1
        %v4645 = vpop.permute.xlu0 %4644
        %4646 = vrot.lane.b32.xlu0 %v4584, 1
        %v4647 = vpop.permute.xlu0 %4646
        %4648 = vrot.lane.b32.xlu0 %v4586, 1
        %v4649 = vpop.permute.xlu0 %4648
        %4650 = vrot.lane.b32.xlu0 %v4589, 1
        %v4651 = vpop.permute.xlu0 %4650
        %4652 = vrot.lane.b32.xlu0 %v4591, 1
        %v4653 = vpop.permute.xlu0 %4652
        %4654 = vrot.lane.b32.xlu0 %v4594, 1
        %v4655 = vpop.permute.xlu0 %4654
        %4656 = vrot.lane.b32.xlu0 %v4596, 1
        %v4657 = vpop.permute.xlu0 %4656
        %4658 = vrot.lane.b32.xlu0 %v4599, 1
        %v4659 = vpop.permute.xlu0 %4658
        %4660 = vrot.lane.b32.xlu0 %v4601, 1
        %v4661 = vpop.permute.xlu0 %4660
        %v4692 = vrot.slane %v4465, 2
        %v4693 = vrot.slane %v4340, 2
        %v4694 = vsel %vm1003, %v4692, %v4693
        %v4695 = vrot.slane %v4481, 2
        %v4696 = vsel %vm1003, %v4693, %v4695
        %v4697 = vrot.slane %v4466, 2
        %v4698 = vrot.slane %v4343, 2
        %v4699 = vsel %vm1003, %v4697, %v4698
        %v4700 = vrot.slane %v4482, 2
        %v4701 = vsel %vm1003, %v4698, %v4700
        %v4702 = vrot.slane %v4467, 2
        %v4703 = vrot.slane %v4346, 2
        %v4704 = vsel %vm1003, %v4702, %v4703
        %v4705 = vrot.slane %v4483, 2
        %v4706 = vsel %vm1003, %v4703, %v4705
        %v4707 = vrot.slane %v4468, 2
        %v4708 = vrot.slane %v4349, 2
        %v4709 = vsel %vm1003, %v4707, %v4708
        %v4710 = vrot.slane %v4484, 2
        %v4711 = vsel %vm1003, %v4708, %v4710
        %v4712 = vrot.slane %v4469, 2
        %v4713 = vrot.slane %v4352, 2
        %v4714 = vsel %vm1003, %v4712, %v4713
        %v4715 = vrot.slane %v4485, 2
        %v4716 = vsel %vm1003, %v4713, %v4715
        %v4717 = vrot.slane %v4470, 2
        %v4718 = vrot.slane %v4355, 2
        %v4719 = vsel %vm1003, %v4717, %v4718
        %v4720 = vrot.slane %v4486, 2
        %v4721 = vsel %vm1003, %v4718, %v4720
        %v4722 = vrot.slane %v4471, 2
        %v4723 = vrot.slane %v4358, 2
        %v4724 = vsel %vm1003, %v4722, %v4723
        %v4725 = vrot.slane %v4487, 2
        %v4726 = vsel %vm1003, %v4723, %v4725
        %v4727 = vrot.slane %v4472, 2
        %v4728 = vrot.slane %v4361, 2
        %v4729 = vsel %vm1003, %v4727, %v4728
        %v4730 = vrot.slane %v4488, 2
        %v4731 = vsel %vm1003, %v4728, %v4730
        %v4732 = vrot.slane %v4473, 2
        %v4733 = vrot.slane %v4364, 2
        %v4734 = vsel %vm1003, %v4732, %v4733
        %v4735 = vrot.slane %v4489, 2
        %v4736 = vsel %vm1003, %v4733, %v4735
        %v4737 = vrot.slane %v4474, 2
        %v4738 = vrot.slane %v4367, 2
        %v4739 = vsel %vm1003, %v4737, %v4738
        %v4740 = vrot.slane %v4490, 2
        %v4741 = vsel %vm1003, %v4738, %v4740
        %v4742 = vrot.slane %v4475, 2
        %v4743 = vrot.slane %v4370, 2
        %v4744 = vsel %vm1003, %v4742, %v4743
        %v4745 = vrot.slane %v4491, 2
        %v4746 = vsel %vm1003, %v4743, %v4745
        %v4747 = vrot.slane %v4476, 2
        %v4748 = vrot.slane %v4373, 2
        %v4749 = vsel %vm1003, %v4747, %v4748
        %v4750 = vrot.slane %v4492, 2
        %v4751 = vsel %vm1003, %v4748, %v4750
        %v4752 = vrot.slane %v4477, 2
        %v4753 = vrot.slane %v4376, 2
        %v4754 = vsel %vm1003, %v4752, %v4753
        %v4755 = vrot.slane %v4493, 2
        %v4756 = vsel %vm1003, %v4753, %v4755
        %v4757 = vrot.slane %v4478, 2
        %v4758 = vrot.slane %v4379, 2
        %v4759 = vsel %vm1003, %v4757, %v4758
        %v4760 = vrot.slane %v4494, 2
        %v4761 = vsel %vm1003, %v4758, %v4760
        %v4762 = vrot.slane %v4479, 2
        %v4763 = vrot.slane %v4382, 2
        %v4764 = vsel %vm1003, %v4762, %v4763
        %v4765 = vrot.slane %v4495, 2
        %v4766 = vsel %vm1003, %v4763, %v4765
        %4767 = vrot.lane.b32.xlu0 %v4694, 2
        %v4768 = vpop.permute.xlu0 %4767
        %4769 = vrot.lane.b32.xlu0 %v4696, 2
        %v4770 = vpop.permute.xlu0 %4769
        %4771 = vrot.lane.b32.xlu0 %v4699, 2
        %v4772 = vpop.permute.xlu0 %4771
        %4773 = vrot.lane.b32.xlu0 %v4701, 2
        %v4774 = vpop.permute.xlu0 %4773
        %4775 = vrot.lane.b32.xlu0 %v4704, 2
        %v4776 = vpop.permute.xlu0 %4775
        %4777 = vrot.lane.b32.xlu0 %v4706, 2
        %v4778 = vpop.permute.xlu0 %4777
        %4779 = vrot.lane.b32.xlu0 %v4709, 2
        %v4780 = vpop.permute.xlu0 %4779
        %4781 = vrot.lane.b32.xlu0 %v4711, 2
        %v4782 = vpop.permute.xlu0 %4781
        %4783 = vrot.lane.b32.xlu0 %v4714, 2
        %v4784 = vpop.permute.xlu0 %4783
        %4785 = vrot.lane.b32.xlu0 %v4716, 2
        %v4786 = vpop.permute.xlu0 %4785
        %4787 = vrot.lane.b32.xlu0 %v4719, 2
        %v4788 = vpop.permute.xlu0 %4787
        %4789 = vrot.lane.b32.xlu0 %v4721, 2
        %v4790 = vpop.permute.xlu0 %4789
        %4791 = vrot.lane.b32.xlu0 %v4724, 2
        %v4792 = vpop.permute.xlu0 %4791
        %4793 = vrot.lane.b32.xlu0 %v4726, 2
        %v4794 = vpop.permute.xlu0 %4793
        %4795 = vrot.lane.b32.xlu0 %v4729, 2
        %v4796 = vpop.permute.xlu0 %4795
        %4797 = vrot.lane.b32.xlu0 %v4731, 2
        %v4798 = vpop.permute.xlu0 %4797
        %4799 = vrot.lane.b32.xlu0 %v4734, 2
        %v4800 = vpop.permute.xlu0 %4799
        %4801 = vrot.lane.b32.xlu0 %v4736, 2
        %v4802 = vpop.permute.xlu0 %4801
        %4803 = vrot.lane.b32.xlu0 %v4739, 2
        %v4804 = vpop.permute.xlu0 %4803
        %4805 = vrot.lane.b32.xlu0 %v4741, 2
        %v4806 = vpop.permute.xlu0 %4805
        %4807 = vrot.lane.b32.xlu0 %v4744, 2
        %v4808 = vpop.permute.xlu0 %4807
        %4809 = vrot.lane.b32.xlu0 %v4746, 2
        %v4810 = vpop.permute.xlu0 %4809
        %4811 = vrot.lane.b32.xlu0 %v4749, 2
        %v4812 = vpop.permute.xlu0 %4811
        %4813 = vrot.lane.b32.xlu0 %v4751, 2
        %v4814 = vpop.permute.xlu0 %4813
        %4815 = vrot.lane.b32.xlu0 %v4754, 2
        %v4816 = vpop.permute.xlu0 %4815
        %4817 = vrot.lane.b32.xlu0 %v4756, 2
        %v4818 = vpop.permute.xlu0 %4817
        %4819 = vrot.lane.b32.xlu0 %v4759, 2
        %v4820 = vpop.permute.xlu0 %4819
        %4821 = vrot.lane.b32.xlu0 %v4761, 2
        %v4822 = vpop.permute.xlu0 %4821
        %4823 = vrot.lane.b32.xlu0 %v4764, 2
        %v4824 = vpop.permute.xlu0 %4823
        %4825 = vrot.lane.b32.xlu0 %v4766, 2
        %v4826 = vpop.permute.xlu0 %4825
        %4858 = vrot.lane.b32.xlu0 %v4466, 3
        %v4859 = vpop.permute.xlu0 %4858
        %4860 = vrot.lane.b32.xlu0 %v4343, 3
        %v4861 = vpop.permute.xlu0 %4860
        %4862 = vrot.lane.b32.xlu0 %v4465, 3
        %v4863 = vpop.permute.xlu0 %4862
        %4864 = vrot.lane.b32.xlu0 %v4340, 3
        %v4865 = vpop.permute.xlu0 %4864
        %4866 = vrot.lane.b32.xlu0 %v4467, 3
        %v4867 = vpop.permute.xlu0 %4866
        %4868 = vrot.lane.b32.xlu0 %v4346, 3
        %v4869 = vpop.permute.xlu0 %4868
        %4870 = vrot.lane.b32.xlu0 %v4468, 3
        %v4871 = vpop.permute.xlu0 %4870
        %4872 = vrot.lane.b32.xlu0 %v4349, 3
        %v4873 = vpop.permute.xlu0 %4872
        %4874 = vrot.lane.b32.xlu0 %v4469, 3
        %v4875 = vpop.permute.xlu0 %4874
        %4876 = vrot.lane.b32.xlu0 %v4352, 3
        %v4877 = vpop.permute.xlu0 %4876
        %4878 = vrot.lane.b32.xlu0 %v4470, 3
        %v4879 = vpop.permute.xlu0 %4878
        %4880 = vrot.lane.b32.xlu0 %v4355, 3
        %v4881 = vpop.permute.xlu0 %4880
        %4882 = vrot.lane.b32.xlu0 %v4471, 3
        %v4883 = vpop.permute.xlu0 %4882
        %4884 = vrot.lane.b32.xlu0 %v4358, 3
        %v4885 = vpop.permute.xlu0 %4884
        %4886 = vrot.lane.b32.xlu0 %v4472, 3
        %v4887 = vpop.permute.xlu0 %4886
        %4888 = vrot.lane.b32.xlu0 %v4361, 3
        %v4889 = vpop.permute.xlu0 %4888
        %4890 = vrot.lane.b32.xlu0 %v4473, 3
        %v4891 = vpop.permute.xlu0 %4890
        %4892 = vrot.lane.b32.xlu0 %v4364, 3
        %v4893 = vpop.permute.xlu0 %4892
        %4894 = vrot.lane.b32.xlu0 %v4474, 3
        %v4895 = vpop.permute.xlu0 %4894
        %4896 = vrot.lane.b32.xlu0 %v4367, 3
        %v4897 = vpop.permute.xlu0 %4896
        %4898 = vrot.lane.b32.xlu0 %v4475, 3
        %v4899 = vpop.permute.xlu0 %4898
        %4900 = vrot.lane.b32.xlu0 %v4370, 3
        %v4901 = vpop.permute.xlu0 %4900
        %4902 = vrot.lane.b32.xlu0 %v4476, 3
        %v4903 = vpop.permute.xlu0 %4902
        %4904 = vrot.lane.b32.xlu0 %v4373, 3
        %v4905 = vpop.permute.xlu0 %4904
        %4906 = vrot.lane.b32.xlu0 %v4477, 3
        %v4907 = vpop.permute.xlu0 %4906
        %4908 = vrot.lane.b32.xlu0 %v4376, 3
        %v4909 = vpop.permute.xlu0 %4908
        %4910 = vrot.lane.b32.xlu0 %v4478, 3
        %v4911 = vpop.permute.xlu0 %4910
        %4912 = vrot.lane.b32.xlu0 %v4379, 3
        %v4913 = vpop.permute.xlu0 %4912
        %4914 = vrot.lane.b32.xlu0 %v4479, 3
        %v4915 = vpop.permute.xlu0 %4914
        %4916 = vrot.lane.b32.xlu0 %v4382, 3
        %v4917 = vpop.permute.xlu0 %4916
        %4918 = vrot.lane.b32.xlu0 %v4480, 3
        %v4919 = vpop.permute.xlu0 %4918
        %4920 = vrot.lane.b32.xlu0 %v4385, 3
        %v4921 = vpop.permute.xlu0 %4920
        %v4955 = vrot.slane %v4480, 1
        %v4956 = vrot.slane %v4385, 1
        %v4957 = vsel %vm837, %v4955, %v4956
        %v4958 = vrot.slane %v4496, 1
        %v4959 = vsel %vm837, %v4956, %v4958
        %4960 = vrot.lane.b32.xlu0 %v4534, 4
        %v4961 = vpop.permute.xlu0 %4960
        %4962 = vrot.lane.b32.xlu0 %v4536, 4
        %v4963 = vpop.permute.xlu0 %4962
        %4964 = vrot.lane.b32.xlu0 %v4529, 4
        %v4965 = vpop.permute.xlu0 %4964
        %4966 = vrot.lane.b32.xlu0 %v4531, 4
        %v4967 = vpop.permute.xlu0 %4966
        %4968 = vrot.lane.b32.xlu0 %v4539, 4
        %v4969 = vpop.permute.xlu0 %4968
        %4970 = vrot.lane.b32.xlu0 %v4541, 4
        %v4971 = vpop.permute.xlu0 %4970
        %4972 = vrot.lane.b32.xlu0 %v4544, 4
        %v4973 = vpop.permute.xlu0 %4972
        %4974 = vrot.lane.b32.xlu0 %v4546, 4
        %v4975 = vpop.permute.xlu0 %4974
        %4976 = vrot.lane.b32.xlu0 %v4549, 4
        %v4977 = vpop.permute.xlu0 %4976
        %4978 = vrot.lane.b32.xlu0 %v4551, 4
        %v4979 = vpop.permute.xlu0 %4978
        %4980 = vrot.lane.b32.xlu0 %v4554, 4
        %v4981 = vpop.permute.xlu0 %4980
        %4982 = vrot.lane.b32.xlu0 %v4556, 4
        %v4983 = vpop.permute.xlu0 %4982
        %4984 = vrot.lane.b32.xlu0 %v4559, 4
        %v4985 = vpop.permute.xlu0 %4984
        %4986 = vrot.lane.b32.xlu0 %v4561, 4
        %v4987 = vpop.permute.xlu0 %4986
        %4988 = vrot.lane.b32.xlu0 %v4564, 4
        %v4989 = vpop.permute.xlu0 %4988
        %4990 = vrot.lane.b32.xlu0 %v4566, 4
        %v4991 = vpop.permute.xlu0 %4990
        %4992 = vrot.lane.b32.xlu0 %v4569, 4
        %v4993 = vpop.permute.xlu0 %4992
        %4994 = vrot.lane.b32.xlu0 %v4571, 4
        %v4995 = vpop.permute.xlu0 %4994
        %4996 = vrot.lane.b32.xlu0 %v4574, 4
        %v4997 = vpop.permute.xlu0 %4996
        %4998 = vrot.lane.b32.xlu0 %v4576, 4
        %v4999 = vpop.permute.xlu0 %4998
        %5000 = vrot.lane.b32.xlu0 %v4579, 4
        %v5001 = vpop.permute.xlu0 %5000
        %5002 = vrot.lane.b32.xlu0 %v4581, 4
        %v5003 = vpop.permute.xlu0 %5002
        %5004 = vrot.lane.b32.xlu0 %v4584, 4
        %v5005 = vpop.permute.xlu0 %5004
        %5006 = vrot.lane.b32.xlu0 %v4586, 4
        %v5007 = vpop.permute.xlu0 %5006
        %5008 = vrot.lane.b32.xlu0 %v4589, 4
        %v5009 = vpop.permute.xlu0 %5008
        %5010 = vrot.lane.b32.xlu0 %v4591, 4
        %v5011 = vpop.permute.xlu0 %5010
        %5012 = vrot.lane.b32.xlu0 %v4594, 4
        %v5013 = vpop.permute.xlu0 %5012
        %5014 = vrot.lane.b32.xlu0 %v4596, 4
        %v5015 = vpop.permute.xlu0 %5014
        %5016 = vrot.lane.b32.xlu0 %v4599, 4
        %v5017 = vpop.permute.xlu0 %5016
        %5018 = vrot.lane.b32.xlu0 %v4601, 4
        %v5019 = vpop.permute.xlu0 %5018
        %5020 = vrot.lane.b32.xlu0 %v4957, 4
        %v5021 = vpop.permute.xlu0 %5020
        %5022 = vrot.lane.b32.xlu0 %v4959, 4
        %v5023 = vpop.permute.xlu0 %5022
        %v5056 = vrot.slane %v4480, 2
        %v5057 = vrot.slane %v4385, 2
        %v5058 = vsel %vm1003, %v5056, %v5057
        %v5059 = vrot.slane %v4496, 2
        %v5060 = vsel %vm1003, %v5057, %v5059
        %5061 = vrot.lane.b32.xlu0 %v4699, 5
        %v5062 = vpop.permute.xlu0 %5061
        %5063 = vrot.lane.b32.xlu0 %v4701, 5
        %v5064 = vpop.permute.xlu0 %5063
        %5065 = vrot.lane.b32.xlu0 %v4694, 5
        %v5066 = vpop.permute.xlu0 %5065
        %5067 = vrot.lane.b32.xlu0 %v4696, 5
        %v5068 = vpop.permute.xlu0 %5067
        %5069 = vrot.lane.b32.xlu0 %v4704, 5
        %v5070 = vpop.permute.xlu0 %5069
        %5071 = vrot.lane.b32.xlu0 %v4706, 5
        %v5072 = vpop.permute.xlu0 %5071
        %5073 = vrot.lane.b32.xlu0 %v4709, 5
        %v5074 = vpop.permute.xlu0 %5073
        %5075 = vrot.lane.b32.xlu0 %v4711, 5
        %v5076 = vpop.permute.xlu0 %5075
        %5077 = vrot.lane.b32.xlu0 %v4714, 5
        %v5078 = vpop.permute.xlu0 %5077
        %5079 = vrot.lane.b32.xlu0 %v4716, 5
        %v5080 = vpop.permute.xlu0 %5079
        %5081 = vrot.lane.b32.xlu0 %v4719, 5
        %v5082 = vpop.permute.xlu0 %5081
        %5083 = vrot.lane.b32.xlu0 %v4721, 5
        %v5084 = vpop.permute.xlu0 %5083
        %5085 = vrot.lane.b32.xlu0 %v4724, 5
        %v5086 = vpop.permute.xlu0 %5085
        %5087 = vrot.lane.b32.xlu0 %v4726, 5
        %v5088 = vpop.permute.xlu0 %5087
        %5089 = vrot.lane.b32.xlu0 %v4729, 5
        %v5090 = vpop.permute.xlu0 %5089
        %5091 = vrot.lane.b32.xlu0 %v4731, 5
        %v5092 = vpop.permute.xlu0 %5091
        %5093 = vrot.lane.b32.xlu0 %v4734, 5
        %v5094 = vpop.permute.xlu0 %5093
        %5095 = vrot.lane.b32.xlu0 %v4736, 5
        %v5096 = vpop.permute.xlu0 %5095
        %5097 = vrot.lane.b32.xlu0 %v4739, 5
        %v5098 = vpop.permute.xlu0 %5097
        %5099 = vrot.lane.b32.xlu0 %v4741, 5
        %v5100 = vpop.permute.xlu0 %5099
        %5101 = vrot.lane.b32.xlu0 %v4744, 5
        %v5102 = vpop.permute.xlu0 %5101
        %5103 = vrot.lane.b32.xlu0 %v4746, 5
        %v5104 = vpop.permute.xlu0 %5103
        %5105 = vrot.lane.b32.xlu0 %v4749, 5
        %v5106 = vpop.permute.xlu0 %5105
        %5107 = vrot.lane.b32.xlu0 %v4751, 5
        %v5108 = vpop.permute.xlu0 %5107
        %5109 = vrot.lane.b32.xlu0 %v4754, 5
        %v5110 = vpop.permute.xlu0 %5109
        %5111 = vrot.lane.b32.xlu0 %v4756, 5
        %v5112 = vpop.permute.xlu0 %5111
        %5113 = vrot.lane.b32.xlu0 %v4759, 5
        %v5114 = vpop.permute.xlu0 %5113
        %5115 = vrot.lane.b32.xlu0 %v4761, 5
        %v5116 = vpop.permute.xlu0 %5115
        %5117 = vrot.lane.b32.xlu0 %v4764, 5
        %v5118 = vpop.permute.xlu0 %5117
        %5119 = vrot.lane.b32.xlu0 %v4766, 5
        %v5120 = vpop.permute.xlu0 %5119
        %5121 = vrot.lane.b32.xlu0 %v5058, 5
        %v5122 = vpop.permute.xlu0 %5121
        %5123 = vrot.lane.b32.xlu0 %v5060, 5
        %v5124 = vpop.permute.xlu0 %5123
        %5157 = vrot.lane.b32.xlu0 %v4465, 6
        %v5158 = vpop.permute.xlu0 %5157
        %5159 = vrot.lane.b32.xlu0 %v4340, 6
        %v5160 = vpop.permute.xlu0 %5159
        %5161 = vrot.lane.b32.xlu0 %v4467, 6
        %v5162 = vpop.permute.xlu0 %5161
        %5163 = vrot.lane.b32.xlu0 %v4346, 6
        %v5164 = vpop.permute.xlu0 %5163
        %5165 = vrot.lane.b32.xlu0 %v4468, 6
        %v5166 = vpop.permute.xlu0 %5165
        %5167 = vrot.lane.b32.xlu0 %v4349, 6
        %v5168 = vpop.permute.xlu0 %5167
        %5169 = vrot.lane.b32.xlu0 %v4469, 6
        %v5170 = vpop.permute.xlu0 %5169
        %5171 = vrot.lane.b32.xlu0 %v4352, 6
        %v5172 = vpop.permute.xlu0 %5171
        %5173 = vrot.lane.b32.xlu0 %v4470, 6
        %v5174 = vpop.permute.xlu0 %5173
        %5175 = vrot.lane.b32.xlu0 %v4355, 6
        %v5176 = vpop.permute.xlu0 %5175
        %5177 = vrot.lane.b32.xlu0 %v4471, 6
        %v5178 = vpop.permute.xlu0 %5177
        %5179 = vrot.lane.b32.xlu0 %v4358, 6
        %v5180 = vpop.permute.xlu0 %5179
        %5181 = vrot.lane.b32.xlu0 %v4472, 6
        %v5182 = vpop.permute.xlu0 %5181
        %5183 = vrot.lane.b32.xlu0 %v4361, 6
        %v5184 = vpop.permute.xlu0 %5183
        %5185 = vrot.lane.b32.xlu0 %v4473, 6
        %v5186 = vpop.permute.xlu0 %5185
        %5187 = vrot.lane.b32.xlu0 %v4364, 6
        %v5188 = vpop.permute.xlu0 %5187
        %5189 = vrot.lane.b32.xlu0 %v4474, 6
        %v5190 = vpop.permute.xlu0 %5189
        %5191 = vrot.lane.b32.xlu0 %v4367, 6
        %v5192 = vpop.permute.xlu0 %5191
        %5193 = vrot.lane.b32.xlu0 %v4475, 6
        %v5194 = vpop.permute.xlu0 %5193
        %5195 = vrot.lane.b32.xlu0 %v4370, 6
        %v5196 = vpop.permute.xlu0 %5195
        %5197 = vrot.lane.b32.xlu0 %v4476, 6
        %v5198 = vpop.permute.xlu0 %5197
        %5199 = vrot.lane.b32.xlu0 %v4373, 6
        %v5200 = vpop.permute.xlu0 %5199
        %5201 = vrot.lane.b32.xlu0 %v4477, 6
        %v5202 = vpop.permute.xlu0 %5201
        %5203 = vrot.lane.b32.xlu0 %v4376, 6
        %v5204 = vpop.permute.xlu0 %5203
        %5205 = vrot.lane.b32.xlu0 %v4478, 6
        %v5206 = vpop.permute.xlu0 %5205
        %5207 = vrot.lane.b32.xlu0 %v4379, 6
        %v5208 = vpop.permute.xlu0 %5207
        %5209 = vrot.lane.b32.xlu0 %v4479, 6
        %v5210 = vpop.permute.xlu0 %5209
        %5211 = vrot.lane.b32.xlu0 %v4382, 6
        %v5212 = vpop.permute.xlu0 %5211
        %5213 = vrot.lane.b32.xlu0 %v4480, 6
        %v5214 = vpop.permute.xlu0 %5213
        %5215 = vrot.lane.b32.xlu0 %v4385, 6
        %v5216 = vpop.permute.xlu0 %5215
        %5247 = vrot.lane.b32.xlu0 %v4529, 7
        %v5248 = vpop.permute.xlu0 %5247
        %5249 = vrot.lane.b32.xlu0 %v4531, 7
        %v5250 = vpop.permute.xlu0 %5249
        %5251 = vrot.lane.b32.xlu0 %v4539, 7
        %v5252 = vpop.permute.xlu0 %5251
        %5253 = vrot.lane.b32.xlu0 %v4541, 7
        %v5254 = vpop.permute.xlu0 %5253
        %5255 = vrot.lane.b32.xlu0 %v4544, 7
        %v5256 = vpop.permute.xlu0 %5255
        %5257 = vrot.lane.b32.xlu0 %v4546, 7
        %v5258 = vpop.permute.xlu0 %5257
        %5259 = vrot.lane.b32.xlu0 %v4549, 7
        %v5260 = vpop.permute.xlu0 %5259
        %5261 = vrot.lane.b32.xlu0 %v4551, 7
        %v5262 = vpop.permute.xlu0 %5261
        %5263 = vrot.lane.b32.xlu0 %v4554, 7
        %v5264 = vpop.permute.xlu0 %5263
        %5265 = vrot.lane.b32.xlu0 %v4556, 7
        %v5266 = vpop.permute.xlu0 %5265
        %5267 = vrot.lane.b32.xlu0 %v4559, 7
        %v5268 = vpop.permute.xlu0 %5267
        %5269 = vrot.lane.b32.xlu0 %v4561, 7
        %v5270 = vpop.permute.xlu0 %5269
        %5271 = vrot.lane.b32.xlu0 %v4564, 7
        %v5272 = vpop.permute.xlu0 %5271
        %5273 = vrot.lane.b32.xlu0 %v4566, 7
        %v5274 = vpop.permute.xlu0 %5273
        %5275 = vrot.lane.b32.xlu0 %v4569, 7
        %v5276 = vpop.permute.xlu0 %5275
        %5277 = vrot.lane.b32.xlu0 %v4571, 7
        %v5278 = vpop.permute.xlu0 %5277
        %5279 = vrot.lane.b32.xlu0 %v4574, 7
        %v5280 = vpop.permute.xlu0 %5279
        %5281 = vrot.lane.b32.xlu0 %v4576, 7
        %v5282 = vpop.permute.xlu0 %5281
        %5283 = vrot.lane.b32.xlu0 %v4579, 7
        %v5284 = vpop.permute.xlu0 %5283
        %5285 = vrot.lane.b32.xlu0 %v4581, 7
        %v5286 = vpop.permute.xlu0 %5285
        %5287 = vrot.lane.b32.xlu0 %v4584, 7
        %v5288 = vpop.permute.xlu0 %5287
        %5289 = vrot.lane.b32.xlu0 %v4586, 7
        %v5290 = vpop.permute.xlu0 %5289
        %5291 = vrot.lane.b32.xlu0 %v4589, 7
        %v5292 = vpop.permute.xlu0 %5291
        %5293 = vrot.lane.b32.xlu0 %v4591, 7
        %v5294 = vpop.permute.xlu0 %5293
        %5295 = vrot.lane.b32.xlu0 %v4594, 7
        %v5296 = vpop.permute.xlu0 %5295
        %5297 = vrot.lane.b32.xlu0 %v4596, 7
        %v5298 = vpop.permute.xlu0 %5297
        %5299 = vrot.lane.b32.xlu0 %v4599, 7
        %v5300 = vpop.permute.xlu0 %5299
        %5301 = vrot.lane.b32.xlu0 %v4601, 7
        %v5302 = vpop.permute.xlu0 %5301
        %5303 = vrot.lane.b32.xlu0 %v4957, 7
        %v5304 = vpop.permute.xlu0 %5303
        %5305 = vrot.lane.b32.xlu0 %v4959, 7
        %v5306 = vpop.permute.xlu0 %5305
        %5337 = vrot.lane.b32.xlu0 %v4694, 8
        %v5338 = vpop.permute.xlu0 %5337
        %5339 = vrot.lane.b32.xlu0 %v4696, 8
        %v5340 = vpop.permute.xlu0 %5339
        %5341 = vrot.lane.b32.xlu0 %v4704, 8
        %v5342 = vpop.permute.xlu0 %5341
        %5343 = vrot.lane.b32.xlu0 %v4706, 8
        %v5344 = vpop.permute.xlu0 %5343
        %5345 = vrot.lane.b32.xlu0 %v4709, 8
        %v5346 = vpop.permute.xlu0 %5345
        %5347 = vrot.lane.b32.xlu0 %v4711, 8
        %v5348 = vpop.permute.xlu0 %5347
        %5349 = vrot.lane.b32.xlu0 %v4714, 8
        %v5350 = vpop.permute.xlu0 %5349
        %5351 = vrot.lane.b32.xlu0 %v4716, 8
        %v5352 = vpop.permute.xlu0 %5351
        %5353 = vrot.lane.b32.xlu0 %v4719, 8
        %v5354 = vpop.permute.xlu0 %5353
        %5355 = vrot.lane.b32.xlu0 %v4721, 8
        %v5356 = vpop.permute.xlu0 %5355
        %5357 = vrot.lane.b32.xlu0 %v4724, 8
        %v5358 = vpop.permute.xlu0 %5357
        %5359 = vrot.lane.b32.xlu0 %v4726, 8
        %v5360 = vpop.permute.xlu0 %5359
        %5361 = vrot.lane.b32.xlu0 %v4729, 8
        %v5362 = vpop.permute.xlu0 %5361
        %5363 = vrot.lane.b32.xlu0 %v4731, 8
        %v5364 = vpop.permute.xlu0 %5363
        %5365 = vrot.lane.b32.xlu0 %v4734, 8
        %v5366 = vpop.permute.xlu0 %5365
        %5367 = vrot.lane.b32.xlu0 %v4736, 8
        %v5368 = vpop.permute.xlu0 %5367
        %5369 = vrot.lane.b32.xlu0 %v4739, 8
        %v5370 = vpop.permute.xlu0 %5369
        %5371 = vrot.lane.b32.xlu0 %v4741, 8
        %v5372 = vpop.permute.xlu0 %5371
        %5373 = vrot.lane.b32.xlu0 %v4744, 8
        %v5374 = vpop.permute.xlu0 %5373
        %5375 = vrot.lane.b32.xlu0 %v4746, 8
        %v5376 = vpop.permute.xlu0 %5375
        %5377 = vrot.lane.b32.xlu0 %v4749, 8
        %v5378 = vpop.permute.xlu0 %5377
        %5379 = vrot.lane.b32.xlu0 %v4751, 8
        %v5380 = vpop.permute.xlu0 %5379
        %5381 = vrot.lane.b32.xlu0 %v4754, 8
        %v5382 = vpop.permute.xlu0 %5381
        %5383 = vrot.lane.b32.xlu0 %v4756, 8
        %v5384 = vpop.permute.xlu0 %5383
        %5385 = vrot.lane.b32.xlu0 %v4759, 8
        %v5386 = vpop.permute.xlu0 %5385
        %5387 = vrot.lane.b32.xlu0 %v4761, 8
        %v5388 = vpop.permute.xlu0 %5387
        %5389 = vrot.lane.b32.xlu0 %v4764, 8
        %v5390 = vpop.permute.xlu0 %5389
        %5391 = vrot.lane.b32.xlu0 %v4766, 8
        %v5392 = vpop.permute.xlu0 %5391
        %5393 = vrot.lane.b32.xlu0 %v5058, 8
        %v5394 = vpop.permute.xlu0 %5393
        %5395 = vrot.lane.b32.xlu0 %v5060, 8
        %v5396 = vpop.permute.xlu0 %5395
        %v5427 = vsel %vm3586, %v4465, %v4603
        %v5428 = vsel %vm3586, %v4340, %v4605
        %v5429 = vsel %vm3586, %v4466, %v4607
        %v5430 = vsel %vm3586, %v4343, %v4609
        %v5431 = vsel %vm3586, %v4467, %v4611
        %v5432 = vsel %vm3586, %v4346, %v4613
        %v5433 = vsel %vm3586, %v4468, %v4615
        %v5434 = vsel %vm3586, %v4349, %v4617
        %v5435 = vsel %vm3586, %v4469, %v4619
        %v5436 = vsel %vm3586, %v4352, %v4621
        %v5437 = vsel %vm3586, %v4470, %v4623
        %v5438 = vsel %vm3586, %v4355, %v4625
        %v5439 = vsel %vm3586, %v4471, %v4627
        %v5440 = vsel %vm3586, %v4358, %v4629
        %v5441 = vsel %vm3586, %v4472, %v4631
        %v5442 = vsel %vm3586, %v4361, %v4633
        %v5443 = vsel %vm3586, %v4473, %v4635
        %v5444 = vsel %vm3586, %v4364, %v4637
        %v5445 = vsel %vm3586, %v4474, %v4639
        %v5446 = vsel %vm3586, %v4367, %v4641
        %v5447 = vsel %vm3586, %v4475, %v4643
        %v5448 = vsel %vm3586, %v4370, %v4645
        %v5449 = vsel %vm3586, %v4476, %v4647
        %v5450 = vsel %vm3586, %v4373, %v4649
        %v5451 = vsel %vm3586, %v4477, %v4651
        %v5452 = vsel %vm3586, %v4376, %v4653
        %v5453 = vsel %vm3586, %v4478, %v4655
        %v5454 = vsel %vm3586, %v4379, %v4657
        %v5455 = vsel %vm3586, %v4479, %v4659
        %v5456 = vsel %vm3586, %v4382, %v4661
        %v5457 = vsel %vm3617, %v5427, %v4768
        %v5458 = vsel %vm3617, %v5428, %v4770
        %v5459 = vsel %vm3617, %v5429, %v4772
        %v5460 = vsel %vm3617, %v5430, %v4774
        %v5461 = vsel %vm3617, %v5431, %v4776
        %v5462 = vsel %vm3617, %v5432, %v4778
        %v5463 = vsel %vm3617, %v5433, %v4780
        %v5464 = vsel %vm3617, %v5434, %v4782
        %v5465 = vsel %vm3617, %v5435, %v4784
        %v5466 = vsel %vm3617, %v5436, %v4786
        %v5467 = vsel %vm3617, %v5437, %v4788
        %v5468 = vsel %vm3617, %v5438, %v4790
        %v5469 = vsel %vm3617, %v5439, %v4792
        %v5470 = vsel %vm3617, %v5440, %v4794
        %v5471 = vsel %vm3617, %v5441, %v4796
        %v5472 = vsel %vm3617, %v5442, %v4798
        %v5473 = vsel %vm3617, %v5443, %v4800
        %v5474 = vsel %vm3617, %v5444, %v4802
        %v5475 = vsel %vm3617, %v5445, %v4804
        %v5476 = vsel %vm3617, %v5446, %v4806
        %v5477 = vsel %vm3617, %v5447, %v4808
        %v5478 = vsel %vm3617, %v5448, %v4810
        %v5479 = vsel %vm3617, %v5449, %v4812
        %v5480 = vsel %vm3617, %v5450, %v4814
        %v5481 = vsel %vm3617, %v5451, %v4816
        %v5482 = vsel %vm3617, %v5452, %v4818
        %v5483 = vsel %vm3617, %v5453, %v4820
        %v5484 = vsel %vm3617, %v5454, %v4822
        %v5485 = vsel %vm3617, %v5455, %v4824
        %v5486 = vsel %vm3617, %v5456, %v4826
        %v5487 = vsel %vm3648, %v5457, %v4859
        %v5488 = vsel %vm3648, %v5458, %v4861
        %v5489 = vsel %vm3648, %v5459, %v4863
        %v5490 = vsel %vm3648, %v5460, %v4865
        %v5491 = vsel %vm3648, %v5457, %v4867
        %v5492 = vsel %vm3648, %v5458, %v4869
        %v5493 = vsel %vm3648, %v5461, %v4871
        %v5494 = vsel %vm3648, %v5462, %v4873
        %v5495 = vsel %vm3648, %v5463, %v4875
        %v5496 = vsel %vm3648, %v5464, %v4877
        %v5497 = vsel %vm3648, %v5465, %v4879
        %v5498 = vsel %vm3648, %v5466, %v4881
        %v5499 = vsel %vm3648, %v5467, %v4883
        %v5500 = vsel %vm3648, %v5468, %v4885
        %v5501 = vsel %vm3648, %v5469, %v4887
        %v5502 = vsel %vm3648, %v5470, %v4889
        %v5503 = vsel %vm3648, %v5471, %v4891
        %v5504 = vsel %vm3648, %v5472, %v4893
        %v5505 = vsel %vm3648, %v5473, %v4895
        %v5506 = vsel %vm3648, %v5474, %v4897
        %v5507 = vsel %vm3648, %v5475, %v4899
        %v5508 = vsel %vm3648, %v5476, %v4901
        %v5509 = vsel %vm3648, %v5477, %v4903
        %v5510 = vsel %vm3648, %v5478, %v4905
        %v5511 = vsel %vm3648, %v5479, %v4907
        %v5512 = vsel %vm3648, %v5480, %v4909
        %v5513 = vsel %vm3648, %v5481, %v4911
        %v5514 = vsel %vm3648, %v5482, %v4913
        %v5515 = vsel %vm3648, %v5483, %v4915
        %v5516 = vsel %vm3648, %v5484, %v4917
        %v5517 = vsel %vm3648, %v5485, %v4919
        %v5518 = vsel %vm3648, %v5486, %v4921
        %v5519 = vsel %vm1739, %v5487, %v4961
        %v5520 = vsel %vm1739, %v5488, %v4963
        %v5521 = vsel %vm1739, %v5489, %v4965
        %v5522 = vsel %vm1739, %v5490, %v4967
        %v5523 = vsel %vm1739, %v5491, %v4969
        %v5524 = vsel %vm1739, %v5492, %v4971
        %v5525 = vsel %vm1739, %v5493, %v4973
        %v5526 = vsel %vm1739, %v5494, %v4975
        %v5527 = vsel %vm1739, %v5495, %v4977
        %v5528 = vsel %vm1739, %v5496, %v4979
        %v5529 = vsel %vm1739, %v5497, %v4981
        %v5530 = vsel %vm1739, %v5498, %v4983
        %v5531 = vsel %vm1739, %v5499, %v4985
        %v5532 = vsel %vm1739, %v5500, %v4987
        %v5533 = vsel %vm1739, %v5501, %v4989
        %v5534 = vsel %vm1739, %v5502, %v4991
        %v5535 = vsel %vm1739, %v5503, %v4993
        %v5536 = vsel %vm1739, %v5504, %v4995
        %v5537 = vsel %vm1739, %v5505, %v4997
        %v5538 = vsel %vm1739, %v5506, %v4999
        %v5539 = vsel %vm1739, %v5507, %v5001
        %v5540 = vsel %vm1739, %v5508, %v5003
        %v5541 = vsel %vm1739, %v5509, %v5005
        %v5542 = vsel %vm1739, %v5510, %v5007
        %v5543 = vsel %vm1739, %v5511, %v5009
        %v5544 = vsel %vm1739, %v5512, %v5011
        %v5545 = vsel %vm1739, %v5513, %v5013
        %v5546 = vsel %vm1739, %v5514, %v5015
        %v5547 = vsel %vm1739, %v5515, %v5017
        %v5548 = vsel %vm1739, %v5516, %v5019
        %v5549 = vsel %vm1739, %v5517, %v5021
        %v5550 = vsel %vm1739, %v5518, %v5023
        %v5551 = vsel %vm3713, %v5519, %v5062
        %v5552 = vsel %vm3713, %v5520, %v5064
        %v5553 = vsel %vm3713, %v5521, %v5066
        %v5554 = vsel %vm3713, %v5522, %v5068
        %v5555 = vsel %vm3713, %v5523, %v5070
        %v5556 = vsel %vm3713, %v5524, %v5072
        %v5557 = vsel %vm3713, %v5525, %v5074
        %v5558 = vsel %vm3713, %v5526, %v5076
        %v5559 = vsel %vm3713, %v5527, %v5078
        %v5560 = vsel %vm3713, %v5528, %v5080
        %v5561 = vsel %vm3713, %v5529, %v5082
        %v5562 = vsel %vm3713, %v5530, %v5084
        %v5563 = vsel %vm3713, %v5531, %v5086
        %v5564 = vsel %vm3713, %v5532, %v5088
        %v5565 = vsel %vm3713, %v5533, %v5090
        %v5566 = vsel %vm3713, %v5534, %v5092
        %v5567 = vsel %vm3713, %v5535, %v5094
        %v5568 = vsel %vm3713, %v5536, %v5096
        %v5569 = vsel %vm3713, %v5537, %v5098
        %v5570 = vsel %vm3713, %v5538, %v5100
        %v5571 = vsel %vm3713, %v5539, %v5102
        %v5572 = vsel %vm3713, %v5540, %v5104
        %v5573 = vsel %vm3713, %v5541, %v5106
        %v5574 = vsel %vm3713, %v5542, %v5108
        %v5575 = vsel %vm3713, %v5543, %v5110
        %v5576 = vsel %vm3713, %v5544, %v5112
        %v5577 = vsel %vm3713, %v5545, %v5114
        %v5578 = vsel %vm3713, %v5546, %v5116
        %v5579 = vsel %vm3713, %v5547, %v5118
        %v5580 = vsel %vm3713, %v5548, %v5120
        %v5581 = vsel %vm3713, %v5549, %v5122
        %v5582 = vsel %vm3713, %v5550, %v5124
        %v5583 = vsel %vm3746, %v5551, %v5158
        %v5584 = vsel %vm3746, %v5552, %v5160
        %v5585 = vsel %vm3746, %v5553, %v5162
        %v5586 = vsel %vm3746, %v5554, %v5164
        %v5587 = vsel %vm3746, %v5555, %v5166
        %v5588 = vsel %vm3746, %v5556, %v5168
        %v5589 = vsel %vm3746, %v5557, %v5170
        %v5590 = vsel %vm3746, %v5558, %v5172
        %v5591 = vsel %vm3746, %v5559, %v5174
        %v5592 = vsel %vm3746, %v5560, %v5176
        %v5593 = vsel %vm3746, %v5561, %v5178
        %v5594 = vsel %vm3746, %v5562, %v5180
        %v5595 = vsel %vm3746, %v5563, %v5182
        %v5596 = vsel %vm3746, %v5564, %v5184
        %v5597 = vsel %vm3746, %v5565, %v5186
        %v5598 = vsel %vm3746, %v5566, %v5188
        %v5599 = vsel %vm3746, %v5567, %v5190
        %v5600 = vsel %vm3746, %v5568, %v5192
        %v5601 = vsel %vm3746, %v5569, %v5194
        %v5602 = vsel %vm3746, %v5570, %v5196
        %v5603 = vsel %vm3746, %v5571, %v5198
        %v5604 = vsel %vm3746, %v5572, %v5200
        %v5605 = vsel %vm3746, %v5573, %v5202
        %v5606 = vsel %vm3746, %v5574, %v5204
        %v5607 = vsel %vm3746, %v5575, %v5206
        %v5608 = vsel %vm3746, %v5576, %v5208
        %v5609 = vsel %vm3746, %v5577, %v5210
        %v5610 = vsel %vm3746, %v5578, %v5212
        %v5611 = vsel %vm3746, %v5579, %v5214
        %v5612 = vsel %vm3746, %v5580, %v5216
        %v5613 = vsel %vm3746, %v5581, %v5210
        %v5614 = vsel %vm3746, %v5582, %v5212
        %v5615 = vsel %vm3779, %v5583, %v5248
        %v5616 = vsel %vm3779, %v5584, %v5250
        %v5617 = vsel %vm3779, %v5585, %v5252
        %v5618 = vsel %vm3779, %v5586, %v5254
        %v5619 = vsel %vm3779, %v5587, %v5256
        %v5620 = vsel %vm3779, %v5588, %v5258
        %v5621 = vsel %vm3779, %v5589, %v5260
        %v5622 = vsel %vm3779, %v5590, %v5262
        %v5623 = vsel %vm3779, %v5591, %v5264
        %v5624 = vsel %vm3779, %v5592, %v5266
        %v5625 = vsel %vm3779, %v5593, %v5268
        %v5626 = vsel %vm3779, %v5594, %v5270
        %v5627 = vsel %vm3779, %v5595, %v5272
        %v5628 = vsel %vm3779, %v5596, %v5274
        %v5629 = vsel %vm3779, %v5597, %v5276
        %v5630 = vsel %vm3779, %v5598, %v5278
        %v5631 = vsel %vm3779, %v5599, %v5280
        %v5632 = vsel %vm3779, %v5600, %v5282
        %v5633 = vsel %vm3779, %v5601, %v5284
        %v5634 = vsel %vm3779, %v5602, %v5286
        %v5635 = vsel %vm3779, %v5603, %v5288
        %v5636 = vsel %vm3779, %v5604, %v5290
        %v5637 = vsel %vm3779, %v5605, %v5292
        %v5638 = vsel %vm3779, %v5606, %v5294
        %v5639 = vsel %vm3779, %v5607, %v5296
        %v5640 = vsel %vm3779, %v5608, %v5298
        %v5641 = vsel %vm3779, %v5609, %v5300
        %v5642 = vsel %vm3779, %v5610, %v5302
        %v5643 = vsel %vm3779, %v5611, %v5304
        %v5644 = vsel %vm3779, %v5612, %v5306
        %v5645 = vsel %vm3779, %v5613, %v5300
        %v5646 = vsel %vm3779, %v5614, %v5302
        %v5647 = vsel %vm1770, %v5615, %v5338
        %v5648 = vsel %vm1770, %v5616, %v5340
        %v5649 = vsel %vm1770, %v5617, %v5342
        %v5650 = vsel %vm1770, %v5618, %v5344
        %v5651 = vsel %vm1770, %v5619, %v5346
        %v5652 = vsel %vm1770, %v5620, %v5348
        %v5653 = vsel %vm1770, %v5621, %v5350
        %v5654 = vsel %vm1770, %v5622, %v5352
        %v5655 = vsel %vm1770, %v5623, %v5354
        %v5656 = vsel %vm1770, %v5624, %v5356
        %v5657 = vsel %vm1770, %v5625, %v5358
        %v5658 = vsel %vm1770, %v5626, %v5360
        %v5659 = vsel %vm1770, %v5627, %v5362
        %v5660 = vsel %vm1770, %v5628, %v5364
        %v5661 = vsel %vm1770, %v5629, %v5366
        %v5662 = vsel %vm1770, %v5630, %v5368
        %v5663 = vsel %vm1770, %v5631, %v5370
        %v5664 = vsel %vm1770, %v5632, %v5372
        %v5665 = vsel %vm1770, %v5633, %v5374
        %v5666 = vsel %vm1770, %v5634, %v5376
        %v5667 = vsel %vm1770, %v5635, %v5378
        %v5668 = vsel %vm1770, %v5636, %v5380
        %v5669 = vsel %vm1770, %v5637, %v5382
        %v5670 = vsel %vm1770, %v5638, %v5384
        %v5671 = vsel %vm1770, %v5639, %v5386
        %v5672 = vsel %vm1770, %v5640, %v5388
        %v5673 = vsel %vm1770, %v5641, %v5390
        %v5674 = vsel %vm1770, %v5642, %v5392
        %v5675 = vsel %vm1770, %v5643, %v5394
        %v5676 = vsel %vm1770, %v5644, %v5396
        %v5677 = vsel %vm1770, %v5645, %v5390
        %v5678 = vsel %vm1770, %v5646, %v5392
        %v5679 = vld [vmem:[%s4] sm:$0xff]
        %v5680 = vld [vmem:[%s4 + $0x8] sm:$0x1]
        %v5681 = vld [vmem:[%s5] sm:$0x1]
        %v5683 = vlaneseq
        %v5684 = vshrl.u32 %v5683, 7
        %v5685 = vsub.s32 0, %v5684
        %v5686 = vrot.slane %v5681, %v5685
        %v5689 = vsel %vm3853, %v5647, 0
        %v5692 = vsel %vm3853, %v5648, 0
        %v5695 = vsel %vm3853, %v5649, 0
        %v5698 = vsel %vm3853, %v5650, 0
        %v5701 = vsel %vm3853, %v5651, 0
        %v5704 = vsel %vm3853, %v5652, 0
        %v5707 = vsel %vm3853, %v5653, 0
        %v5710 = vsel %vm3853, %v5654, 0
        %v5713 = vsel %vm3853, %v5655, 0
        %v5716 = vsel %vm3853, %v5656, 0
        %v5719 = vsel %vm3853, %v5657, 0
        %v5722 = vsel %vm3853, %v5658, 0
        %v5725 = vsel %vm3853, %v5659, 0
        %v5728 = vsel %vm3853, %v5660, 0
        %v5731 = vsel %vm3853, %v5661, 0
        %v5734 = vsel %vm3853, %v5662, 0
        %v5737 = vsel %vm3853, %v5663, 0
        %v5740 = vsel %vm3853, %v5664, 0
        %v5743 = vsel %vm3853, %v5665, 0
        %v5746 = vsel %vm3853, %v5666, 0
        %v5749 = vsel %vm3853, %v5667, 0
        %v5752 = vsel %vm3853, %v5668, 0
        %v5755 = vsel %vm3853, %v5669, 0
        %v5758 = vsel %vm3853, %v5670, 0
        %v5761 = vsel %vm3853, %v5671, 0
        %v5764 = vsel %vm3853, %v5672, 0
        %v5767 = vsel %vm3853, %v5673, 0
        %v5770 = vsel %vm3853, %v5674, 0
        %v5773 = vsel %vm3853, %v5675, 0
        %v5776 = vsel %vm3853, %v5676, 0
        %v5779 = vsel %vm3853, %v5677, 0
        %v5782 = vsel %vm3853, %v5678, 0
        %v5785 = vsel %vm647, %v5680, 0
        %5787 = vmatprep.subr.mxu0 0.0
        %5788 = vmatpush1.msra.mxu0 %v5679
        %5789 = vmatprep.subr.mxu0 0.0
        %5790 = vmatpush1.msra.mxu0 %v5785
        %5791 = vmatprep.subr.mxu0 0.0
        %5792 = vmatpush1.msra.mxu0 0.0
        %5793 = vmatprep.subr.mxu0 0.0
        %5794 = vmatpush1.msra.mxu0 0.0
        %5795 = vmatprep.subr.mxu0 0.0
        %5796 = vmatpush1.msra.mxu0 0.0
        %5797 = vmatprep.subr.mxu0 0.0
        %5798 = vmatpush1.msra.mxu0 0.0
        %5799 = vmatprep.subr.mxu0 0.0
        %5800 = vmatpush1.msra.mxu0 0.0
        %5801 = vmatprep.subr.mxu0 0.0
        %5802 = vmatpush1.msra.mxu0 0.0
        %5803 = vmatprep.subr.mxu0 0.0
        %5804 = vmatpush1.msra.mxu0 0.0
        %5805 = vmatprep.subr.mxu0 0.0
        %5806 = vmatpush1.msra.mxu0 0.0
        %5807 = vmatprep.subr.mxu0 0.0
        %5808 = vmatpush1.msra.mxu0 0.0
        %5809 = vmatprep.subr.mxu0 0.0
        %5810 = vmatpush1.msra.mxu0 0.0
        %5811 = vmatprep.subr.mxu0 0.0
        %5812 = vmatpush1.msra.mxu0 0.0
        %5813 = vmatprep.subr.mxu0 0.0
        %5814 = vmatpush1.msra.mxu0 0.0
        %5815 = vmatprep.subr.mxu0 0.0
        %5816 = vmatpush1.msra.mxu0 0.0
        %5817 = vmatprep.subr.mxu0 0.0
        %5818 = vmatpush1.msra.mxu0 0.0
        %5819 = vmatprep.subr.mxu0 0.0
        %5820 = vmatpush1.msra.mxu0 0.0
        %5821 = vmatprep.subr.mxu0 0.0
        %5822 = vmatpush1.msra.mxu0 0.0
        %5823 = vmatprep.subr.mxu0 0.0
        %5824 = vmatpush1.msra.mxu0 0.0
        %5825 = vmatprep.subr.mxu0 0.0
        %5826 = vmatpush1.msra.mxu0 0.0
        %5827 = vmatprep.subr.mxu0 0.0
        %5828 = vmatpush1.msra.mxu0 0.0
        %5829 = vmatprep.subr.mxu0 0.0
        %5830 = vmatpush1.msra.mxu0 0.0
        %5831 = vmatprep.subr.mxu0 0.0
        %5832 = vmatpush1.msra.mxu0 0.0
        %5833 = vmatprep.subr.mxu0 0.0
        %5834 = vmatpush1.msra.mxu0 0.0
        %5835 = vmatprep.subr.mxu0 0.0
        %5836 = vmatpush1.msra.mxu0 0.0
        %5837 = vmatprep.subr.mxu0 0.0
        %5838 = vmatpush1.msra.mxu0 0.0
        %5839 = vmatprep.subr.mxu0 0.0
        %5840 = vmatpush1.msra.mxu0 0.0
        %5841 = vmatprep.subr.mxu0 0.0
        %5842 = vmatpush1.msra.mxu0 0.0
        %5843 = vmatprep.subr.mxu0 0.0
        %5844 = vmatpush1.msra.mxu0 0.0
        %5845 = vmatprep.subr.mxu0 0.0
        %5846 = vmatpush1.msra.mxu0 0.0
        %5847 = vmatprep.subr.mxu0 0.0
        %5848 = vmatpush1.msra.mxu0 0.0
        %5849 = vmatprep.subr.mxu0 0.0
        %5850 = vmatpush1.msra.mxu0 0.0
        %5851 = vmatprep.mubr.f32.mxu0 0.0
        %5852 = vmatmul.mubr.f32.gmra.mrb[0].mxu0 %v5689
        %v5853 = vpop.f32.mrb[0].mxu0
        %v5854 = vadd.f32 %v5686, %v5853
        %v5855 = vpop.f32.mrb[0].mxu0
        %5856 = vmatprep.mubr.f32.mxu0 0.0
        %5857 = vmatmul.mubr.f32.gmra.mrb[0].mxu0 %v5692
        %v5858 = vpop.f32.mrb[0].mxu0
        %v5859 = vadd.f32 %v5686, %v5858
        %v5860 = vpop.f32.mrb[0].mxu0
        %5861 = vmatprep.mubr.f32.mxu0 0.0
        %5862 = vmatmul.mubr.f32.gmra.mrb[0].mxu0 %v5695
        %v5863 = vpop.f32.mrb[0].mxu0
        %v5864 = vadd.f32 %v5686, %v5863
        %v5865 = vpop.f32.mrb[0].mxu0
        %5866 = vmatprep.mubr.f32.mxu0 0.0
        %5867 = vmatmul.mubr.f32.gmra.mrb[0].mxu0 %v5698
        %v5868 = vpop.f32.mrb[0].mxu0
        %v5869 = vadd.f32 %v5686, %v5868
        %v5870 = vpop.f32.mrb[0].mxu0
        %5871 = vmatprep.mubr.f32.mxu0 0.0
        %5872 = vmatmul.mubr.f32.gmra.mrb[0].mxu0 %v5701
        %v5873 = vpop.f32.mrb[0].mxu0
        %v5874 = vadd.f32 %v5686, %v5873
        %v5875 = vpop.f32.mrb[0].mxu0
        %5876 = vmatprep.mubr.f32.mxu0 0.0
        %5877 = vmatmul.mubr.f32.gmra.mrb[0].mxu0 %v5704
        %v5878 = vpop.f32.mrb[0].mxu0
        %v5879 = vadd.f32 %v5686, %v5878
        %v5880 = vpop.f32.mrb[0].mxu0
        %5881 = vmatprep.mubr.f32.mxu0 0.0
        %5882 = vmatmul.mubr.f32.gmra.mrb[0].mxu0 %v5707
        %v5883 = vpop.f32.mrb[0].mxu0
        %v5884 = vadd.f32 %v5686, %v5883
        %v5885 = vpop.f32.mrb[0].mxu0
        %5886 = vmatprep.mubr.f32.mxu0 0.0
        %5887 = vmatmul.mubr.f32.gmra.mrb[0].mxu0 %v5710
        %v5888 = vpop.f32.mrb[0].mxu0
        %v5889 = vadd.f32 %v5686, %v5888
        %v5890 = vpop.f32.mrb[0].mxu0
        %5891 = vmatprep.mubr.f32.mxu0 0.0
        %5892 = vmatmul.mubr.f32.gmra.mrb[0].mxu0 %v5713
        %v5893 = vpop.f32.mrb[0].mxu0
        %v5894 = vadd.f32 %v5686, %v5893
        %v5895 = vpop.f32.mrb[0].mxu0
        %5896 = vmatprep.mubr.f32.mxu0 0.0
        %5897 = vmatmul.mubr.f32.gmra.mrb[0].mxu0 %v5716
        %v5898 = vpop.f32.mrb[0].mxu0
        %v5899 = vadd.f32 %v5686, %v5898
        %v5900 = vpop.f32.mrb[0].mxu0
        %5901 = vmatprep.mubr.f32.mxu0 0.0
        %5902 = vmatmul.mubr.f32.gmra.mrb[0].mxu0 %v5719
        %v5903 = vpop.f32.mrb[0].mxu0
        %v5904 = vadd.f32 %v5686, %v5903
        %v5905 = vpop.f32.mrb[0].mxu0
        %5906 = vmatprep.mubr.f32.mxu0 0.0
        %5907 = vmatmul.mubr.f32.gmra.mrb[0].mxu0 %v5722
        %v5908 = vpop.f32.mrb[0].mxu0
        %v5909 = vadd.f32 %v5686, %v5908
        %v5910 = vpop.f32.mrb[0].mxu0
        %5911 = vmatprep.mubr.f32.mxu0 0.0
        %5912 = vmatmul.mubr.f32.gmra.mrb[0].mxu0 %v5725
        %v5913 = vpop.f32.mrb[0].mxu0
        %v5914 = vadd.f32 %v5686, %v5913
        %v5915 = vpop.f32.mrb[0].mxu0
        %5916 = vmatprep.mubr.f32.mxu0 0.0
        %5917 = vmatmul.mubr.f32.gmra.mrb[0].mxu0 %v5728
        %v5918 = vpop.f32.mrb[0].mxu0
        %v5919 = vadd.f32 %v5686, %v5918
        %v5920 = vpop.f32.mrb[0].mxu0
        %5921 = vmatprep.mubr.f32.mxu0 0.0
        %5922 = vmatmul.mubr.f32.gmra.mrb[0].mxu0 %v5731
        %v5923 = vpop.f32.mrb[0].mxu0
        %v5924 = vadd.f32 %v5686, %v5923
        %v5925 = vpop.f32.mrb[0].mxu0
        %5926 = vmatprep.mubr.f32.mxu0 0.0
        %5927 = vmatmul.mubr.f32.gmra.mrb[0].mxu0 %v5734
        %v5928 = vpop.f32.mrb[0].mxu0
        %v5929 = vadd.f32 %v5686, %v5928
        %v5930 = vpop.f32.mrb[0].mxu0
        %5931 = vmatprep.mubr.f32.mxu0 0.0
        %5932 = vmatmul.mubr.f32.gmra.mrb[0].mxu0 %v5737
        %v5933 = vpop.f32.mrb[0].mxu0
        %v5934 = vadd.f32 %v5686, %v5933
        %v5935 = vpop.f32.mrb[0].mxu0
        %5936 = vmatprep.mubr.f32.mxu0 0.0
        %5937 = vmatmul.mubr.f32.gmra.mrb[0].mxu0 %v5740
        %v5938 = vpop.f32.mrb[0].mxu0
        %v5939 = vadd.f32 %v5686, %v5938
        %v5940 = vpop.f32.mrb[0].mxu0
        %5941 = vmatprep.mubr.f32.mxu0 0.0
        %5942 = vmatmul.mubr.f32.gmra.mrb[0].mxu0 %v5743
        %v5943 = vpop.f32.mrb[0].mxu0
        %v5944 = vadd.f32 %v5686, %v5943
        %v5945 = vpop.f32.mrb[0].mxu0
        %5946 = vmatprep.mubr.f32.mxu0 0.0
        %5947 = vmatmul.mubr.f32.gmra.mrb[0].mxu0 %v5746
        %v5948 = vpop.f32.mrb[0].mxu0
        %v5949 = vadd.f32 %v5686, %v5948
        %v5950 = vpop.f32.mrb[0].mxu0
        %5951 = vmatprep.mubr.f32.mxu0 0.0
        %5952 = vmatmul.mubr.f32.gmra.mrb[0].mxu0 %v5749
        %v5953 = vpop.f32.mrb[0].mxu0
        %v5954 = vadd.f32 %v5686, %v5953
        %v5955 = vpop.f32.mrb[0].mxu0
        %5956 = vmatprep.mubr.f32.mxu0 0.0
        %5957 = vmatmul.mubr.f32.gmra.mrb[0].mxu0 %v5752
        %v5958 = vpop.f32.mrb[0].mxu0
        %v5959 = vadd.f32 %v5686, %v5958
        %v5960 = vpop.f32.mrb[0].mxu0
        %5961 = vmatprep.mubr.f32.mxu0 0.0
        %5962 = vmatmul.mubr.f32.gmra.mrb[0].mxu0 %v5755
        %v5963 = vpop.f32.mrb[0].mxu0
        %v5964 = vadd.f32 %v5686, %v5963
        %v5965 = vpop.f32.mrb[0].mxu0
        %5966 = vmatprep.mubr.f32.mxu0 0.0
        %5967 = vmatmul.mubr.f32.gmra.mrb[0].mxu0 %v5758
        %v5968 = vpop.f32.mrb[0].mxu0
        %v5969 = vadd.f32 %v5686, %v5968
        %v5970 = vpop.f32.mrb[0].mxu0
        %5971 = vmatprep.mubr.f32.mxu0 0.0
        %5972 = vmatmul.mubr.f32.gmra.mrb[0].mxu0 %v5761
        %v5973 = vpop.f32.mrb[0].mxu0
        %v5974 = vadd.f32 %v5686, %v5973
        %v5975 = vpop.f32.mrb[0].mxu0
        %5976 = vmatprep.mubr.f32.mxu0 0.0
        %5977 = vmatmul.mubr.f32.gmra.mrb[0].mxu0 %v5764
        %v5978 = vpop.f32.mrb[0].mxu0
        %v5979 = vadd.f32 %v5686, %v5978
        %v5980 = vpop.f32.mrb[0].mxu0
        %5981 = vmatprep.mubr.f32.mxu0 0.0
        %5982 = vmatmul.mubr.f32.gmra.mrb[0].mxu0 %v5767
        %v5983 = vpop.f32.mrb[0].mxu0
        %v5984 = vadd.f32 %v5686, %v5983
        %v5985 = vpop.f32.mrb[0].mxu0
        %5986 = vmatprep.mubr.f32.mxu0 0.0
        %5987 = vmatmul.mubr.f32.gmra.mrb[0].mxu0 %v5770
        %v5988 = vpop.f32.mrb[0].mxu0
        %v5989 = vadd.f32 %v5686, %v5988
        %v5990 = vpop.f32.mrb[0].mxu0
        %5991 = vmatprep.mubr.f32.mxu0 0.0
        %5992 = vmatmul.mubr.f32.gmra.mrb[0].mxu0 %v5773
        %v5993 = vpop.f32.mrb[0].mxu0
        %v5994 = vadd.f32 %v5686, %v5993
        %v5995 = vpop.f32.mrb[0].mxu0
        %5996 = vmatprep.mubr.f32.mxu0 0.0
        %5997 = vmatmul.mubr.f32.gmra.mrb[0].mxu0 %v5776
        %v5998 = vpop.f32.mrb[0].mxu0
        %v5999 = vadd.f32 %v5686, %v5998
        %v6000 = vpop.f32.mrb[0].mxu0
        %6001 = vmatprep.mubr.f32.mxu0 0.0
        %6002 = vmatmul.mubr.f32.gmra.mrb[0].mxu0 %v5779
        %v6003 = vpop.f32.mrb[0].mxu0
        %v6004 = vadd.f32 %v5686, %v6003
        %v6005 = vpop.f32.mrb[0].mxu0
        %6006 = vmatprep.mubr.f32.mxu0 0.0
        %6007 = vmatmul.mubr.f32.gmra.mrb[0].mxu0 %v5782
        %v6008 = vpop.f32.mrb[0].mxu0
        %v6009 = vadd.f32 %v5686, %v6008
        %v6010 = vpop.f32.mrb[0].mxu0
        %6011 = vdwg.mxu0
        %v6012 = vadd.f32 %v5854, %v465
        %v6013 = vadd.f32 %v5859, %v466
        %v6014 = vadd.f32 %v5864, %v467
        %v6015 = vadd.f32 %v5869, %v468
        %v6016 = vadd.f32 %v5874, %v469
        %v6017 = vadd.f32 %v5879, %v470
        %v6018 = vadd.f32 %v5884, %v471
        %v6019 = vadd.f32 %v5889, %v472
        %v6020 = vadd.f32 %v5894, %v473
        %v6021 = vadd.f32 %v5899, %v474
        %v6022 = vadd.f32 %v5904, %v475
        %v6023 = vadd.f32 %v5909, %v476
        %v6024 = vadd.f32 %v5914, %v477
        %v6025 = vadd.f32 %v5919, %v478
        %v6026 = vadd.f32 %v5924, %v479
        %v6027 = vadd.f32 %v5929, %v480
        %v6028 = vadd.f32 %v5934, %v497
        %v6029 = vadd.f32 %v5939, %v498
        %v6030 = vadd.f32 %v5944, %v499
        %v6031 = vadd.f32 %v5949, %v500
        %v6032 = vadd.f32 %v5954, %v501
        %v6033 = vadd.f32 %v5959, %v502
        %v6034 = vadd.f32 %v5964, %v503
        %v6035 = vadd.f32 %v5969, %v504
        %v6036 = vadd.f32 %v5974, %v505
        %v6037 = vadd.f32 %v5979, %v506
        %v6038 = vadd.f32 %v5984, %v507
        %v6039 = vadd.f32 %v5989, %v508
        %v6040 = vadd.f32 %v5994, %v509
        %v6041 = vadd.f32 %v5999, %v510
        %v6042 = vadd.f32 %v6004, %v511
        %v6043 = vadd.f32 %v6009, %v512
        %v6060 = vrot.slane %v6014, 1
        %v6061 = vrot.slane %v6012, 1
        %v6062 = vrot.slane %v6016, 1
        %v6063 = vrot.slane %v6018, 1
        %v6064 = vrot.slane %v6020, 1
        %v6065 = vrot.slane %v6022, 1
        %v6066 = vrot.slane %v6024, 1
        %v6067 = vrot.slane %v6026, 1
        %v6068 = vrot.slane %v6028, 1
        %v6069 = vrot.slane %v6030, 1
        %v6070 = vrot.slane %v6032, 1
        %v6071 = vrot.slane %v6034, 1
        %v6072 = vrot.slane %v6036, 1
        %v6073 = vrot.slane %v6038, 1
        %v6074 = vrot.slane %v6040, 1
        %v6075 = vrot.slane %v6042, 1
        %v6108 = vrot.slane %v6014, 7
        %v6109 = vrot.slane %v6015, 7
        %v6110 = vsel %vm647, %v6108, %v6109
        %v6111 = vrot.slane %v6012, 7
        %v6112 = vrot.slane %v6013, 7
        %v6113 = vsel %vm647, %v6111, %v6112
        %v6114 = vrot.slane %v6016, 7
        %v6115 = vrot.slane %v6017, 7
        %v6116 = vsel %vm647, %v6114, %v6115
        %v6117 = vrot.slane %v6018, 7
        %v6118 = vrot.slane %v6019, 7
        %v6119 = vsel %vm647, %v6117, %v6118
        %v6120 = vrot.slane %v6020, 7
        %v6121 = vrot.slane %v6021, 7
        %v6122 = vsel %vm647, %v6120, %v6121
        %v6123 = vrot.slane %v6022, 7
        %v6124 = vrot.slane %v6023, 7
        %v6125 = vsel %vm647, %v6123, %v6124
        %v6126 = vrot.slane %v6024, 7
        %v6127 = vrot.slane %v6025, 7
        %v6128 = vsel %vm647, %v6126, %v6127
        %v6129 = vrot.slane %v6026, 7
        %v6130 = vrot.slane %v6027, 7
        %v6131 = vsel %vm647, %v6129, %v6130
        %v6132 = vrot.slane %v6028, 7
        %v6133 = vrot.slane %v6029, 7
        %v6134 = vsel %vm647, %v6132, %v6133
        %v6135 = vrot.slane %v6030, 7
        %v6136 = vrot.slane %v6031, 7
        %v6137 = vsel %vm647, %v6135, %v6136
        %v6138 = vrot.slane %v6032, 7
        %v6139 = vrot.slane %v6033, 7
        %v6140 = vsel %vm647, %v6138, %v6139
        %v6141 = vrot.slane %v6034, 7
        %v6142 = vrot.slane %v6035, 7
        %v6143 = vsel %vm647, %v6141, %v6142
        %v6144 = vrot.slane %v6036, 7
        %v6145 = vrot.slane %v6037, 7
        %v6146 = vsel %vm647, %v6144, %v6145
        %v6147 = vrot.slane %v6038, 7
        %v6148 = vrot.slane %v6039, 7
        %v6149 = vsel %vm647, %v6147, %v6148
        %v6150 = vrot.slane %v6040, 7
        %v6151 = vrot.slane %v6041, 7
        %v6152 = vsel %vm647, %v6150, %v6151
        %v6153 = vrot.slane %v6042, 7
        %v6154 = vrot.slane %v6043, 7
        %v6155 = vsel %vm647, %v6153, %v6154
        %v6203 = vrot.slane %v6015, 5
        %v6204 = vrot.slane %v6013, 5
        %v6205 = vrot.slane %v6017, 5
        %v6206 = vrot.slane %v6019, 5
        %v6207 = vrot.slane %v6021, 5
        %v6208 = vrot.slane %v6023, 5
        %v6209 = vrot.slane %v6025, 5
        %v6210 = vrot.slane %v6027, 5
        %v6211 = vrot.slane %v6029, 5
        %v6212 = vrot.slane %v6031, 5
        %v6213 = vrot.slane %v6033, 5
        %v6214 = vrot.slane %v6035, 5
        %v6215 = vrot.slane %v6037, 5
        %v6216 = vrot.slane %v6039, 5
        %v6217 = vrot.slane %v6041, 5
        %v6218 = vrot.slane %v6043, 5
        %v6235 = vsel %vm647, %v6060, %v6108
        %v6236 = vsel %vm647, %v6061, %v6111
        %v6237 = vsel %vm647, %v6062, %v6114
        %v6238 = vsel %vm647, %v6063, %v6117
        %v6239 = vsel %vm647, %v6064, %v6120
        %v6240 = vsel %vm647, %v6065, %v6123
        %v6241 = vsel %vm647, %v6066, %v6126
        %v6242 = vsel %vm647, %v6067, %v6129
        %v6243 = vsel %vm647, %v6068, %v6132
        %v6244 = vsel %vm647, %v6069, %v6135
        %v6245 = vsel %vm647, %v6070, %v6138
        %v6246 = vsel %vm647, %v6071, %v6141
        %v6247 = vsel %vm647, %v6072, %v6144
        %v6248 = vsel %vm647, %v6073, %v6147
        %v6249 = vsel %vm647, %v6074, %v6150
        %v6250 = vsel %vm647, %v6075, %v6153
        %v6251 = vsel %vm647, %v6109, %v6203
        %v6252 = vsel %vm647, %v6112, %v6204
        %v6253 = vsel %vm647, %v6115, %v6205
        %v6254 = vsel %vm647, %v6118, %v6206
        %v6255 = vsel %vm647, %v6121, %v6207
        %v6256 = vsel %vm647, %v6124, %v6208
        %v6257 = vsel %vm647, %v6127, %v6209
        %v6258 = vsel %vm647, %v6130, %v6210
        %v6259 = vsel %vm647, %v6133, %v6211
        %v6260 = vsel %vm647, %v6136, %v6212
        %v6261 = vsel %vm647, %v6139, %v6213
        %v6262 = vsel %vm647, %v6142, %v6214
        %v6263 = vsel %vm647, %v6145, %v6215
        %v6264 = vsel %vm647, %v6148, %v6216
        %v6265 = vsel %vm647, %v6151, %v6217
        %v6266 = vsel %vm647, %v6154, %v6218
        %v6297 = vrot.slane %v6235, 1
        %v6298 = vrot.slane %v6110, 1
        %v6299 = vsel %vm837, %v6297, %v6298
        %v6300 = vrot.slane %v6251, 1
        %v6301 = vsel %vm837, %v6298, %v6300
        %v6302 = vrot.slane %v6236, 1
        %v6303 = vrot.slane %v6113, 1
        %v6304 = vsel %vm837, %v6302, %v6303
        %v6305 = vrot.slane %v6252, 1
        %v6306 = vsel %vm837, %v6303, %v6305
        %v6307 = vrot.slane %v6237, 1
        %v6308 = vrot.slane %v6116, 1
        %v6309 = vsel %vm837, %v6307, %v6308
        %v6310 = vrot.slane %v6253, 1
        %v6311 = vsel %vm837, %v6308, %v6310
        %v6312 = vrot.slane %v6238, 1
        %v6313 = vrot.slane %v6119, 1
        %v6314 = vsel %vm837, %v6312, %v6313
        %v6315 = vrot.slane %v6254, 1
        %v6316 = vsel %vm837, %v6313, %v6315
        %v6317 = vrot.slane %v6239, 1
        %v6318 = vrot.slane %v6122, 1
        %v6319 = vsel %vm837, %v6317, %v6318
        %v6320 = vrot.slane %v6255, 1
        %v6321 = vsel %vm837, %v6318, %v6320
        %v6322 = vrot.slane %v6240, 1
        %v6323 = vrot.slane %v6125, 1
        %v6324 = vsel %vm837, %v6322, %v6323
        %v6325 = vrot.slane %v6256, 1
        %v6326 = vsel %vm837, %v6323, %v6325
        %v6327 = vrot.slane %v6241, 1
        %v6328 = vrot.slane %v6128, 1
        %v6329 = vsel %vm837, %v6327, %v6328
        %v6330 = vrot.slane %v6257, 1
        %v6331 = vsel %vm837, %v6328, %v6330
        %v6332 = vrot.slane %v6242, 1
        %v6333 = vrot.slane %v6131, 1
        %v6334 = vsel %vm837, %v6332, %v6333
        %v6335 = vrot.slane %v6258, 1
        %v6336 = vsel %vm837, %v6333, %v6335
        %v6337 = vrot.slane %v6243, 1
        %v6338 = vrot.slane %v6134, 1
        %v6339 = vsel %vm837, %v6337, %v6338
        %v6340 = vrot.slane %v6259, 1
        %v6341 = vsel %vm837, %v6338, %v6340
        %v6342 = vrot.slane %v6244, 1
        %v6343 = vrot.slane %v6137, 1
        %v6344 = vsel %vm837, %v6342, %v6343
        %v6345 = vrot.slane %v6260, 1
        %v6346 = vsel %vm837, %v6343, %v6345
        %v6347 = vrot.slane %v6245, 1
        %v6348 = vrot.slane %v6140, 1
        %v6349 = vsel %vm837, %v6347, %v6348
        %v6350 = vrot.slane %v6261, 1
        %v6351 = vsel %vm837, %v6348, %v6350
        %v6352 = vrot.slane %v6246, 1
        %v6353 = vrot.slane %v6143, 1
        %v6354 = vsel %vm837, %v6352, %v6353
        %v6355 = vrot.slane %v6262, 1
        %v6356 = vsel %vm837, %v6353, %v6355
        %v6357 = vrot.slane %v6247, 1
        %v6358 = vrot.slane %v6146, 1
        %v6359 = vsel %vm837, %v6357, %v6358
        %v6360 = vrot.slane %v6263, 1
        %v6361 = vsel %vm837, %v6358, %v6360
        %v6362 = vrot.slane %v6248, 1
        %v6363 = vrot.slane %v6149, 1
        %v6364 = vsel %vm837, %v6362, %v6363
        %v6365 = vrot.slane %v6264, 1
        %v6366 = vsel %vm837, %v6363, %v6365
        %v6367 = vrot.slane %v6249, 1
        %v6368 = vrot.slane %v6152, 1
        %v6369 = vsel %vm837, %v6367, %v6368
        %v6370 = vrot.slane %v6265, 1
        %v6371 = vsel %vm837, %v6368, %v6370
        %6372 = vrot.lane.b32.xlu0 %v6299, 4
        %v6373 = vpop.permute.xlu0 %6372
        %6374 = vrot.lane.b32.xlu0 %v6301, 4
        %v6375 = vpop.permute.xlu0 %6374
        %6376 = vrot.lane.b32.xlu0 %v6304, 4
        %v6377 = vpop.permute.xlu0 %6376
        %6378 = vrot.lane.b32.xlu0 %v6306, 4
        %v6379 = vpop.permute.xlu0 %6378
        %6380 = vrot.lane.b32.xlu0 %v6309, 4
        %v6381 = vpop.permute.xlu0 %6380
        %6382 = vrot.lane.b32.xlu0 %v6311, 4
        %v6383 = vpop.permute.xlu0 %6382
        %6384 = vrot.lane.b32.xlu0 %v6314, 4
        %v6385 = vpop.permute.xlu0 %6384
        %6386 = vrot.lane.b32.xlu0 %v6316, 4
        %v6387 = vpop.permute.xlu0 %6386
        %6388 = vrot.lane.b32.xlu0 %v6319, 4
        %v6389 = vpop.permute.xlu0 %6388
        %6390 = vrot.lane.b32.xlu0 %v6321, 4
        %v6391 = vpop.permute.xlu0 %6390
        %6392 = vrot.lane.b32.xlu0 %v6324, 4
        %v6393 = vpop.permute.xlu0 %6392
        %6394 = vrot.lane.b32.xlu0 %v6326, 4
        %v6395 = vpop.permute.xlu0 %6394
        %6396 = vrot.lane.b32.xlu0 %v6329, 4
        %v6397 = vpop.permute.xlu0 %6396
        %6398 = vrot.lane.b32.xlu0 %v6331, 4
        %v6399 = vpop.permute.xlu0 %6398
        %6400 = vrot.lane.b32.xlu0 %v6334, 4
        %v6401 = vpop.permute.xlu0 %6400
        %6402 = vrot.lane.b32.xlu0 %v6336, 4
        %v6403 = vpop.permute.xlu0 %6402
        %6404 = vrot.lane.b32.xlu0 %v6339, 4
        %v6405 = vpop.permute.xlu0 %6404
        %6406 = vrot.lane.b32.xlu0 %v6341, 4
        %v6407 = vpop.permute.xlu0 %6406
        %6408 = vrot.lane.b32.xlu0 %v6344, 4
        %v6409 = vpop.permute.xlu0 %6408
        %6410 = vrot.lane.b32.xlu0 %v6346, 4
        %v6411 = vpop.permute.xlu0 %6410
        %6412 = vrot.lane.b32.xlu0 %v6349, 4
        %v6413 = vpop.permute.xlu0 %6412
        %6414 = vrot.lane.b32.xlu0 %v6351, 4
        %v6415 = vpop.permute.xlu0 %6414
        %6416 = vrot.lane.b32.xlu0 %v6354, 4
        %v6417 = vpop.permute.xlu0 %6416
        %6418 = vrot.lane.b32.xlu0 %v6356, 4
        %v6419 = vpop.permute.xlu0 %6418
        %6420 = vrot.lane.b32.xlu0 %v6359, 4
        %v6421 = vpop.permute.xlu0 %6420
        %6422 = vrot.lane.b32.xlu0 %v6361, 4
        %v6423 = vpop.permute.xlu0 %6422
        %6424 = vrot.lane.b32.xlu0 %v6364, 4
        %v6425 = vpop.permute.xlu0 %6424
        %6426 = vrot.lane.b32.xlu0 %v6366, 4
        %v6427 = vpop.permute.xlu0 %6426
        %6428 = vrot.lane.b32.xlu0 %v6369, 4
        %v6429 = vpop.permute.xlu0 %6428
        %6430 = vrot.lane.b32.xlu0 %v6371, 4
        %v6431 = vpop.permute.xlu0 %6430
        %v6462 = vrot.slane %v6235, 2
        %v6463 = vrot.slane %v6110, 2
        %v6464 = vsel %vm1003, %v6462, %v6463
        %v6465 = vrot.slane %v6251, 2
        %v6466 = vsel %vm1003, %v6463, %v6465
        %v6467 = vrot.slane %v6236, 2
        %v6468 = vrot.slane %v6113, 2
        %v6469 = vsel %vm1003, %v6467, %v6468
        %v6470 = vrot.slane %v6252, 2
        %v6471 = vsel %vm1003, %v6468, %v6470
        %v6472 = vrot.slane %v6237, 2
        %v6473 = vrot.slane %v6116, 2
        %v6474 = vsel %vm1003, %v6472, %v6473
        %v6475 = vrot.slane %v6253, 2
        %v6476 = vsel %vm1003, %v6473, %v6475
        %v6477 = vrot.slane %v6238, 2
        %v6478 = vrot.slane %v6119, 2
        %v6479 = vsel %vm1003, %v6477, %v6478
        %v6480 = vrot.slane %v6254, 2
        %v6481 = vsel %vm1003, %v6478, %v6480
        %v6482 = vrot.slane %v6239, 2
        %v6483 = vrot.slane %v6122, 2
        %v6484 = vsel %vm1003, %v6482, %v6483
        %v6485 = vrot.slane %v6255, 2
        %v6486 = vsel %vm1003, %v6483, %v6485
        %v6487 = vrot.slane %v6240, 2
        %v6488 = vrot.slane %v6125, 2
        %v6489 = vsel %vm1003, %v6487, %v6488
        %v6490 = vrot.slane %v6256, 2
        %v6491 = vsel %vm1003, %v6488, %v6490
        %v6492 = vrot.slane %v6241, 2
        %v6493 = vrot.slane %v6128, 2
        %v6494 = vsel %vm1003, %v6492, %v6493
        %v6495 = vrot.slane %v6257, 2
        %v6496 = vsel %vm1003, %v6493, %v6495
        %v6497 = vrot.slane %v6242, 2
        %v6498 = vrot.slane %v6131, 2
        %v6499 = vsel %vm1003, %v6497, %v6498
        %v6500 = vrot.slane %v6258, 2
        %v6501 = vsel %vm1003, %v6498, %v6500
        %v6502 = vrot.slane %v6243, 2
        %v6503 = vrot.slane %v6134, 2
        %v6504 = vsel %vm1003, %v6502, %v6503
        %v6505 = vrot.slane %v6259, 2
        %v6506 = vsel %vm1003, %v6503, %v6505
        %v6507 = vrot.slane %v6244, 2
        %v6508 = vrot.slane %v6137, 2
        %v6509 = vsel %vm1003, %v6507, %v6508
        %v6510 = vrot.slane %v6260, 2
        %v6511 = vsel %vm1003, %v6508, %v6510
        %v6512 = vrot.slane %v6245, 2
        %v6513 = vrot.slane %v6140, 2
        %v6514 = vsel %vm1003, %v6512, %v6513
        %v6515 = vrot.slane %v6261, 2
        %v6516 = vsel %vm1003, %v6513, %v6515
        %v6517 = vrot.slane %v6246, 2
        %v6518 = vrot.slane %v6143, 2
        %v6519 = vsel %vm1003, %v6517, %v6518
        %v6520 = vrot.slane %v6262, 2
        %v6521 = vsel %vm1003, %v6518, %v6520
        %v6522 = vrot.slane %v6247, 2
        %v6523 = vrot.slane %v6146, 2
        %v6524 = vsel %vm1003, %v6522, %v6523
        %v6525 = vrot.slane %v6263, 2
        %v6526 = vsel %vm1003, %v6523, %v6525
        %v6527 = vrot.slane %v6248, 2
        %v6528 = vrot.slane %v6149, 2
        %v6529 = vsel %vm1003, %v6527, %v6528
        %v6530 = vrot.slane %v6264, 2
        %v6531 = vsel %vm1003, %v6528, %v6530
        %v6532 = vrot.slane %v6249, 2
        %v6533 = vrot.slane %v6152, 2
        %v6534 = vsel %vm1003, %v6532, %v6533
        %v6535 = vrot.slane %v6265, 2
        %v6536 = vsel %vm1003, %v6533, %v6535
        %6537 = vrot.lane.b32.xlu0 %v6464, 8
        %v6538 = vpop.permute.xlu0 %6537
        %6539 = vrot.lane.b32.xlu0 %v6466, 8
        %v6540 = vpop.permute.xlu0 %6539
        %6541 = vrot.lane.b32.xlu0 %v6469, 8
        %v6542 = vpop.permute.xlu0 %6541
        %6543 = vrot.lane.b32.xlu0 %v6471, 8
        %v6544 = vpop.permute.xlu0 %6543
        %6545 = vrot.lane.b32.xlu0 %v6474, 8
        %v6546 = vpop.permute.xlu0 %6545
        %6547 = vrot.lane.b32.xlu0 %v6476, 8
        %v6548 = vpop.permute.xlu0 %6547
        %6549 = vrot.lane.b32.xlu0 %v6479, 8
        %v6550 = vpop.permute.xlu0 %6549
        %6551 = vrot.lane.b32.xlu0 %v6481, 8
        %v6552 = vpop.permute.xlu0 %6551
        %6553 = vrot.lane.b32.xlu0 %v6484, 8
        %v6554 = vpop.permute.xlu0 %6553
        %6555 = vrot.lane.b32.xlu0 %v6486, 8
        %v6556 = vpop.permute.xlu0 %6555
        %6557 = vrot.lane.b32.xlu0 %v6489, 8
        %v6558 = vpop.permute.xlu0 %6557
        %6559 = vrot.lane.b32.xlu0 %v6491, 8
        %v6560 = vpop.permute.xlu0 %6559
        %6561 = vrot.lane.b32.xlu0 %v6494, 8
        %v6562 = vpop.permute.xlu0 %6561
        %6563 = vrot.lane.b32.xlu0 %v6496, 8
        %v6564 = vpop.permute.xlu0 %6563
        %6565 = vrot.lane.b32.xlu0 %v6499, 8
        %v6566 = vpop.permute.xlu0 %6565
        %6567 = vrot.lane.b32.xlu0 %v6501, 8
        %v6568 = vpop.permute.xlu0 %6567
        %6569 = vrot.lane.b32.xlu0 %v6504, 8
        %v6570 = vpop.permute.xlu0 %6569
        %6571 = vrot.lane.b32.xlu0 %v6506, 8
        %v6572 = vpop.permute.xlu0 %6571
        %6573 = vrot.lane.b32.xlu0 %v6509, 8
        %v6574 = vpop.permute.xlu0 %6573
        %6575 = vrot.lane.b32.xlu0 %v6511, 8
        %v6576 = vpop.permute.xlu0 %6575
        %6577 = vrot.lane.b32.xlu0 %v6514, 8
        %v6578 = vpop.permute.xlu0 %6577
        %6579 = vrot.lane.b32.xlu0 %v6516, 8
        %v6580 = vpop.permute.xlu0 %6579
        %6581 = vrot.lane.b32.xlu0 %v6519, 8
        %v6582 = vpop.permute.xlu0 %6581
        %6583 = vrot.lane.b32.xlu0 %v6521, 8
        %v6584 = vpop.permute.xlu0 %6583
        %6585 = vrot.lane.b32.xlu0 %v6524, 8
        %v6586 = vpop.permute.xlu0 %6585
        %6587 = vrot.lane.b32.xlu0 %v6526, 8
        %v6588 = vpop.permute.xlu0 %6587
        %6589 = vrot.lane.b32.xlu0 %v6529, 8
        %v6590 = vpop.permute.xlu0 %6589
        %6591 = vrot.lane.b32.xlu0 %v6531, 8
        %v6592 = vpop.permute.xlu0 %6591
        %6593 = vrot.lane.b32.xlu0 %v6534, 8
        %v6594 = vpop.permute.xlu0 %6593
        %6595 = vrot.lane.b32.xlu0 %v6536, 8
        %v6596 = vpop.permute.xlu0 %6595
        %6628 = vrot.lane.b32.xlu0 %v6236, 12
        %v6629 = vpop.permute.xlu0 %6628
        %6630 = vrot.lane.b32.xlu0 %v6113, 12
        %v6631 = vpop.permute.xlu0 %6630
        %6632 = vrot.lane.b32.xlu0 %v6235, 12
        %v6633 = vpop.permute.xlu0 %6632
        %6634 = vrot.lane.b32.xlu0 %v6110, 12
        %v6635 = vpop.permute.xlu0 %6634
        %6636 = vrot.lane.b32.xlu0 %v6237, 12
        %v6637 = vpop.permute.xlu0 %6636
        %6638 = vrot.lane.b32.xlu0 %v6116, 12
        %v6639 = vpop.permute.xlu0 %6638
        %6640 = vrot.lane.b32.xlu0 %v6238, 12
        %v6641 = vpop.permute.xlu0 %6640
        %6642 = vrot.lane.b32.xlu0 %v6119, 12
        %v6643 = vpop.permute.xlu0 %6642
        %6644 = vrot.lane.b32.xlu0 %v6239, 12
        %v6645 = vpop.permute.xlu0 %6644
        %6646 = vrot.lane.b32.xlu0 %v6122, 12
        %v6647 = vpop.permute.xlu0 %6646
        %6648 = vrot.lane.b32.xlu0 %v6240, 12
        %v6649 = vpop.permute.xlu0 %6648
        %6650 = vrot.lane.b32.xlu0 %v6125, 12
        %v6651 = vpop.permute.xlu0 %6650
        %6652 = vrot.lane.b32.xlu0 %v6241, 12
        %v6653 = vpop.permute.xlu0 %6652
        %6654 = vrot.lane.b32.xlu0 %v6128, 12
        %v6655 = vpop.permute.xlu0 %6654
        %6656 = vrot.lane.b32.xlu0 %v6242, 12
        %v6657 = vpop.permute.xlu0 %6656
        %6658 = vrot.lane.b32.xlu0 %v6131, 12
        %v6659 = vpop.permute.xlu0 %6658
        %6660 = vrot.lane.b32.xlu0 %v6243, 12
        %v6661 = vpop.permute.xlu0 %6660
        %6662 = vrot.lane.b32.xlu0 %v6134, 12
        %v6663 = vpop.permute.xlu0 %6662
        %6664 = vrot.lane.b32.xlu0 %v6244, 12
        %v6665 = vpop.permute.xlu0 %6664
        %6666 = vrot.lane.b32.xlu0 %v6137, 12
        %v6667 = vpop.permute.xlu0 %6666
        %6668 = vrot.lane.b32.xlu0 %v6245, 12
        %v6669 = vpop.permute.xlu0 %6668
        %6670 = vrot.lane.b32.xlu0 %v6140, 12
        %v6671 = vpop.permute.xlu0 %6670
        %6672 = vrot.lane.b32.xlu0 %v6246, 12
        %v6673 = vpop.permute.xlu0 %6672
        %6674 = vrot.lane.b32.xlu0 %v6143, 12
        %v6675 = vpop.permute.xlu0 %6674
        %6676 = vrot.lane.b32.xlu0 %v6247, 12
        %v6677 = vpop.permute.xlu0 %6676
        %6678 = vrot.lane.b32.xlu0 %v6146, 12
        %v6679 = vpop.permute.xlu0 %6678
        %6680 = vrot.lane.b32.xlu0 %v6248, 12
        %v6681 = vpop.permute.xlu0 %6680
        %6682 = vrot.lane.b32.xlu0 %v6149, 12
        %v6683 = vpop.permute.xlu0 %6682
        %6684 = vrot.lane.b32.xlu0 %v6249, 12
        %v6685 = vpop.permute.xlu0 %6684
        %6686 = vrot.lane.b32.xlu0 %v6152, 12
        %v6687 = vpop.permute.xlu0 %6686
        %6688 = vrot.lane.b32.xlu0 %v6250, 12
        %v6689 = vpop.permute.xlu0 %6688
        %6690 = vrot.lane.b32.xlu0 %v6155, 12
        %v6691 = vpop.permute.xlu0 %6690
        %v6725 = vrot.slane %v6250, 1
        %v6726 = vrot.slane %v6155, 1
        %v6727 = vsel %vm837, %v6725, %v6726
        %v6728 = vrot.slane %v6266, 1
        %v6729 = vsel %vm837, %v6726, %v6728
        %6730 = vrot.lane.b32.xlu0 %v6304, 16
        %v6731 = vpop.permute.xlu0 %6730
        %6732 = vrot.lane.b32.xlu0 %v6306, 16
        %v6733 = vpop.permute.xlu0 %6732
        %6734 = vrot.lane.b32.xlu0 %v6299, 16
        %v6735 = vpop.permute.xlu0 %6734
        %6736 = vrot.lane.b32.xlu0 %v6301, 16
        %v6737 = vpop.permute.xlu0 %6736
        %6738 = vrot.lane.b32.xlu0 %v6309, 16
        %v6739 = vpop.permute.xlu0 %6738
        %6740 = vrot.lane.b32.xlu0 %v6311, 16
        %v6741 = vpop.permute.xlu0 %6740
        %6742 = vrot.lane.b32.xlu0 %v6314, 16
        %v6743 = vpop.permute.xlu0 %6742
        %6744 = vrot.lane.b32.xlu0 %v6316, 16
        %v6745 = vpop.permute.xlu0 %6744
        %6746 = vrot.lane.b32.xlu0 %v6319, 16
        %v6747 = vpop.permute.xlu0 %6746
        %6748 = vrot.lane.b32.xlu0 %v6321, 16
        %v6749 = vpop.permute.xlu0 %6748
        %6750 = vrot.lane.b32.xlu0 %v6324, 16
        %v6751 = vpop.permute.xlu0 %6750
        %6752 = vrot.lane.b32.xlu0 %v6326, 16
        %v6753 = vpop.permute.xlu0 %6752
        %6754 = vrot.lane.b32.xlu0 %v6329, 16
        %v6755 = vpop.permute.xlu0 %6754
        %6756 = vrot.lane.b32.xlu0 %v6331, 16
        %v6757 = vpop.permute.xlu0 %6756
        %6758 = vrot.lane.b32.xlu0 %v6334, 16
        %v6759 = vpop.permute.xlu0 %6758
        %6760 = vrot.lane.b32.xlu0 %v6336, 16
        %v6761 = vpop.permute.xlu0 %6760
        %6762 = vrot.lane.b32.xlu0 %v6339, 16
        %v6763 = vpop.permute.xlu0 %6762
        %6764 = vrot.lane.b32.xlu0 %v6341, 16
        %v6765 = vpop.permute.xlu0 %6764
        %6766 = vrot.lane.b32.xlu0 %v6344, 16
        %v6767 = vpop.permute.xlu0 %6766
        %6768 = vrot.lane.b32.xlu0 %v6346, 16
        %v6769 = vpop.permute.xlu0 %6768
        %6770 = vrot.lane.b32.xlu0 %v6349, 16
        %v6771 = vpop.permute.xlu0 %6770
        %6772 = vrot.lane.b32.xlu0 %v6351, 16
        %v6773 = vpop.permute.xlu0 %6772
        %6774 = vrot.lane.b32.xlu0 %v6354, 16
        %v6775 = vpop.permute.xlu0 %6774
        %6776 = vrot.lane.b32.xlu0 %v6356, 16
        %v6777 = vpop.permute.xlu0 %6776
        %6778 = vrot.lane.b32.xlu0 %v6359, 16
        %v6779 = vpop.permute.xlu0 %6778
        %6780 = vrot.lane.b32.xlu0 %v6361, 16
        %v6781 = vpop.permute.xlu0 %6780
        %6782 = vrot.lane.b32.xlu0 %v6364, 16
        %v6783 = vpop.permute.xlu0 %6782
        %6784 = vrot.lane.b32.xlu0 %v6366, 16
        %v6785 = vpop.permute.xlu0 %6784
        %6786 = vrot.lane.b32.xlu0 %v6369, 16
        %v6787 = vpop.permute.xlu0 %6786
        %6788 = vrot.lane.b32.xlu0 %v6371, 16
        %v6789 = vpop.permute.xlu0 %6788
        %6790 = vrot.lane.b32.xlu0 %v6727, 16
        %v6791 = vpop.permute.xlu0 %6790
        %6792 = vrot.lane.b32.xlu0 %v6729, 16
        %v6793 = vpop.permute.xlu0 %6792
        %v6826 = vrot.slane %v6250, 2
        %v6827 = vrot.slane %v6155, 2
        %v6828 = vsel %vm1003, %v6826, %v6827
        %v6829 = vrot.slane %v6266, 2
        %v6830 = vsel %vm1003, %v6827, %v6829
        %6831 = vrot.lane.b32.xlu0 %v6469, 20
        %v6832 = vpop.permute.xlu0 %6831
        %6833 = vrot.lane.b32.xlu0 %v6471, 20
        %v6834 = vpop.permute.xlu0 %6833
        %6835 = vrot.lane.b32.xlu0 %v6464, 20
        %v6836 = vpop.permute.xlu0 %6835
        %6837 = vrot.lane.b32.xlu0 %v6466, 20
        %v6838 = vpop.permute.xlu0 %6837
        %6839 = vrot.lane.b32.xlu0 %v6474, 20
        %v6840 = vpop.permute.xlu0 %6839
        %6841 = vrot.lane.b32.xlu0 %v6476, 20
        %v6842 = vpop.permute.xlu0 %6841
        %6843 = vrot.lane.b32.xlu0 %v6479, 20
        %v6844 = vpop.permute.xlu0 %6843
        %6845 = vrot.lane.b32.xlu0 %v6481, 20
        %v6846 = vpop.permute.xlu0 %6845
        %6847 = vrot.lane.b32.xlu0 %v6484, 20
        %v6848 = vpop.permute.xlu0 %6847
        %6849 = vrot.lane.b32.xlu0 %v6486, 20
        %v6850 = vpop.permute.xlu0 %6849
        %6851 = vrot.lane.b32.xlu0 %v6489, 20
        %v6852 = vpop.permute.xlu0 %6851
        %6853 = vrot.lane.b32.xlu0 %v6491, 20
        %v6854 = vpop.permute.xlu0 %6853
        %6855 = vrot.lane.b32.xlu0 %v6494, 20
        %v6856 = vpop.permute.xlu0 %6855
        %6857 = vrot.lane.b32.xlu0 %v6496, 20
        %v6858 = vpop.permute.xlu0 %6857
        %6859 = vrot.lane.b32.xlu0 %v6499, 20
        %v6860 = vpop.permute.xlu0 %6859
        %6861 = vrot.lane.b32.xlu0 %v6501, 20
        %v6862 = vpop.permute.xlu0 %6861
        %6863 = vrot.lane.b32.xlu0 %v6504, 20
        %v6864 = vpop.permute.xlu0 %6863
        %6865 = vrot.lane.b32.xlu0 %v6506, 20
        %v6866 = vpop.permute.xlu0 %6865
        %6867 = vrot.lane.b32.xlu0 %v6509, 20
        %v6868 = vpop.permute.xlu0 %6867
        %6869 = vrot.lane.b32.xlu0 %v6511, 20
        %v6870 = vpop.permute.xlu0 %6869
        %6871 = vrot.lane.b32.xlu0 %v6514, 20
        %v6872 = vpop.permute.xlu0 %6871
        %6873 = vrot.lane.b32.xlu0 %v6516, 20
        %v6874 = vpop.permute.xlu0 %6873
        %6875 = vrot.lane.b32.xlu0 %v6519, 20
        %v6876 = vpop.permute.xlu0 %6875
        %6877 = vrot.lane.b32.xlu0 %v6521, 20
        %v6878 = vpop.permute.xlu0 %6877
        %6879 = vrot.lane.b32.xlu0 %v6524, 20
        %v6880 = vpop.permute.xlu0 %6879
        %6881 = vrot.lane.b32.xlu0 %v6526, 20
        %v6882 = vpop.permute.xlu0 %6881
        %6883 = vrot.lane.b32.xlu0 %v6529, 20
        %v6884 = vpop.permute.xlu0 %6883
        %6885 = vrot.lane.b32.xlu0 %v6531, 20
        %v6886 = vpop.permute.xlu0 %6885
        %6887 = vrot.lane.b32.xlu0 %v6534, 20
        %v6888 = vpop.permute.xlu0 %6887
        %6889 = vrot.lane.b32.xlu0 %v6536, 20
        %v6890 = vpop.permute.xlu0 %6889
        %6891 = vrot.lane.b32.xlu0 %v6828, 20
        %v6892 = vpop.permute.xlu0 %6891
        %6893 = vrot.lane.b32.xlu0 %v6830, 20
        %v6894 = vpop.permute.xlu0 %6893
        %6927 = vrot.lane.b32.xlu0 %v6235, 24
        %v6928 = vpop.permute.xlu0 %6927
        %6929 = vrot.lane.b32.xlu0 %v6110, 24
        %v6930 = vpop.permute.xlu0 %6929
        %6931 = vrot.lane.b32.xlu0 %v6237, 24
        %v6932 = vpop.permute.xlu0 %6931
        %6933 = vrot.lane.b32.xlu0 %v6116, 24
        %v6934 = vpop.permute.xlu0 %6933
        %6935 = vrot.lane.b32.xlu0 %v6238, 24
        %v6936 = vpop.permute.xlu0 %6935
        %6937 = vrot.lane.b32.xlu0 %v6119, 24
        %v6938 = vpop.permute.xlu0 %6937
        %6939 = vrot.lane.b32.xlu0 %v6239, 24
        %v6940 = vpop.permute.xlu0 %6939
        %6941 = vrot.lane.b32.xlu0 %v6122, 24
        %v6942 = vpop.permute.xlu0 %6941
        %6943 = vrot.lane.b32.xlu0 %v6240, 24
        %v6944 = vpop.permute.xlu0 %6943
        %6945 = vrot.lane.b32.xlu0 %v6125, 24
        %v6946 = vpop.permute.xlu0 %6945
        %6947 = vrot.lane.b32.xlu0 %v6241, 24
        %v6948 = vpop.permute.xlu0 %6947
        %6949 = vrot.lane.b32.xlu0 %v6128, 24
        %v6950 = vpop.permute.xlu0 %6949
        %6951 = vrot.lane.b32.xlu0 %v6242, 24
        %v6952 = vpop.permute.xlu0 %6951
        %6953 = vrot.lane.b32.xlu0 %v6131, 24
        %v6954 = vpop.permute.xlu0 %6953
        %6955 = vrot.lane.b32.xlu0 %v6243, 24
        %v6956 = vpop.permute.xlu0 %6955
        %6957 = vrot.lane.b32.xlu0 %v6134, 24
        %v6958 = vpop.permute.xlu0 %6957
        %6959 = vrot.lane.b32.xlu0 %v6244, 24
        %v6960 = vpop.permute.xlu0 %6959
        %6961 = vrot.lane.b32.xlu0 %v6137, 24
        %v6962 = vpop.permute.xlu0 %6961
        %6963 = vrot.lane.b32.xlu0 %v6245, 24
        %v6964 = vpop.permute.xlu0 %6963
        %6965 = vrot.lane.b32.xlu0 %v6140, 24
        %v6966 = vpop.permute.xlu0 %6965
        %6967 = vrot.lane.b32.xlu0 %v6246, 24
        %v6968 = vpop.permute.xlu0 %6967
        %6969 = vrot.lane.b32.xlu0 %v6143, 24
        %v6970 = vpop.permute.xlu0 %6969
        %6971 = vrot.lane.b32.xlu0 %v6247, 24
        %v6972 = vpop.permute.xlu0 %6971
        %6973 = vrot.lane.b32.xlu0 %v6146, 24
        %v6974 = vpop.permute.xlu0 %6973
        %6975 = vrot.lane.b32.xlu0 %v6248, 24
        %v6976 = vpop.permute.xlu0 %6975
        %6977 = vrot.lane.b32.xlu0 %v6149, 24
        %v6978 = vpop.permute.xlu0 %6977
        %6979 = vrot.lane.b32.xlu0 %v6249, 24
        %v6980 = vpop.permute.xlu0 %6979
        %6981 = vrot.lane.b32.xlu0 %v6152, 24
        %v6982 = vpop.permute.xlu0 %6981
        %6983 = vrot.lane.b32.xlu0 %v6250, 24
        %v6984 = vpop.permute.xlu0 %6983
        %6985 = vrot.lane.b32.xlu0 %v6155, 24
        %v6986 = vpop.permute.xlu0 %6985
        %7017 = vrot.lane.b32.xlu0 %v6299, 28
        %v7018 = vpop.permute.xlu0 %7017
        %7019 = vrot.lane.b32.xlu0 %v6301, 28
        %v7020 = vpop.permute.xlu0 %7019
        %7021 = vrot.lane.b32.xlu0 %v6309, 28
        %v7022 = vpop.permute.xlu0 %7021
        %7023 = vrot.lane.b32.xlu0 %v6311, 28
        %v7024 = vpop.permute.xlu0 %7023
        %7025 = vrot.lane.b32.xlu0 %v6314, 28
        %v7026 = vpop.permute.xlu0 %7025
        %7027 = vrot.lane.b32.xlu0 %v6316, 28
        %v7028 = vpop.permute.xlu0 %7027
        %7029 = vrot.lane.b32.xlu0 %v6319, 28
        %v7030 = vpop.permute.xlu0 %7029
        %7031 = vrot.lane.b32.xlu0 %v6321, 28
        %v7032 = vpop.permute.xlu0 %7031
        %7033 = vrot.lane.b32.xlu0 %v6324, 28
        %v7034 = vpop.permute.xlu0 %7033
        %7035 = vrot.lane.b32.xlu0 %v6326, 28
        %v7036 = vpop.permute.xlu0 %7035
        %7037 = vrot.lane.b32.xlu0 %v6329, 28
        %v7038 = vpop.permute.xlu0 %7037
        %7039 = vrot.lane.b32.xlu0 %v6331, 28
        %v7040 = vpop.permute.xlu0 %7039
        %7041 = vrot.lane.b32.xlu0 %v6334, 28
        %v7042 = vpop.permute.xlu0 %7041
        %7043 = vrot.lane.b32.xlu0 %v6336, 28
        %v7044 = vpop.permute.xlu0 %7043
        %7045 = vrot.lane.b32.xlu0 %v6339, 28
        %v7046 = vpop.permute.xlu0 %7045
        %7047 = vrot.lane.b32.xlu0 %v6341, 28
        %v7048 = vpop.permute.xlu0 %7047
        %7049 = vrot.lane.b32.xlu0 %v6344, 28
        %v7050 = vpop.permute.xlu0 %7049
        %7051 = vrot.lane.b32.xlu0 %v6346, 28
        %v7052 = vpop.permute.xlu0 %7051
        %7053 = vrot.lane.b32.xlu0 %v6349, 28
        %v7054 = vpop.permute.xlu0 %7053
        %7055 = vrot.lane.b32.xlu0 %v6351, 28
        %v7056 = vpop.permute.xlu0 %7055
        %7057 = vrot.lane.b32.xlu0 %v6354, 28
        %v7058 = vpop.permute.xlu0 %7057
        %7059 = vrot.lane.b32.xlu0 %v6356, 28
        %v7060 = vpop.permute.xlu0 %7059
        %7061 = vrot.lane.b32.xlu0 %v6359, 28
        %v7062 = vpop.permute.xlu0 %7061
        %7063 = vrot.lane.b32.xlu0 %v6361, 28
        %v7064 = vpop.permute.xlu0 %7063
        %7065 = vrot.lane.b32.xlu0 %v6364, 28
        %v7066 = vpop.permute.xlu0 %7065
        %7067 = vrot.lane.b32.xlu0 %v6366, 28
        %v7068 = vpop.permute.xlu0 %7067
        %7069 = vrot.lane.b32.xlu0 %v6369, 28
        %v7070 = vpop.permute.xlu0 %7069
        %7071 = vrot.lane.b32.xlu0 %v6371, 28
        %v7072 = vpop.permute.xlu0 %7071
        %7073 = vrot.lane.b32.xlu0 %v6727, 28
        %v7074 = vpop.permute.xlu0 %7073
        %7075 = vrot.lane.b32.xlu0 %v6729, 28
        %v7076 = vpop.permute.xlu0 %7075
        %7107 = vrot.lane.b32.xlu0 %v6464, 32
        %v7108 = vpop.permute.xlu0 %7107
        %7109 = vrot.lane.b32.xlu0 %v6466, 32
        %v7110 = vpop.permute.xlu0 %7109
        %7111 = vrot.lane.b32.xlu0 %v6474, 32
        %v7112 = vpop.permute.xlu0 %7111
        %7113 = vrot.lane.b32.xlu0 %v6476, 32
        %v7114 = vpop.permute.xlu0 %7113
        %7115 = vrot.lane.b32.xlu0 %v6479, 32
        %v7116 = vpop.permute.xlu0 %7115
        %7117 = vrot.lane.b32.xlu0 %v6481, 32
        %v7118 = vpop.permute.xlu0 %7117
        %7119 = vrot.lane.b32.xlu0 %v6484, 32
        %v7120 = vpop.permute.xlu0 %7119
        %7121 = vrot.lane.b32.xlu0 %v6486, 32
        %v7122 = vpop.permute.xlu0 %7121
        %7123 = vrot.lane.b32.xlu0 %v6489, 32
        %v7124 = vpop.permute.xlu0 %7123
        %7125 = vrot.lane.b32.xlu0 %v6491, 32
        %v7126 = vpop.permute.xlu0 %7125
        %7127 = vrot.lane.b32.xlu0 %v6494, 32
        %v7128 = vpop.permute.xlu0 %7127
        %7129 = vrot.lane.b32.xlu0 %v6496, 32
        %v7130 = vpop.permute.xlu0 %7129
        %7131 = vrot.lane.b32.xlu0 %v6499, 32
        %v7132 = vpop.permute.xlu0 %7131
        %7133 = vrot.lane.b32.xlu0 %v6501, 32
        %v7134 = vpop.permute.xlu0 %7133
        %7135 = vrot.lane.b32.xlu0 %v6504, 32
        %v7136 = vpop.permute.xlu0 %7135
        %7137 = vrot.lane.b32.xlu0 %v6506, 32
        %v7138 = vpop.permute.xlu0 %7137
        %7139 = vrot.lane.b32.xlu0 %v6509, 32
        %v7140 = vpop.permute.xlu0 %7139
        %7141 = vrot.lane.b32.xlu0 %v6511, 32
        %v7142 = vpop.permute.xlu0 %7141
        %7143 = vrot.lane.b32.xlu0 %v6514, 32
        %v7144 = vpop.permute.xlu0 %7143
        %7145 = vrot.lane.b32.xlu0 %v6516, 32
        %v7146 = vpop.permute.xlu0 %7145
        %7147 = vrot.lane.b32.xlu0 %v6519, 32
        %v7148 = vpop.permute.xlu0 %7147
        %7149 = vrot.lane.b32.xlu0 %v6521, 32
        %v7150 = vpop.permute.xlu0 %7149
        %7151 = vrot.lane.b32.xlu0 %v6524, 32
        %v7152 = vpop.permute.xlu0 %7151
        %7153 = vrot.lane.b32.xlu0 %v6526, 32
        %v7154 = vpop.permute.xlu0 %7153
        %7155 = vrot.lane.b32.xlu0 %v6529, 32
        %v7156 = vpop.permute.xlu0 %7155
        %7157 = vrot.lane.b32.xlu0 %v6531, 32
        %v7158 = vpop.permute.xlu0 %7157
        %7159 = vrot.lane.b32.xlu0 %v6534, 32
        %v7160 = vpop.permute.xlu0 %7159
        %7161 = vrot.lane.b32.xlu0 %v6536, 32
        %v7162 = vpop.permute.xlu0 %7161
        %7163 = vrot.lane.b32.xlu0 %v6828, 32
        %v7164 = vpop.permute.xlu0 %7163
        %7165 = vrot.lane.b32.xlu0 %v6830, 32
        %v7166 = vpop.permute.xlu0 %7165
        %v7197 = vsel %vm1739, %v6235, %v6373
        %v7198 = vsel %vm1739, %v6110, %v6375
        %v7199 = vsel %vm1739, %v6236, %v6377
        %v7200 = vsel %vm1739, %v6113, %v6379
        %v7201 = vsel %vm1739, %v6237, %v6381
        %v7202 = vsel %vm1739, %v6116, %v6383
        %v7203 = vsel %vm1739, %v6238, %v6385
        %v7204 = vsel %vm1739, %v6119, %v6387
        %v7205 = vsel %vm1739, %v6239, %v6389
        %v7206 = vsel %vm1739, %v6122, %v6391
        %v7207 = vsel %vm1739, %v6240, %v6393
        %v7208 = vsel %vm1739, %v6125, %v6395
        %v7209 = vsel %vm1739, %v6241, %v6397
        %v7210 = vsel %vm1739, %v6128, %v6399
        %v7211 = vsel %vm1739, %v6242, %v6401
        %v7212 = vsel %vm1739, %v6131, %v6403
        %v7213 = vsel %vm1739, %v6243, %v6405
        %v7214 = vsel %vm1739, %v6134, %v6407
        %v7215 = vsel %vm1739, %v6244, %v6409
        %v7216 = vsel %vm1739, %v6137, %v6411
        %v7217 = vsel %vm1739, %v6245, %v6413
        %v7218 = vsel %vm1739, %v6140, %v6415
        %v7219 = vsel %vm1739, %v6246, %v6417
        %v7220 = vsel %vm1739, %v6143, %v6419
        %v7221 = vsel %vm1739, %v6247, %v6421
        %v7222 = vsel %vm1739, %v6146, %v6423
        %v7223 = vsel %vm1739, %v6248, %v6425
        %v7224 = vsel %vm1739, %v6149, %v6427
        %v7225 = vsel %vm1739, %v6249, %v6429
        %v7226 = vsel %vm1739, %v6152, %v6431
        %v7227 = vsel %vm1770, %v7197, %v6538
        %v7228 = vsel %vm1770, %v7198, %v6540
        %v7229 = vsel %vm1770, %v7199, %v6542
        %v7230 = vsel %vm1770, %v7200, %v6544
        %v7231 = vsel %vm1770, %v7201, %v6546
        %v7232 = vsel %vm1770, %v7202, %v6548
        %v7233 = vsel %vm1770, %v7203, %v6550
        %v7234 = vsel %vm1770, %v7204, %v6552
        %v7235 = vsel %vm1770, %v7205, %v6554
        %v7236 = vsel %vm1770, %v7206, %v6556
        %v7237 = vsel %vm1770, %v7207, %v6558
        %v7238 = vsel %vm1770, %v7208, %v6560
        %v7239 = vsel %vm1770, %v7209, %v6562
        %v7240 = vsel %vm1770, %v7210, %v6564
        %v7241 = vsel %vm1770, %v7211, %v6566
        %v7242 = vsel %vm1770, %v7212, %v6568
        %v7243 = vsel %vm1770, %v7213, %v6570
        %v7244 = vsel %vm1770, %v7214, %v6572
        %v7245 = vsel %vm1770, %v7215, %v6574
        %v7246 = vsel %vm1770, %v7216, %v6576
        %v7247 = vsel %vm1770, %v7217, %v6578
        %v7248 = vsel %vm1770, %v7218, %v6580
        %v7249 = vsel %vm1770, %v7219, %v6582
        %v7250 = vsel %vm1770, %v7220, %v6584
        %v7251 = vsel %vm1770, %v7221, %v6586
        %v7252 = vsel %vm1770, %v7222, %v6588
        %v7253 = vsel %vm1770, %v7223, %v6590
        %v7254 = vsel %vm1770, %v7224, %v6592
        %v7255 = vsel %vm1770, %v7225, %v6594
        %v7256 = vsel %vm1770, %v7226, %v6596
        %v7257 = vsel %vm1801, %v7227, %v6629
        %v7258 = vsel %vm1801, %v7228, %v6631
        %v7259 = vsel %vm1801, %v7229, %v6633
        %v7260 = vsel %vm1801, %v7230, %v6635
        %v7261 = vsel %vm1801, %v7227, %v6637
        %v7262 = vsel %vm1801, %v7228, %v6639
        %v7263 = vsel %vm1801, %v7231, %v6641
        %v7264 = vsel %vm1801, %v7232, %v6643
        %v7265 = vsel %vm1801, %v7233, %v6645
        %v7266 = vsel %vm1801, %v7234, %v6647
        %v7267 = vsel %vm1801, %v7235, %v6649
        %v7268 = vsel %vm1801, %v7236, %v6651
        %v7269 = vsel %vm1801, %v7237, %v6653
        %v7270 = vsel %vm1801, %v7238, %v6655
        %v7271 = vsel %vm1801, %v7239, %v6657
        %v7272 = vsel %vm1801, %v7240, %v6659
        %v7273 = vsel %vm1801, %v7241, %v6661
        %v7274 = vsel %vm1801, %v7242, %v6663
        %v7275 = vsel %vm1801, %v7243, %v6665
        %v7276 = vsel %vm1801, %v7244, %v6667
        %v7277 = vsel %vm1801, %v7245, %v6669
        %v7278 = vsel %vm1801, %v7246, %v6671
        %v7279 = vsel %vm1801, %v7247, %v6673
        %v7280 = vsel %vm1801, %v7248, %v6675
        %v7281 = vsel %vm1801, %v7249, %v6677
        %v7282 = vsel %vm1801, %v7250, %v6679
        %v7283 = vsel %vm1801, %v7251, %v6681
        %v7284 = vsel %vm1801, %v7252, %v6683
        %v7285 = vsel %vm1801, %v7253, %v6685
        %v7286 = vsel %vm1801, %v7254, %v6687
        %v7287 = vsel %vm1801, %v7255, %v6689
        %v7288 = vsel %vm1801, %v7256, %v6691
        %v7289 = vsel %vm1834, %v7257, %v6731
        %v7290 = vsel %vm1834, %v7258, %v6733
        %v7291 = vsel %vm1834, %v7259, %v6735
        %v7292 = vsel %vm1834, %v7260, %v6737
        %v7293 = vsel %vm1834, %v7261, %v6739
        %v7294 = vsel %vm1834, %v7262, %v6741
        %v7295 = vsel %vm1834, %v7263, %v6743
        %v7296 = vsel %vm1834, %v7264, %v6745
        %v7297 = vsel %vm1834, %v7265, %v6747
        %v7298 = vsel %vm1834, %v7266, %v6749
        %v7299 = vsel %vm1834, %v7267, %v6751
        %v7300 = vsel %vm1834, %v7268, %v6753
        %v7301 = vsel %vm1834, %v7269, %v6755
        %v7302 = vsel %vm1834, %v7270, %v6757
        %v7303 = vsel %vm1834, %v7271, %v6759
        %v7304 = vsel %vm1834, %v7272, %v6761
        %v7305 = vsel %vm1834, %v7273, %v6763
        %v7306 = vsel %vm1834, %v7274, %v6765
        %v7307 = vsel %vm1834, %v7275, %v6767
        %v7308 = vsel %vm1834, %v7276, %v6769
        %v7309 = vsel %vm1834, %v7277, %v6771
        %v7310 = vsel %vm1834, %v7278, %v6773
        %v7311 = vsel %vm1834, %v7279, %v6775
        %v7312 = vsel %vm1834, %v7280, %v6777
        %v7313 = vsel %vm1834, %v7281, %v6779
        %v7314 = vsel %vm1834, %v7282, %v6781
        %v7315 = vsel %vm1834, %v7283, %v6783
        %v7316 = vsel %vm1834, %v7284, %v6785
        %v7317 = vsel %vm1834, %v7285, %v6787
        %v7318 = vsel %vm1834, %v7286, %v6789
        %v7319 = vsel %vm1834, %v7287, %v6791
        %v7320 = vsel %vm1834, %v7288, %v6793
        %v7321 = vsel %vm1867, %v7289, %v6832
        %v7322 = vsel %vm1867, %v7290, %v6834
        %v7323 = vsel %vm1867, %v7291, %v6836
        %v7324 = vsel %vm1867, %v7292, %v6838
        %v7325 = vsel %vm1867, %v7293, %v6840
        %v7326 = vsel %vm1867, %v7294, %v6842
        %v7327 = vsel %vm1867, %v7295, %v6844
        %v7328 = vsel %vm1867, %v7296, %v6846
        %v7329 = vsel %vm1867, %v7297, %v6848
        %v7330 = vsel %vm1867, %v7298, %v6850
        %v7331 = vsel %vm1867, %v7299, %v6852
        %v7332 = vsel %vm1867, %v7300, %v6854
        %v7333 = vsel %vm1867, %v7301, %v6856
        %v7334 = vsel %vm1867, %v7302, %v6858
        %v7335 = vsel %vm1867, %v7303, %v6860
        %v7336 = vsel %vm1867, %v7304, %v6862
        %v7337 = vsel %vm1867, %v7305, %v6864
        %v7338 = vsel %vm1867, %v7306, %v6866
        %v7339 = vsel %vm1867, %v7307, %v6868
        %v7340 = vsel %vm1867, %v7308, %v6870
        %v7341 = vsel %vm1867, %v7309, %v6872
        %v7342 = vsel %vm1867, %v7310, %v6874
        %v7343 = vsel %vm1867, %v7311, %v6876
        %v7344 = vsel %vm1867, %v7312, %v6878
        %v7345 = vsel %vm1867, %v7313, %v6880
        %v7346 = vsel %vm1867, %v7314, %v6882
        %v7347 = vsel %vm1867, %v7315, %v6884
        %v7348 = vsel %vm1867, %v7316, %v6886
        %v7349 = vsel %vm1867, %v7317, %v6888
        %v7350 = vsel %vm1867, %v7318, %v6890
        %v7351 = vsel %vm1867, %v7319, %v6892
        %v7352 = vsel %vm1867, %v7320, %v6894
        %v7353 = vsel %vm1900, %v7321, %v6928
        %v7354 = vsel %vm1900, %v7322, %v6930
        %v7355 = vsel %vm1900, %v7323, %v6932
        %v7356 = vsel %vm1900, %v7324, %v6934
        %v7357 = vsel %vm1900, %v7325, %v6936
        %v7358 = vsel %vm1900, %v7326, %v6938
        %v7359 = vsel %vm1900, %v7327, %v6940
        %v7360 = vsel %vm1900, %v7328, %v6942
        %v7361 = vsel %vm1900, %v7329, %v6944
        %v7362 = vsel %vm1900, %v7330, %v6946
        %v7363 = vsel %vm1900, %v7331, %v6948
        %v7364 = vsel %vm1900, %v7332, %v6950
        %v7365 = vsel %vm1900, %v7333, %v6952
        %v7366 = vsel %vm1900, %v7334, %v6954
        %v7367 = vsel %vm1900, %v7335, %v6956
        %v7368 = vsel %vm1900, %v7336, %v6958
        %v7369 = vsel %vm1900, %v7337, %v6960
        %v7370 = vsel %vm1900, %v7338, %v6962
        %v7371 = vsel %vm1900, %v7339, %v6964
        %v7372 = vsel %vm1900, %v7340, %v6966
        %v7373 = vsel %vm1900, %v7341, %v6968
        %v7374 = vsel %vm1900, %v7342, %v6970
        %v7375 = vsel %vm1900, %v7343, %v6972
        %v7376 = vsel %vm1900, %v7344, %v6974
        %v7377 = vsel %vm1900, %v7345, %v6976
        %v7378 = vsel %vm1900, %v7346, %v6978
        %v7379 = vsel %vm1900, %v7347, %v6980
        %v7380 = vsel %vm1900, %v7348, %v6982
        %v7381 = vsel %vm1900, %v7349, %v6984
        %v7382 = vsel %vm1900, %v7350, %v6986
        %v7383 = vsel %vm1900, %v7351, %v6980
        %v7384 = vsel %vm1900, %v7352, %v6982
        %v7385 = vsel %vm1933, %v7353, %v7018
        %v7386 = vsel %vm1933, %v7354, %v7020
        %v7387 = vsel %vm1933, %v7355, %v7022
        %v7388 = vsel %vm1933, %v7356, %v7024
        %v7389 = vsel %vm1933, %v7357, %v7026
        %v7390 = vsel %vm1933, %v7358, %v7028
        %v7391 = vsel %vm1933, %v7359, %v7030
        %v7392 = vsel %vm1933, %v7360, %v7032
        %v7393 = vsel %vm1933, %v7361, %v7034
        %v7394 = vsel %vm1933, %v7362, %v7036
        %v7395 = vsel %vm1933, %v7363, %v7038
        %v7396 = vsel %vm1933, %v7364, %v7040
        %v7397 = vsel %vm1933, %v7365, %v7042
        %v7398 = vsel %vm1933, %v7366, %v7044
        %v7399 = vsel %vm1933, %v7367, %v7046
        %v7400 = vsel %vm1933, %v7368, %v7048
        %v7401 = vsel %vm1933, %v7369, %v7050
        %v7402 = vsel %vm1933, %v7370, %v7052
        %v7403 = vsel %vm1933, %v7371, %v7054
        %v7404 = vsel %vm1933, %v7372, %v7056
        %v7405 = vsel %vm1933, %v7373, %v7058
        %v7406 = vsel %vm1933, %v7374, %v7060
        %v7407 = vsel %vm1933, %v7375, %v7062
        %v7408 = vsel %vm1933, %v7376, %v7064
        %v7409 = vsel %vm1933, %v7377, %v7066
        %v7410 = vsel %vm1933, %v7378, %v7068
        %v7411 = vsel %vm1933, %v7379, %v7070
        %v7412 = vsel %vm1933, %v7380, %v7072
        %v7413 = vsel %vm1933, %v7381, %v7074
        %v7414 = vsel %vm1933, %v7382, %v7076
        %v7415 = vsel %vm1933, %v7383, %v7070
        %v7416 = vsel %vm1933, %v7384, %v7072
        %v7417 = vsel %vm1966, %v7385, %v7108
        %v7418 = vsel %vm1966, %v7386, %v7110
        %v7419 = vsel %vm1966, %v7387, %v7112
        %v7420 = vsel %vm1966, %v7388, %v7114
        %v7421 = vsel %vm1966, %v7389, %v7116
        %v7422 = vsel %vm1966, %v7390, %v7118
        %v7423 = vsel %vm1966, %v7391, %v7120
        %v7424 = vsel %vm1966, %v7392, %v7122
        %v7425 = vsel %vm1966, %v7393, %v7124
        %v7426 = vsel %vm1966, %v7394, %v7126
        %v7427 = vsel %vm1966, %v7395, %v7128
        %v7428 = vsel %vm1966, %v7396, %v7130
        %v7429 = vsel %vm1966, %v7397, %v7132
        %v7430 = vsel %vm1966, %v7398, %v7134
        %v7431 = vsel %vm1966, %v7399, %v7136
        %v7432 = vsel %vm1966, %v7400, %v7138
        %v7433 = vsel %vm1966, %v7401, %v7140
        %v7434 = vsel %vm1966, %v7402, %v7142
        %v7435 = vsel %vm1966, %v7403, %v7144
        %v7436 = vsel %vm1966, %v7404, %v7146
        %v7437 = vsel %vm1966, %v7405, %v7148
        %v7438 = vsel %vm1966, %v7406, %v7150
        %v7439 = vsel %vm1966, %v7407, %v7152
        %v7440 = vsel %vm1966, %v7408, %v7154
        %v7441 = vsel %vm1966, %v7409, %v7156
        %v7442 = vsel %vm1966, %v7410, %v7158
        %v7443 = vsel %vm1966, %v7411, %v7160
        %v7444 = vsel %vm1966, %v7412, %v7162
        %v7445 = vsel %vm1966, %v7413, %v7164
        %v7446 = vsel %vm1966, %v7414, %v7166
        %v7447 = vsel %vm1966, %v7415, %v7160
        %v7448 = vsel %vm1966, %v7416, %v7162
        %v7449 = vld [vmem:[%s6] sm:$0xff]
        %v7450 = vld [vmem:[%s6 + $0x8] sm:$0xff]
        %v7451 = vld [vmem:[%s6 + $0x10] sm:$0xff]
        %v7452 = vld [vmem:[%s6 + $0x18] sm:$0xff]
        %v7453 = vld [vmem:[%s6 + $0x20] sm:$0xf]
        %v7454 = vld [vmem:[#allocation4] sm:$0x1]
        %v7456 = vlaneseq
        %v7457 = vshrl.u32 %v7456, 7
        %v7458 = vsub.s32 0, %v7457
        %v7459 = vrot.slane %v7454, %v7458
        %v7462 = vsel %vm2011, %v7417, 0
        %v7465 = vsel %vm2011, %v7418, 0
        %v7468 = vsel %vm2011, %v7419, 0
        %v7471 = vsel %vm2011, %v7420, 0
        %v7474 = vsel %vm2011, %v7421, 0
        %v7477 = vsel %vm2011, %v7422, 0
        %v7480 = vsel %vm2011, %v7423, 0
        %v7483 = vsel %vm2011, %v7424, 0
        %v7486 = vsel %vm2011, %v7425, 0
        %v7489 = vsel %vm2011, %v7426, 0
        %v7492 = vsel %vm2011, %v7427, 0
        %v7495 = vsel %vm2011, %v7428, 0
        %v7498 = vsel %vm2011, %v7429, 0
        %v7501 = vsel %vm2011, %v7430, 0
        %v7504 = vsel %vm2011, %v7431, 0
        %v7507 = vsel %vm2011, %v7432, 0
        %v7510 = vsel %vm2011, %v7433, 0
        %v7513 = vsel %vm2011, %v7434, 0
        %v7516 = vsel %vm2011, %v7435, 0
        %v7519 = vsel %vm2011, %v7436, 0
        %v7522 = vsel %vm2011, %v7437, 0
        %v7525 = vsel %vm2011, %v7438, 0
        %v7528 = vsel %vm2011, %v7439, 0
        %v7531 = vsel %vm2011, %v7440, 0
        %v7534 = vsel %vm2011, %v7441, 0
        %v7537 = vsel %vm2011, %v7442, 0
        %v7540 = vsel %vm2011, %v7443, 0
        %v7543 = vsel %vm2011, %v7444, 0
        %v7546 = vsel %vm2011, %v7445, 0
        %v7549 = vsel %vm2011, %v7446, 0
        %v7552 = vsel %vm2011, %v7447, 0
        %v7555 = vsel %vm2011, %v7448, 0
        %v7558 = vsel %vm2108, %v7453, 0
        %7560 = vmatprep.subr.mxu0 0.0
        %7561 = vmatpush1.msra.mxu0 %v7449
        %7562 = vmatprep.subr.mxu0 0.0
        %7563 = vmatpush1.msra.mxu0 %v7450
        %7564 = vmatprep.subr.mxu0 0.0
        %7565 = vmatpush1.msra.mxu0 %v7451
        %7566 = vmatprep.subr.mxu0 0.0
        %7567 = vmatpush1.msra.mxu0 %v7452
        %7568 = vmatprep.subr.mxu0 0.0
        %7569 = vmatpush1.msra.mxu0 %v7558
        %7570 = vmatprep.subr.mxu0 0.0
        %7571 = vmatpush1.msra.mxu0 0.0
        %7572 = vmatprep.subr.mxu0 0.0
        %7573 = vmatpush1.msra.mxu0 0.0
        %7574 = vmatprep.subr.mxu0 0.0
        %7575 = vmatpush1.msra.mxu0 0.0
        %7576 = vmatprep.subr.mxu0 0.0
        %7577 = vmatpush1.msra.mxu0 0.0
        %7578 = vmatprep.subr.mxu0 0.0
        %7579 = vmatpush1.msra.mxu0 0.0
        %7580 = vmatprep.subr.mxu0 0.0
        %7581 = vmatpush1.msra.mxu0 0.0
        %7582 = vmatprep.subr.mxu0 0.0
        %7583 = vmatpush1.msra.mxu0 0.0
        %7584 = vmatprep.subr.mxu0 0.0
        %7585 = vmatpush1.msra.mxu0 0.0
        %7586 = vmatprep.subr.mxu0 0.0
        %7587 = vmatpush1.msra.mxu0 0.0
        %7588 = vmatprep.subr.mxu0 0.0
        %7589 = vmatpush1.msra.mxu0 0.0
        %7590 = vmatprep.subr.mxu0 0.0
        %7591 = vmatpush1.msra.mxu0 0.0
        %7592 = vmatprep.subr.mxu0 0.0
        %7593 = vmatpush1.msra.mxu0 0.0
        %7594 = vmatprep.subr.mxu0 0.0
        %7595 = vmatpush1.msra.mxu0 0.0
        %7596 = vmatprep.subr.mxu0 0.0
        %7597 = vmatpush1.msra.mxu0 0.0
        %7598 = vmatprep.subr.mxu0 0.0
        %7599 = vmatpush1.msra.mxu0 0.0
        %7600 = vmatprep.subr.mxu0 0.0
        %7601 = vmatpush1.msra.mxu0 0.0
        %7602 = vmatprep.subr.mxu0 0.0
        %7603 = vmatpush1.msra.mxu0 0.0
        %7604 = vmatprep.subr.mxu0 0.0
        %7605 = vmatpush1.msra.mxu0 0.0
        %7606 = vmatprep.subr.mxu0 0.0
        %7607 = vmatpush1.msra.mxu0 0.0
        %7608 = vmatprep.subr.mxu0 0.0
        %7609 = vmatpush1.msra.mxu0 0.0
        %7610 = vmatprep.subr.mxu0 0.0
        %7611 = vmatpush1.msra.mxu0 0.0
        %7612 = vmatprep.subr.mxu0 0.0
        %7613 = vmatpush1.msra.mxu0 0.0
        %7614 = vmatprep.subr.mxu0 0.0
        %7615 = vmatpush1.msra.mxu0 0.0
        %7616 = vmatprep.subr.mxu0 0.0
        %7617 = vmatpush1.msra.mxu0 0.0
        %7618 = vmatprep.subr.mxu0 0.0
        %7619 = vmatpush1.msra.mxu0 0.0
        %7620 = vmatprep.subr.mxu0 0.0
        %7621 = vmatpush1.msra.mxu0 0.0
        %7622 = vmatprep.subr.mxu0 0.0
        %7623 = vmatpush1.msra.mxu0 0.0
        %7624 = vmatprep.mubr.f32.mxu0 0.0
        %7625 = vmatmul.mubr.f32.gmra.mrb[0].mxu0 %v7462
        %v7626 = vpop.f32.mrb[0].mxu0
        %v7627 = vadd.f32 %v7459, %v7626
        %v7628 = vpop.f32.mrb[0].mxu0
        %7629 = vmatprep.mubr.f32.mxu0 0.0
        %7630 = vmatmul.mubr.f32.gmra.mrb[0].mxu0 %v7465
        %v7631 = vpop.f32.mrb[0].mxu0
        %v7632 = vadd.f32 %v7459, %v7631
        %v7633 = vpop.f32.mrb[0].mxu0
        %7634 = vmatprep.mubr.f32.mxu0 0.0
        %7635 = vmatmul.mubr.f32.gmra.mrb[0].mxu0 %v7468
        %v7636 = vpop.f32.mrb[0].mxu0
        %v7637 = vadd.f32 %v7459, %v7636
        %v7638 = vpop.f32.mrb[0].mxu0
        %7639 = vmatprep.mubr.f32.mxu0 0.0
        %7640 = vmatmul.mubr.f32.gmra.mrb[0].mxu0 %v7471
        %v7641 = vpop.f32.mrb[0].mxu0
        %v7642 = vadd.f32 %v7459, %v7641
        %v7643 = vpop.f32.mrb[0].mxu0
        %7644 = vmatprep.mubr.f32.mxu0 0.0
        %7645 = vmatmul.mubr.f32.gmra.mrb[0].mxu0 %v7474
        %v7646 = vpop.f32.mrb[0].mxu0
        %v7647 = vadd.f32 %v7459, %v7646
        %v7648 = vpop.f32.mrb[0].mxu0
        %7649 = vmatprep.mubr.f32.mxu0 0.0
        %7650 = vmatmul.mubr.f32.gmra.mrb[0].mxu0 %v7477
        %v7651 = vpop.f32.mrb[0].mxu0
        %v7652 = vadd.f32 %v7459, %v7651
        %v7653 = vpop.f32.mrb[0].mxu0
        %7654 = vmatprep.mubr.f32.mxu0 0.0
        %7655 = vmatmul.mubr.f32.gmra.mrb[0].mxu0 %v7480
        %v7656 = vpop.f32.mrb[0].mxu0
        %v7657 = vadd.f32 %v7459, %v7656
        %v7658 = vpop.f32.mrb[0].mxu0
        %7659 = vmatprep.mubr.f32.mxu0 0.0
        %7660 = vmatmul.mubr.f32.gmra.mrb[0].mxu0 %v7483
        %v7661 = vpop.f32.mrb[0].mxu0
        %v7662 = vadd.f32 %v7459, %v7661
        %v7663 = vpop.f32.mrb[0].mxu0
        %7664 = vmatprep.mubr.f32.mxu0 0.0
        %7665 = vmatmul.mubr.f32.gmra.mrb[0].mxu0 %v7486
        %v7666 = vpop.f32.mrb[0].mxu0
        %v7667 = vadd.f32 %v7459, %v7666
        %v7668 = vpop.f32.mrb[0].mxu0
        %7669 = vmatprep.mubr.f32.mxu0 0.0
        %7670 = vmatmul.mubr.f32.gmra.mrb[0].mxu0 %v7489
        %v7671 = vpop.f32.mrb[0].mxu0
        %v7672 = vadd.f32 %v7459, %v7671
        %v7673 = vpop.f32.mrb[0].mxu0
        %7674 = vmatprep.mubr.f32.mxu0 0.0
        %7675 = vmatmul.mubr.f32.gmra.mrb[0].mxu0 %v7492
        %v7676 = vpop.f32.mrb[0].mxu0
        %v7677 = vadd.f32 %v7459, %v7676
        %v7678 = vpop.f32.mrb[0].mxu0
        %7679 = vmatprep.mubr.f32.mxu0 0.0
        %7680 = vmatmul.mubr.f32.gmra.mrb[0].mxu0 %v7495
        %v7681 = vpop.f32.mrb[0].mxu0
        %v7682 = vadd.f32 %v7459, %v7681
        %v7683 = vpop.f32.mrb[0].mxu0
        %7684 = vmatprep.mubr.f32.mxu0 0.0
        %7685 = vmatmul.mubr.f32.gmra.mrb[0].mxu0 %v7498
        %v7686 = vpop.f32.mrb[0].mxu0
        %v7687 = vadd.f32 %v7459, %v7686
        %v7688 = vpop.f32.mrb[0].mxu0
        %7689 = vmatprep.mubr.f32.mxu0 0.0
        %7690 = vmatmul.mubr.f32.gmra.mrb[0].mxu0 %v7501
        %v7691 = vpop.f32.mrb[0].mxu0
        %v7692 = vadd.f32 %v7459, %v7691
        %v7693 = vpop.f32.mrb[0].mxu0
        %7694 = vmatprep.mubr.f32.mxu0 0.0
        %7695 = vmatmul.mubr.f32.gmra.mrb[0].mxu0 %v7504
        %v7696 = vpop.f32.mrb[0].mxu0
        %v7697 = vadd.f32 %v7459, %v7696
        %v7698 = vpop.f32.mrb[0].mxu0
        %7699 = vmatprep.mubr.f32.mxu0 0.0
        %7700 = vmatmul.mubr.f32.gmra.mrb[0].mxu0 %v7507
        %v7701 = vpop.f32.mrb[0].mxu0
        %v7702 = vadd.f32 %v7459, %v7701
        %v7703 = vpop.f32.mrb[0].mxu0
        %7704 = vmatprep.mubr.f32.mxu0 0.0
        %7705 = vmatmul.mubr.f32.gmra.mrb[0].mxu0 %v7510
        %v7706 = vpop.f32.mrb[0].mxu0
        %v7707 = vadd.f32 %v7459, %v7706
        %v7708 = vpop.f32.mrb[0].mxu0
        %7709 = vmatprep.mubr.f32.mxu0 0.0
        %7710 = vmatmul.mubr.f32.gmra.mrb[0].mxu0 %v7513
        %v7711 = vpop.f32.mrb[0].mxu0
        %v7712 = vadd.f32 %v7459, %v7711
        %v7713 = vpop.f32.mrb[0].mxu0
        %7714 = vmatprep.mubr.f32.mxu0 0.0
        %7715 = vmatmul.mubr.f32.gmra.mrb[0].mxu0 %v7516
        %v7716 = vpop.f32.mrb[0].mxu0
        %v7717 = vadd.f32 %v7459, %v7716
        %v7718 = vpop.f32.mrb[0].mxu0
        %7719 = vmatprep.mubr.f32.mxu0 0.0
        %7720 = vmatmul.mubr.f32.gmra.mrb[0].mxu0 %v7519
        %v7721 = vpop.f32.mrb[0].mxu0
        %v7722 = vadd.f32 %v7459, %v7721
        %v7723 = vpop.f32.mrb[0].mxu0
        %7724 = vmatprep.mubr.f32.mxu0 0.0
        %7725 = vmatmul.mubr.f32.gmra.mrb[0].mxu0 %v7522
        %v7726 = vpop.f32.mrb[0].mxu0
        %v7727 = vadd.f32 %v7459, %v7726
        %v7728 = vpop.f32.mrb[0].mxu0
        %7729 = vmatprep.mubr.f32.mxu0 0.0
        %7730 = vmatmul.mubr.f32.gmra.mrb[0].mxu0 %v7525
        %v7731 = vpop.f32.mrb[0].mxu0
        %v7732 = vadd.f32 %v7459, %v7731
        %v7733 = vpop.f32.mrb[0].mxu0
        %7734 = vmatprep.mubr.f32.mxu0 0.0
        %7735 = vmatmul.mubr.f32.gmra.mrb[0].mxu0 %v7528
        %v7736 = vpop.f32.mrb[0].mxu0
        %v7737 = vadd.f32 %v7459, %v7736
        %v7738 = vpop.f32.mrb[0].mxu0
        %7739 = vmatprep.mubr.f32.mxu0 0.0
        %7740 = vmatmul.mubr.f32.gmra.mrb[0].mxu0 %v7531
        %v7741 = vpop.f32.mrb[0].mxu0
        %v7742 = vadd.f32 %v7459, %v7741
        %v7743 = vpop.f32.mrb[0].mxu0
        %7744 = vmatprep.mubr.f32.mxu0 0.0
        %7745 = vmatmul.mubr.f32.gmra.mrb[0].mxu0 %v7534
        %v7746 = vpop.f32.mrb[0].mxu0
        %v7747 = vadd.f32 %v7459, %v7746
        %v7748 = vpop.f32.mrb[0].mxu0
        %7749 = vmatprep.mubr.f32.mxu0 0.0
        %7750 = vmatmul.mubr.f32.gmra.mrb[0].mxu0 %v7537
        %v7751 = vpop.f32.mrb[0].mxu0
        %v7752 = vadd.f32 %v7459, %v7751
        %v7753 = vpop.f32.mrb[0].mxu0
        %7754 = vmatprep.mubr.f32.mxu0 0.0
        %7755 = vmatmul.mubr.f32.gmra.mrb[0].mxu0 %v7540
        %v7756 = vpop.f32.mrb[0].mxu0
        %v7757 = vadd.f32 %v7459, %v7756
        %v7758 = vpop.f32.mrb[0].mxu0
        %7759 = vmatprep.mubr.f32.mxu0 0.0
        %7760 = vmatmul.mubr.f32.gmra.mrb[0].mxu0 %v7543
        %v7761 = vpop.f32.mrb[0].mxu0
        %v7762 = vadd.f32 %v7459, %v7761
        %v7763 = vpop.f32.mrb[0].mxu0
        %7764 = vmatprep.mubr.f32.mxu0 0.0
        %7765 = vmatmul.mubr.f32.gmra.mrb[0].mxu0 %v7546
        %v7766 = vpop.f32.mrb[0].mxu0
        %v7767 = vadd.f32 %v7459, %v7766
        %v7768 = vpop.f32.mrb[0].mxu0
        %7769 = vmatprep.mubr.f32.mxu0 0.0
        %7770 = vmatmul.mubr.f32.gmra.mrb[0].mxu0 %v7549
        %v7771 = vpop.f32.mrb[0].mxu0
        %v7772 = vadd.f32 %v7459, %v7771
        %v7773 = vpop.f32.mrb[0].mxu0
        %7774 = vmatprep.mubr.f32.mxu0 0.0
        %7775 = vmatmul.mubr.f32.gmra.mrb[0].mxu0 %v7552
        %v7776 = vpop.f32.mrb[0].mxu0
        %v7777 = vadd.f32 %v7459, %v7776
        %v7778 = vpop.f32.mrb[0].mxu0
        %7779 = vmatprep.mubr.f32.mxu0 0.0
        %7780 = vmatmul.mubr.f32.gmra.mrb[0].mxu0 %v7555
        %v7781 = vpop.f32.mrb[0].mxu0
        %v7782 = vadd.f32 %v7459, %v7781
        %v7783 = vpop.f32.mrb[0].mxu0
        %7784 = vdwg.mxu0
        %vm7785 = vcmp.gt.f32.partialorder %v7627, 0.0
        %vm7786 = vcmp.gt.f32.partialorder %v7632, 0.0
        %vm7787 = vcmp.gt.f32.partialorder %v7637, 0.0
        %vm7788 = vcmp.gt.f32.partialorder %v7642, 0.0
        %vm7789 = vcmp.gt.f32.partialorder %v7647, 0.0
        %vm7790 = vcmp.gt.f32.partialorder %v7652, 0.0
        %vm7791 = vcmp.gt.f32.partialorder %v7657, 0.0
        %vm7792 = vcmp.gt.f32.partialorder %v7662, 0.0
        %vm7793 = vcmp.gt.f32.partialorder %v7667, 0.0
        %vm7794 = vcmp.gt.f32.partialorder %v7672, 0.0
        %vm7795 = vcmp.gt.f32.partialorder %v7677, 0.0
        %vm7796 = vcmp.gt.f32.partialorder %v7682, 0.0
        %vm7797 = vcmp.gt.f32.partialorder %v7687, 0.0
        %vm7798 = vcmp.gt.f32.partialorder %v7692, 0.0
        %vm7799 = vcmp.gt.f32.partialorder %v7697, 0.0
        %vm7800 = vcmp.gt.f32.partialorder %v7702, 0.0
        %vm7801 = vcmp.gt.f32.partialorder %v7707, 0.0
        %vm7802 = vcmp.gt.f32.partialorder %v7712, 0.0
        %vm7803 = vcmp.gt.f32.partialorder %v7717, 0.0
        %vm7804 = vcmp.gt.f32.partialorder %v7722, 0.0
        %vm7805 = vcmp.gt.f32.partialorder %v7727, 0.0
        %vm7806 = vcmp.gt.f32.partialorder %v7732, 0.0
        %vm7807 = vcmp.gt.f32.partialorder %v7737, 0.0
        %vm7808 = vcmp.gt.f32.partialorder %v7742, 0.0
        %vm7809 = vcmp.gt.f32.partialorder %v7747, 0.0
        %vm7810 = vcmp.gt.f32.partialorder %v7752, 0.0
        %vm7811 = vcmp.gt.f32.partialorder %v7757, 0.0
        %vm7812 = vcmp.gt.f32.partialorder %v7762, 0.0
        %vm7813 = vcmp.gt.f32.partialorder %v7767, 0.0
        %vm7814 = vcmp.gt.f32.partialorder %v7772, 0.0
        %vm7815 = vcmp.gt.f32.partialorder %v7777, 0.0
        %vm7816 = vcmp.gt.f32.partialorder %v7782, 0.0
        %v7817 = vmul.f32 %v7627, 0.02
        %v7818 = vmul.f32 %v7632, 0.02
        %v7819 = vmul.f32 %v7637, 0.02
        %v7820 = vmul.f32 %v7642, 0.02
        %v7821 = vmul.f32 %v7647, 0.02
        %v7822 = vmul.f32 %v7652, 0.02
        %v7823 = vmul.f32 %v7657, 0.02
        %v7824 = vmul.f32 %v7662, 0.02
        %v7825 = vmul.f32 %v7667, 0.02
        %v7826 = vmul.f32 %v7672, 0.02
        %v7827 = vmul.f32 %v7677, 0.02
        %v7828 = vmul.f32 %v7682, 0.02
        %v7829 = vmul.f32 %v7687, 0.02
        %v7830 = vmul.f32 %v7692, 0.02
        %v7831 = vmul.f32 %v7697, 0.02
        %v7832 = vmul.f32 %v7702, 0.02
        %v7833 = vmul.f32 %v7707, 0.02
        %v7834 = vmul.f32 %v7712, 0.02
        %v7835 = vmul.f32 %v7717, 0.02
        %v7836 = vmul.f32 %v7722, 0.02
        %v7837 = vmul.f32 %v7727, 0.02
        %v7838 = vmul.f32 %v7732, 0.02
        %v7839 = vmul.f32 %v7737, 0.02
        %v7840 = vmul.f32 %v7742, 0.02
        %v7841 = vmul.f32 %v7747, 0.02
        %v7842 = vmul.f32 %v7752, 0.02
        %v7843 = vmul.f32 %v7757, 0.02
        %v7844 = vmul.f32 %v7762, 0.02
        %v7845 = vmul.f32 %v7767, 0.02
        %v7846 = vmul.f32 %v7772, 0.02
        %v7847 = vmul.f32 %v7777, 0.02
        %v7848 = vmul.f32 %v7782, 0.02
        %v7849 = vsel %vm7785, %v7627, %v7817
        %v7850 = vsel %vm7786, %v7632, %v7818
        %v7851 = vsel %vm7787, %v7637, %v7819
        %v7852 = vsel %vm7788, %v7642, %v7820
        %v7853 = vsel %vm7789, %v7647, %v7821
        %v7854 = vsel %vm7790, %v7652, %v7822
        %v7855 = vsel %vm7791, %v7657, %v7823
        %v7856 = vsel %vm7792, %v7662, %v7824
        %v7857 = vsel %vm7793, %v7667, %v7825
        %v7858 = vsel %vm7794, %v7672, %v7826
        %v7859 = vsel %vm7795, %v7677, %v7827
        %v7860 = vsel %vm7796, %v7682, %v7828
        %v7861 = vsel %vm7797, %v7687, %v7829
        %v7862 = vsel %vm7798, %v7692, %v7830
        %v7863 = vsel %vm7799, %v7697, %v7831
        %v7864 = vsel %vm7800, %v7702, %v7832
        %v7865 = vsel %vm7801, %v7707, %v7833
        %v7866 = vsel %vm7802, %v7712, %v7834
        %v7867 = vsel %vm7803, %v7717, %v7835
        %v7868 = vsel %vm7804, %v7722, %v7836
        %v7869 = vsel %vm7805, %v7727, %v7837
        %v7870 = vsel %vm7806, %v7732, %v7838
        %v7871 = vsel %vm7807, %v7737, %v7839
        %v7872 = vsel %vm7808, %v7742, %v7840
        %v7873 = vsel %vm7809, %v7747, %v7841
        %v7874 = vsel %vm7810, %v7752, %v7842
        %v7875 = vsel %vm7811, %v7757, %v7843
        %v7876 = vsel %vm7812, %v7762, %v7844
        %v7877 = vsel %vm7813, %v7767, %v7845
        %v7878 = vsel %vm7814, %v7772, %v7846
        %v7879 = vsel %vm7815, %v7777, %v7847
        %v7880 = vsel %vm7816, %v7782, %v7848
        %v7897 = vrot.slane %v7851, 1
        %v7898 = vrot.slane %v7849, 1
        %v7899 = vrot.slane %v7853, 1
        %v7900 = vrot.slane %v7855, 1
        %v7901 = vrot.slane %v7857, 1
        %v7902 = vrot.slane %v7859, 1
        %v7903 = vrot.slane %v7861, 1
        %v7904 = vrot.slane %v7863, 1
        %v7905 = vrot.slane %v7865, 1
        %v7906 = vrot.slane %v7867, 1
        %v7907 = vrot.slane %v7869, 1
        %v7908 = vrot.slane %v7871, 1
        %v7909 = vrot.slane %v7873, 1
        %v7910 = vrot.slane %v7875, 1
        %v7911 = vrot.slane %v7877, 1
        %v7912 = vrot.slane %v7879, 1
        %v7945 = vrot.slane %v7851, 7
        %v7946 = vrot.slane %v7852, 7
        %v7947 = vsel %vm647, %v7945, %v7946
        %v7948 = vrot.slane %v7849, 7
        %v7949 = vrot.slane %v7850, 7
        %v7950 = vsel %vm647, %v7948, %v7949
        %v7951 = vrot.slane %v7853, 7
        %v7952 = vrot.slane %v7854, 7
        %v7953 = vsel %vm647, %v7951, %v7952
        %v7954 = vrot.slane %v7855, 7
        %v7955 = vrot.slane %v7856, 7
        %v7956 = vsel %vm647, %v7954, %v7955
        %v7957 = vrot.slane %v7857, 7
        %v7958 = vrot.slane %v7858, 7
        %v7959 = vsel %vm647, %v7957, %v7958
        %v7960 = vrot.slane %v7859, 7
        %v7961 = vrot.slane %v7860, 7
        %v7962 = vsel %vm647, %v7960, %v7961
        %v7963 = vrot.slane %v7861, 7
        %v7964 = vrot.slane %v7862, 7
        %v7965 = vsel %vm647, %v7963, %v7964
        %v7966 = vrot.slane %v7863, 7
        %v7967 = vrot.slane %v7864, 7
        %v7968 = vsel %vm647, %v7966, %v7967
        %v7969 = vrot.slane %v7865, 7
        %v7970 = vrot.slane %v7866, 7
        %v7971 = vsel %vm647, %v7969, %v7970
        %v7972 = vrot.slane %v7867, 7
        %v7973 = vrot.slane %v7868, 7
        %v7974 = vsel %vm647, %v7972, %v7973
        %v7975 = vrot.slane %v7869, 7
        %v7976 = vrot.slane %v7870, 7
        %v7977 = vsel %vm647, %v7975, %v7976
        %v7978 = vrot.slane %v7871, 7
        %v7979 = vrot.slane %v7872, 7
        %v7980 = vsel %vm647, %v7978, %v7979
        %v7981 = vrot.slane %v7873, 7
        %v7982 = vrot.slane %v7874, 7
        %v7983 = vsel %vm647, %v7981, %v7982
        %v7984 = vrot.slane %v7875, 7
        %v7985 = vrot.slane %v7876, 7
        %v7986 = vsel %vm647, %v7984, %v7985
        %v7987 = vrot.slane %v7877, 7
        %v7988 = vrot.slane %v7878, 7
        %v7989 = vsel %vm647, %v7987, %v7988
        %v7990 = vrot.slane %v7879, 7
        %v7991 = vrot.slane %v7880, 7
        %v7992 = vsel %vm647, %v7990, %v7991
        %v8040 = vrot.slane %v7852, 5
        %v8041 = vrot.slane %v7850, 5
        %v8042 = vrot.slane %v7854, 5
        %v8043 = vrot.slane %v7856, 5
        %v8044 = vrot.slane %v7858, 5
        %v8045 = vrot.slane %v7860, 5
        %v8046 = vrot.slane %v7862, 5
        %v8047 = vrot.slane %v7864, 5
        %v8048 = vrot.slane %v7866, 5
        %v8049 = vrot.slane %v7868, 5
        %v8050 = vrot.slane %v7870, 5
        %v8051 = vrot.slane %v7872, 5
        %v8052 = vrot.slane %v7874, 5
        %v8053 = vrot.slane %v7876, 5
        %v8054 = vrot.slane %v7878, 5
        %v8055 = vrot.slane %v7880, 5
        %v8072 = vsel %vm647, %v7897, %v7945
        %v8073 = vsel %vm647, %v7898, %v7948
        %v8074 = vsel %vm647, %v7899, %v7951
        %v8075 = vsel %vm647, %v7900, %v7954
        %v8076 = vsel %vm647, %v7901, %v7957
        %v8077 = vsel %vm647, %v7902, %v7960
        %v8078 = vsel %vm647, %v7903, %v7963
        %v8079 = vsel %vm647, %v7904, %v7966
        %v8080 = vsel %vm647, %v7905, %v7969
        %v8081 = vsel %vm647, %v7906, %v7972
        %v8082 = vsel %vm647, %v7907, %v7975
        %v8083 = vsel %vm647, %v7908, %v7978
        %v8084 = vsel %vm647, %v7909, %v7981
        %v8085 = vsel %vm647, %v7910, %v7984
        %v8086 = vsel %vm647, %v7911, %v7987
        %v8087 = vsel %vm647, %v7912, %v7990
        %v8088 = vsel %vm647, %v7946, %v8040
        %v8089 = vsel %vm647, %v7949, %v8041
        %v8090 = vsel %vm647, %v7952, %v8042
        %v8091 = vsel %vm647, %v7955, %v8043
        %v8092 = vsel %vm647, %v7958, %v8044
        %v8093 = vsel %vm647, %v7961, %v8045
        %v8094 = vsel %vm647, %v7964, %v8046
        %v8095 = vsel %vm647, %v7967, %v8047
        %v8096 = vsel %vm647, %v7970, %v8048
        %v8097 = vsel %vm647, %v7973, %v8049
        %v8098 = vsel %vm647, %v7976, %v8050
        %v8099 = vsel %vm647, %v7979, %v8051
        %v8100 = vsel %vm647, %v7982, %v8052
        %v8101 = vsel %vm647, %v7985, %v8053
        %v8102 = vsel %vm647, %v7988, %v8054
        %v8103 = vsel %vm647, %v7991, %v8055
        %v8134 = vrot.slane %v8072, 1
        %v8135 = vrot.slane %v7947, 1
        %v8136 = vsel %vm837, %v8134, %v8135
        %v8137 = vrot.slane %v8088, 1
        %v8138 = vsel %vm837, %v8135, %v8137
        %v8139 = vrot.slane %v8073, 1
        %v8140 = vrot.slane %v7950, 1
        %v8141 = vsel %vm837, %v8139, %v8140
        %v8142 = vrot.slane %v8089, 1
        %v8143 = vsel %vm837, %v8140, %v8142
        %v8144 = vrot.slane %v8074, 1
        %v8145 = vrot.slane %v7953, 1
        %v8146 = vsel %vm837, %v8144, %v8145
        %v8147 = vrot.slane %v8090, 1
        %v8148 = vsel %vm837, %v8145, %v8147
        %v8149 = vrot.slane %v8075, 1
        %v8150 = vrot.slane %v7956, 1
        %v8151 = vsel %vm837, %v8149, %v8150
        %v8152 = vrot.slane %v8091, 1
        %v8153 = vsel %vm837, %v8150, %v8152
        %v8154 = vrot.slane %v8076, 1
        %v8155 = vrot.slane %v7959, 1
        %v8156 = vsel %vm837, %v8154, %v8155
        %v8157 = vrot.slane %v8092, 1
        %v8158 = vsel %vm837, %v8155, %v8157
        %v8159 = vrot.slane %v8077, 1
        %v8160 = vrot.slane %v7962, 1
        %v8161 = vsel %vm837, %v8159, %v8160
        %v8162 = vrot.slane %v8093, 1
        %v8163 = vsel %vm837, %v8160, %v8162
        %v8164 = vrot.slane %v8078, 1
        %v8165 = vrot.slane %v7965, 1
        %v8166 = vsel %vm837, %v8164, %v8165
        %v8167 = vrot.slane %v8094, 1
        %v8168 = vsel %vm837, %v8165, %v8167
        %v8169 = vrot.slane %v8079, 1
        %v8170 = vrot.slane %v7968, 1
        %v8171 = vsel %vm837, %v8169, %v8170
        %v8172 = vrot.slane %v8095, 1
        %v8173 = vsel %vm837, %v8170, %v8172
        %v8174 = vrot.slane %v8080, 1
        %v8175 = vrot.slane %v7971, 1
        %v8176 = vsel %vm837, %v8174, %v8175
        %v8177 = vrot.slane %v8096, 1
        %v8178 = vsel %vm837, %v8175, %v8177
        %v8179 = vrot.slane %v8081, 1
        %v8180 = vrot.slane %v7974, 1
        %v8181 = vsel %vm837, %v8179, %v8180
        %v8182 = vrot.slane %v8097, 1
        %v8183 = vsel %vm837, %v8180, %v8182
        %v8184 = vrot.slane %v8082, 1
        %v8185 = vrot.slane %v7977, 1
        %v8186 = vsel %vm837, %v8184, %v8185
        %v8187 = vrot.slane %v8098, 1
        %v8188 = vsel %vm837, %v8185, %v8187
        %v8189 = vrot.slane %v8083, 1
        %v8190 = vrot.slane %v7980, 1
        %v8191 = vsel %vm837, %v8189, %v8190
        %v8192 = vrot.slane %v8099, 1
        %v8193 = vsel %vm837, %v8190, %v8192
        %v8194 = vrot.slane %v8084, 1
        %v8195 = vrot.slane %v7983, 1
        %v8196 = vsel %vm837, %v8194, %v8195
        %v8197 = vrot.slane %v8100, 1
        %v8198 = vsel %vm837, %v8195, %v8197
        %v8199 = vrot.slane %v8085, 1
        %v8200 = vrot.slane %v7986, 1
        %v8201 = vsel %vm837, %v8199, %v8200
        %v8202 = vrot.slane %v8101, 1
        %v8203 = vsel %vm837, %v8200, %v8202
        %v8204 = vrot.slane %v8086, 1
        %v8205 = vrot.slane %v7989, 1
        %v8206 = vsel %vm837, %v8204, %v8205
        %v8207 = vrot.slane %v8102, 1
        %v8208 = vsel %vm837, %v8205, %v8207
        %8209 = vrot.lane.b32.xlu0 %v8136, 1
        %v8210 = vpop.permute.xlu0 %8209
        %8211 = vrot.lane.b32.xlu0 %v8138, 1
        %v8212 = vpop.permute.xlu0 %8211
        %8213 = vrot.lane.b32.xlu0 %v8141, 1
        %v8214 = vpop.permute.xlu0 %8213
        %8215 = vrot.lane.b32.xlu0 %v8143, 1
        %v8216 = vpop.permute.xlu0 %8215
        %8217 = vrot.lane.b32.xlu0 %v8146, 1
        %v8218 = vpop.permute.xlu0 %8217
        %8219 = vrot.lane.b32.xlu0 %v8148, 1
        %v8220 = vpop.permute.xlu0 %8219
        %8221 = vrot.lane.b32.xlu0 %v8151, 1
        %v8222 = vpop.permute.xlu0 %8221
        %8223 = vrot.lane.b32.xlu0 %v8153, 1
        %v8224 = vpop.permute.xlu0 %8223
        %8225 = vrot.lane.b32.xlu0 %v8156, 1
        %v8226 = vpop.permute.xlu0 %8225
        %8227 = vrot.lane.b32.xlu0 %v8158, 1
        %v8228 = vpop.permute.xlu0 %8227
        %8229 = vrot.lane.b32.xlu0 %v8161, 1
        %v8230 = vpop.permute.xlu0 %8229
        %8231 = vrot.lane.b32.xlu0 %v8163, 1
        %v8232 = vpop.permute.xlu0 %8231
        %8233 = vrot.lane.b32.xlu0 %v8166, 1
        %v8234 = vpop.permute.xlu0 %8233
        %8235 = vrot.lane.b32.xlu0 %v8168, 1
        %v8236 = vpop.permute.xlu0 %8235
        %8237 = vrot.lane.b32.xlu0 %v8171, 1
        %v8238 = vpop.permute.xlu0 %8237
        %8239 = vrot.lane.b32.xlu0 %v8173, 1
        %v8240 = vpop.permute.xlu0 %8239
        %8241 = vrot.lane.b32.xlu0 %v8176, 1
        %v8242 = vpop.permute.xlu0 %8241
        %8243 = vrot.lane.b32.xlu0 %v8178, 1
        %v8244 = vpop.permute.xlu0 %8243
        %8245 = vrot.lane.b32.xlu0 %v8181, 1
        %v8246 = vpop.permute.xlu0 %8245
        %8247 = vrot.lane.b32.xlu0 %v8183, 1
        %v8248 = vpop.permute.xlu0 %8247
        %8249 = vrot.lane.b32.xlu0 %v8186, 1
        %v8250 = vpop.permute.xlu0 %8249
        %8251 = vrot.lane.b32.xlu0 %v8188, 1
        %v8252 = vpop.permute.xlu0 %8251
        %8253 = vrot.lane.b32.xlu0 %v8191, 1
        %v8254 = vpop.permute.xlu0 %8253
        %8255 = vrot.lane.b32.xlu0 %v8193, 1
        %v8256 = vpop.permute.xlu0 %8255
        %8257 = vrot.lane.b32.xlu0 %v8196, 1
        %v8258 = vpop.permute.xlu0 %8257
        %8259 = vrot.lane.b32.xlu0 %v8198, 1
        %v8260 = vpop.permute.xlu0 %8259
        %8261 = vrot.lane.b32.xlu0 %v8201, 1
        %v8262 = vpop.permute.xlu0 %8261
        %8263 = vrot.lane.b32.xlu0 %v8203, 1
        %v8264 = vpop.permute.xlu0 %8263
        %8265 = vrot.lane.b32.xlu0 %v8206, 1
        %v8266 = vpop.permute.xlu0 %8265
        %8267 = vrot.lane.b32.xlu0 %v8208, 1
        %v8268 = vpop.permute.xlu0 %8267
        %v8299 = vrot.slane %v8072, 2
        %v8300 = vrot.slane %v7947, 2
        %v8301 = vsel %vm1003, %v8299, %v8300
        %v8302 = vrot.slane %v8088, 2
        %v8303 = vsel %vm1003, %v8300, %v8302
        %v8304 = vrot.slane %v8073, 2
        %v8305 = vrot.slane %v7950, 2
        %v8306 = vsel %vm1003, %v8304, %v8305
        %v8307 = vrot.slane %v8089, 2
        %v8308 = vsel %vm1003, %v8305, %v8307
        %v8309 = vrot.slane %v8074, 2
        %v8310 = vrot.slane %v7953, 2
        %v8311 = vsel %vm1003, %v8309, %v8310
        %v8312 = vrot.slane %v8090, 2
        %v8313 = vsel %vm1003, %v8310, %v8312
        %v8314 = vrot.slane %v8075, 2
        %v8315 = vrot.slane %v7956, 2
        %v8316 = vsel %vm1003, %v8314, %v8315
        %v8317 = vrot.slane %v8091, 2
        %v8318 = vsel %vm1003, %v8315, %v8317
        %v8319 = vrot.slane %v8076, 2
        %v8320 = vrot.slane %v7959, 2
        %v8321 = vsel %vm1003, %v8319, %v8320
        %v8322 = vrot.slane %v8092, 2
        %v8323 = vsel %vm1003, %v8320, %v8322
        %v8324 = vrot.slane %v8077, 2
        %v8325 = vrot.slane %v7962, 2
        %v8326 = vsel %vm1003, %v8324, %v8325
        %v8327 = vrot.slane %v8093, 2
        %v8328 = vsel %vm1003, %v8325, %v8327
        %v8329 = vrot.slane %v8078, 2
        %v8330 = vrot.slane %v7965, 2
        %v8331 = vsel %vm1003, %v8329, %v8330
        %v8332 = vrot.slane %v8094, 2
        %v8333 = vsel %vm1003, %v8330, %v8332
        %v8334 = vrot.slane %v8079, 2
        %v8335 = vrot.slane %v7968, 2
        %v8336 = vsel %vm1003, %v8334, %v8335
        %v8337 = vrot.slane %v8095, 2
        %v8338 = vsel %vm1003, %v8335, %v8337
        %v8339 = vrot.slane %v8080, 2
        %v8340 = vrot.slane %v7971, 2
        %v8341 = vsel %vm1003, %v8339, %v8340
        %v8342 = vrot.slane %v8096, 2
        %v8343 = vsel %vm1003, %v8340, %v8342
        %v8344 = vrot.slane %v8081, 2
        %v8345 = vrot.slane %v7974, 2
        %v8346 = vsel %vm1003, %v8344, %v8345
        %v8347 = vrot.slane %v8097, 2
        %v8348 = vsel %vm1003, %v8345, %v8347
        %v8349 = vrot.slane %v8082, 2
        %v8350 = vrot.slane %v7977, 2
        %v8351 = vsel %vm1003, %v8349, %v8350
        %v8352 = vrot.slane %v8098, 2
        %v8353 = vsel %vm1003, %v8350, %v8352
        %v8354 = vrot.slane %v8083, 2
        %v8355 = vrot.slane %v7980, 2
        %v8356 = vsel %vm1003, %v8354, %v8355
        %v8357 = vrot.slane %v8099, 2
        %v8358 = vsel %vm1003, %v8355, %v8357
        %v8359 = vrot.slane %v8084, 2
        %v8360 = vrot.slane %v7983, 2
        %v8361 = vsel %vm1003, %v8359, %v8360
        %v8362 = vrot.slane %v8100, 2
        %v8363 = vsel %vm1003, %v8360, %v8362
        %v8364 = vrot.slane %v8085, 2
        %v8365 = vrot.slane %v7986, 2
        %v8366 = vsel %vm1003, %v8364, %v8365
        %v8367 = vrot.slane %v8101, 2
        %v8368 = vsel %vm1003, %v8365, %v8367
        %v8369 = vrot.slane %v8086, 2
        %v8370 = vrot.slane %v7989, 2
        %v8371 = vsel %vm1003, %v8369, %v8370
        %v8372 = vrot.slane %v8102, 2
        %v8373 = vsel %vm1003, %v8370, %v8372
        %8374 = vrot.lane.b32.xlu0 %v8301, 2
        %v8375 = vpop.permute.xlu0 %8374
        %8376 = vrot.lane.b32.xlu0 %v8303, 2
        %v8377 = vpop.permute.xlu0 %8376
        %8378 = vrot.lane.b32.xlu0 %v8306, 2
        %v8379 = vpop.permute.xlu0 %8378
        %8380 = vrot.lane.b32.xlu0 %v8308, 2
        %v8381 = vpop.permute.xlu0 %8380
        %8382 = vrot.lane.b32.xlu0 %v8311, 2
        %v8383 = vpop.permute.xlu0 %8382
        %8384 = vrot.lane.b32.xlu0 %v8313, 2
        %v8385 = vpop.permute.xlu0 %8384
        %8386 = vrot.lane.b32.xlu0 %v8316, 2
        %v8387 = vpop.permute.xlu0 %8386
        %8388 = vrot.lane.b32.xlu0 %v8318, 2
        %v8389 = vpop.permute.xlu0 %8388
        %8390 = vrot.lane.b32.xlu0 %v8321, 2
        %v8391 = vpop.permute.xlu0 %8390
        %8392 = vrot.lane.b32.xlu0 %v8323, 2
        %v8393 = vpop.permute.xlu0 %8392
        %8394 = vrot.lane.b32.xlu0 %v8326, 2
        %v8395 = vpop.permute.xlu0 %8394
        %8396 = vrot.lane.b32.xlu0 %v8328, 2
        %v8397 = vpop.permute.xlu0 %8396
        %8398 = vrot.lane.b32.xlu0 %v8331, 2
        %v8399 = vpop.permute.xlu0 %8398
        %8400 = vrot.lane.b32.xlu0 %v8333, 2
        %v8401 = vpop.permute.xlu0 %8400
        %8402 = vrot.lane.b32.xlu0 %v8336, 2
        %v8403 = vpop.permute.xlu0 %8402
        %8404 = vrot.lane.b32.xlu0 %v8338, 2
        %v8405 = vpop.permute.xlu0 %8404
        %8406 = vrot.lane.b32.xlu0 %v8341, 2
        %v8407 = vpop.permute.xlu0 %8406
        %8408 = vrot.lane.b32.xlu0 %v8343, 2
        %v8409 = vpop.permute.xlu0 %8408
        %8410 = vrot.lane.b32.xlu0 %v8346, 2
        %v8411 = vpop.permute.xlu0 %8410
        %8412 = vrot.lane.b32.xlu0 %v8348, 2
        %v8413 = vpop.permute.xlu0 %8412
        %8414 = vrot.lane.b32.xlu0 %v8351, 2
        %v8415 = vpop.permute.xlu0 %8414
        %8416 = vrot.lane.b32.xlu0 %v8353, 2
        %v8417 = vpop.permute.xlu0 %8416
        %8418 = vrot.lane.b32.xlu0 %v8356, 2
        %v8419 = vpop.permute.xlu0 %8418
        %8420 = vrot.lane.b32.xlu0 %v8358, 2
        %v8421 = vpop.permute.xlu0 %8420
        %8422 = vrot.lane.b32.xlu0 %v8361, 2
        %v8423 = vpop.permute.xlu0 %8422
        %8424 = vrot.lane.b32.xlu0 %v8363, 2
        %v8425 = vpop.permute.xlu0 %8424
        %8426 = vrot.lane.b32.xlu0 %v8366, 2
        %v8427 = vpop.permute.xlu0 %8426
        %8428 = vrot.lane.b32.xlu0 %v8368, 2
        %v8429 = vpop.permute.xlu0 %8428
        %8430 = vrot.lane.b32.xlu0 %v8371, 2
        %v8431 = vpop.permute.xlu0 %8430
        %8432 = vrot.lane.b32.xlu0 %v8373, 2
        %v8433 = vpop.permute.xlu0 %8432
        %8465 = vrot.lane.b32.xlu0 %v8073, 3
        %v8466 = vpop.permute.xlu0 %8465
        %8467 = vrot.lane.b32.xlu0 %v7950, 3
        %v8468 = vpop.permute.xlu0 %8467
        %8469 = vrot.lane.b32.xlu0 %v8072, 3
        %v8470 = vpop.permute.xlu0 %8469
        %8471 = vrot.lane.b32.xlu0 %v7947, 3
        %v8472 = vpop.permute.xlu0 %8471
        %8473 = vrot.lane.b32.xlu0 %v8074, 3
        %v8474 = vpop.permute.xlu0 %8473
        %8475 = vrot.lane.b32.xlu0 %v7953, 3
        %v8476 = vpop.permute.xlu0 %8475
        %8477 = vrot.lane.b32.xlu0 %v8075, 3
        %v8478 = vpop.permute.xlu0 %8477
        %8479 = vrot.lane.b32.xlu0 %v7956, 3
        %v8480 = vpop.permute.xlu0 %8479
        %8481 = vrot.lane.b32.xlu0 %v8076, 3
        %v8482 = vpop.permute.xlu0 %8481
        %8483 = vrot.lane.b32.xlu0 %v7959, 3
        %v8484 = vpop.permute.xlu0 %8483
        %8485 = vrot.lane.b32.xlu0 %v8077, 3
        %v8486 = vpop.permute.xlu0 %8485
        %8487 = vrot.lane.b32.xlu0 %v7962, 3
        %v8488 = vpop.permute.xlu0 %8487
        %8489 = vrot.lane.b32.xlu0 %v8078, 3
        %v8490 = vpop.permute.xlu0 %8489
        %8491 = vrot.lane.b32.xlu0 %v7965, 3
        %v8492 = vpop.permute.xlu0 %8491
        %8493 = vrot.lane.b32.xlu0 %v8079, 3
        %v8494 = vpop.permute.xlu0 %8493
        %8495 = vrot.lane.b32.xlu0 %v7968, 3
        %v8496 = vpop.permute.xlu0 %8495
        %8497 = vrot.lane.b32.xlu0 %v8080, 3
        %v8498 = vpop.permute.xlu0 %8497
        %8499 = vrot.lane.b32.xlu0 %v7971, 3
        %v8500 = vpop.permute.xlu0 %8499
        %8501 = vrot.lane.b32.xlu0 %v8081, 3
        %v8502 = vpop.permute.xlu0 %8501
        %8503 = vrot.lane.b32.xlu0 %v7974, 3
        %v8504 = vpop.permute.xlu0 %8503
        %8505 = vrot.lane.b32.xlu0 %v8082, 3
        %v8506 = vpop.permute.xlu0 %8505
        %8507 = vrot.lane.b32.xlu0 %v7977, 3
        %v8508 = vpop.permute.xlu0 %8507
        %8509 = vrot.lane.b32.xlu0 %v8083, 3
        %v8510 = vpop.permute.xlu0 %8509
        %8511 = vrot.lane.b32.xlu0 %v7980, 3
        %v8512 = vpop.permute.xlu0 %8511
        %8513 = vrot.lane.b32.xlu0 %v8084, 3
        %v8514 = vpop.permute.xlu0 %8513
        %8515 = vrot.lane.b32.xlu0 %v7983, 3
        %v8516 = vpop.permute.xlu0 %8515
        %8517 = vrot.lane.b32.xlu0 %v8085, 3
        %v8518 = vpop.permute.xlu0 %8517
        %8519 = vrot.lane.b32.xlu0 %v7986, 3
        %v8520 = vpop.permute.xlu0 %8519
        %8521 = vrot.lane.b32.xlu0 %v8086, 3
        %v8522 = vpop.permute.xlu0 %8521
        %8523 = vrot.lane.b32.xlu0 %v7989, 3
        %v8524 = vpop.permute.xlu0 %8523
        %8525 = vrot.lane.b32.xlu0 %v8087, 3
        %v8526 = vpop.permute.xlu0 %8525
        %8527 = vrot.lane.b32.xlu0 %v7992, 3
        %v8528 = vpop.permute.xlu0 %8527
        %v8562 = vrot.slane %v8087, 1
        %v8563 = vrot.slane %v7992, 1
        %v8564 = vsel %vm837, %v8562, %v8563
        %v8565 = vrot.slane %v8103, 1
        %v8566 = vsel %vm837, %v8563, %v8565
        %8567 = vrot.lane.b32.xlu0 %v8141, 4
        %v8568 = vpop.permute.xlu0 %8567
        %8569 = vrot.lane.b32.xlu0 %v8143, 4
        %v8570 = vpop.permute.xlu0 %8569
        %8571 = vrot.lane.b32.xlu0 %v8136, 4
        %v8572 = vpop.permute.xlu0 %8571
        %8573 = vrot.lane.b32.xlu0 %v8138, 4
        %v8574 = vpop.permute.xlu0 %8573
        %8575 = vrot.lane.b32.xlu0 %v8146, 4
        %v8576 = vpop.permute.xlu0 %8575
        %8577 = vrot.lane.b32.xlu0 %v8148, 4
        %v8578 = vpop.permute.xlu0 %8577
        %8579 = vrot.lane.b32.xlu0 %v8151, 4
        %v8580 = vpop.permute.xlu0 %8579
        %8581 = vrot.lane.b32.xlu0 %v8153, 4
        %v8582 = vpop.permute.xlu0 %8581
        %8583 = vrot.lane.b32.xlu0 %v8156, 4
        %v8584 = vpop.permute.xlu0 %8583
        %8585 = vrot.lane.b32.xlu0 %v8158, 4
        %v8586 = vpop.permute.xlu0 %8585
        %8587 = vrot.lane.b32.xlu0 %v8161, 4
        %v8588 = vpop.permute.xlu0 %8587
        %8589 = vrot.lane.b32.xlu0 %v8163, 4
        %v8590 = vpop.permute.xlu0 %8589
        %8591 = vrot.lane.b32.xlu0 %v8166, 4
        %v8592 = vpop.permute.xlu0 %8591
        %8593 = vrot.lane.b32.xlu0 %v8168, 4
        %v8594 = vpop.permute.xlu0 %8593
        %8595 = vrot.lane.b32.xlu0 %v8171, 4
        %v8596 = vpop.permute.xlu0 %8595
        %8597 = vrot.lane.b32.xlu0 %v8173, 4
        %v8598 = vpop.permute.xlu0 %8597
        %8599 = vrot.lane.b32.xlu0 %v8176, 4
        %v8600 = vpop.permute.xlu0 %8599
        %8601 = vrot.lane.b32.xlu0 %v8178, 4
        %v8602 = vpop.permute.xlu0 %8601
        %8603 = vrot.lane.b32.xlu0 %v8181, 4
        %v8604 = vpop.permute.xlu0 %8603
        %8605 = vrot.lane.b32.xlu0 %v8183, 4
        %v8606 = vpop.permute.xlu0 %8605
        %8607 = vrot.lane.b32.xlu0 %v8186, 4
        %v8608 = vpop.permute.xlu0 %8607
        %8609 = vrot.lane.b32.xlu0 %v8188, 4
        %v8610 = vpop.permute.xlu0 %8609
        %8611 = vrot.lane.b32.xlu0 %v8191, 4
        %v8612 = vpop.permute.xlu0 %8611
        %8613 = vrot.lane.b32.xlu0 %v8193, 4
        %v8614 = vpop.permute.xlu0 %8613
        %8615 = vrot.lane.b32.xlu0 %v8196, 4
        %v8616 = vpop.permute.xlu0 %8615
        %8617 = vrot.lane.b32.xlu0 %v8198, 4
        %v8618 = vpop.permute.xlu0 %8617
        %8619 = vrot.lane.b32.xlu0 %v8201, 4
        %v8620 = vpop.permute.xlu0 %8619
        %8621 = vrot.lane.b32.xlu0 %v8203, 4
        %v8622 = vpop.permute.xlu0 %8621
        %8623 = vrot.lane.b32.xlu0 %v8206, 4
        %v8624 = vpop.permute.xlu0 %8623
        %8625 = vrot.lane.b32.xlu0 %v8208, 4
        %v8626 = vpop.permute.xlu0 %8625
        %8627 = vrot.lane.b32.xlu0 %v8564, 4
        %v8628 = vpop.permute.xlu0 %8627
        %8629 = vrot.lane.b32.xlu0 %v8566, 4
        %v8630 = vpop.permute.xlu0 %8629
        %v8663 = vrot.slane %v8087, 2
        %v8664 = vrot.slane %v7992, 2
        %v8665 = vsel %vm1003, %v8663, %v8664
        %v8666 = vrot.slane %v8103, 2
        %v8667 = vsel %vm1003, %v8664, %v8666
        %8668 = vrot.lane.b32.xlu0 %v8306, 5
        %v8669 = vpop.permute.xlu0 %8668
        %8670 = vrot.lane.b32.xlu0 %v8308, 5
        %v8671 = vpop.permute.xlu0 %8670
        %8672 = vrot.lane.b32.xlu0 %v8301, 5
        %v8673 = vpop.permute.xlu0 %8672
        %8674 = vrot.lane.b32.xlu0 %v8303, 5
        %v8675 = vpop.permute.xlu0 %8674
        %8676 = vrot.lane.b32.xlu0 %v8311, 5
        %v8677 = vpop.permute.xlu0 %8676
        %8678 = vrot.lane.b32.xlu0 %v8313, 5
        %v8679 = vpop.permute.xlu0 %8678
        %8680 = vrot.lane.b32.xlu0 %v8316, 5
        %v8681 = vpop.permute.xlu0 %8680
        %8682 = vrot.lane.b32.xlu0 %v8318, 5
        %v8683 = vpop.permute.xlu0 %8682
        %8684 = vrot.lane.b32.xlu0 %v8321, 5
        %v8685 = vpop.permute.xlu0 %8684
        %8686 = vrot.lane.b32.xlu0 %v8323, 5
        %v8687 = vpop.permute.xlu0 %8686
        %8688 = vrot.lane.b32.xlu0 %v8326, 5
        %v8689 = vpop.permute.xlu0 %8688
        %8690 = vrot.lane.b32.xlu0 %v8328, 5
        %v8691 = vpop.permute.xlu0 %8690
        %8692 = vrot.lane.b32.xlu0 %v8331, 5
        %v8693 = vpop.permute.xlu0 %8692
        %8694 = vrot.lane.b32.xlu0 %v8333, 5
        %v8695 = vpop.permute.xlu0 %8694
        %8696 = vrot.lane.b32.xlu0 %v8336, 5
        %v8697 = vpop.permute.xlu0 %8696
        %8698 = vrot.lane.b32.xlu0 %v8338, 5
        %v8699 = vpop.permute.xlu0 %8698
        %8700 = vrot.lane.b32.xlu0 %v8341, 5
        %v8701 = vpop.permute.xlu0 %8700
        %8702 = vrot.lane.b32.xlu0 %v8343, 5
        %v8703 = vpop.permute.xlu0 %8702
        %8704 = vrot.lane.b32.xlu0 %v8346, 5
        %v8705 = vpop.permute.xlu0 %8704
        %8706 = vrot.lane.b32.xlu0 %v8348, 5
        %v8707 = vpop.permute.xlu0 %8706
        %8708 = vrot.lane.b32.xlu0 %v8351, 5
        %v8709 = vpop.permute.xlu0 %8708
        %8710 = vrot.lane.b32.xlu0 %v8353, 5
        %v8711 = vpop.permute.xlu0 %8710
        %8712 = vrot.lane.b32.xlu0 %v8356, 5
        %v8713 = vpop.permute.xlu0 %8712
        %8714 = vrot.lane.b32.xlu0 %v8358, 5
        %v8715 = vpop.permute.xlu0 %8714
        %8716 = vrot.lane.b32.xlu0 %v8361, 5
        %v8717 = vpop.permute.xlu0 %8716
        %8718 = vrot.lane.b32.xlu0 %v8363, 5
        %v8719 = vpop.permute.xlu0 %8718
        %8720 = vrot.lane.b32.xlu0 %v8366, 5
        %v8721 = vpop.permute.xlu0 %8720
        %8722 = vrot.lane.b32.xlu0 %v8368, 5
        %v8723 = vpop.permute.xlu0 %8722
        %8724 = vrot.lane.b32.xlu0 %v8371, 5
        %v8725 = vpop.permute.xlu0 %8724
        %8726 = vrot.lane.b32.xlu0 %v8373, 5
        %v8727 = vpop.permute.xlu0 %8726
        %8728 = vrot.lane.b32.xlu0 %v8665, 5
        %v8729 = vpop.permute.xlu0 %8728
        %8730 = vrot.lane.b32.xlu0 %v8667, 5
        %v8731 = vpop.permute.xlu0 %8730
        %8764 = vrot.lane.b32.xlu0 %v8072, 6
        %v8765 = vpop.permute.xlu0 %8764
        %8766 = vrot.lane.b32.xlu0 %v7947, 6
        %v8767 = vpop.permute.xlu0 %8766
        %8768 = vrot.lane.b32.xlu0 %v8074, 6
        %v8769 = vpop.permute.xlu0 %8768
        %8770 = vrot.lane.b32.xlu0 %v7953, 6
        %v8771 = vpop.permute.xlu0 %8770
        %8772 = vrot.lane.b32.xlu0 %v8075, 6
        %v8773 = vpop.permute.xlu0 %8772
        %8774 = vrot.lane.b32.xlu0 %v7956, 6
        %v8775 = vpop.permute.xlu0 %8774
        %8776 = vrot.lane.b32.xlu0 %v8076, 6
        %v8777 = vpop.permute.xlu0 %8776
        %8778 = vrot.lane.b32.xlu0 %v7959, 6
        %v8779 = vpop.permute.xlu0 %8778
        %8780 = vrot.lane.b32.xlu0 %v8077, 6
        %v8781 = vpop.permute.xlu0 %8780
        %8782 = vrot.lane.b32.xlu0 %v7962, 6
        %v8783 = vpop.permute.xlu0 %8782
        %8784 = vrot.lane.b32.xlu0 %v8078, 6
        %v8785 = vpop.permute.xlu0 %8784
        %8786 = vrot.lane.b32.xlu0 %v7965, 6
        %v8787 = vpop.permute.xlu0 %8786
        %8788 = vrot.lane.b32.xlu0 %v8079, 6
        %v8789 = vpop.permute.xlu0 %8788
        %8790 = vrot.lane.b32.xlu0 %v7968, 6
        %v8791 = vpop.permute.xlu0 %8790
        %8792 = vrot.lane.b32.xlu0 %v8080, 6
        %v8793 = vpop.permute.xlu0 %8792
        %8794 = vrot.lane.b32.xlu0 %v7971, 6
        %v8795 = vpop.permute.xlu0 %8794
        %8796 = vrot.lane.b32.xlu0 %v8081, 6
        %v8797 = vpop.permute.xlu0 %8796
        %8798 = vrot.lane.b32.xlu0 %v7974, 6
        %v8799 = vpop.permute.xlu0 %8798
        %8800 = vrot.lane.b32.xlu0 %v8082, 6
        %v8801 = vpop.permute.xlu0 %8800
        %8802 = vrot.lane.b32.xlu0 %v7977, 6
        %v8803 = vpop.permute.xlu0 %8802
        %8804 = vrot.lane.b32.xlu0 %v8083, 6
        %v8805 = vpop.permute.xlu0 %8804
        %8806 = vrot.lane.b32.xlu0 %v7980, 6
        %v8807 = vpop.permute.xlu0 %8806
        %8808 = vrot.lane.b32.xlu0 %v8084, 6
        %v8809 = vpop.permute.xlu0 %8808
        %8810 = vrot.lane.b32.xlu0 %v7983, 6
        %v8811 = vpop.permute.xlu0 %8810
        %8812 = vrot.lane.b32.xlu0 %v8085, 6
        %v8813 = vpop.permute.xlu0 %8812
        %8814 = vrot.lane.b32.xlu0 %v7986, 6
        %v8815 = vpop.permute.xlu0 %8814
        %8816 = vrot.lane.b32.xlu0 %v8086, 6
        %v8817 = vpop.permute.xlu0 %8816
        %8818 = vrot.lane.b32.xlu0 %v7989, 6
        %v8819 = vpop.permute.xlu0 %8818
        %8820 = vrot.lane.b32.xlu0 %v8087, 6
        %v8821 = vpop.permute.xlu0 %8820
        %8822 = vrot.lane.b32.xlu0 %v7992, 6
        %v8823 = vpop.permute.xlu0 %8822
        %8854 = vrot.lane.b32.xlu0 %v8136, 7
        %v8855 = vpop.permute.xlu0 %8854
        %8856 = vrot.lane.b32.xlu0 %v8138, 7
        %v8857 = vpop.permute.xlu0 %8856
        %8858 = vrot.lane.b32.xlu0 %v8146, 7
        %v8859 = vpop.permute.xlu0 %8858
        %8860 = vrot.lane.b32.xlu0 %v8148, 7
        %v8861 = vpop.permute.xlu0 %8860
        %8862 = vrot.lane.b32.xlu0 %v8151, 7
        %v8863 = vpop.permute.xlu0 %8862
        %8864 = vrot.lane.b32.xlu0 %v8153, 7
        %v8865 = vpop.permute.xlu0 %8864
        %8866 = vrot.lane.b32.xlu0 %v8156, 7
        %v8867 = vpop.permute.xlu0 %8866
        %8868 = vrot.lane.b32.xlu0 %v8158, 7
        %v8869 = vpop.permute.xlu0 %8868
        %8870 = vrot.lane.b32.xlu0 %v8161, 7
        %v8871 = vpop.permute.xlu0 %8870
        %8872 = vrot.lane.b32.xlu0 %v8163, 7
        %v8873 = vpop.permute.xlu0 %8872
        %8874 = vrot.lane.b32.xlu0 %v8166, 7
        %v8875 = vpop.permute.xlu0 %8874
        %8876 = vrot.lane.b32.xlu0 %v8168, 7
        %v8877 = vpop.permute.xlu0 %8876
        %8878 = vrot.lane.b32.xlu0 %v8171, 7
        %v8879 = vpop.permute.xlu0 %8878
        %8880 = vrot.lane.b32.xlu0 %v8173, 7
        %v8881 = vpop.permute.xlu0 %8880
        %8882 = vrot.lane.b32.xlu0 %v8176, 7
        %v8883 = vpop.permute.xlu0 %8882
        %8884 = vrot.lane.b32.xlu0 %v8178, 7
        %v8885 = vpop.permute.xlu0 %8884
        %8886 = vrot.lane.b32.xlu0 %v8181, 7
        %v8887 = vpop.permute.xlu0 %8886
        %8888 = vrot.lane.b32.xlu0 %v8183, 7
        %v8889 = vpop.permute.xlu0 %8888
        %8890 = vrot.lane.b32.xlu0 %v8186, 7
        %v8891 = vpop.permute.xlu0 %8890
        %8892 = vrot.lane.b32.xlu0 %v8188, 7
        %v8893 = vpop.permute.xlu0 %8892
        %8894 = vrot.lane.b32.xlu0 %v8191, 7
        %v8895 = vpop.permute.xlu0 %8894
        %8896 = vrot.lane.b32.xlu0 %v8193, 7
        %v8897 = vpop.permute.xlu0 %8896
        %8898 = vrot.lane.b32.xlu0 %v8196, 7
        %v8899 = vpop.permute.xlu0 %8898
        %8900 = vrot.lane.b32.xlu0 %v8198, 7
        %v8901 = vpop.permute.xlu0 %8900
        %8902 = vrot.lane.b32.xlu0 %v8201, 7
        %v8903 = vpop.permute.xlu0 %8902
        %8904 = vrot.lane.b32.xlu0 %v8203, 7
        %v8905 = vpop.permute.xlu0 %8904
        %8906 = vrot.lane.b32.xlu0 %v8206, 7
        %v8907 = vpop.permute.xlu0 %8906
        %8908 = vrot.lane.b32.xlu0 %v8208, 7
        %v8909 = vpop.permute.xlu0 %8908
        %8910 = vrot.lane.b32.xlu0 %v8564, 7
        %v8911 = vpop.permute.xlu0 %8910
        %8912 = vrot.lane.b32.xlu0 %v8566, 7
        %v8913 = vpop.permute.xlu0 %8912
        %8944 = vrot.lane.b32.xlu0 %v8301, 8
        %v8945 = vpop.permute.xlu0 %8944
        %8946 = vrot.lane.b32.xlu0 %v8303, 8
        %v8947 = vpop.permute.xlu0 %8946
        %8948 = vrot.lane.b32.xlu0 %v8311, 8
        %v8949 = vpop.permute.xlu0 %8948
        %8950 = vrot.lane.b32.xlu0 %v8313, 8
        %v8951 = vpop.permute.xlu0 %8950
        %8952 = vrot.lane.b32.xlu0 %v8316, 8
        %v8953 = vpop.permute.xlu0 %8952
        %8954 = vrot.lane.b32.xlu0 %v8318, 8
        %v8955 = vpop.permute.xlu0 %8954
        %8956 = vrot.lane.b32.xlu0 %v8321, 8
        %v8957 = vpop.permute.xlu0 %8956
        %8958 = vrot.lane.b32.xlu0 %v8323, 8
        %v8959 = vpop.permute.xlu0 %8958
        %8960 = vrot.lane.b32.xlu0 %v8326, 8
        %v8961 = vpop.permute.xlu0 %8960
        %8962 = vrot.lane.b32.xlu0 %v8328, 8
        %v8963 = vpop.permute.xlu0 %8962
        %8964 = vrot.lane.b32.xlu0 %v8331, 8
        %v8965 = vpop.permute.xlu0 %8964
        %8966 = vrot.lane.b32.xlu0 %v8333, 8
        %v8967 = vpop.permute.xlu0 %8966
        %8968 = vrot.lane.b32.xlu0 %v8336, 8
        %v8969 = vpop.permute.xlu0 %8968
        %8970 = vrot.lane.b32.xlu0 %v8338, 8
        %v8971 = vpop.permute.xlu0 %8970
        %8972 = vrot.lane.b32.xlu0 %v8341, 8
        %v8973 = vpop.permute.xlu0 %8972
        %8974 = vrot.lane.b32.xlu0 %v8343, 8
        %v8975 = vpop.permute.xlu0 %8974
        %8976 = vrot.lane.b32.xlu0 %v8346, 8
        %v8977 = vpop.permute.xlu0 %8976
        %8978 = vrot.lane.b32.xlu0 %v8348, 8
        %v8979 = vpop.permute.xlu0 %8978
        %8980 = vrot.lane.b32.xlu0 %v8351, 8
        %v8981 = vpop.permute.xlu0 %8980
        %8982 = vrot.lane.b32.xlu0 %v8353, 8
        %v8983 = vpop.permute.xlu0 %8982
        %8984 = vrot.lane.b32.xlu0 %v8356, 8
        %v8985 = vpop.permute.xlu0 %8984
        %8986 = vrot.lane.b32.xlu0 %v8358, 8
        %v8987 = vpop.permute.xlu0 %8986
        %8988 = vrot.lane.b32.xlu0 %v8361, 8
        %v8989 = vpop.permute.xlu0 %8988
        %8990 = vrot.lane.b32.xlu0 %v8363, 8
        %v8991 = vpop.permute.xlu0 %8990
        %8992 = vrot.lane.b32.xlu0 %v8366, 8
        %v8993 = vpop.permute.xlu0 %8992
        %8994 = vrot.lane.b32.xlu0 %v8368, 8
        %v8995 = vpop.permute.xlu0 %8994
        %8996 = vrot.lane.b32.xlu0 %v8371, 8
        %v8997 = vpop.permute.xlu0 %8996
        %8998 = vrot.lane.b32.xlu0 %v8373, 8
        %v8999 = vpop.permute.xlu0 %8998
        %9000 = vrot.lane.b32.xlu0 %v8665, 8
        %v9001 = vpop.permute.xlu0 %9000
        %9002 = vrot.lane.b32.xlu0 %v8667, 8
        %v9003 = vpop.permute.xlu0 %9002
        %v9034 = vsel %vm3586, %v8072, %v8210
        %v9035 = vsel %vm3586, %v7947, %v8212
        %v9036 = vsel %vm3586, %v8073, %v8214
        %v9037 = vsel %vm3586, %v7950, %v8216
        %v9038 = vsel %vm3586, %v8074, %v8218
        %v9039 = vsel %vm3586, %v7953, %v8220
        %v9040 = vsel %vm3586, %v8075, %v8222
        %v9041 = vsel %vm3586, %v7956, %v8224
        %v9042 = vsel %vm3586, %v8076, %v8226
        %v9043 = vsel %vm3586, %v7959, %v8228
        %v9044 = vsel %vm3586, %v8077, %v8230
        %v9045 = vsel %vm3586, %v7962, %v8232
        %v9046 = vsel %vm3586, %v8078, %v8234
        %v9047 = vsel %vm3586, %v7965, %v8236
        %v9048 = vsel %vm3586, %v8079, %v8238
        %v9049 = vsel %vm3586, %v7968, %v8240
        %v9050 = vsel %vm3586, %v8080, %v8242
        %v9051 = vsel %vm3586, %v7971, %v8244
        %v9052 = vsel %vm3586, %v8081, %v8246
        %v9053 = vsel %vm3586, %v7974, %v8248
        %v9054 = vsel %vm3586, %v8082, %v8250
        %v9055 = vsel %vm3586, %v7977, %v8252
        %v9056 = vsel %vm3586, %v8083, %v8254
        %v9057 = vsel %vm3586, %v7980, %v8256
        %v9058 = vsel %vm3586, %v8084, %v8258
        %v9059 = vsel %vm3586, %v7983, %v8260
        %v9060 = vsel %vm3586, %v8085, %v8262
        %v9061 = vsel %vm3586, %v7986, %v8264
        %v9062 = vsel %vm3586, %v8086, %v8266
        %v9063 = vsel %vm3586, %v7989, %v8268
        %v9064 = vsel %vm3617, %v9034, %v8375
        %v9065 = vsel %vm3617, %v9035, %v8377
        %v9066 = vsel %vm3617, %v9036, %v8379
        %v9067 = vsel %vm3617, %v9037, %v8381
        %v9068 = vsel %vm3617, %v9038, %v8383
        %v9069 = vsel %vm3617, %v9039, %v8385
        %v9070 = vsel %vm3617, %v9040, %v8387
        %v9071 = vsel %vm3617, %v9041, %v8389
        %v9072 = vsel %vm3617, %v9042, %v8391
        %v9073 = vsel %vm3617, %v9043, %v8393
        %v9074 = vsel %vm3617, %v9044, %v8395
        %v9075 = vsel %vm3617, %v9045, %v8397
        %v9076 = vsel %vm3617, %v9046, %v8399
        %v9077 = vsel %vm3617, %v9047, %v8401
        %v9078 = vsel %vm3617, %v9048, %v8403
        %v9079 = vsel %vm3617, %v9049, %v8405
        %v9080 = vsel %vm3617, %v9050, %v8407
        %v9081 = vsel %vm3617, %v9051, %v8409
        %v9082 = vsel %vm3617, %v9052, %v8411
        %v9083 = vsel %vm3617, %v9053, %v8413
        %v9084 = vsel %vm3617, %v9054, %v8415
        %v9085 = vsel %vm3617, %v9055, %v8417
        %v9086 = vsel %vm3617, %v9056, %v8419
        %v9087 = vsel %vm3617, %v9057, %v8421
        %v9088 = vsel %vm3617, %v9058, %v8423
        %v9089 = vsel %vm3617, %v9059, %v8425
        %v9090 = vsel %vm3617, %v9060, %v8427
        %v9091 = vsel %vm3617, %v9061, %v8429
        %v9092 = vsel %vm3617, %v9062, %v8431
        %v9093 = vsel %vm3617, %v9063, %v8433
        %v9094 = vsel %vm3648, %v9064, %v8466
        %v9095 = vsel %vm3648, %v9065, %v8468
        %v9096 = vsel %vm3648, %v9066, %v8470
        %v9097 = vsel %vm3648, %v9067, %v8472
        %v9098 = vsel %vm3648, %v9064, %v8474
        %v9099 = vsel %vm3648, %v9065, %v8476
        %v9100 = vsel %vm3648, %v9068, %v8478
        %v9101 = vsel %vm3648, %v9069, %v8480
        %v9102 = vsel %vm3648, %v9070, %v8482
        %v9103 = vsel %vm3648, %v9071, %v8484
        %v9104 = vsel %vm3648, %v9072, %v8486
        %v9105 = vsel %vm3648, %v9073, %v8488
        %v9106 = vsel %vm3648, %v9074, %v8490
        %v9107 = vsel %vm3648, %v9075, %v8492
        %v9108 = vsel %vm3648, %v9076, %v8494
        %v9109 = vsel %vm3648, %v9077, %v8496
        %v9110 = vsel %vm3648, %v9078, %v8498
        %v9111 = vsel %vm3648, %v9079, %v8500
        %v9112 = vsel %vm3648, %v9080, %v8502
        %v9113 = vsel %vm3648, %v9081, %v8504
        %v9114 = vsel %vm3648, %v9082, %v8506
        %v9115 = vsel %vm3648, %v9083, %v8508
        %v9116 = vsel %vm3648, %v9084, %v8510
        %v9117 = vsel %vm3648, %v9085, %v8512
        %v9118 = vsel %vm3648, %v9086, %v8514
        %v9119 = vsel %vm3648, %v9087, %v8516
        %v9120 = vsel %vm3648, %v9088, %v8518
        %v9121 = vsel %vm3648, %v9089, %v8520
        %v9122 = vsel %vm3648, %v9090, %v8522
        %v9123 = vsel %vm3648, %v9091, %v8524
        %v9124 = vsel %vm3648, %v9092, %v8526
        %v9125 = vsel %vm3648, %v9093, %v8528
        %v9126 = vsel %vm1739, %v9094, %v8568
        %v9127 = vsel %vm1739, %v9095, %v8570
        %v9128 = vsel %vm1739, %v9096, %v8572
        %v9129 = vsel %vm1739, %v9097, %v8574
        %v9130 = vsel %vm1739, %v9098, %v8576
        %v9131 = vsel %vm1739, %v9099, %v8578
        %v9132 = vsel %vm1739, %v9100, %v8580
        %v9133 = vsel %vm1739, %v9101, %v8582
        %v9134 = vsel %vm1739, %v9102, %v8584
        %v9135 = vsel %vm1739, %v9103, %v8586
        %v9136 = vsel %vm1739, %v9104, %v8588
        %v9137 = vsel %vm1739, %v9105, %v8590
        %v9138 = vsel %vm1739, %v9106, %v8592
        %v9139 = vsel %vm1739, %v9107, %v8594
        %v9140 = vsel %vm1739, %v9108, %v8596
        %v9141 = vsel %vm1739, %v9109, %v8598
        %v9142 = vsel %vm1739, %v9110, %v8600
        %v9143 = vsel %vm1739, %v9111, %v8602
        %v9144 = vsel %vm1739, %v9112, %v8604
        %v9145 = vsel %vm1739, %v9113, %v8606
        %v9146 = vsel %vm1739, %v9114, %v8608
        %v9147 = vsel %vm1739, %v9115, %v8610
        %v9148 = vsel %vm1739, %v9116, %v8612
        %v9149 = vsel %vm1739, %v9117, %v8614
        %v9150 = vsel %vm1739, %v9118, %v8616
        %v9151 = vsel %vm1739, %v9119, %v8618
        %v9152 = vsel %vm1739, %v9120, %v8620
        %v9153 = vsel %vm1739, %v9121, %v8622
        %v9154 = vsel %vm1739, %v9122, %v8624
        %v9155 = vsel %vm1739, %v9123, %v8626
        %v9156 = vsel %vm1739, %v9124, %v8628
        %v9157 = vsel %vm1739, %v9125, %v8630
        %v9158 = vsel %vm3713, %v9126, %v8669
        %v9159 = vsel %vm3713, %v9127, %v8671
        %v9160 = vsel %vm3713, %v9128, %v8673
        %v9161 = vsel %vm3713, %v9129, %v8675
        %v9162 = vsel %vm3713, %v9130, %v8677
        %v9163 = vsel %vm3713, %v9131, %v8679
        %v9164 = vsel %vm3713, %v9132, %v8681
        %v9165 = vsel %vm3713, %v9133, %v8683
        %v9166 = vsel %vm3713, %v9134, %v8685
        %v9167 = vsel %vm3713, %v9135, %v8687
        %v9168 = vsel %vm3713, %v9136, %v8689
        %v9169 = vsel %vm3713, %v9137, %v8691
        %v9170 = vsel %vm3713, %v9138, %v8693
        %v9171 = vsel %vm3713, %v9139, %v8695
        %v9172 = vsel %vm3713, %v9140, %v8697
        %v9173 = vsel %vm3713, %v9141, %v8699
        %v9174 = vsel %vm3713, %v9142, %v8701
        %v9175 = vsel %vm3713, %v9143, %v8703
        %v9176 = vsel %vm3713, %v9144, %v8705
        %v9177 = vsel %vm3713, %v9145, %v8707
        %v9178 = vsel %vm3713, %v9146, %v8709
        %v9179 = vsel %vm3713, %v9147, %v8711
        %v9180 = vsel %vm3713, %v9148, %v8713
        %v9181 = vsel %vm3713, %v9149, %v8715
        %v9182 = vsel %vm3713, %v9150, %v8717
        %v9183 = vsel %vm3713, %v9151, %v8719
        %v9184 = vsel %vm3713, %v9152, %v8721
        %v9185 = vsel %vm3713, %v9153, %v8723
        %v9186 = vsel %vm3713, %v9154, %v8725
        %v9187 = vsel %vm3713, %v9155, %v8727
        %v9188 = vsel %vm3713, %v9156, %v8729
        %v9189 = vsel %vm3713, %v9157, %v8731
        %v9190 = vsel %vm3746, %v9158, %v8765
        %v9191 = vsel %vm3746, %v9159, %v8767
        %v9192 = vsel %vm3746, %v9160, %v8769
        %v9193 = vsel %vm3746, %v9161, %v8771
        %v9194 = vsel %vm3746, %v9162, %v8773
        %v9195 = vsel %vm3746, %v9163, %v8775
        %v9196 = vsel %vm3746, %v9164, %v8777
        %v9197 = vsel %vm3746, %v9165, %v8779
        %v9198 = vsel %vm3746, %v9166, %v8781
        %v9199 = vsel %vm3746, %v9167, %v8783
        %v9200 = vsel %vm3746, %v9168, %v8785
        %v9201 = vsel %vm3746, %v9169, %v8787
        %v9202 = vsel %vm3746, %v9170, %v8789
        %v9203 = vsel %vm3746, %v9171, %v8791
        %v9204 = vsel %vm3746, %v9172, %v8793
        %v9205 = vsel %vm3746, %v9173, %v8795
        %v9206 = vsel %vm3746, %v9174, %v8797
        %v9207 = vsel %vm3746, %v9175, %v8799
        %v9208 = vsel %vm3746, %v9176, %v8801
        %v9209 = vsel %vm3746, %v9177, %v8803
        %v9210 = vsel %vm3746, %v9178, %v8805
        %v9211 = vsel %vm3746, %v9179, %v8807
        %v9212 = vsel %vm3746, %v9180, %v8809
        %v9213 = vsel %vm3746, %v9181, %v8811
        %v9214 = vsel %vm3746, %v9182, %v8813
        %v9215 = vsel %vm3746, %v9183, %v8815
        %v9216 = vsel %vm3746, %v9184, %v8817
        %v9217 = vsel %vm3746, %v9185, %v8819
        %v9218 = vsel %vm3746, %v9186, %v8821
        %v9219 = vsel %vm3746, %v9187, %v8823
        %v9220 = vsel %vm3746, %v9188, %v8817
        %v9221 = vsel %vm3746, %v9189, %v8819
        %v9222 = vsel %vm3779, %v9190, %v8855
        %v9223 = vsel %vm3779, %v9191, %v8857
        %v9224 = vsel %vm3779, %v9192, %v8859
        %v9225 = vsel %vm3779, %v9193, %v8861
        %v9226 = vsel %vm3779, %v9194, %v8863
        %v9227 = vsel %vm3779, %v9195, %v8865
        %v9228 = vsel %vm3779, %v9196, %v8867
        %v9229 = vsel %vm3779, %v9197, %v8869
        %v9230 = vsel %vm3779, %v9198, %v8871
        %v9231 = vsel %vm3779, %v9199, %v8873
        %v9232 = vsel %vm3779, %v9200, %v8875
        %v9233 = vsel %vm3779, %v9201, %v8877
        %v9234 = vsel %vm3779, %v9202, %v8879
        %v9235 = vsel %vm3779, %v9203, %v8881
        %v9236 = vsel %vm3779, %v9204, %v8883
        %v9237 = vsel %vm3779, %v9205, %v8885
        %v9238 = vsel %vm3779, %v9206, %v8887
        %v9239 = vsel %vm3779, %v9207, %v8889
        %v9240 = vsel %vm3779, %v9208, %v8891
        %v9241 = vsel %vm3779, %v9209, %v8893
        %v9242 = vsel %vm3779, %v9210, %v8895
        %v9243 = vsel %vm3779, %v9211, %v8897
        %v9244 = vsel %vm3779, %v9212, %v8899
        %v9245 = vsel %vm3779, %v9213, %v8901
        %v9246 = vsel %vm3779, %v9214, %v8903
        %v9247 = vsel %vm3779, %v9215, %v8905
        %v9248 = vsel %vm3779, %v9216, %v8907
        %v9249 = vsel %vm3779, %v9217, %v8909
        %v9250 = vsel %vm3779, %v9218, %v8911
        %v9251 = vsel %vm3779, %v9219, %v8913
        %v9252 = vsel %vm3779, %v9220, %v8907
        %v9253 = vsel %vm3779, %v9221, %v8909
        %v9254 = vsel %vm1770, %v9222, %v8945
        %v9255 = vsel %vm1770, %v9223, %v8947
        %v9256 = vsel %vm1770, %v9224, %v8949
        %v9257 = vsel %vm1770, %v9225, %v8951
        %v9258 = vsel %vm1770, %v9226, %v8953
        %v9259 = vsel %vm1770, %v9227, %v8955
        %v9260 = vsel %vm1770, %v9228, %v8957
        %v9261 = vsel %vm1770, %v9229, %v8959
        %v9262 = vsel %vm1770, %v9230, %v8961
        %v9263 = vsel %vm1770, %v9231, %v8963
        %v9264 = vsel %vm1770, %v9232, %v8965
        %v9265 = vsel %vm1770, %v9233, %v8967
        %v9266 = vsel %vm1770, %v9234, %v8969
        %v9267 = vsel %vm1770, %v9235, %v8971
        %v9268 = vsel %vm1770, %v9236, %v8973
        %v9269 = vsel %vm1770, %v9237, %v8975
        %v9270 = vsel %vm1770, %v9238, %v8977
        %v9271 = vsel %vm1770, %v9239, %v8979
        %v9272 = vsel %vm1770, %v9240, %v8981
        %v9273 = vsel %vm1770, %v9241, %v8983
        %v9274 = vsel %vm1770, %v9242, %v8985
        %v9275 = vsel %vm1770, %v9243, %v8987
        %v9276 = vsel %vm1770, %v9244, %v8989
        %v9277 = vsel %vm1770, %v9245, %v8991
        %v9278 = vsel %vm1770, %v9246, %v8993
        %v9279 = vsel %vm1770, %v9247, %v8995
        %v9280 = vsel %vm1770, %v9248, %v8997
        %v9281 = vsel %vm1770, %v9249, %v8999
        %v9282 = vsel %vm1770, %v9250, %v9001
        %v9283 = vsel %vm1770, %v9251, %v9003
        %v9284 = vsel %vm1770, %v9252, %v8997
        %v9285 = vsel %vm1770, %v9253, %v8999
        %v9286 = vld [vmem:[%s8] sm:$0xff]
        %v9287 = vld [vmem:[%s8 + $0x8] sm:$0x1]
        %v9288 = vld [vmem:[#allocation5] sm:$0x1]
        %v9290 = vlaneseq
        %v9291 = vshrl.u32 %v9290, 7
        %v9292 = vsub.s32 0, %v9291
        %v9293 = vrot.slane %v9288, %v9292
        %v9296 = vsel %vm3853, %v9254, 0
        %v9299 = vsel %vm3853, %v9255, 0
        %v9302 = vsel %vm3853, %v9256, 0
        %v9305 = vsel %vm3853, %v9257, 0
        %v9308 = vsel %vm3853, %v9258, 0
        %v9311 = vsel %vm3853, %v9259, 0
        %v9314 = vsel %vm3853, %v9260, 0
        %v9317 = vsel %vm3853, %v9261, 0
        %v9320 = vsel %vm3853, %v9262, 0
        %v9323 = vsel %vm3853, %v9263, 0
        %v9326 = vsel %vm3853, %v9264, 0
        %v9329 = vsel %vm3853, %v9265, 0
        %v9332 = vsel %vm3853, %v9266, 0
        %v9335 = vsel %vm3853, %v9267, 0
        %v9338 = vsel %vm3853, %v9268, 0
        %v9341 = vsel %vm3853, %v9269, 0
        %v9344 = vsel %vm3853, %v9270, 0
        %v9347 = vsel %vm3853, %v9271, 0
        %v9350 = vsel %vm3853, %v9272, 0
        %v9353 = vsel %vm3853, %v9273, 0
        %v9356 = vsel %vm3853, %v9274, 0
        %v9359 = vsel %vm3853, %v9275, 0
        %v9362 = vsel %vm3853, %v9276, 0
        %v9365 = vsel %vm3853, %v9277, 0
        %v9368 = vsel %vm3853, %v9278, 0
        %v9371 = vsel %vm3853, %v9279, 0
        %v9374 = vsel %vm3853, %v9280, 0
        %v9377 = vsel %vm3853, %v9281, 0
        %v9380 = vsel %vm3853, %v9282, 0
        %v9383 = vsel %vm3853, %v9283, 0
        %v9386 = vsel %vm3853, %v9284, 0
        %v9389 = vsel %vm3853, %v9285, 0
        %v9392 = vsel %vm647, %v9287, 0
        %9394 = vmatprep.subr.mxu0 0.0
        %9395 = vmatpush1.msra.mxu0 %v9286
        %9396 = vmatprep.subr.mxu0 0.0
        %9397 = vmatpush1.msra.mxu0 %v9392
        %9398 = vmatprep.subr.mxu0 0.0
        %9399 = vmatpush1.msra.mxu0 0.0
        %9400 = vmatprep.subr.mxu0 0.0
        %9401 = vmatpush1.msra.mxu0 0.0
        %9402 = vmatprep.subr.mxu0 0.0
        %9403 = vmatpush1.msra.mxu0 0.0
        %9404 = vmatprep.subr.mxu0 0.0
        %9405 = vmatpush1.msra.mxu0 0.0
        %9406 = vmatprep.subr.mxu0 0.0
        %9407 = vmatpush1.msra.mxu0 0.0
        %9408 = vmatprep.subr.mxu0 0.0
        %9409 = vmatpush1.msra.mxu0 0.0
        %9410 = vmatprep.subr.mxu0 0.0
        %9411 = vmatpush1.msra.mxu0 0.0
        %9412 = vmatprep.subr.mxu0 0.0
        %9413 = vmatpush1.msra.mxu0 0.0
        %9414 = vmatprep.subr.mxu0 0.0
        %9415 = vmatpush1.msra.mxu0 0.0
        %9416 = vmatprep.subr.mxu0 0.0
        %9417 = vmatpush1.msra.mxu0 0.0
        %9418 = vmatprep.subr.mxu0 0.0
        %9419 = vmatpush1.msra.mxu0 0.0
        %9420 = vmatprep.subr.mxu0 0.0
        %9421 = vmatpush1.msra.mxu0 0.0
        %9422 = vmatprep.subr.mxu0 0.0
        %9423 = vmatpush1.msra.mxu0 0.0
        %9424 = vmatprep.subr.mxu0 0.0
        %9425 = vmatpush1.msra.mxu0 0.0
        %9426 = vmatprep.subr.mxu0 0.0
        %9427 = vmatpush1.msra.mxu0 0.0
        %9428 = vmatprep.subr.mxu0 0.0
        %9429 = vmatpush1.msra.mxu0 0.0
        %9430 = vmatprep.subr.mxu0 0.0
        %9431 = vmatpush1.msra.mxu0 0.0
        %9432 = vmatprep.subr.mxu0 0.0
        %9433 = vmatpush1.msra.mxu0 0.0
        %9434 = vmatprep.subr.mxu0 0.0
        %9435 = vmatpush1.msra.mxu0 0.0
        %9436 = vmatprep.subr.mxu0 0.0
        %9437 = vmatpush1.msra.mxu0 0.0
        %9438 = vmatprep.subr.mxu0 0.0
        %9439 = vmatpush1.msra.mxu0 0.0
        %9440 = vmatprep.subr.mxu0 0.0
        %9441 = vmatpush1.msra.mxu0 0.0
        %9442 = vmatprep.subr.mxu0 0.0
        %9443 = vmatpush1.msra.mxu0 0.0
        %9444 = vmatprep.subr.mxu0 0.0
        %9445 = vmatpush1.msra.mxu0 0.0
        %9446 = vmatprep.subr.mxu0 0.0
        %9447 = vmatpush1.msra.mxu0 0.0
        %9448 = vmatprep.subr.mxu0 0.0
        %9449 = vmatpush1.msra.mxu0 0.0
        %9450 = vmatprep.subr.mxu0 0.0
        %9451 = vmatpush1.msra.mxu0 0.0
        %9452 = vmatprep.subr.mxu0 0.0
        %9453 = vmatpush1.msra.mxu0 0.0
        %9454 = vmatprep.subr.mxu0 0.0
        %9455 = vmatpush1.msra.mxu0 0.0
        %9456 = vmatprep.subr.mxu0 0.0
        %9457 = vmatpush1.msra.mxu0 0.0
        %9458 = vmatprep.mubr.f32.mxu0 0.0
        %9459 = vmatmul.mubr.f32.gmra.mrb[0].mxu0 %v9296
        %v9460 = vpop.f32.mrb[0].mxu0
        %v9461 = vadd.f32 %v9293, %v9460
        %v9462 = vpop.f32.mrb[0].mxu0
        %9463 = vmatprep.mubr.f32.mxu0 0.0
        %9464 = vmatmul.mubr.f32.gmra.mrb[0].mxu0 %v9299
        %v9465 = vpop.f32.mrb[0].mxu0
        %v9466 = vadd.f32 %v9293, %v9465
        %v9467 = vpop.f32.mrb[0].mxu0
        %9468 = vmatprep.mubr.f32.mxu0 0.0
        %9469 = vmatmul.mubr.f32.gmra.mrb[0].mxu0 %v9302
        %v9470 = vpop.f32.mrb[0].mxu0
        %v9471 = vadd.f32 %v9293, %v9470
        %v9472 = vpop.f32.mrb[0].mxu0
        %9473 = vmatprep.mubr.f32.mxu0 0.0
        %9474 = vmatmul.mubr.f32.gmra.mrb[0].mxu0 %v9305
        %v9475 = vpop.f32.mrb[0].mxu0
        %v9476 = vadd.f32 %v9293, %v9475
        %v9477 = vpop.f32.mrb[0].mxu0
        %9478 = vmatprep.mubr.f32.mxu0 0.0
        %9479 = vmatmul.mubr.f32.gmra.mrb[0].mxu0 %v9308
        %v9480 = vpop.f32.mrb[0].mxu0
        %v9481 = vadd.f32 %v9293, %v9480
        %v9482 = vpop.f32.mrb[0].mxu0
        %9483 = vmatprep.mubr.f32.mxu0 0.0
        %9484 = vmatmul.mubr.f32.gmra.mrb[0].mxu0 %v9311
        %v9485 = vpop.f32.mrb[0].mxu0
        %v9486 = vadd.f32 %v9293, %v9485
        %v9487 = vpop.f32.mrb[0].mxu0
        %9488 = vmatprep.mubr.f32.mxu0 0.0
        %9489 = vmatmul.mubr.f32.gmra.mrb[0].mxu0 %v9314
        %v9490 = vpop.f32.mrb[0].mxu0
        %v9491 = vadd.f32 %v9293, %v9490
        %v9492 = vpop.f32.mrb[0].mxu0
        %9493 = vmatprep.mubr.f32.mxu0 0.0
        %9494 = vmatmul.mubr.f32.gmra.mrb[0].mxu0 %v9317
        %v9495 = vpop.f32.mrb[0].mxu0
        %v9496 = vadd.f32 %v9293, %v9495
        %v9497 = vpop.f32.mrb[0].mxu0
        %9498 = vmatprep.mubr.f32.mxu0 0.0
        %9499 = vmatmul.mubr.f32.gmra.mrb[0].mxu0 %v9320
        %v9500 = vpop.f32.mrb[0].mxu0
        %v9501 = vadd.f32 %v9293, %v9500
        %v9502 = vpop.f32.mrb[0].mxu0
        %9503 = vmatprep.mubr.f32.mxu0 0.0
        %9504 = vmatmul.mubr.f32.gmra.mrb[0].mxu0 %v9323
        %v9505 = vpop.f32.mrb[0].mxu0
        %v9506 = vadd.f32 %v9293, %v9505
        %v9507 = vpop.f32.mrb[0].mxu0
        %9508 = vmatprep.mubr.f32.mxu0 0.0
        %9509 = vmatmul.mubr.f32.gmra.mrb[0].mxu0 %v9326
        %v9510 = vpop.f32.mrb[0].mxu0
        %v9511 = vadd.f32 %v9293, %v9510
        %v9512 = vpop.f32.mrb[0].mxu0
        %9513 = vmatprep.mubr.f32.mxu0 0.0
        %9514 = vmatmul.mubr.f32.gmra.mrb[0].mxu0 %v9329
        %v9515 = vpop.f32.mrb[0].mxu0
        %v9516 = vadd.f32 %v9293, %v9515
        %v9517 = vpop.f32.mrb[0].mxu0
        %9518 = vmatprep.mubr.f32.mxu0 0.0
        %9519 = vmatmul.mubr.f32.gmra.mrb[0].mxu0 %v9332
        %v9520 = vpop.f32.mrb[0].mxu0
        %v9521 = vadd.f32 %v9293, %v9520
        %v9522 = vpop.f32.mrb[0].mxu0
        %9523 = vmatprep.mubr.f32.mxu0 0.0
        %9524 = vmatmul.mubr.f32.gmra.mrb[0].mxu0 %v9335
        %v9525 = vpop.f32.mrb[0].mxu0
        %v9526 = vadd.f32 %v9293, %v9525
        %v9527 = vpop.f32.mrb[0].mxu0
        %9528 = vmatprep.mubr.f32.mxu0 0.0
        %9529 = vmatmul.mubr.f32.gmra.mrb[0].mxu0 %v9338
        %v9530 = vpop.f32.mrb[0].mxu0
        %v9531 = vadd.f32 %v9293, %v9530
        %v9532 = vpop.f32.mrb[0].mxu0
        %9533 = vmatprep.mubr.f32.mxu0 0.0
        %9534 = vmatmul.mubr.f32.gmra.mrb[0].mxu0 %v9341
        %v9535 = vpop.f32.mrb[0].mxu0
        %v9536 = vadd.f32 %v9293, %v9535
        %v9537 = vpop.f32.mrb[0].mxu0
        %9538 = vmatprep.mubr.f32.mxu0 0.0
        %9539 = vmatmul.mubr.f32.gmra.mrb[0].mxu0 %v9344
        %v9540 = vpop.f32.mrb[0].mxu0
        %v9541 = vadd.f32 %v9293, %v9540
        %v9542 = vpop.f32.mrb[0].mxu0
        %9543 = vmatprep.mubr.f32.mxu0 0.0
        %9544 = vmatmul.mubr.f32.gmra.mrb[0].mxu0 %v9347
        %v9545 = vpop.f32.mrb[0].mxu0
        %v9546 = vadd.f32 %v9293, %v9545
        %v9547 = vpop.f32.mrb[0].mxu0
        %9548 = vmatprep.mubr.f32.mxu0 0.0
        %9549 = vmatmul.mubr.f32.gmra.mrb[0].mxu0 %v9350
        %v9550 = vpop.f32.mrb[0].mxu0
        %v9551 = vadd.f32 %v9293, %v9550
        %v9552 = vpop.f32.mrb[0].mxu0
        %9553 = vmatprep.mubr.f32.mxu0 0.0
        %9554 = vmatmul.mubr.f32.gmra.mrb[0].mxu0 %v9353
        %v9555 = vpop.f32.mrb[0].mxu0
        %v9556 = vadd.f32 %v9293, %v9555
        %v9557 = vpop.f32.mrb[0].mxu0
        %9558 = vmatprep.mubr.f32.mxu0 0.0
        %9559 = vmatmul.mubr.f32.gmra.mrb[0].mxu0 %v9356
        %v9560 = vpop.f32.mrb[0].mxu0
        %v9561 = vadd.f32 %v9293, %v9560
        %v9562 = vpop.f32.mrb[0].mxu0
        %9563 = vmatprep.mubr.f32.mxu0 0.0
        %9564 = vmatmul.mubr.f32.gmra.mrb[0].mxu0 %v9359
        %v9565 = vpop.f32.mrb[0].mxu0
        %v9566 = vadd.f32 %v9293, %v9565
        %v9567 = vpop.f32.mrb[0].mxu0
        %9568 = vmatprep.mubr.f32.mxu0 0.0
        %9569 = vmatmul.mubr.f32.gmra.mrb[0].mxu0 %v9362
        %v9570 = vpop.f32.mrb[0].mxu0
        %v9571 = vadd.f32 %v9293, %v9570
        %v9572 = vpop.f32.mrb[0].mxu0
        %9573 = vmatprep.mubr.f32.mxu0 0.0
        %9574 = vmatmul.mubr.f32.gmra.mrb[0].mxu0 %v9365
        %v9575 = vpop.f32.mrb[0].mxu0
        %v9576 = vadd.f32 %v9293, %v9575
        %v9577 = vpop.f32.mrb[0].mxu0
        %9578 = vmatprep.mubr.f32.mxu0 0.0
        %9579 = vmatmul.mubr.f32.gmra.mrb[0].mxu0 %v9368
        %v9580 = vpop.f32.mrb[0].mxu0
        %v9581 = vadd.f32 %v9293, %v9580
        %v9582 = vpop.f32.mrb[0].mxu0
        %9583 = vmatprep.mubr.f32.mxu0 0.0
        %9584 = vmatmul.mubr.f32.gmra.mrb[0].mxu0 %v9371
        %v9585 = vpop.f32.mrb[0].mxu0
        %v9586 = vadd.f32 %v9293, %v9585
        %v9587 = vpop.f32.mrb[0].mxu0
        %9588 = vmatprep.mubr.f32.mxu0 0.0
        %9589 = vmatmul.mubr.f32.gmra.mrb[0].mxu0 %v9374
        %v9590 = vpop.f32.mrb[0].mxu0
        %v9591 = vadd.f32 %v9293, %v9590
        %v9592 = vpop.f32.mrb[0].mxu0
        %9593 = vmatprep.mubr.f32.mxu0 0.0
        %9594 = vmatmul.mubr.f32.gmra.mrb[0].mxu0 %v9377
        %v9595 = vpop.f32.mrb[0].mxu0
        %v9596 = vadd.f32 %v9293, %v9595
        %v9597 = vpop.f32.mrb[0].mxu0
        %9598 = vmatprep.mubr.f32.mxu0 0.0
        %9599 = vmatmul.mubr.f32.gmra.mrb[0].mxu0 %v9380
        %v9600 = vpop.f32.mrb[0].mxu0
        %v9601 = vadd.f32 %v9293, %v9600
        %v9602 = vpop.f32.mrb[0].mxu0
        %9603 = vmatprep.mubr.f32.mxu0 0.0
        %9604 = vmatmul.mubr.f32.gmra.mrb[0].mxu0 %v9383
        %v9605 = vpop.f32.mrb[0].mxu0
        %v9606 = vadd.f32 %v9293, %v9605
        %v9607 = vpop.f32.mrb[0].mxu0
        %9608 = vmatprep.mubr.f32.mxu0 0.0
        %9609 = vmatmul.mubr.f32.gmra.mrb[0].mxu0 %v9386
        %v9610 = vpop.f32.mrb[0].mxu0
        %v9611 = vadd.f32 %v9293, %v9610
        %v9612 = vpop.f32.mrb[0].mxu0
        %9613 = vmatprep.mubr.f32.mxu0 0.0
        %9614 = vmatmul.mubr.f32.gmra.mrb[0].mxu0 %v9389
        %v9615 = vpop.f32.mrb[0].mxu0
        %v9616 = vadd.f32 %v9293, %v9615
        %v9617 = vpop.f32.mrb[0].mxu0
        %9618 = vdwg.mxu0
        %vm9619 = vcmp.gt.f32.partialorder %v9461, 0.0
        %vm9620 = vcmp.gt.f32.partialorder %v9466, 0.0
        %vm9621 = vcmp.gt.f32.partialorder %v9471, 0.0
        %vm9622 = vcmp.gt.f32.partialorder %v9476, 0.0
        %vm9623 = vcmp.gt.f32.partialorder %v9481, 0.0
        %vm9624 = vcmp.gt.f32.partialorder %v9486, 0.0
        %vm9625 = vcmp.gt.f32.partialorder %v9491, 0.0
        %vm9626 = vcmp.gt.f32.partialorder %v9496, 0.0
        %vm9627 = vcmp.gt.f32.partialorder %v9501, 0.0
        %vm9628 = vcmp.gt.f32.partialorder %v9506, 0.0
        %vm9629 = vcmp.gt.f32.partialorder %v9511, 0.0
        %vm9630 = vcmp.gt.f32.partialorder %v9516, 0.0
        %vm9631 = vcmp.gt.f32.partialorder %v9521, 0.0
        %vm9632 = vcmp.gt.f32.partialorder %v9526, 0.0
        %vm9633 = vcmp.gt.f32.partialorder %v9531, 0.0
        %vm9634 = vcmp.gt.f32.partialorder %v9536, 0.0
        %vm9635 = vcmp.gt.f32.partialorder %v9541, 0.0
        %vm9636 = vcmp.gt.f32.partialorder %v9546, 0.0
        %vm9637 = vcmp.gt.f32.partialorder %v9551, 0.0
        %vm9638 = vcmp.gt.f32.partialorder %v9556, 0.0
        %vm9639 = vcmp.gt.f32.partialorder %v9561, 0.0
        %vm9640 = vcmp.gt.f32.partialorder %v9566, 0.0
        %vm9641 = vcmp.gt.f32.partialorder %v9571, 0.0
        %vm9642 = vcmp.gt.f32.partialorder %v9576, 0.0
        %vm9643 = vcmp.gt.f32.partialorder %v9581, 0.0
        %vm9644 = vcmp.gt.f32.partialorder %v9586, 0.0
        %vm9645 = vcmp.gt.f32.partialorder %v9591, 0.0
        %vm9646 = vcmp.gt.f32.partialorder %v9596, 0.0
        %vm9647 = vcmp.gt.f32.partialorder %v9601, 0.0
        %vm9648 = vcmp.gt.f32.partialorder %v9606, 0.0
        %vm9649 = vcmp.gt.f32.partialorder %v9611, 0.0
        %vm9650 = vcmp.gt.f32.partialorder %v9616, 0.0
        %v9651 = vmul.f32 %v9461, 0.02
        %v9652 = vmul.f32 %v9466, 0.02
        %v9653 = vmul.f32 %v9471, 0.02
        %v9654 = vmul.f32 %v9476, 0.02
        %v9655 = vmul.f32 %v9481, 0.02
        %v9656 = vmul.f32 %v9486, 0.02
        %v9657 = vmul.f32 %v9491, 0.02
        %v9658 = vmul.f32 %v9496, 0.02
        %v9659 = vmul.f32 %v9501, 0.02
        %v9660 = vmul.f32 %v9506, 0.02
        %v9661 = vmul.f32 %v9511, 0.02
        %v9662 = vmul.f32 %v9516, 0.02
        %v9663 = vmul.f32 %v9521, 0.02
        %v9664 = vmul.f32 %v9526, 0.02
        %v9665 = vmul.f32 %v9531, 0.02
        %v9666 = vmul.f32 %v9536, 0.02
        %v9667 = vmul.f32 %v9541, 0.02
        %v9668 = vmul.f32 %v9546, 0.02
        %v9669 = vmul.f32 %v9551, 0.02
        %v9670 = vmul.f32 %v9556, 0.02
        %v9671 = vmul.f32 %v9561, 0.02
        %v9672 = vmul.f32 %v9566, 0.02
        %v9673 = vmul.f32 %v9571, 0.02
        %v9674 = vmul.f32 %v9576, 0.02
        %v9675 = vmul.f32 %v9581, 0.02
        %v9676 = vmul.f32 %v9586, 0.02
        %v9677 = vmul.f32 %v9591, 0.02
        %v9678 = vmul.f32 %v9596, 0.02
        %v9679 = vmul.f32 %v9601, 0.02
        %v9680 = vmul.f32 %v9606, 0.02
        %v9681 = vmul.f32 %v9611, 0.02
        %v9682 = vmul.f32 %v9616, 0.02
        %v9683 = vsel %vm9619, %v9461, %v9651
        %v9684 = vsel %vm9620, %v9466, %v9652
        %v9685 = vsel %vm9621, %v9471, %v9653
        %v9686 = vsel %vm9622, %v9476, %v9654
        %v9687 = vsel %vm9623, %v9481, %v9655
        %v9688 = vsel %vm9624, %v9486, %v9656
        %v9689 = vsel %vm9625, %v9491, %v9657
        %v9690 = vsel %vm9626, %v9496, %v9658
        %v9691 = vsel %vm9627, %v9501, %v9659
        %v9692 = vsel %vm9628, %v9506, %v9660
        %v9693 = vsel %vm9629, %v9511, %v9661
        %v9694 = vsel %vm9630, %v9516, %v9662
        %v9695 = vsel %vm9631, %v9521, %v9663
        %v9696 = vsel %vm9632, %v9526, %v9664
        %v9697 = vsel %vm9633, %v9531, %v9665
        %v9698 = vsel %vm9634, %v9536, %v9666
        %v9699 = vsel %vm9635, %v9541, %v9667
        %v9700 = vsel %vm9636, %v9546, %v9668
        %v9701 = vsel %vm9637, %v9551, %v9669
        %v9702 = vsel %vm9638, %v9556, %v9670
        %v9703 = vsel %vm9639, %v9561, %v9671
        %v9704 = vsel %vm9640, %v9566, %v9672
        %v9705 = vsel %vm9641, %v9571, %v9673
        %v9706 = vsel %vm9642, %v9576, %v9674
        %v9707 = vsel %vm9643, %v9581, %v9675
        %v9708 = vsel %vm9644, %v9586, %v9676
        %v9709 = vsel %vm9645, %v9591, %v9677
        %v9710 = vsel %vm9646, %v9596, %v9678
        %v9711 = vsel %vm9647, %v9601, %v9679
        %v9712 = vsel %vm9648, %v9606, %v9680
        %v9713 = vsel %vm9649, %v9611, %v9681
        %v9714 = vsel %vm9650, %v9616, %v9682
        %v9731 = vrot.slane %v9685, 1
        %v9732 = vrot.slane %v9683, 1
        %v9733 = vrot.slane %v9687, 1
        %v9734 = vrot.slane %v9689, 1
        %v9735 = vrot.slane %v9691, 1
        %v9736 = vrot.slane %v9693, 1
        %v9737 = vrot.slane %v9695, 1
        %v9738 = vrot.slane %v9697, 1
        %v9739 = vrot.slane %v9699, 1
        %v9740 = vrot.slane %v9701, 1
        %v9741 = vrot.slane %v9703, 1
        %v9742 = vrot.slane %v9705, 1
        %v9743 = vrot.slane %v9707, 1
        %v9744 = vrot.slane %v9709, 1
        %v9745 = vrot.slane %v9711, 1
        %v9746 = vrot.slane %v9713, 1
        %v9779 = vrot.slane %v9685, 7
        %v9780 = vrot.slane %v9686, 7
        %v9781 = vsel %vm647, %v9779, %v9780
        %v9782 = vrot.slane %v9683, 7
        %v9783 = vrot.slane %v9684, 7
        %v9784 = vsel %vm647, %v9782, %v9783
        %v9785 = vrot.slane %v9687, 7
        %v9786 = vrot.slane %v9688, 7
        %v9787 = vsel %vm647, %v9785, %v9786
        %v9788 = vrot.slane %v9689, 7
        %v9789 = vrot.slane %v9690, 7
        %v9790 = vsel %vm647, %v9788, %v9789
        %v9791 = vrot.slane %v9691, 7
        %v9792 = vrot.slane %v9692, 7
        %v9793 = vsel %vm647, %v9791, %v9792
        %v9794 = vrot.slane %v9693, 7
        %v9795 = vrot.slane %v9694, 7
        %v9796 = vsel %vm647, %v9794, %v9795
        %v9797 = vrot.slane %v9695, 7
        %v9798 = vrot.slane %v9696, 7
        %v9799 = vsel %vm647, %v9797, %v9798
        %v9800 = vrot.slane %v9697, 7
        %v9801 = vrot.slane %v9698, 7
        %v9802 = vsel %vm647, %v9800, %v9801
        %v9803 = vrot.slane %v9699, 7
        %v9804 = vrot.slane %v9700, 7
        %v9805 = vsel %vm647, %v9803, %v9804
        %v9806 = vrot.slane %v9701, 7
        %v9807 = vrot.slane %v9702, 7
        %v9808 = vsel %vm647, %v9806, %v9807
        %v9809 = vrot.slane %v9703, 7
        %v9810 = vrot.slane %v9704, 7
        %v9811 = vsel %vm647, %v9809, %v9810
        %v9812 = vrot.slane %v9705, 7
        %v9813 = vrot.slane %v9706, 7
        %v9814 = vsel %vm647, %v9812, %v9813
        %v9815 = vrot.slane %v9707, 7
        %v9816 = vrot.slane %v9708, 7
        %v9817 = vsel %vm647, %v9815, %v9816
        %v9818 = vrot.slane %v9709, 7
        %v9819 = vrot.slane %v9710, 7
        %v9820 = vsel %vm647, %v9818, %v9819
        %v9821 = vrot.slane %v9711, 7
        %v9822 = vrot.slane %v9712, 7
        %v9823 = vsel %vm647, %v9821, %v9822
        %v9824 = vrot.slane %v9713, 7
        %v9825 = vrot.slane %v9714, 7
        %v9826 = vsel %vm647, %v9824, %v9825
        %v9874 = vrot.slane %v9686, 5
        %v9875 = vrot.slane %v9684, 5
        %v9876 = vrot.slane %v9688, 5
        %v9877 = vrot.slane %v9690, 5
        %v9878 = vrot.slane %v9692, 5
        %v9879 = vrot.slane %v9694, 5
        %v9880 = vrot.slane %v9696, 5
        %v9881 = vrot.slane %v9698, 5
        %v9882 = vrot.slane %v9700, 5
        %v9883 = vrot.slane %v9702, 5
        %v9884 = vrot.slane %v9704, 5
        %v9885 = vrot.slane %v9706, 5
        %v9886 = vrot.slane %v9708, 5
        %v9887 = vrot.slane %v9710, 5
        %v9888 = vrot.slane %v9712, 5
        %v9889 = vrot.slane %v9714, 5
        %v9906 = vsel %vm647, %v9731, %v9779
        %v9907 = vsel %vm647, %v9732, %v9782
        %v9908 = vsel %vm647, %v9733, %v9785
        %v9909 = vsel %vm647, %v9734, %v9788
        %v9910 = vsel %vm647, %v9735, %v9791
        %v9911 = vsel %vm647, %v9736, %v9794
        %v9912 = vsel %vm647, %v9737, %v9797
        %v9913 = vsel %vm647, %v9738, %v9800
        %v9914 = vsel %vm647, %v9739, %v9803
        %v9915 = vsel %vm647, %v9740, %v9806
        %v9916 = vsel %vm647, %v9741, %v9809
        %v9917 = vsel %vm647, %v9742, %v9812
        %v9918 = vsel %vm647, %v9743, %v9815
        %v9919 = vsel %vm647, %v9744, %v9818
        %v9920 = vsel %vm647, %v9745, %v9821
        %v9921 = vsel %vm647, %v9746, %v9824
        %v9922 = vsel %vm647, %v9780, %v9874
        %v9923 = vsel %vm647, %v9783, %v9875
        %v9924 = vsel %vm647, %v9786, %v9876
        %v9925 = vsel %vm647, %v9789, %v9877
        %v9926 = vsel %vm647, %v9792, %v9878
        %v9927 = vsel %vm647, %v9795, %v9879
        %v9928 = vsel %vm647, %v9798, %v9880
        %v9929 = vsel %vm647, %v9801, %v9881
        %v9930 = vsel %vm647, %v9804, %v9882
        %v9931 = vsel %vm647, %v9807, %v9883
        %v9932 = vsel %vm647, %v9810, %v9884
        %v9933 = vsel %vm647, %v9813, %v9885
        %v9934 = vsel %vm647, %v9816, %v9886
        %v9935 = vsel %vm647, %v9819, %v9887
        %v9936 = vsel %vm647, %v9822, %v9888
        %v9937 = vsel %vm647, %v9825, %v9889
        %v9968 = vrot.slane %v9906, 1
        %v9969 = vrot.slane %v9781, 1
        %v9970 = vsel %vm837, %v9968, %v9969
        %v9971 = vrot.slane %v9922, 1
        %v9972 = vsel %vm837, %v9969, %v9971
        %v9973 = vrot.slane %v9907, 1
        %v9974 = vrot.slane %v9784, 1
        %v9975 = vsel %vm837, %v9973, %v9974
        %v9976 = vrot.slane %v9923, 1
        %v9977 = vsel %vm837, %v9974, %v9976
        %v9978 = vrot.slane %v9908, 1
        %v9979 = vrot.slane %v9787, 1
        %v9980 = vsel %vm837, %v9978, %v9979
        %v9981 = vrot.slane %v9924, 1
        %v9982 = vsel %vm837, %v9979, %v9981
        %v9983 = vrot.slane %v9909, 1
        %v9984 = vrot.slane %v9790, 1
        %v9985 = vsel %vm837, %v9983, %v9984
        %v9986 = vrot.slane %v9925, 1
        %v9987 = vsel %vm837, %v9984, %v9986
        %v9988 = vrot.slane %v9910, 1
        %v9989 = vrot.slane %v9793, 1
        %v9990 = vsel %vm837, %v9988, %v9989
        %v9991 = vrot.slane %v9926, 1
        %v9992 = vsel %vm837, %v9989, %v9991
        %v9993 = vrot.slane %v9911, 1
        %v9994 = vrot.slane %v9796, 1
        %v9995 = vsel %vm837, %v9993, %v9994
        %v9996 = vrot.slane %v9927, 1
        %v9997 = vsel %vm837, %v9994, %v9996
        %v9998 = vrot.slane %v9912, 1
        %v9999 = vrot.slane %v9799, 1
        %v10000 = vsel %vm837, %v9998, %v9999
        %v10001 = vrot.slane %v9928, 1
        %v10002 = vsel %vm837, %v9999, %v10001
        %v10003 = vrot.slane %v9913, 1
        %v10004 = vrot.slane %v9802, 1
        %v10005 = vsel %vm837, %v10003, %v10004
        %v10006 = vrot.slane %v9929, 1
        %v10007 = vsel %vm837, %v10004, %v10006
        %v10008 = vrot.slane %v9914, 1
        %v10009 = vrot.slane %v9805, 1
        %v10010 = vsel %vm837, %v10008, %v10009
        %v10011 = vrot.slane %v9930, 1
        %v10012 = vsel %vm837, %v10009, %v10011
        %v10013 = vrot.slane %v9915, 1
        %v10014 = vrot.slane %v9808, 1
        %v10015 = vsel %vm837, %v10013, %v10014
        %v10016 = vrot.slane %v9931, 1
        %v10017 = vsel %vm837, %v10014, %v10016
        %v10018 = vrot.slane %v9916, 1
        %v10019 = vrot.slane %v9811, 1
        %v10020 = vsel %vm837, %v10018, %v10019
        %v10021 = vrot.slane %v9932, 1
        %v10022 = vsel %vm837, %v10019, %v10021
        %v10023 = vrot.slane %v9917, 1
        %v10024 = vrot.slane %v9814, 1
        %v10025 = vsel %vm837, %v10023, %v10024
        %v10026 = vrot.slane %v9933, 1
        %v10027 = vsel %vm837, %v10024, %v10026
        %v10028 = vrot.slane %v9918, 1
        %v10029 = vrot.slane %v9817, 1
        %v10030 = vsel %vm837, %v10028, %v10029
        %v10031 = vrot.slane %v9934, 1
        %v10032 = vsel %vm837, %v10029, %v10031
        %v10033 = vrot.slane %v9919, 1
        %v10034 = vrot.slane %v9820, 1
        %v10035 = vsel %vm837, %v10033, %v10034
        %v10036 = vrot.slane %v9935, 1
        %v10037 = vsel %vm837, %v10034, %v10036
        %v10038 = vrot.slane %v9920, 1
        %v10039 = vrot.slane %v9823, 1
        %v10040 = vsel %vm837, %v10038, %v10039
        %v10041 = vrot.slane %v9936, 1
        %v10042 = vsel %vm837, %v10039, %v10041
        %10043 = vrot.lane.b32.xlu0 %v9970, 1
        %v10044 = vpop.permute.xlu0 %10043
        %10045 = vrot.lane.b32.xlu0 %v9972, 1
        %v10046 = vpop.permute.xlu0 %10045
        %10047 = vrot.lane.b32.xlu0 %v9975, 1
        %v10048 = vpop.permute.xlu0 %10047
        %10049 = vrot.lane.b32.xlu0 %v9977, 1
        %v10050 = vpop.permute.xlu0 %10049
        %10051 = vrot.lane.b32.xlu0 %v9980, 1
        %v10052 = vpop.permute.xlu0 %10051
        %10053 = vrot.lane.b32.xlu0 %v9982, 1
        %v10054 = vpop.permute.xlu0 %10053
        %10055 = vrot.lane.b32.xlu0 %v9985, 1
        %v10056 = vpop.permute.xlu0 %10055
        %10057 = vrot.lane.b32.xlu0 %v9987, 1
        %v10058 = vpop.permute.xlu0 %10057
        %10059 = vrot.lane.b32.xlu0 %v9990, 1
        %v10060 = vpop.permute.xlu0 %10059
        %10061 = vrot.lane.b32.xlu0 %v9992, 1
        %v10062 = vpop.permute.xlu0 %10061
        %10063 = vrot.lane.b32.xlu0 %v9995, 1
        %v10064 = vpop.permute.xlu0 %10063
        %10065 = vrot.lane.b32.xlu0 %v9997, 1
        %v10066 = vpop.permute.xlu0 %10065
        %10067 = vrot.lane.b32.xlu0 %v10000, 1
        %v10068 = vpop.permute.xlu0 %10067
        %10069 = vrot.lane.b32.xlu0 %v10002, 1
        %v10070 = vpop.permute.xlu0 %10069
        %10071 = vrot.lane.b32.xlu0 %v10005, 1
        %v10072 = vpop.permute.xlu0 %10071
        %10073 = vrot.lane.b32.xlu0 %v10007, 1
        %v10074 = vpop.permute.xlu0 %10073
        %10075 = vrot.lane.b32.xlu0 %v10010, 1
        %v10076 = vpop.permute.xlu0 %10075
        %10077 = vrot.lane.b32.xlu0 %v10012, 1
        %v10078 = vpop.permute.xlu0 %10077
        %10079 = vrot.lane.b32.xlu0 %v10015, 1
        %v10080 = vpop.permute.xlu0 %10079
        %10081 = vrot.lane.b32.xlu0 %v10017, 1
        %v10082 = vpop.permute.xlu0 %10081
        %10083 = vrot.lane.b32.xlu0 %v10020, 1
        %v10084 = vpop.permute.xlu0 %10083
        %10085 = vrot.lane.b32.xlu0 %v10022, 1
        %v10086 = vpop.permute.xlu0 %10085
        %10087 = vrot.lane.b32.xlu0 %v10025, 1
        %v10088 = vpop.permute.xlu0 %10087
        %10089 = vrot.lane.b32.xlu0 %v10027, 1
        %v10090 = vpop.permute.xlu0 %10089
        %10091 = vrot.lane.b32.xlu0 %v10030, 1
        %v10092 = vpop.permute.xlu0 %10091
        %10093 = vrot.lane.b32.xlu0 %v10032, 1
        %v10094 = vpop.permute.xlu0 %10093
        %10095 = vrot.lane.b32.xlu0 %v10035, 1
        %v10096 = vpop.permute.xlu0 %10095
        %10097 = vrot.lane.b32.xlu0 %v10037, 1
        %v10098 = vpop.permute.xlu0 %10097
        %10099 = vrot.lane.b32.xlu0 %v10040, 1
        %v10100 = vpop.permute.xlu0 %10099
        %10101 = vrot.lane.b32.xlu0 %v10042, 1
        %v10102 = vpop.permute.xlu0 %10101
        %v10133 = vrot.slane %v9906, 2
        %v10134 = vrot.slane %v9781, 2
        %v10135 = vsel %vm1003, %v10133, %v10134
        %v10136 = vrot.slane %v9922, 2
        %v10137 = vsel %vm1003, %v10134, %v10136
        %v10138 = vrot.slane %v9907, 2
        %v10139 = vrot.slane %v9784, 2
        %v10140 = vsel %vm1003, %v10138, %v10139
        %v10141 = vrot.slane %v9923, 2
        %v10142 = vsel %vm1003, %v10139, %v10141
        %v10143 = vrot.slane %v9908, 2
        %v10144 = vrot.slane %v9787, 2
        %v10145 = vsel %vm1003, %v10143, %v10144
        %v10146 = vrot.slane %v9924, 2
        %v10147 = vsel %vm1003, %v10144, %v10146
        %v10148 = vrot.slane %v9909, 2
        %v10149 = vrot.slane %v9790, 2
        %v10150 = vsel %vm1003, %v10148, %v10149
        %v10151 = vrot.slane %v9925, 2
        %v10152 = vsel %vm1003, %v10149, %v10151
        %v10153 = vrot.slane %v9910, 2
        %v10154 = vrot.slane %v9793, 2
        %v10155 = vsel %vm1003, %v10153, %v10154
        %v10156 = vrot.slane %v9926, 2
        %v10157 = vsel %vm1003, %v10154, %v10156
        %v10158 = vrot.slane %v9911, 2
        %v10159 = vrot.slane %v9796, 2
        %v10160 = vsel %vm1003, %v10158, %v10159
        %v10161 = vrot.slane %v9927, 2
        %v10162 = vsel %vm1003, %v10159, %v10161
        %v10163 = vrot.slane %v9912, 2
        %v10164 = vrot.slane %v9799, 2
        %v10165 = vsel %vm1003, %v10163, %v10164
        %v10166 = vrot.slane %v9928, 2
        %v10167 = vsel %vm1003, %v10164, %v10166
        %v10168 = vrot.slane %v9913, 2
        %v10169 = vrot.slane %v9802, 2
        %v10170 = vsel %vm1003, %v10168, %v10169
        %v10171 = vrot.slane %v9929, 2
        %v10172 = vsel %vm1003, %v10169, %v10171
        %v10173 = vrot.slane %v9914, 2
        %v10174 = vrot.slane %v9805, 2
        %v10175 = vsel %vm1003, %v10173, %v10174
        %v10176 = vrot.slane %v9930, 2
        %v10177 = vsel %vm1003, %v10174, %v10176
        %v10178 = vrot.slane %v9915, 2
        %v10179 = vrot.slane %v9808, 2
        %v10180 = vsel %vm1003, %v10178, %v10179
        %v10181 = vrot.slane %v9931, 2
        %v10182 = vsel %vm1003, %v10179, %v10181
        %v10183 = vrot.slane %v9916, 2
        %v10184 = vrot.slane %v9811, 2
        %v10185 = vsel %vm1003, %v10183, %v10184
        %v10186 = vrot.slane %v9932, 2
        %v10187 = vsel %vm1003, %v10184, %v10186
        %v10188 = vrot.slane %v9917, 2
        %v10189 = vrot.slane %v9814, 2
        %v10190 = vsel %vm1003, %v10188, %v10189
        %v10191 = vrot.slane %v9933, 2
        %v10192 = vsel %vm1003, %v10189, %v10191
        %v10193 = vrot.slane %v9918, 2
        %v10194 = vrot.slane %v9817, 2
        %v10195 = vsel %vm1003, %v10193, %v10194
        %v10196 = vrot.slane %v9934, 2
        %v10197 = vsel %vm1003, %v10194, %v10196
        %v10198 = vrot.slane %v9919, 2
        %v10199 = vrot.slane %v9820, 2
        %v10200 = vsel %vm1003, %v10198, %v10199
        %v10201 = vrot.slane %v9935, 2
        %v10202 = vsel %vm1003, %v10199, %v10201
        %v10203 = vrot.slane %v9920, 2
        %v10204 = vrot.slane %v9823, 2
        %v10205 = vsel %vm1003, %v10203, %v10204
        %v10206 = vrot.slane %v9936, 2
        %v10207 = vsel %vm1003, %v10204, %v10206
        %10208 = vrot.lane.b32.xlu0 %v10135, 2
        %v10209 = vpop.permute.xlu0 %10208
        %10210 = vrot.lane.b32.xlu0 %v10137, 2
        %v10211 = vpop.permute.xlu0 %10210
        %10212 = vrot.lane.b32.xlu0 %v10140, 2
        %v10213 = vpop.permute.xlu0 %10212
        %10214 = vrot.lane.b32.xlu0 %v10142, 2
        %v10215 = vpop.permute.xlu0 %10214
        %10216 = vrot.lane.b32.xlu0 %v10145, 2
        %v10217 = vpop.permute.xlu0 %10216
        %10218 = vrot.lane.b32.xlu0 %v10147, 2
        %v10219 = vpop.permute.xlu0 %10218
        %10220 = vrot.lane.b32.xlu0 %v10150, 2
        %v10221 = vpop.permute.xlu0 %10220
        %10222 = vrot.lane.b32.xlu0 %v10152, 2
        %v10223 = vpop.permute.xlu0 %10222
        %10224 = vrot.lane.b32.xlu0 %v10155, 2
        %v10225 = vpop.permute.xlu0 %10224
        %10226 = vrot.lane.b32.xlu0 %v10157, 2
        %v10227 = vpop.permute.xlu0 %10226
        %10228 = vrot.lane.b32.xlu0 %v10160, 2
        %v10229 = vpop.permute.xlu0 %10228
        %10230 = vrot.lane.b32.xlu0 %v10162, 2
        %v10231 = vpop.permute.xlu0 %10230
        %10232 = vrot.lane.b32.xlu0 %v10165, 2
        %v10233 = vpop.permute.xlu0 %10232
        %10234 = vrot.lane.b32.xlu0 %v10167, 2
        %v10235 = vpop.permute.xlu0 %10234
        %10236 = vrot.lane.b32.xlu0 %v10170, 2
        %v10237 = vpop.permute.xlu0 %10236
        %10238 = vrot.lane.b32.xlu0 %v10172, 2
        %v10239 = vpop.permute.xlu0 %10238
        %10240 = vrot.lane.b32.xlu0 %v10175, 2
        %v10241 = vpop.permute.xlu0 %10240
        %10242 = vrot.lane.b32.xlu0 %v10177, 2
        %v10243 = vpop.permute.xlu0 %10242
        %10244 = vrot.lane.b32.xlu0 %v10180, 2
        %v10245 = vpop.permute.xlu0 %10244
        %10246 = vrot.lane.b32.xlu0 %v10182, 2
        %v10247 = vpop.permute.xlu0 %10246
        %10248 = vrot.lane.b32.xlu0 %v10185, 2
        %v10249 = vpop.permute.xlu0 %10248
        %10250 = vrot.lane.b32.xlu0 %v10187, 2
        %v10251 = vpop.permute.xlu0 %10250
        %10252 = vrot.lane.b32.xlu0 %v10190, 2
        %v10253 = vpop.permute.xlu0 %10252
        %10254 = vrot.lane.b32.xlu0 %v10192, 2
        %v10255 = vpop.permute.xlu0 %10254
        %10256 = vrot.lane.b32.xlu0 %v10195, 2
        %v10257 = vpop.permute.xlu0 %10256
        %10258 = vrot.lane.b32.xlu0 %v10197, 2
        %v10259 = vpop.permute.xlu0 %10258
        %10260 = vrot.lane.b32.xlu0 %v10200, 2
        %v10261 = vpop.permute.xlu0 %10260
        %10262 = vrot.lane.b32.xlu0 %v10202, 2
        %v10263 = vpop.permute.xlu0 %10262
        %10264 = vrot.lane.b32.xlu0 %v10205, 2
        %v10265 = vpop.permute.xlu0 %10264
        %10266 = vrot.lane.b32.xlu0 %v10207, 2
        %v10267 = vpop.permute.xlu0 %10266
        %10299 = vrot.lane.b32.xlu0 %v9907, 3
        %v10300 = vpop.permute.xlu0 %10299
        %10301 = vrot.lane.b32.xlu0 %v9784, 3
        %v10302 = vpop.permute.xlu0 %10301
        %10303 = vrot.lane.b32.xlu0 %v9906, 3
        %v10304 = vpop.permute.xlu0 %10303
        %10305 = vrot.lane.b32.xlu0 %v9781, 3
        %v10306 = vpop.permute.xlu0 %10305
        %10307 = vrot.lane.b32.xlu0 %v9908, 3
        %v10308 = vpop.permute.xlu0 %10307
        %10309 = vrot.lane.b32.xlu0 %v9787, 3
        %v10310 = vpop.permute.xlu0 %10309
        %10311 = vrot.lane.b32.xlu0 %v9909, 3
        %v10312 = vpop.permute.xlu0 %10311
        %10313 = vrot.lane.b32.xlu0 %v9790, 3
        %v10314 = vpop.permute.xlu0 %10313
        %10315 = vrot.lane.b32.xlu0 %v9910, 3
        %v10316 = vpop.permute.xlu0 %10315
        %10317 = vrot.lane.b32.xlu0 %v9793, 3
        %v10318 = vpop.permute.xlu0 %10317
        %10319 = vrot.lane.b32.xlu0 %v9911, 3
        %v10320 = vpop.permute.xlu0 %10319
        %10321 = vrot.lane.b32.xlu0 %v9796, 3
        %v10322 = vpop.permute.xlu0 %10321
        %10323 = vrot.lane.b32.xlu0 %v9912, 3
        %v10324 = vpop.permute.xlu0 %10323
        %10325 = vrot.lane.b32.xlu0 %v9799, 3
        %v10326 = vpop.permute.xlu0 %10325
        %10327 = vrot.lane.b32.xlu0 %v9913, 3
        %v10328 = vpop.permute.xlu0 %10327
        %10329 = vrot.lane.b32.xlu0 %v9802, 3
        %v10330 = vpop.permute.xlu0 %10329
        %10331 = vrot.lane.b32.xlu0 %v9914, 3
        %v10332 = vpop.permute.xlu0 %10331
        %10333 = vrot.lane.b32.xlu0 %v9805, 3
        %v10334 = vpop.permute.xlu0 %10333
        %10335 = vrot.lane.b32.xlu0 %v9915, 3
        %v10336 = vpop.permute.xlu0 %10335
        %10337 = vrot.lane.b32.xlu0 %v9808, 3
        %v10338 = vpop.permute.xlu0 %10337
        %10339 = vrot.lane.b32.xlu0 %v9916, 3
        %v10340 = vpop.permute.xlu0 %10339
        %10341 = vrot.lane.b32.xlu0 %v9811, 3
        %v10342 = vpop.permute.xlu0 %10341
        %10343 = vrot.lane.b32.xlu0 %v9917, 3
        %v10344 = vpop.permute.xlu0 %10343
        %10345 = vrot.lane.b32.xlu0 %v9814, 3
        %v10346 = vpop.permute.xlu0 %10345
        %10347 = vrot.lane.b32.xlu0 %v9918, 3
        %v10348 = vpop.permute.xlu0 %10347
        %10349 = vrot.lane.b32.xlu0 %v9817, 3
        %v10350 = vpop.permute.xlu0 %10349
        %10351 = vrot.lane.b32.xlu0 %v9919, 3
        %v10352 = vpop.permute.xlu0 %10351
        %10353 = vrot.lane.b32.xlu0 %v9820, 3
        %v10354 = vpop.permute.xlu0 %10353
        %10355 = vrot.lane.b32.xlu0 %v9920, 3
        %v10356 = vpop.permute.xlu0 %10355
        %10357 = vrot.lane.b32.xlu0 %v9823, 3
        %v10358 = vpop.permute.xlu0 %10357
        %10359 = vrot.lane.b32.xlu0 %v9921, 3
        %v10360 = vpop.permute.xlu0 %10359
        %10361 = vrot.lane.b32.xlu0 %v9826, 3
        %v10362 = vpop.permute.xlu0 %10361
        %v10396 = vrot.slane %v9921, 1
        %v10397 = vrot.slane %v9826, 1
        %v10398 = vsel %vm837, %v10396, %v10397
        %v10399 = vrot.slane %v9937, 1
        %v10400 = vsel %vm837, %v10397, %v10399
        %10401 = vrot.lane.b32.xlu0 %v9975, 4
        %v10402 = vpop.permute.xlu0 %10401
        %10403 = vrot.lane.b32.xlu0 %v9977, 4
        %v10404 = vpop.permute.xlu0 %10403
        %10405 = vrot.lane.b32.xlu0 %v9970, 4
        %v10406 = vpop.permute.xlu0 %10405
        %10407 = vrot.lane.b32.xlu0 %v9972, 4
        %v10408 = vpop.permute.xlu0 %10407
        %10409 = vrot.lane.b32.xlu0 %v9980, 4
        %v10410 = vpop.permute.xlu0 %10409
        %10411 = vrot.lane.b32.xlu0 %v9982, 4
        %v10412 = vpop.permute.xlu0 %10411
        %10413 = vrot.lane.b32.xlu0 %v9985, 4
        %v10414 = vpop.permute.xlu0 %10413
        %10415 = vrot.lane.b32.xlu0 %v9987, 4
        %v10416 = vpop.permute.xlu0 %10415
        %10417 = vrot.lane.b32.xlu0 %v9990, 4
        %v10418 = vpop.permute.xlu0 %10417
        %10419 = vrot.lane.b32.xlu0 %v9992, 4
        %v10420 = vpop.permute.xlu0 %10419
        %10421 = vrot.lane.b32.xlu0 %v9995, 4
        %v10422 = vpop.permute.xlu0 %10421
        %10423 = vrot.lane.b32.xlu0 %v9997, 4
        %v10424 = vpop.permute.xlu0 %10423
        %10425 = vrot.lane.b32.xlu0 %v10000, 4
        %v10426 = vpop.permute.xlu0 %10425
        %10427 = vrot.lane.b32.xlu0 %v10002, 4
        %v10428 = vpop.permute.xlu0 %10427
        %10429 = vrot.lane.b32.xlu0 %v10005, 4
        %v10430 = vpop.permute.xlu0 %10429
        %10431 = vrot.lane.b32.xlu0 %v10007, 4
        %v10432 = vpop.permute.xlu0 %10431
        %10433 = vrot.lane.b32.xlu0 %v10010, 4
        %v10434 = vpop.permute.xlu0 %10433
        %10435 = vrot.lane.b32.xlu0 %v10012, 4
        %v10436 = vpop.permute.xlu0 %10435
        %10437 = vrot.lane.b32.xlu0 %v10015, 4
        %v10438 = vpop.permute.xlu0 %10437
        %10439 = vrot.lane.b32.xlu0 %v10017, 4
        %v10440 = vpop.permute.xlu0 %10439
        %10441 = vrot.lane.b32.xlu0 %v10020, 4
        %v10442 = vpop.permute.xlu0 %10441
        %10443 = vrot.lane.b32.xlu0 %v10022, 4
        %v10444 = vpop.permute.xlu0 %10443
        %10445 = vrot.lane.b32.xlu0 %v10025, 4
        %v10446 = vpop.permute.xlu0 %10445
        %10447 = vrot.lane.b32.xlu0 %v10027, 4
        %v10448 = vpop.permute.xlu0 %10447
        %10449 = vrot.lane.b32.xlu0 %v10030, 4
        %v10450 = vpop.permute.xlu0 %10449
        %10451 = vrot.lane.b32.xlu0 %v10032, 4
        %v10452 = vpop.permute.xlu0 %10451
        %10453 = vrot.lane.b32.xlu0 %v10035, 4
        %v10454 = vpop.permute.xlu0 %10453
        %10455 = vrot.lane.b32.xlu0 %v10037, 4
        %v10456 = vpop.permute.xlu0 %10455
        %10457 = vrot.lane.b32.xlu0 %v10040, 4
        %v10458 = vpop.permute.xlu0 %10457
        %10459 = vrot.lane.b32.xlu0 %v10042, 4
        %v10460 = vpop.permute.xlu0 %10459
        %10461 = vrot.lane.b32.xlu0 %v10398, 4
        %v10462 = vpop.permute.xlu0 %10461
        %10463 = vrot.lane.b32.xlu0 %v10400, 4
        %v10464 = vpop.permute.xlu0 %10463
        %v10497 = vrot.slane %v9921, 2
        %v10498 = vrot.slane %v9826, 2
        %v10499 = vsel %vm1003, %v10497, %v10498
        %v10500 = vrot.slane %v9937, 2
        %v10501 = vsel %vm1003, %v10498, %v10500
        %10502 = vrot.lane.b32.xlu0 %v10140, 5
        %v10503 = vpop.permute.xlu0 %10502
        %10504 = vrot.lane.b32.xlu0 %v10142, 5
        %v10505 = vpop.permute.xlu0 %10504
        %10506 = vrot.lane.b32.xlu0 %v10135, 5
        %v10507 = vpop.permute.xlu0 %10506
        %10508 = vrot.lane.b32.xlu0 %v10137, 5
        %v10509 = vpop.permute.xlu0 %10508
        %10510 = vrot.lane.b32.xlu0 %v10145, 5
        %v10511 = vpop.permute.xlu0 %10510
        %10512 = vrot.lane.b32.xlu0 %v10147, 5
        %v10513 = vpop.permute.xlu0 %10512
        %10514 = vrot.lane.b32.xlu0 %v10150, 5
        %v10515 = vpop.permute.xlu0 %10514
        %10516 = vrot.lane.b32.xlu0 %v10152, 5
        %v10517 = vpop.permute.xlu0 %10516
        %10518 = vrot.lane.b32.xlu0 %v10155, 5
        %v10519 = vpop.permute.xlu0 %10518
        %10520 = vrot.lane.b32.xlu0 %v10157, 5
        %v10521 = vpop.permute.xlu0 %10520
        %10522 = vrot.lane.b32.xlu0 %v10160, 5
        %v10523 = vpop.permute.xlu0 %10522
        %10524 = vrot.lane.b32.xlu0 %v10162, 5
        %v10525 = vpop.permute.xlu0 %10524
        %10526 = vrot.lane.b32.xlu0 %v10165, 5
        %v10527 = vpop.permute.xlu0 %10526
        %10528 = vrot.lane.b32.xlu0 %v10167, 5
        %v10529 = vpop.permute.xlu0 %10528
        %10530 = vrot.lane.b32.xlu0 %v10170, 5
        %v10531 = vpop.permute.xlu0 %10530
        %10532 = vrot.lane.b32.xlu0 %v10172, 5
        %v10533 = vpop.permute.xlu0 %10532
        %10534 = vrot.lane.b32.xlu0 %v10175, 5
        %v10535 = vpop.permute.xlu0 %10534
        %10536 = vrot.lane.b32.xlu0 %v10177, 5
        %v10537 = vpop.permute.xlu0 %10536
        %10538 = vrot.lane.b32.xlu0 %v10180, 5
        %v10539 = vpop.permute.xlu0 %10538
        %10540 = vrot.lane.b32.xlu0 %v10182, 5
        %v10541 = vpop.permute.xlu0 %10540
        %10542 = vrot.lane.b32.xlu0 %v10185, 5
        %v10543 = vpop.permute.xlu0 %10542
        %10544 = vrot.lane.b32.xlu0 %v10187, 5
        %v10545 = vpop.permute.xlu0 %10544
        %10546 = vrot.lane.b32.xlu0 %v10190, 5
        %v10547 = vpop.permute.xlu0 %10546
        %10548 = vrot.lane.b32.xlu0 %v10192, 5
        %v10549 = vpop.permute.xlu0 %10548
        %10550 = vrot.lane.b32.xlu0 %v10195, 5
        %v10551 = vpop.permute.xlu0 %10550
        %10552 = vrot.lane.b32.xlu0 %v10197, 5
        %v10553 = vpop.permute.xlu0 %10552
        %10554 = vrot.lane.b32.xlu0 %v10200, 5
        %v10555 = vpop.permute.xlu0 %10554
        %10556 = vrot.lane.b32.xlu0 %v10202, 5
        %v10557 = vpop.permute.xlu0 %10556
        %10558 = vrot.lane.b32.xlu0 %v10205, 5
        %v10559 = vpop.permute.xlu0 %10558
        %10560 = vrot.lane.b32.xlu0 %v10207, 5
        %v10561 = vpop.permute.xlu0 %10560
        %10562 = vrot.lane.b32.xlu0 %v10499, 5
        %v10563 = vpop.permute.xlu0 %10562
        %10564 = vrot.lane.b32.xlu0 %v10501, 5
        %v10565 = vpop.permute.xlu0 %10564
        %10598 = vrot.lane.b32.xlu0 %v9906, 6
        %v10599 = vpop.permute.xlu0 %10598
        %10600 = vrot.lane.b32.xlu0 %v9781, 6
        %v10601 = vpop.permute.xlu0 %10600
        %10602 = vrot.lane.b32.xlu0 %v9908, 6
        %v10603 = vpop.permute.xlu0 %10602
        %10604 = vrot.lane.b32.xlu0 %v9787, 6
        %v10605 = vpop.permute.xlu0 %10604
        %10606 = vrot.lane.b32.xlu0 %v9909, 6
        %v10607 = vpop.permute.xlu0 %10606
        %10608 = vrot.lane.b32.xlu0 %v9790, 6
        %v10609 = vpop.permute.xlu0 %10608
        %10610 = vrot.lane.b32.xlu0 %v9910, 6
        %v10611 = vpop.permute.xlu0 %10610
        %10612 = vrot.lane.b32.xlu0 %v9793, 6
        %v10613 = vpop.permute.xlu0 %10612
        %10614 = vrot.lane.b32.xlu0 %v9911, 6
        %v10615 = vpop.permute.xlu0 %10614
        %10616 = vrot.lane.b32.xlu0 %v9796, 6
        %v10617 = vpop.permute.xlu0 %10616
        %10618 = vrot.lane.b32.xlu0 %v9912, 6
        %v10619 = vpop.permute.xlu0 %10618
        %10620 = vrot.lane.b32.xlu0 %v9799, 6
        %v10621 = vpop.permute.xlu0 %10620
        %10622 = vrot.lane.b32.xlu0 %v9913, 6
        %v10623 = vpop.permute.xlu0 %10622
        %10624 = vrot.lane.b32.xlu0 %v9802, 6
        %v10625 = vpop.permute.xlu0 %10624
        %10626 = vrot.lane.b32.xlu0 %v9914, 6
        %v10627 = vpop.permute.xlu0 %10626
        %10628 = vrot.lane.b32.xlu0 %v9805, 6
        %v10629 = vpop.permute.xlu0 %10628
        %10630 = vrot.lane.b32.xlu0 %v9915, 6
        %v10631 = vpop.permute.xlu0 %10630
        %10632 = vrot.lane.b32.xlu0 %v9808, 6
        %v10633 = vpop.permute.xlu0 %10632
        %10634 = vrot.lane.b32.xlu0 %v9916, 6
        %v10635 = vpop.permute.xlu0 %10634
        %10636 = vrot.lane.b32.xlu0 %v9811, 6
        %v10637 = vpop.permute.xlu0 %10636
        %10638 = vrot.lane.b32.xlu0 %v9917, 6
        %v10639 = vpop.permute.xlu0 %10638
        %10640 = vrot.lane.b32.xlu0 %v9814, 6
        %v10641 = vpop.permute.xlu0 %10640
        %10642 = vrot.lane.b32.xlu0 %v9918, 6
        %v10643 = vpop.permute.xlu0 %10642
        %10644 = vrot.lane.b32.xlu0 %v9817, 6
        %v10645 = vpop.permute.xlu0 %10644
        %10646 = vrot.lane.b32.xlu0 %v9919, 6
        %v10647 = vpop.permute.xlu0 %10646
        %10648 = vrot.lane.b32.xlu0 %v9820, 6
        %v10649 = vpop.permute.xlu0 %10648
        %10650 = vrot.lane.b32.xlu0 %v9920, 6
        %v10651 = vpop.permute.xlu0 %10650
        %10652 = vrot.lane.b32.xlu0 %v9823, 6
        %v10653 = vpop.permute.xlu0 %10652
        %10654 = vrot.lane.b32.xlu0 %v9921, 6
        %v10655 = vpop.permute.xlu0 %10654
        %10656 = vrot.lane.b32.xlu0 %v9826, 6
        %v10657 = vpop.permute.xlu0 %10656
        %10688 = vrot.lane.b32.xlu0 %v9970, 7
        %v10689 = vpop.permute.xlu0 %10688
        %10690 = vrot.lane.b32.xlu0 %v9972, 7
        %v10691 = vpop.permute.xlu0 %10690
        %10692 = vrot.lane.b32.xlu0 %v9980, 7
        %v10693 = vpop.permute.xlu0 %10692
        %10694 = vrot.lane.b32.xlu0 %v9982, 7
        %v10695 = vpop.permute.xlu0 %10694
        %10696 = vrot.lane.b32.xlu0 %v9985, 7
        %v10697 = vpop.permute.xlu0 %10696
        %10698 = vrot.lane.b32.xlu0 %v9987, 7
        %v10699 = vpop.permute.xlu0 %10698
        %10700 = vrot.lane.b32.xlu0 %v9990, 7
        %v10701 = vpop.permute.xlu0 %10700
        %10702 = vrot.lane.b32.xlu0 %v9992, 7
        %v10703 = vpop.permute.xlu0 %10702
        %10704 = vrot.lane.b32.xlu0 %v9995, 7
        %v10705 = vpop.permute.xlu0 %10704
        %10706 = vrot.lane.b32.xlu0 %v9997, 7
        %v10707 = vpop.permute.xlu0 %10706
        %10708 = vrot.lane.b32.xlu0 %v10000, 7
        %v10709 = vpop.permute.xlu0 %10708
        %10710 = vrot.lane.b32.xlu0 %v10002, 7
        %v10711 = vpop.permute.xlu0 %10710
        %10712 = vrot.lane.b32.xlu0 %v10005, 7
        %v10713 = vpop.permute.xlu0 %10712
        %10714 = vrot.lane.b32.xlu0 %v10007, 7
        %v10715 = vpop.permute.xlu0 %10714
        %10716 = vrot.lane.b32.xlu0 %v10010, 7
        %v10717 = vpop.permute.xlu0 %10716
        %10718 = vrot.lane.b32.xlu0 %v10012, 7
        %v10719 = vpop.permute.xlu0 %10718
        %10720 = vrot.lane.b32.xlu0 %v10015, 7
        %v10721 = vpop.permute.xlu0 %10720
        %10722 = vrot.lane.b32.xlu0 %v10017, 7
        %v10723 = vpop.permute.xlu0 %10722
        %10724 = vrot.lane.b32.xlu0 %v10020, 7
        %v10725 = vpop.permute.xlu0 %10724
        %10726 = vrot.lane.b32.xlu0 %v10022, 7
        %v10727 = vpop.permute.xlu0 %10726
        %10728 = vrot.lane.b32.xlu0 %v10025, 7
        %v10729 = vpop.permute.xlu0 %10728
        %10730 = vrot.lane.b32.xlu0 %v10027, 7
        %v10731 = vpop.permute.xlu0 %10730
        %10732 = vrot.lane.b32.xlu0 %v10030, 7
        %v10733 = vpop.permute.xlu0 %10732
        %10734 = vrot.lane.b32.xlu0 %v10032, 7
        %v10735 = vpop.permute.xlu0 %10734
        %10736 = vrot.lane.b32.xlu0 %v10035, 7
        %v10737 = vpop.permute.xlu0 %10736
        %10738 = vrot.lane.b32.xlu0 %v10037, 7
        %v10739 = vpop.permute.xlu0 %10738
        %10740 = vrot.lane.b32.xlu0 %v10040, 7
        %v10741 = vpop.permute.xlu0 %10740
        %10742 = vrot.lane.b32.xlu0 %v10042, 7
        %v10743 = vpop.permute.xlu0 %10742
        %10744 = vrot.lane.b32.xlu0 %v10398, 7
        %v10745 = vpop.permute.xlu0 %10744
        %10746 = vrot.lane.b32.xlu0 %v10400, 7
        %v10747 = vpop.permute.xlu0 %10746
        %10778 = vrot.lane.b32.xlu0 %v10135, 8
        %v10779 = vpop.permute.xlu0 %10778
        %10780 = vrot.lane.b32.xlu0 %v10137, 8
        %v10781 = vpop.permute.xlu0 %10780
        %10782 = vrot.lane.b32.xlu0 %v10145, 8
        %v10783 = vpop.permute.xlu0 %10782
        %10784 = vrot.lane.b32.xlu0 %v10147, 8
        %v10785 = vpop.permute.xlu0 %10784
        %10786 = vrot.lane.b32.xlu0 %v10150, 8
        %v10787 = vpop.permute.xlu0 %10786
        %10788 = vrot.lane.b32.xlu0 %v10152, 8
        %v10789 = vpop.permute.xlu0 %10788
        %10790 = vrot.lane.b32.xlu0 %v10155, 8
        %v10791 = vpop.permute.xlu0 %10790
        %10792 = vrot.lane.b32.xlu0 %v10157, 8
        %v10793 = vpop.permute.xlu0 %10792
        %10794 = vrot.lane.b32.xlu0 %v10160, 8
        %v10795 = vpop.permute.xlu0 %10794
        %10796 = vrot.lane.b32.xlu0 %v10162, 8
        %v10797 = vpop.permute.xlu0 %10796
        %10798 = vrot.lane.b32.xlu0 %v10165, 8
        %v10799 = vpop.permute.xlu0 %10798
        %10800 = vrot.lane.b32.xlu0 %v10167, 8
        %v10801 = vpop.permute.xlu0 %10800
        %10802 = vrot.lane.b32.xlu0 %v10170, 8
        %v10803 = vpop.permute.xlu0 %10802
        %10804 = vrot.lane.b32.xlu0 %v10172, 8
        %v10805 = vpop.permute.xlu0 %10804
        %10806 = vrot.lane.b32.xlu0 %v10175, 8
        %v10807 = vpop.permute.xlu0 %10806
        %10808 = vrot.lane.b32.xlu0 %v10177, 8
        %v10809 = vpop.permute.xlu0 %10808
        %10810 = vrot.lane.b32.xlu0 %v10180, 8
        %v10811 = vpop.permute.xlu0 %10810
        %10812 = vrot.lane.b32.xlu0 %v10182, 8
        %v10813 = vpop.permute.xlu0 %10812
        %10814 = vrot.lane.b32.xlu0 %v10185, 8
        %v10815 = vpop.permute.xlu0 %10814
        %10816 = vrot.lane.b32.xlu0 %v10187, 8
        %v10817 = vpop.permute.xlu0 %10816
        %10818 = vrot.lane.b32.xlu0 %v10190, 8
        %v10819 = vpop.permute.xlu0 %10818
        %10820 = vrot.lane.b32.xlu0 %v10192, 8
        %v10821 = vpop.permute.xlu0 %10820
        %10822 = vrot.lane.b32.xlu0 %v10195, 8
        %v10823 = vpop.permute.xlu0 %10822
        %10824 = vrot.lane.b32.xlu0 %v10197, 8
        %v10825 = vpop.permute.xlu0 %10824
        %10826 = vrot.lane.b32.xlu0 %v10200, 8
        %v10827 = vpop.permute.xlu0 %10826
        %10828 = vrot.lane.b32.xlu0 %v10202, 8
        %v10829 = vpop.permute.xlu0 %10828
        %10830 = vrot.lane.b32.xlu0 %v10205, 8
        %v10831 = vpop.permute.xlu0 %10830
        %10832 = vrot.lane.b32.xlu0 %v10207, 8
        %v10833 = vpop.permute.xlu0 %10832
        %10834 = vrot.lane.b32.xlu0 %v10499, 8
        %v10835 = vpop.permute.xlu0 %10834
        %10836 = vrot.lane.b32.xlu0 %v10501, 8
        %v10837 = vpop.permute.xlu0 %10836
        %v10868 = vsel %vm3586, %v9906, %v10044
        %v10869 = vsel %vm3586, %v9781, %v10046
        %v10870 = vsel %vm3586, %v9907, %v10048
        %v10871 = vsel %vm3586, %v9784, %v10050
        %v10872 = vsel %vm3586, %v9908, %v10052
        %v10873 = vsel %vm3586, %v9787, %v10054
        %v10874 = vsel %vm3586, %v9909, %v10056
        %v10875 = vsel %vm3586, %v9790, %v10058
        %v10876 = vsel %vm3586, %v9910, %v10060
        %v10877 = vsel %vm3586, %v9793, %v10062
        %v10878 = vsel %vm3586, %v9911, %v10064
        %v10879 = vsel %vm3586, %v9796, %v10066
        %v10880 = vsel %vm3586, %v9912, %v10068
        %v10881 = vsel %vm3586, %v9799, %v10070
        %v10882 = vsel %vm3586, %v9913, %v10072
        %v10883 = vsel %vm3586, %v9802, %v10074
        %v10884 = vsel %vm3586, %v9914, %v10076
        %v10885 = vsel %vm3586, %v9805, %v10078
        %v10886 = vsel %vm3586, %v9915, %v10080
        %v10887 = vsel %vm3586, %v9808, %v10082
        %v10888 = vsel %vm3586, %v9916, %v10084
        %v10889 = vsel %vm3586, %v9811, %v10086
        %v10890 = vsel %vm3586, %v9917, %v10088
        %v10891 = vsel %vm3586, %v9814, %v10090
        %v10892 = vsel %vm3586, %v9918, %v10092
        %v10893 = vsel %vm3586, %v9817, %v10094
        %v10894 = vsel %vm3586, %v9919, %v10096
        %v10895 = vsel %vm3586, %v9820, %v10098
        %v10896 = vsel %vm3586, %v9920, %v10100
        %v10897 = vsel %vm3586, %v9823, %v10102
        %v10898 = vsel %vm3617, %v10868, %v10209
        %v10899 = vsel %vm3617, %v10869, %v10211
        %v10900 = vsel %vm3617, %v10870, %v10213
        %v10901 = vsel %vm3617, %v10871, %v10215
        %v10902 = vsel %vm3617, %v10872, %v10217
        %v10903 = vsel %vm3617, %v10873, %v10219
        %v10904 = vsel %vm3617, %v10874, %v10221
        %v10905 = vsel %vm3617, %v10875, %v10223
        %v10906 = vsel %vm3617, %v10876, %v10225
        %v10907 = vsel %vm3617, %v10877, %v10227
        %v10908 = vsel %vm3617, %v10878, %v10229
        %v10909 = vsel %vm3617, %v10879, %v10231
        %v10910 = vsel %vm3617, %v10880, %v10233
        %v10911 = vsel %vm3617, %v10881, %v10235
        %v10912 = vsel %vm3617, %v10882, %v10237
        %v10913 = vsel %vm3617, %v10883, %v10239
        %v10914 = vsel %vm3617, %v10884, %v10241
        %v10915 = vsel %vm3617, %v10885, %v10243
        %v10916 = vsel %vm3617, %v10886, %v10245
        %v10917 = vsel %vm3617, %v10887, %v10247
        %v10918 = vsel %vm3617, %v10888, %v10249
        %v10919 = vsel %vm3617, %v10889, %v10251
        %v10920 = vsel %vm3617, %v10890, %v10253
        %v10921 = vsel %vm3617, %v10891, %v10255
        %v10922 = vsel %vm3617, %v10892, %v10257
        %v10923 = vsel %vm3617, %v10893, %v10259
        %v10924 = vsel %vm3617, %v10894, %v10261
        %v10925 = vsel %vm3617, %v10895, %v10263
        %v10926 = vsel %vm3617, %v10896, %v10265
        %v10927 = vsel %vm3617, %v10897, %v10267
        %v10928 = vsel %vm3648, %v10898, %v10300
        %v10929 = vsel %vm3648, %v10899, %v10302
        %v10930 = vsel %vm3648, %v10900, %v10304
        %v10931 = vsel %vm3648, %v10901, %v10306
        %v10932 = vsel %vm3648, %v10898, %v10308
        %v10933 = vsel %vm3648, %v10899, %v10310
        %v10934 = vsel %vm3648, %v10902, %v10312
        %v10935 = vsel %vm3648, %v10903, %v10314
        %v10936 = vsel %vm3648, %v10904, %v10316
        %v10937 = vsel %vm3648, %v10905, %v10318
        %v10938 = vsel %vm3648, %v10906, %v10320
        %v10939 = vsel %vm3648, %v10907, %v10322
        %v10940 = vsel %vm3648, %v10908, %v10324
        %v10941 = vsel %vm3648, %v10909, %v10326
        %v10942 = vsel %vm3648, %v10910, %v10328
        %v10943 = vsel %vm3648, %v10911, %v10330
        %v10944 = vsel %vm3648, %v10912, %v10332
        %v10945 = vsel %vm3648, %v10913, %v10334
        %v10946 = vsel %vm3648, %v10914, %v10336
        %v10947 = vsel %vm3648, %v10915, %v10338
        %v10948 = vsel %vm3648, %v10916, %v10340
        %v10949 = vsel %vm3648, %v10917, %v10342
        %v10950 = vsel %vm3648, %v10918, %v10344
        %v10951 = vsel %vm3648, %v10919, %v10346
        %v10952 = vsel %vm3648, %v10920, %v10348
        %v10953 = vsel %vm3648, %v10921, %v10350
        %v10954 = vsel %vm3648, %v10922, %v10352
        %v10955 = vsel %vm3648, %v10923, %v10354
        %v10956 = vsel %vm3648, %v10924, %v10356
        %v10957 = vsel %vm3648, %v10925, %v10358
        %v10958 = vsel %vm3648, %v10926, %v10360
        %v10959 = vsel %vm3648, %v10927, %v10362
        %v10960 = vsel %vm1739, %v10928, %v10402
        %v10961 = vsel %vm1739, %v10929, %v10404
        %v10962 = vsel %vm1739, %v10930, %v10406
        %v10963 = vsel %vm1739, %v10931, %v10408
        %v10964 = vsel %vm1739, %v10932, %v10410
        %v10965 = vsel %vm1739, %v10933, %v10412
        %v10966 = vsel %vm1739, %v10934, %v10414
        %v10967 = vsel %vm1739, %v10935, %v10416
        %v10968 = vsel %vm1739, %v10936, %v10418
        %v10969 = vsel %vm1739, %v10937, %v10420
        %v10970 = vsel %vm1739, %v10938, %v10422
        %v10971 = vsel %vm1739, %v10939, %v10424
        %v10972 = vsel %vm1739, %v10940, %v10426
        %v10973 = vsel %vm1739, %v10941, %v10428
        %v10974 = vsel %vm1739, %v10942, %v10430
        %v10975 = vsel %vm1739, %v10943, %v10432
        %v10976 = vsel %vm1739, %v10944, %v10434
        %v10977 = vsel %vm1739, %v10945, %v10436
        %v10978 = vsel %vm1739, %v10946, %v10438
        %v10979 = vsel %vm1739, %v10947, %v10440
        %v10980 = vsel %vm1739, %v10948, %v10442
        %v10981 = vsel %vm1739, %v10949, %v10444
        %v10982 = vsel %vm1739, %v10950, %v10446
        %v10983 = vsel %vm1739, %v10951, %v10448
        %v10984 = vsel %vm1739, %v10952, %v10450
        %v10985 = vsel %vm1739, %v10953, %v10452
        %v10986 = vsel %vm1739, %v10954, %v10454
        %v10987 = vsel %vm1739, %v10955, %v10456
        %v10988 = vsel %vm1739, %v10956, %v10458
        %v10989 = vsel %vm1739, %v10957, %v10460
        %v10990 = vsel %vm1739, %v10958, %v10462
        %v10991 = vsel %vm1739, %v10959, %v10464
        %v10992 = vsel %vm3713, %v10960, %v10503
        %v10993 = vsel %vm3713, %v10961, %v10505
        %v10994 = vsel %vm3713, %v10962, %v10507
        %v10995 = vsel %vm3713, %v10963, %v10509
        %v10996 = vsel %vm3713, %v10964, %v10511
        %v10997 = vsel %vm3713, %v10965, %v10513
        %v10998 = vsel %vm3713, %v10966, %v10515
        %v10999 = vsel %vm3713, %v10967, %v10517
        %v11000 = vsel %vm3713, %v10968, %v10519
        %v11001 = vsel %vm3713, %v10969, %v10521
        %v11002 = vsel %vm3713, %v10970, %v10523
        %v11003 = vsel %vm3713, %v10971, %v10525
        %v11004 = vsel %vm3713, %v10972, %v10527
        %v11005 = vsel %vm3713, %v10973, %v10529
        %v11006 = vsel %vm3713, %v10974, %v10531
        %v11007 = vsel %vm3713, %v10975, %v10533
        %v11008 = vsel %vm3713, %v10976, %v10535
        %v11009 = vsel %vm3713, %v10977, %v10537
        %v11010 = vsel %vm3713, %v10978, %v10539
        %v11011 = vsel %vm3713, %v10979, %v10541
        %v11012 = vsel %vm3713, %v10980, %v10543
        %v11013 = vsel %vm3713, %v10981, %v10545
        %v11014 = vsel %vm3713, %v10982, %v10547
        %v11015 = vsel %vm3713, %v10983, %v10549
        %v11016 = vsel %vm3713, %v10984, %v10551
        %v11017 = vsel %vm3713, %v10985, %v10553
        %v11018 = vsel %vm3713, %v10986, %v10555
        %v11019 = vsel %vm3713, %v10987, %v10557
        %v11020 = vsel %vm3713, %v10988, %v10559
        %v11021 = vsel %vm3713, %v10989, %v10561
        %v11022 = vsel %vm3713, %v10990, %v10563
        %v11023 = vsel %vm3713, %v10991, %v10565
        %v11024 = vsel %vm3746, %v10992, %v10599
        %v11025 = vsel %vm3746, %v10993, %v10601
        %v11026 = vsel %vm3746, %v10994, %v10603
        %v11027 = vsel %vm3746, %v10995, %v10605
        %v11028 = vsel %vm3746, %v10996, %v10607
        %v11029 = vsel %vm3746, %v10997, %v10609
        %v11030 = vsel %vm3746, %v10998, %v10611
        %v11031 = vsel %vm3746, %v10999, %v10613
        %v11032 = vsel %vm3746, %v11000, %v10615
        %v11033 = vsel %vm3746, %v11001, %v10617
        %v11034 = vsel %vm3746, %v11002, %v10619
        %v11035 = vsel %vm3746, %v11003, %v10621
        %v11036 = vsel %vm3746, %v11004, %v10623
        %v11037 = vsel %vm3746, %v11005, %v10625
        %v11038 = vsel %vm3746, %v11006, %v10627
        %v11039 = vsel %vm3746, %v11007, %v10629
        %v11040 = vsel %vm3746, %v11008, %v10631
        %v11041 = vsel %vm3746, %v11009, %v10633
        %v11042 = vsel %vm3746, %v11010, %v10635
        %v11043 = vsel %vm3746, %v11011, %v10637
        %v11044 = vsel %vm3746, %v11012, %v10639
        %v11045 = vsel %vm3746, %v11013, %v10641
        %v11046 = vsel %vm3746, %v11014, %v10643
        %v11047 = vsel %vm3746, %v11015, %v10645
        %v11048 = vsel %vm3746, %v11016, %v10647
        %v11049 = vsel %vm3746, %v11017, %v10649
        %v11050 = vsel %vm3746, %v11018, %v10651
        %v11051 = vsel %vm3746, %v11019, %v10653
        %v11052 = vsel %vm3746, %v11020, %v10655
        %v11053 = vsel %vm3746, %v11021, %v10657
        %v11054 = vsel %vm3746, %v11022, %v10651
        %v11055 = vsel %vm3746, %v11023, %v10653
        %v11056 = vsel %vm3779, %v11024, %v10689
        %v11057 = vsel %vm3779, %v11025, %v10691
        %v11058 = vsel %vm3779, %v11026, %v10693
        %v11059 = vsel %vm3779, %v11027, %v10695
        %v11060 = vsel %vm3779, %v11028, %v10697
        %v11061 = vsel %vm3779, %v11029, %v10699
        %v11062 = vsel %vm3779, %v11030, %v10701
        %v11063 = vsel %vm3779, %v11031, %v10703
        %v11064 = vsel %vm3779, %v11032, %v10705
        %v11065 = vsel %vm3779, %v11033, %v10707
        %v11066 = vsel %vm3779, %v11034, %v10709
        %v11067 = vsel %vm3779, %v11035, %v10711
        %v11068 = vsel %vm3779, %v11036, %v10713
        %v11069 = vsel %vm3779, %v11037, %v10715
        %v11070 = vsel %vm3779, %v11038, %v10717
        %v11071 = vsel %vm3779, %v11039, %v10719
        %v11072 = vsel %vm3779, %v11040, %v10721
        %v11073 = vsel %vm3779, %v11041, %v10723
        %v11074 = vsel %vm3779, %v11042, %v10725
        %v11075 = vsel %vm3779, %v11043, %v10727
        %v11076 = vsel %vm3779, %v11044, %v10729
        %v11077 = vsel %vm3779, %v11045, %v10731
        %v11078 = vsel %vm3779, %v11046, %v10733
        %v11079 = vsel %vm3779, %v11047, %v10735
        %v11080 = vsel %vm3779, %v11048, %v10737
        %v11081 = vsel %vm3779, %v11049, %v10739
        %v11082 = vsel %vm3779, %v11050, %v10741
        %v11083 = vsel %vm3779, %v11051, %v10743
        %v11084 = vsel %vm3779, %v11052, %v10745
        %v11085 = vsel %vm3779, %v11053, %v10747
        %v11086 = vsel %vm3779, %v11054, %v10741
        %v11087 = vsel %vm3779, %v11055, %v10743
        %v11088 = vsel %vm1770, %v11056, %v10779
        %v11089 = vsel %vm1770, %v11057, %v10781
        %v11090 = vsel %vm1770, %v11058, %v10783
        %v11091 = vsel %vm1770, %v11059, %v10785
        %v11092 = vsel %vm1770, %v11060, %v10787
        %v11093 = vsel %vm1770, %v11061, %v10789
        %v11094 = vsel %vm1770, %v11062, %v10791
        %v11095 = vsel %vm1770, %v11063, %v10793
        %v11096 = vsel %vm1770, %v11064, %v10795
        %v11097 = vsel %vm1770, %v11065, %v10797
        %v11098 = vsel %vm1770, %v11066, %v10799
        %v11099 = vsel %vm1770, %v11067, %v10801
        %v11100 = vsel %vm1770, %v11068, %v10803
        %v11101 = vsel %vm1770, %v11069, %v10805
        %v11102 = vsel %vm1770, %v11070, %v10807
        %v11103 = vsel %vm1770, %v11071, %v10809
        %v11104 = vsel %vm1770, %v11072, %v10811
        %v11105 = vsel %vm1770, %v11073, %v10813
        %v11106 = vsel %vm1770, %v11074, %v10815
        %v11107 = vsel %vm1770, %v11075, %v10817
        %v11108 = vsel %vm1770, %v11076, %v10819
        %v11109 = vsel %vm1770, %v11077, %v10821
        %v11110 = vsel %vm1770, %v11078, %v10823
        %v11111 = vsel %vm1770, %v11079, %v10825
        %v11112 = vsel %vm1770, %v11080, %v10827
        %v11113 = vsel %vm1770, %v11081, %v10829
        %v11114 = vsel %vm1770, %v11082, %v10831
        %v11115 = vsel %vm1770, %v11083, %v10833
        %v11116 = vsel %vm1770, %v11084, %v10835
        %v11117 = vsel %vm1770, %v11085, %v10837
        %v11118 = vsel %vm1770, %v11086, %v10831
        %v11119 = vsel %vm1770, %v11087, %v10833
        %v11120 = vld [vmem:[%s10] sm:$0xff]
        %v11121 = vld [vmem:[%s10 + $0x8] sm:$0x1]
        %v11122 = vld [vmem:[%s11] sm:$0x1]
        %v11124 = vlaneseq
        %v11125 = vshrl.u32 %v11124, 7
        %v11126 = vsub.s32 0, %v11125
        %v11127 = vrot.slane %v11122, %v11126
        %v11130 = vsel %vm3853, %v11088, 0
        %v11133 = vsel %vm3853, %v11089, 0
        %v11136 = vsel %vm3853, %v11090, 0
        %v11139 = vsel %vm3853, %v11091, 0
        %v11142 = vsel %vm3853, %v11092, 0
        %v11145 = vsel %vm3853, %v11093, 0
        %v11148 = vsel %vm3853, %v11094, 0
        %v11151 = vsel %vm3853, %v11095, 0
        %v11154 = vsel %vm3853, %v11096, 0
        %v11157 = vsel %vm3853, %v11097, 0
        %v11160 = vsel %vm3853, %v11098, 0
        %v11163 = vsel %vm3853, %v11099, 0
        %v11166 = vsel %vm3853, %v11100, 0
        %v11169 = vsel %vm3853, %v11101, 0
        %v11172 = vsel %vm3853, %v11102, 0
        %v11175 = vsel %vm3853, %v11103, 0
        %v11178 = vsel %vm3853, %v11104, 0
        %v11181 = vsel %vm3853, %v11105, 0
        %v11184 = vsel %vm3853, %v11106, 0
        %v11187 = vsel %vm3853, %v11107, 0
        %v11190 = vsel %vm3853, %v11108, 0
        %v11193 = vsel %vm3853, %v11109, 0
        %v11196 = vsel %vm3853, %v11110, 0
        %v11199 = vsel %vm3853, %v11111, 0
        %v11202 = vsel %vm3853, %v11112, 0
        %v11205 = vsel %vm3853, %v11113, 0
        %v11208 = vsel %vm3853, %v11114, 0
        %v11211 = vsel %vm3853, %v11115, 0
        %v11214 = vsel %vm3853, %v11116, 0
        %v11217 = vsel %vm3853, %v11117, 0
        %v11220 = vsel %vm3853, %v11118, 0
        %v11223 = vsel %vm3853, %v11119, 0
        %v11226 = vsel %vm647, %v11121, 0
        %11228 = vmatprep.subr.mxu0 0.0
        %11229 = vmatpush1.msra.mxu0 %v11120
        %11230 = vmatprep.subr.mxu0 0.0
        %11231 = vmatpush1.msra.mxu0 %v11226
        %11232 = vmatprep.subr.mxu0 0.0
        %11233 = vmatpush1.msra.mxu0 0.0
        %11234 = vmatprep.subr.mxu0 0.0
        %11235 = vmatpush1.msra.mxu0 0.0
        %11236 = vmatprep.subr.mxu0 0.0
        %11237 = vmatpush1.msra.mxu0 0.0
        %11238 = vmatprep.subr.mxu0 0.0
        %11239 = vmatpush1.msra.mxu0 0.0
        %11240 = vmatprep.subr.mxu0 0.0
        %11241 = vmatpush1.msra.mxu0 0.0
        %11242 = vmatprep.subr.mxu0 0.0
        %11243 = vmatpush1.msra.mxu0 0.0
        %11244 = vmatprep.subr.mxu0 0.0
        %11245 = vmatpush1.msra.mxu0 0.0
        %11246 = vmatprep.subr.mxu0 0.0
        %11247 = vmatpush1.msra.mxu0 0.0
        %11248 = vmatprep.subr.mxu0 0.0
        %11249 = vmatpush1.msra.mxu0 0.0
        %11250 = vmatprep.subr.mxu0 0.0
        %11251 = vmatpush1.msra.mxu0 0.0
        %11252 = vmatprep.subr.mxu0 0.0
        %11253 = vmatpush1.msra.mxu0 0.0
        %11254 = vmatprep.subr.mxu0 0.0
        %11255 = vmatpush1.msra.mxu0 0.0
        %11256 = vmatprep.subr.mxu0 0.0
        %11257 = vmatpush1.msra.mxu0 0.0
        %11258 = vmatprep.subr.mxu0 0.0
        %11259 = vmatpush1.msra.mxu0 0.0
        %11260 = vmatprep.subr.mxu0 0.0
        %11261 = vmatpush1.msra.mxu0 0.0
        %11262 = vmatprep.subr.mxu0 0.0
        %11263 = vmatpush1.msra.mxu0 0.0
        %11264 = vmatprep.subr.mxu0 0.0
        %11265 = vmatpush1.msra.mxu0 0.0
        %11266 = vmatprep.subr.mxu0 0.0
        %11267 = vmatpush1.msra.mxu0 0.0
        %11268 = vmatprep.subr.mxu0 0.0
        %11269 = vmatpush1.msra.mxu0 0.0
        %11270 = vmatprep.subr.mxu0 0.0
        %11271 = vmatpush1.msra.mxu0 0.0
        %11272 = vmatprep.subr.mxu0 0.0
        %11273 = vmatpush1.msra.mxu0 0.0
        %11274 = vmatprep.subr.mxu0 0.0
        %11275 = vmatpush1.msra.mxu0 0.0
        %11276 = vmatprep.subr.mxu0 0.0
        %11277 = vmatpush1.msra.mxu0 0.0
        %11278 = vmatprep.subr.mxu0 0.0
        %11279 = vmatpush1.msra.mxu0 0.0
        %11280 = vmatprep.subr.mxu0 0.0
        %11281 = vmatpush1.msra.mxu0 0.0
        %11282 = vmatprep.subr.mxu0 0.0
        %11283 = vmatpush1.msra.mxu0 0.0
        %11284 = vmatprep.subr.mxu0 0.0
        %11285 = vmatpush1.msra.mxu0 0.0
        %11286 = vmatprep.subr.mxu0 0.0
        %11287 = vmatpush1.msra.mxu0 0.0
        %11288 = vmatprep.subr.mxu0 0.0
        %11289 = vmatpush1.msra.mxu0 0.0
        %11290 = vmatprep.subr.mxu0 0.0
        %11291 = vmatpush1.msra.mxu0 0.0
        %11292 = vmatprep.mubr.f32.mxu0 0.0
        %11293 = vmatmul.mubr.f32.gmra.mrb[0].mxu0 %v11130
        %v11294 = vpop.f32.mrb[0].mxu0
        %v11295 = vadd.f32 %v11127, %v11294
        %v11296 = vpop.f32.mrb[0].mxu0
        %11297 = vmatprep.mubr.f32.mxu0 0.0
        %11298 = vmatmul.mubr.f32.gmra.mrb[0].mxu0 %v11133
        %v11299 = vpop.f32.mrb[0].mxu0
        %v11300 = vadd.f32 %v11127, %v11299
        %v11301 = vpop.f32.mrb[0].mxu0
        %11302 = vmatprep.mubr.f32.mxu0 0.0
        %11303 = vmatmul.mubr.f32.gmra.mrb[0].mxu0 %v11136
        %v11304 = vpop.f32.mrb[0].mxu0
        %v11305 = vadd.f32 %v11127, %v11304
        %v11306 = vpop.f32.mrb[0].mxu0
        %11307 = vmatprep.mubr.f32.mxu0 0.0
        %11308 = vmatmul.mubr.f32.gmra.mrb[0].mxu0 %v11139
        %v11309 = vpop.f32.mrb[0].mxu0
        %v11310 = vadd.f32 %v11127, %v11309
        %v11311 = vpop.f32.mrb[0].mxu0
        %11312 = vmatprep.mubr.f32.mxu0 0.0
        %11313 = vmatmul.mubr.f32.gmra.mrb[0].mxu0 %v11142
        %v11314 = vpop.f32.mrb[0].mxu0
        %v11315 = vadd.f32 %v11127, %v11314
        %v11316 = vpop.f32.mrb[0].mxu0
        %11317 = vmatprep.mubr.f32.mxu0 0.0
        %11318 = vmatmul.mubr.f32.gmra.mrb[0].mxu0 %v11145
        %v11319 = vpop.f32.mrb[0].mxu0
        %v11320 = vadd.f32 %v11127, %v11319
        %v11321 = vpop.f32.mrb[0].mxu0
        %11322 = vmatprep.mubr.f32.mxu0 0.0
        %11323 = vmatmul.mubr.f32.gmra.mrb[0].mxu0 %v11148
        %v11324 = vpop.f32.mrb[0].mxu0
        %v11325 = vadd.f32 %v11127, %v11324
        %v11326 = vpop.f32.mrb[0].mxu0
        %11327 = vmatprep.mubr.f32.mxu0 0.0
        %11328 = vmatmul.mubr.f32.gmra.mrb[0].mxu0 %v11151
        %v11329 = vpop.f32.mrb[0].mxu0
        %v11330 = vadd.f32 %v11127, %v11329
        %v11331 = vpop.f32.mrb[0].mxu0
        %11332 = vmatprep.mubr.f32.mxu0 0.0
        %11333 = vmatmul.mubr.f32.gmra.mrb[0].mxu0 %v11154
        %v11334 = vpop.f32.mrb[0].mxu0
        %v11335 = vadd.f32 %v11127, %v11334
        %v11336 = vpop.f32.mrb[0].mxu0
        %11337 = vmatprep.mubr.f32.mxu0 0.0
        %11338 = vmatmul.mubr.f32.gmra.mrb[0].mxu0 %v11157
        %v11339 = vpop.f32.mrb[0].mxu0
        %v11340 = vadd.f32 %v11127, %v11339
        %v11341 = vpop.f32.mrb[0].mxu0
        %11342 = vmatprep.mubr.f32.mxu0 0.0
        %11343 = vmatmul.mubr.f32.gmra.mrb[0].mxu0 %v11160
        %v11344 = vpop.f32.mrb[0].mxu0
        %v11345 = vadd.f32 %v11127, %v11344
        %v11346 = vpop.f32.mrb[0].mxu0
        %11347 = vmatprep.mubr.f32.mxu0 0.0
        %11348 = vmatmul.mubr.f32.gmra.mrb[0].mxu0 %v11163
        %v11349 = vpop.f32.mrb[0].mxu0
        %v11350 = vadd.f32 %v11127, %v11349
        %v11351 = vpop.f32.mrb[0].mxu0
        %11352 = vmatprep.mubr.f32.mxu0 0.0
        %11353 = vmatmul.mubr.f32.gmra.mrb[0].mxu0 %v11166
        %v11354 = vpop.f32.mrb[0].mxu0
        %v11355 = vadd.f32 %v11127, %v11354
        %v11356 = vpop.f32.mrb[0].mxu0
        %11357 = vmatprep.mubr.f32.mxu0 0.0
        %11358 = vmatmul.mubr.f32.gmra.mrb[0].mxu0 %v11169
        %v11359 = vpop.f32.mrb[0].mxu0
        %v11360 = vadd.f32 %v11127, %v11359
        %v11361 = vpop.f32.mrb[0].mxu0
        %11362 = vmatprep.mubr.f32.mxu0 0.0
        %11363 = vmatmul.mubr.f32.gmra.mrb[0].mxu0 %v11172
        %v11364 = vpop.f32.mrb[0].mxu0
        %v11365 = vadd.f32 %v11127, %v11364
        %v11366 = vpop.f32.mrb[0].mxu0
        %11367 = vmatprep.mubr.f32.mxu0 0.0
        %11368 = vmatmul.mubr.f32.gmra.mrb[0].mxu0 %v11175
        %v11369 = vpop.f32.mrb[0].mxu0
        %v11370 = vadd.f32 %v11127, %v11369
        %v11371 = vpop.f32.mrb[0].mxu0
        %11372 = vmatprep.mubr.f32.mxu0 0.0
        %11373 = vmatmul.mubr.f32.gmra.mrb[0].mxu0 %v11178
        %v11374 = vpop.f32.mrb[0].mxu0
        %v11375 = vadd.f32 %v11127, %v11374
        %v11376 = vpop.f32.mrb[0].mxu0
        %11377 = vmatprep.mubr.f32.mxu0 0.0
        %11378 = vmatmul.mubr.f32.gmra.mrb[0].mxu0 %v11181
        %v11379 = vpop.f32.mrb[0].mxu0
        %v11380 = vadd.f32 %v11127, %v11379
        %v11381 = vpop.f32.mrb[0].mxu0
        %11382 = vmatprep.mubr.f32.mxu0 0.0
        %11383 = vmatmul.mubr.f32.gmra.mrb[0].mxu0 %v11184
        %v11384 = vpop.f32.mrb[0].mxu0
        %v11385 = vadd.f32 %v11127, %v11384
        %v11386 = vpop.f32.mrb[0].mxu0
        %11387 = vmatprep.mubr.f32.mxu0 0.0
        %11388 = vmatmul.mubr.f32.gmra.mrb[0].mxu0 %v11187
        %v11389 = vpop.f32.mrb[0].mxu0
        %v11390 = vadd.f32 %v11127, %v11389
        %v11391 = vpop.f32.mrb[0].mxu0
        %11392 = vmatprep.mubr.f32.mxu0 0.0
        %11393 = vmatmul.mubr.f32.gmra.mrb[0].mxu0 %v11190
        %v11394 = vpop.f32.mrb[0].mxu0
        %v11395 = vadd.f32 %v11127, %v11394
        %v11396 = vpop.f32.mrb[0].mxu0
        %11397 = vmatprep.mubr.f32.mxu0 0.0
        %11398 = vmatmul.mubr.f32.gmra.mrb[0].mxu0 %v11193
        %v11399 = vpop.f32.mrb[0].mxu0
        %v11400 = vadd.f32 %v11127, %v11399
        %v11401 = vpop.f32.mrb[0].mxu0
        %11402 = vmatprep.mubr.f32.mxu0 0.0
        %11403 = vmatmul.mubr.f32.gmra.mrb[0].mxu0 %v11196
        %v11404 = vpop.f32.mrb[0].mxu0
        %v11405 = vadd.f32 %v11127, %v11404
        %v11406 = vpop.f32.mrb[0].mxu0
        %11407 = vmatprep.mubr.f32.mxu0 0.0
        %11408 = vmatmul.mubr.f32.gmra.mrb[0].mxu0 %v11199
        %v11409 = vpop.f32.mrb[0].mxu0
        %v11410 = vadd.f32 %v11127, %v11409
        %v11411 = vpop.f32.mrb[0].mxu0
        %11412 = vmatprep.mubr.f32.mxu0 0.0
        %11413 = vmatmul.mubr.f32.gmra.mrb[0].mxu0 %v11202
        %v11414 = vpop.f32.mrb[0].mxu0
        %v11415 = vadd.f32 %v11127, %v11414
        %v11416 = vpop.f32.mrb[0].mxu0
        %11417 = vmatprep.mubr.f32.mxu0 0.0
        %11418 = vmatmul.mubr.f32.gmra.mrb[0].mxu0 %v11205
        %v11419 = vpop.f32.mrb[0].mxu0
        %v11420 = vadd.f32 %v11127, %v11419
        %v11421 = vpop.f32.mrb[0].mxu0
        %11422 = vmatprep.mubr.f32.mxu0 0.0
        %11423 = vmatmul.mubr.f32.gmra.mrb[0].mxu0 %v11208
        %v11424 = vpop.f32.mrb[0].mxu0
        %v11425 = vadd.f32 %v11127, %v11424
        %v11426 = vpop.f32.mrb[0].mxu0
        %11427 = vmatprep.mubr.f32.mxu0 0.0
        %11428 = vmatmul.mubr.f32.gmra.mrb[0].mxu0 %v11211
        %v11429 = vpop.f32.mrb[0].mxu0
        %v11430 = vadd.f32 %v11127, %v11429
        %v11431 = vpop.f32.mrb[0].mxu0
        %11432 = vmatprep.mubr.f32.mxu0 0.0
        %11433 = vmatmul.mubr.f32.gmra.mrb[0].mxu0 %v11214
        %v11434 = vpop.f32.mrb[0].mxu0
        %v11435 = vadd.f32 %v11127, %v11434
        %v11436 = vpop.f32.mrb[0].mxu0
        %11437 = vmatprep.mubr.f32.mxu0 0.0
        %11438 = vmatmul.mubr.f32.gmra.mrb[0].mxu0 %v11217
        %v11439 = vpop.f32.mrb[0].mxu0
        %v11440 = vadd.f32 %v11127, %v11439
        %v11441 = vpop.f32.mrb[0].mxu0
        %11442 = vmatprep.mubr.f32.mxu0 0.0
        %11443 = vmatmul.mubr.f32.gmra.mrb[0].mxu0 %v11220
        %v11444 = vpop.f32.mrb[0].mxu0
        %v11445 = vadd.f32 %v11127, %v11444
        %v11446 = vpop.f32.mrb[0].mxu0
        %11447 = vmatprep.mubr.f32.mxu0 0.0
        %11448 = vmatmul.mubr.f32.gmra.mrb[0].mxu0 %v11223
        %v11449 = vpop.f32.mrb[0].mxu0
        %v11450 = vadd.f32 %v11127, %v11449
        %v11451 = vpop.f32.mrb[0].mxu0
        %11452 = vdwg.mxu0
        %v11453 = vadd.f32 %v11295, %v535
        %v11454 = vadd.f32 %v11300, %v536
        %v11455 = vadd.f32 %v11305, %v537
        %v11456 = vadd.f32 %v11310, %v538
        %v11457 = vadd.f32 %v11315, %v539
        %v11458 = vadd.f32 %v11320, %v540
        %v11459 = vadd.f32 %v11325, %v541
        %v11460 = vadd.f32 %v11330, %v542
        %v11461 = vadd.f32 %v11335, %v543
        %v11462 = vadd.f32 %v11340, %v544
        %v11463 = vadd.f32 %v11345, %v545
        %v11464 = vadd.f32 %v11350, %v546
        %v11465 = vadd.f32 %v11355, %v547
        %v11466 = vadd.f32 %v11360, %v548
        %v11467 = vadd.f32 %v11365, %v549
        %v11468 = vadd.f32 %v11370, %v550
        %v11469 = vadd.f32 %v11375, %v567
        %v11470 = vadd.f32 %v11380, %v568
        %v11471 = vadd.f32 %v11385, %v569
        %v11472 = vadd.f32 %v11390, %v570
        %v11473 = vadd.f32 %v11395, %v571
        %v11474 = vadd.f32 %v11400, %v572
        %v11475 = vadd.f32 %v11405, %v573
        %v11476 = vadd.f32 %v11410, %v574
        %v11477 = vadd.f32 %v11415, %v575
        %v11478 = vadd.f32 %v11420, %v576
        %v11479 = vadd.f32 %v11425, %v577
        %v11480 = vadd.f32 %v11430, %v578
        %v11481 = vadd.f32 %v11435, %v579
        %v11482 = vadd.f32 %v11440, %v580
        %v11483 = vadd.f32 %v11445, %v581
        %v11484 = vadd.f32 %v11450, %v582
        %11485 = vxpose.xlu0.b32.start [1/16] %v6012, 128
        %11486 = vxpose.xlu0.b32.cont [2/16] %v6013, 128
        %11487 = vxpose.xlu0.b32.cont [3/16] %v6014, 128
        %11488 = vxpose.xlu0.b32.cont [4/16] %v6015, 128
        %11489 = vxpose.xlu0.b32.cont [5/16] %v6016, 128
        %11490 = vxpose.xlu0.b32.cont [6/16] %v6017, 128
        %11491 = vxpose.xlu0.b32.cont [7/16] %v6018, 128
        %11492 = vxpose.xlu0.b32.cont [8/16] %v6019, 128
        %11493 = vxpose.xlu0.b32.cont [9/16] %v6020, 128
        %11494 = vxpose.xlu0.b32.cont [10/16] %v6021, 128
        %11495 = vxpose.xlu0.b32.cont [11/16] %v6022, 128
        %11496 = vxpose.xlu0.b32.cont [12/16] %v6023, 128
        %11497 = vxpose.xlu0.b32.cont [13/16] %v6024, 128
        %11498 = vxpose.xlu0.b32.cont [14/16] %v6025, 128
        %11499 = vxpose.xlu0.b32.cont [15/16] %v6026, 128
        %11500 = vxpose.xlu0.b32.end [16/16] %v6027, 128
        %v11501 = vpop.trf.xlu0
        %v11502 = vpop.trf.xlu0
        %v11503 = vpop.trf.xlu0
        %v11504 = vpop.trf.xlu0
        %v11505 = vpop.trf.xlu0
        %v11506 = vpop.trf.xlu0
        %v11507 = vpop.trf.xlu0
        %v11508 = vpop.trf.xlu0
        %v11509 = vpop.trf.xlu0
        %v11510 = vpop.trf.xlu0
        %v11511 = vpop.trf.xlu0
        %v11512 = vpop.trf.xlu0
        %v11513 = vpop.trf.xlu0
        %v11514 = vpop.trf.xlu0
        %v11515 = vpop.trf.xlu0
        %v11516 = vpop.trf.xlu0
        %11517 = vxpose.xlu0.b32.start [1/16] %v6028, 128
        %11518 = vxpose.xlu0.b32.cont [2/16] %v6029, 128
        %11519 = vxpose.xlu0.b32.cont [3/16] %v6030, 128
        %11520 = vxpose.xlu0.b32.cont [4/16] %v6031, 128
        %11521 = vxpose.xlu0.b32.cont [5/16] %v6032, 128
        %11522 = vxpose.xlu0.b32.cont [6/16] %v6033, 128
        %11523 = vxpose.xlu0.b32.cont [7/16] %v6034, 128
        %11524 = vxpose.xlu0.b32.cont [8/16] %v6035, 128
        %11525 = vxpose.xlu0.b32.cont [9/16] %v6036, 128
        %11526 = vxpose.xlu0.b32.cont [10/16] %v6037, 128
        %11527 = vxpose.xlu0.b32.cont [11/16] %v6038, 128
        %11528 = vxpose.xlu0.b32.cont [12/16] %v6039, 128
        %11529 = vxpose.xlu0.b32.cont [13/16] %v6040, 128
        %11530 = vxpose.xlu0.b32.cont [14/16] %v6041, 128
        %11531 = vxpose.xlu0.b32.cont [15/16] %v6042, 128
        %11532 = vxpose.xlu0.b32.end [16/16] %v6043, 128
        %v11533 = vpop.trf.xlu0
        %v11534 = vpop.trf.xlu0
        %v11535 = vpop.trf.xlu0
        %v11536 = vpop.trf.xlu0
        %v11537 = vpop.trf.xlu0
        %v11538 = vpop.trf.xlu0
        %v11539 = vpop.trf.xlu0
        %v11540 = vpop.trf.xlu0
        %v11541 = vpop.trf.xlu0
        %v11542 = vpop.trf.xlu0
        %v11543 = vpop.trf.xlu0
        %v11544 = vpop.trf.xlu0
        %v11545 = vpop.trf.xlu0
        %v11546 = vpop.trf.xlu0
        %v11547 = vpop.trf.xlu0
        %v11548 = vpop.trf.xlu0
        %11549 = vst [vmem:[%s441] sm:$0xf] %v11501
        %11550 = vst [vmem:[%s441 + $0x8] sm:$0xf] %v11533
        %11551 = vxpose.xlu0.b32.start [1/16] %v11453, 128
        %11552 = vxpose.xlu0.b32.cont [2/16] %v11454, 128
        %11553 = vxpose.xlu0.b32.cont [3/16] %v11455, 128
        %11554 = vxpose.xlu0.b32.cont [4/16] %v11456, 128
        %11555 = vxpose.xlu0.b32.cont [5/16] %v11457, 128
        %11556 = vxpose.xlu0.b32.cont [6/16] %v11458, 128
        %11557 = vxpose.xlu0.b32.cont [7/16] %v11459, 128
        %11558 = vxpose.xlu0.b32.cont [8/16] %v11460, 128
        %11559 = vxpose.xlu0.b32.cont [9/16] %v11461, 128
        %11560 = vxpose.xlu0.b32.cont [10/16] %v11462, 128
        %11561 = vxpose.xlu0.b32.cont [11/16] %v11463, 128
        %11562 = vxpose.xlu0.b32.cont [12/16] %v11464, 128
        %11563 = vxpose.xlu0.b32.cont [13/16] %v11465, 128
        %11564 = vxpose.xlu0.b32.cont [14/16] %v11466, 128
        %11565 = vxpose.xlu0.b32.cont [15/16] %v11467, 128
        %11566 = vxpose.xlu0.b32.end [16/16] %v11468, 128
        %v11567 = vpop.trf.xlu0
        %v11568 = vpop.trf.xlu0
        %v11569 = vpop.trf.xlu0
        %v11570 = vpop.trf.xlu0
        %v11571 = vpop.trf.xlu0
        %v11572 = vpop.trf.xlu0
        %v11573 = vpop.trf.xlu0
        %v11574 = vpop.trf.xlu0
        %v11575 = vpop.trf.xlu0
        %v11576 = vpop.trf.xlu0
        %v11577 = vpop.trf.xlu0
        %v11578 = vpop.trf.xlu0
        %v11579 = vpop.trf.xlu0
        %v11580 = vpop.trf.xlu0
        %v11581 = vpop.trf.xlu0
        %v11582 = vpop.trf.xlu0
        %11583 = vxpose.xlu0.b32.start [1/16] %v11469, 128
        %11584 = vxpose.xlu0.b32.cont [2/16] %v11470, 128
        %11585 = vxpose.xlu0.b32.cont [3/16] %v11471, 128
        %11586 = vxpose.xlu0.b32.cont [4/16] %v11472, 128
        %11587 = vxpose.xlu0.b32.cont [5/16] %v11473, 128
        %11588 = vxpose.xlu0.b32.cont [6/16] %v11474, 128
        %11589 = vxpose.xlu0.b32.cont [7/16] %v11475, 128
        %11590 = vxpose.xlu0.b32.cont [8/16] %v11476, 128
        %11591 = vxpose.xlu0.b32.cont [9/16] %v11477, 128
        %11592 = vxpose.xlu0.b32.cont [10/16] %v11478, 128
        %11593 = vxpose.xlu0.b32.cont [11/16] %v11479, 128
        %11594 = vxpose.xlu0.b32.cont [12/16] %v11480, 128
        %11595 = vxpose.xlu0.b32.cont [13/16] %v11481, 128
        %11596 = vxpose.xlu0.b32.cont [14/16] %v11482, 128
        %11597 = vxpose.xlu0.b32.cont [15/16] %v11483, 128
        %11598 = vxpose.xlu0.b32.end [16/16] %v11484, 128
        %v11599 = vpop.trf.xlu0
        %v11600 = vpop.trf.xlu0
        %v11601 = vpop.trf.xlu0
        %v11602 = vpop.trf.xlu0
        %v11603 = vpop.trf.xlu0
        %v11604 = vpop.trf.xlu0
        %v11605 = vpop.trf.xlu0
        %v11606 = vpop.trf.xlu0
        %v11607 = vpop.trf.xlu0
        %v11608 = vpop.trf.xlu0
        %v11609 = vpop.trf.xlu0
        %v11610 = vpop.trf.xlu0
        %v11611 = vpop.trf.xlu0
        %v11612 = vpop.trf.xlu0
        %v11613 = vpop.trf.xlu0
        %v11614 = vpop.trf.xlu0
        %v11617 = vrot.slane %v11567, 4
        %v11618 = vrot.slane %v11599, 4
        %11621 = vst [vmem:[%s441] sm:$0xf0] %v11617
        %11622 = vst [vmem:[%s441 + $0x8] sm:$0xf0] %v11618
        %s11623 = sand.u32 %s321, 1
        %s11624 = scalar_lea.sflag [#allocation7], %s11623
        %s11625 = sand.u32 %s321, 1
        %s11626 = smul.addr %s11625, 16
        %s11627 = scalar_lea.vmem [#allocation6], %s11626
        // Predicated region
        $region73: #{tpu_custom_call.1} parent=71 // pred_check
          %p11628 = pneg %p331
        $region74: #{tpu_custom_call.1} parent=71 // pred_check_branch
          %11630 = sbr.rel (%p11628) target = $region76
        $region75: #{tpu_custom_call.1} parent=71 // pred_region
          %s11632 = ssub.s32 256, 256
          %11633 = vsyncadd %s11624, %s11632
          %s11634 = smul.addr %s35, 2
          %s11635 = smul.addr %s11634, 128
          %s11636 = scalar_lea.hbm %s13, %s11635
          %s11638 = sshll.u32 %s11627, 4
          %s11639 = int_to_ptr.vmem [resolvable:$true] %s11638
          %11641 = dma.vmem_to_hbm [thread:$0]  %s11639, 256, %s11636, %s11624
        $region76: #{tpu_custom_call.1} parent=71 // pred_fallthru
          _
      $region72: #{tpu_custom_call.1} parent=5 // pred_fallthru
        _
      %p11642 = scmp.le.s32.totalorder 2, %s30
      // Predicated region
      $region77: #{tpu_custom_call.1} parent=5 // pred_check
        %p11643 = pneg %p11642
      $region78: #{tpu_custom_call.1} parent=5 // pred_check_branch
        %11645 = sbr.rel (%p11643) target = $region80
      $region79: #{tpu_custom_call.1} parent=5 // pred_region
        %s11646 = ssub.s32 %s30, 2
        // Predicated region
        $region81: #{tpu_custom_call.1} parent=79 // pred_check
          %p11647 = pneg %p337
        $region82: #{tpu_custom_call.1} parent=79 // pred_check_branch
          %11649 = sbr.rel (%p11647) target = $region84
        $region83: #{tpu_custom_call.1} parent=79 // pred_region
          %s11650 = sand.u32 %s322, 1
          %s11651 = scalar_lea.sflag [#allocation7], %s11650
          %s11652 = sand.u32 %s322, 1
          %s11653 = smul.addr %s11652, 16
          %s11654 = scalar_lea.vmem [#allocation6], %s11653
          %11655 = dma.done %s11651, 256
        $region84: #{tpu_custom_call.1} parent=79 // pred_fallthru
          _
      $region80: #{tpu_custom_call.1} parent=5 // pred_fallthru
        _
    $region6: #{tpu_custom_call.1} parent=1 // loop_footer
      %s34 = sadd.s32 1, %s30
    $region7: #{tpu_custom_call.1} parent=1 // loop_footer_branch
      %29 = sbr.rel target = $region3
    $region8: #{tpu_custom_call.1} parent=1 // loop_exit
      _
    %11656 = vsyncpa [#allocation7], 1
    %s11657 = scalar_lea.sflag [#allocation7], 1
    %11658 = vsyncpa %s11657, 1

</llo_original>
